<compile_context>
chip_gen: v7x
topology: tpu7x:2x2x1
jax: 0.10.0
libtpu: 0.0.40
codegen_flags: <defaults>
</compile_context>

<pallas_src>
import jax
import jax.numpy as jnp
from jax.experimental import pallas as pl
from jax.experimental.pallas import tpu as pltpu

_EPS = 1e-5
_MXU_DTYPE = jnp.bfloat16                 # matmul-operand / conv-scratch dtype
_HP = jax.lax.Precision.HIGHEST           # keep BN statistic dots at f32 accuracy


def _bn_lane(x2, g_ref, b_ref, pool_ref, bcast_ref, w_spatial):
    """Training-mode BatchNorm on a lane-dense (rows, W*C) view.

    One-pass stats (sum / sum-of-squares, biased variance) per channel; lanes
    hold channel (lane % C), so lane sums are pooled to per-channel sums with a
    tiny 0/1 (L,C) matmul and broadcast back with its (C,L) counterpart.  The
    normalization itself is a single fused x*a + b over the lane-dense tensor.
    """
    rows = x2.shape[0]
    cnt = float(rows * w_spatial)
    s = jnp.sum(x2, axis=0, keepdims=True)                         # (1, L)
    ss = jnp.sum(x2 * x2, axis=0, keepdims=True)                   # (1, L)
    s_c = jnp.dot(s, pool_ref[...], precision=_HP, preferred_element_type=jnp.float32)
    ss_c = jnp.dot(ss, pool_ref[...], precision=_HP, preferred_element_type=jnp.float32)
    mean = s_c / cnt                                               # (1, C)
    var = ss_c / cnt - mean * mean                                 # biased (PyTorch train)
    a_c = g_ref[...] * jax.lax.rsqrt(var + _EPS)                   # (1, C)
    b_c = b_ref[...] - mean * a_c                                  # (1, C)
    a_l = jnp.dot(a_c, bcast_ref[...], precision=_HP, preferred_element_type=jnp.float32)
    b_l = jnp.dot(b_c, bcast_ref[...], precision=_HP, preferred_element_type=jnp.float32)
    return x2 * a_l + b_l                                          # (rows, L) f32


def res_block2d_kernel(x_ref,
                       g1_ref, be1_ref, w1_ref, b1_ref,
                       g2_ref, be2_ref, w2_ref, b2_ref,
                       g3_ref, be3_ref,
                       wu_ref, bu_ref,
                       pool1_ref, bc1_ref, pool2_ref, bc2_ref,
                       o_ref,
                       pad_ref):
    N, H, L1 = x_ref.shape                    # L1 = W * Cin  (lane-dense input)
    L2 = o_ref.shape[-1]                      # L2 = W * Cout (lane-dense output)
    Lp = pad_ref.shape[-1]                    # shared scratch lane width
    R = N * H
    Ci = pool1_ref.shape[1]
    Wsp = L1 // Ci                            # spatial W folded onto the lane axis

    x2 = x_ref[...].reshape(R, L1)

    # Halo rows of the (3,1)-conv padding: zero only these two rows, once.
    # Data rows 1..H are fully (re)written by each conv stage.
    zrow = jnp.zeros((N, 1, Lp), _MXU_DTYPE)
    pad_ref[:, 0:1, :] = zrow
    pad_ref[:, H + 1:H + 2, :] = zrow

    # ---- conv1(bn1(x)) :: three H-shifted matmuls vs W-block-diagonal taps ----
    h1 = _bn_lane(x2, g1_ref, be1_ref, pool1_ref, bc1_ref, Wsp)
    pad_ref[:, 1:H + 1, :L1] = h1.reshape(N, H, L1).astype(_MXU_DTYPE)
    acc = jnp.broadcast_to(b1_ref[...], (R, L2))          # bias as accumulator init
    for k in range(3):                                    # tap k sees rows h + k - 1
        xs = pad_ref[:, k:k + H, :L1].reshape(R, L1)
        acc = acc + jnp.dot(xs, w1_ref[k], preferred_element_type=jnp.float32)

    # ---- conv2(relu(bn2(.))) ----
    h2 = jnp.maximum(_bn_lane(acc, g2_ref, be2_ref, pool2_ref, bc2_ref, Wsp), 0.0)
    pad_ref[:, 1:H + 1, :L2] = h2.reshape(N, H, L2).astype(_MXU_DTYPE)
    acc2 = jnp.broadcast_to(b2_ref[...], (R, L2))
    for k in range(3):
        xs = pad_ref[:, k:k + H, :L2].reshape(R, L2)
        acc2 = acc2 + jnp.dot(xs, w2_ref[k], preferred_element_type=jnp.float32)

    # ---- bn3 + residual 1x1 conv on the raw input ----
    h3 = _bn_lane(acc2, g3_ref, be3_ref, pool2_ref, bc2_ref, Wsp)
    up = jnp.dot(x2.astype(_MXU_DTYPE), wu_ref[...],
                 preferred_element_type=jnp.float32) + bu_ref[...]
    o_ref[...] = (h3 + up).reshape(N, H, L2).astype(o_ref.dtype)


def res_block2d_pallas(x_nchw, p):
    """x_nchw: (N, Cin, H, W) float32 -> (N, Cout, H, W) float32."""
    N, Ci, H, W = x_nchw.shape
    Co = p['conv1_w'].shape[0]
    L1, L2 = W * Ci, W * Co
    Lp = max(L1, L2)

    # NCHW -> lane-dense (N, H, W*Cin): the (3,1) convs only mix H and channels,
    # so W is folded onto the lane axis (W*Co = 128 for the test shape).
    x = jnp.transpose(x_nchw, (0, 2, 3, 1)).reshape(N, H, L1)

    eye_w = jnp.eye(W, dtype=jnp.float32)

    def blkdiag(w_oihw):
        # PyTorch (O, I, kH, 1) -> per-tap block-diagonal (kH, W*I, W*O):
        #   out[k, w*I + i, v*O + o] = (w == v) * weight[o, i, k]
        w_kio = jnp.transpose(w_oihw[:, :, :, 0], (2, 1, 0))
        kH, I, O = w_kio.shape
        return jnp.einsum('wv,kio->kwivo', eye_w, w_kio).reshape(kH, W * I, W * O)

    w1b = blkdiag(p['conv1_w']).astype(_MXU_DTYPE)      # (3, L1, L2)
    w2b = blkdiag(p['conv2_w']).astype(_MXU_DTYPE)      # (3, L2, L2)
    wub = blkdiag(p['up_w'])[0].astype(_MXU_DTYPE)      # (L1, L2)

    b1l = jnp.tile(p['conv1_b'], W).reshape(1, L2)      # lane-tiled conv biases
    b2l = jnp.tile(p['conv2_b'], W).reshape(1, L2)
    bul = jnp.tile(p['up_b'], W).reshape(1, L2)

    # 0/1 pooling (L, C) and broadcast (C, L) matrices: lane l holds channel l % C.
    pool1 = jnp.tile(jnp.eye(Ci, dtype=jnp.float32), (W, 1))
    pool2 = jnp.tile(jnp.eye(Co, dtype=jnp.float32), (W, 1))
    bc1 = jnp.tile(jnp.eye(Ci, dtype=jnp.float32), (1, W))
    bc2 = jnp.tile(jnp.eye(Co, dtype=jnp.float32), (1, W))

    args = (
        x,
        p['bn1_g'].reshape(1, Ci), p['bn1_b'].reshape(1, Ci), w1b, b1l,
        p['bn2_g'].reshape(1, Co), p['bn2_b'].reshape(1, Co), w2b, b2l,
        p['bn3_g'].reshape(1, Co), p['bn3_b'].reshape(1, Co),
        wub, bul,
        pool1, bc1, pool2, bc2,
    )

    # VMEM budget: inputs/output + shared bf16 conv scratch + in-flight f32
    # temporaries, with generous headroom.
    est = (4 * (N * H * (L1 + L2))
           + 2 * (N * (H + 2) * Lp)
           + 2 * (w1b.size + w2b.size + wub.size)
           + 4 * 8 * N * H * L2)
    vmem_limit = int(min(100 * 2 ** 20, max(8 * 2 ** 20, 4 * est)))

    out_nhl = pl.pallas_call(
        res_block2d_kernel,
        out_shape=jax.ShapeDtypeStruct((N, H, L2), jnp.float32),
        in_specs=[pl.BlockSpec(memory_space=pltpu.MemorySpace.VMEM)] * len(args),
        out_specs=pl.BlockSpec(memory_space=pltpu.MemorySpace.VMEM),
        scratch_shapes=[
            # single shared halo-padded conv scratch (bf16) used by both stages
            pltpu.VMEM((N, H + 2, Lp), _MXU_DTYPE),
        ],
        compiler_params=pltpu.CompilerParams(vmem_limit_bytes=vmem_limit),
    )(*args)

    # (N, H, W*Co) -> NCHW
    return jnp.transpose(out_nhl.reshape(N, H, W, Co), (0, 3, 1, 2))


# ---------------- pure-JAX reference (NCHW, lax.conv) for verification ----------------
def res_block2d_ref(x, p):
    def bn(y, g, b):
        mean = jnp.mean(y, axis=(0, 2, 3), keepdims=True)
        var = jnp.mean(jnp.square(y - mean), axis=(0, 2, 3), keepdims=True)
        return (y - mean) * jax.lax.rsqrt(var + _EPS) * g[None, :, None, None] + b[None, :, None, None]

    def conv(y, w, b, pad_h):
        o = jax.lax.conv_general_dilated(
            y, w, window_strides=(1, 1), padding=((pad_h, pad_h), (0, 0)),
            dimension_numbers=('NCHW', 'OIHW', 'NCHW'))
        return o + b[None, :, None, None]

    out = conv(bn(x, p['bn1_g'], p['bn1_b']), p['conv1_w'], p['conv1_b'], 1)
    out = conv(jnp.maximum(bn(out, p['bn2_g'], p['bn2_b']), 0.0), p['conv2_w'], p['conv2_b'], 1)
    out = bn(out, p['bn3_g'], p['bn3_b'])
    out = out + conv(x, p['up_w'], p['up_b'], 0)
    return out


def init_params(key, inp, out):
    ks = jax.random.split(key, 12)
    s = 0.1
    return {
        'bn1_g': 1.0 + s * jax.random.normal(ks[0], (inp,), jnp.float32),
        'bn1_b': s * jax.random.normal(ks[1], (inp,), jnp.float32),
        'conv1_w': s * jax.random.normal(ks[2], (out, inp, 3, 1), jnp.float32),
        'conv1_b': s * jax.random.normal(ks[3], (out,), jnp.float32),
        'bn2_g': 1.0 + s * jax.random.normal(ks[4], (out,), jnp.float32),
        'bn2_b': s * jax.random.normal(ks[5], (out,), jnp.float32),
        'conv2_w': s * jax.random.normal(ks[6], (out, out, 3, 1), jnp.float32),
        'conv2_b': s * jax.random.normal(ks[7], (out,), jnp.float32),
        'bn3_g': 1.0 + s * jax.random.normal(ks[8], (out,), jnp.float32),
        'bn3_b': s * jax.random.normal(ks[9], (out,), jnp.float32),
        'up_w': s * jax.random.normal(ks[10], (out, inp, 1, 1), jnp.float32),
        'up_b': s * jax.random.normal(ks[11], (out,), jnp.float32),
    }


if __name__ == "__main__":
    key = jax.random.PRNGKey(0)
    N, Ci, Co, H, W = 2, 4, 8, 16, 16   # res_block2d(inp=4, out=8, kernel=3)
    kx, kp = jax.random.split(key)
    x = jax.random.normal(kx, (N, Ci, H, W), jnp.float32)
    params = init_params(kp, Ci, Co)

    out = res_block2d_pallas(x, params)
    out = jax.block_until_ready(out)
    assert out.shape == (N, Co, H, W), out.shape

    ref = res_block2d_ref(x, params)
    max_err = float(jnp.max(jnp.abs(out - ref)))
    # bf16 MXU operands (f32 accumulation, f32 BN statistics) give ~1e-2-level
    # differences vs the all-f32 lax reference, hence the loosened tolerance.
    if not jnp.allclose(out, ref, atol=5e-2, rtol=5e-2):
        raise SystemExit(f"mismatch vs reference, max abs err = {max_err}")

    print("KERNEL_OK")
</pallas_src>

<mosaic_0001>
module attributes {stable_mosaic.version = 11 : i64} {
  func.func @res_block2d_kernel(%arg0: memref<2x16x64xf32, #tpu.memory_space<vmem>>, %arg1: memref<1x4xf32, #tpu.memory_space<vmem>>, %arg2: memref<1x4xf32, #tpu.memory_space<vmem>>, %arg3: memref<3x64x128xbf16, #tpu.memory_space<vmem>>, %arg4: memref<1x128xf32, #tpu.memory_space<vmem>>, %arg5: memref<1x8xf32, #tpu.memory_space<vmem>>, %arg6: memref<1x8xf32, #tpu.memory_space<vmem>>, %arg7: memref<3x128x128xbf16, #tpu.memory_space<vmem>>, %arg8: memref<1x128xf32, #tpu.memory_space<vmem>>, %arg9: memref<1x8xf32, #tpu.memory_space<vmem>>, %arg10: memref<1x8xf32, #tpu.memory_space<vmem>>, %arg11: memref<64x128xbf16, #tpu.memory_space<vmem>>, %arg12: memref<1x128xf32, #tpu.memory_space<vmem>>, %arg13: memref<64x4xf32, #tpu.memory_space<vmem>>, %arg14: memref<4x64xf32, #tpu.memory_space<vmem>>, %arg15: memref<128x8xf32, #tpu.memory_space<vmem>>, %arg16: memref<8x128xf32, #tpu.memory_space<vmem>>, %arg17: memref<2x16x128xf32, #tpu.memory_space<vmem>>, %arg18: memref<2x18x128xbf16, #tpu.memory_space<vmem>>) attributes {dimension_semantics = [], scalar_prefetch = 0 : i64, scratch_operands = 1 : i64, tpu.core_type = #tpu.core_type<tc>} {
    %c0 = arith.constant 0 : index
    %c0_0 = arith.constant 0 : index
    %c0_1 = arith.constant 0 : index
    %0 = vector.load %arg0[%c0, %c0_0, %c0_1] : memref<2x16x64xf32, #tpu.memory_space<vmem>>, vector<2x16x64xf32>
    %1 = vector.shape_cast %0 : vector<2x16x64xf32> to vector<32x64xf32>
    %cst = arith.constant 0.000000e+00 : bf16
    %2 = vector.broadcast %cst : bf16 to vector<2x1x128xbf16>
    %c0_2 = arith.constant 0 : index
    %c0_3 = arith.constant 0 : index
    %c0_4 = arith.constant 0 : index
    %3 = vector.load %arg18[%c0_2, %c0_3, %c0_4] : memref<2x18x128xbf16, #tpu.memory_space<vmem>>, vector<2x1x128xbf16>
    tpu.vector_store %arg18[%c0_2, %c0_3, %c0_4], %2 {strides = array<i32>} : memref<2x18x128xbf16, #tpu.memory_space<vmem>>, vector<2x1x128xbf16>,
    %c0_5 = arith.constant 0 : index
    %c17 = arith.constant 17 : index
    %c0_6 = arith.constant 0 : index
    %4 = vector.load %arg18[%c0_5, %c17, %c0_6] : memref<2x18x128xbf16, #tpu.memory_space<vmem>>, vector<2x1x128xbf16>
    tpu.vector_store %arg18[%c0_5, %c17, %c0_6], %2 {strides = array<i32>} : memref<2x18x128xbf16, #tpu.memory_space<vmem>>, vector<2x1x128xbf16>,
    %cst_7 = arith.constant dense<0.000000e+00> : vector<64xf32>
    %5 = vector.multi_reduction <add>, %1, %cst_7 [0] : vector<32x64xf32> to vector<64xf32>
    %6 = vector.shape_cast %5 : vector<64xf32> to vector<1x64xf32>
    %7 = arith.mulf %1, %1 : vector<32x64xf32>
    %cst_8 = arith.constant dense<0.000000e+00> : vector<64xf32>
    %8 = vector.multi_reduction <add>, %7, %cst_8 [0] : vector<32x64xf32> to vector<64xf32>
    %9 = vector.shape_cast %8 : vector<64xf32> to vector<1x64xf32>
    %c0_9 = arith.constant 0 : index
    %c0_10 = arith.constant 0 : index
    %10 = vector.load %arg13[%c0_9, %c0_10] : memref<64x4xf32, #tpu.memory_space<vmem>>, vector<64x4xf32>
    %cst_11 = arith.constant dense<0.000000e+00> : vector<1x4xf32>
    %11 = tpu.matmul %6, %10, %cst_11 {dimension_numbers = #tpu.dot_dimension_numbers<[1], [0], [0], [1], [0, 0, 1, 1], [], []>, precision = #tpu.contract_precision<fp32>} : vector<1x64xf32>, vector<64x4xf32>, vector<1x4xf32> -> vector<1x4xf32>
    %c0_12 = arith.constant 0 : index
    %c0_13 = arith.constant 0 : index
    %12 = vector.load %arg13[%c0_12, %c0_13] : memref<64x4xf32, #tpu.memory_space<vmem>>, vector<64x4xf32>
    %cst_14 = arith.constant dense<0.000000e+00> : vector<1x4xf32>
    %13 = tpu.matmul %9, %12, %cst_14 {dimension_numbers = #tpu.dot_dimension_numbers<[1], [0], [0], [1], [0, 0, 1, 1], [], []>, precision = #tpu.contract_precision<fp32>} : vector<1x64xf32>, vector<64x4xf32>, vector<1x4xf32> -> vector<1x4xf32>
    %cst_15 = arith.constant 5.120000e+02 : f32
    %14 = vector.broadcast %cst_15 : f32 to vector<1x4xf32>
    %15 = arith.divf %11, %14 : vector<1x4xf32>
    %cst_16 = arith.constant 5.120000e+02 : f32
    %16 = vector.broadcast %cst_16 : f32 to vector<1x4xf32>
    %17 = arith.divf %13, %16 : vector<1x4xf32>
    %18 = arith.mulf %15, %15 : vector<1x4xf32>
    %19 = arith.subf %17, %18 : vector<1x4xf32>
    %c0_17 = arith.constant 0 : index
    %c0_18 = arith.constant 0 : index
    %20 = vector.load %arg1[%c0_17, %c0_18] : memref<1x4xf32, #tpu.memory_space<vmem>>, vector<1x4xf32>
    %cst_19 = arith.constant 9.99999974E-6 : f32
    %21 = vector.broadcast %cst_19 : f32 to vector<1x4xf32>
    %22 = arith.addf %19, %21 : vector<1x4xf32>
    %23 = math.rsqrt %22 : vector<1x4xf32>
    %24 = arith.mulf %20, %23 : vector<1x4xf32>
    %c0_20 = arith.constant 0 : index
    %c0_21 = arith.constant 0 : index
    %25 = vector.load %arg2[%c0_20, %c0_21] : memref<1x4xf32, #tpu.memory_space<vmem>>, vector<1x4xf32>
    %26 = arith.mulf %15, %24 : vector<1x4xf32>
    %27 = arith.subf %25, %26 : vector<1x4xf32>
    %c0_22 = arith.constant 0 : index
    %c0_23 = arith.constant 0 : index
    %28 = vector.load %arg14[%c0_22, %c0_23] : memref<4x64xf32, #tpu.memory_space<vmem>>, vector<4x64xf32>
    %cst_24 = arith.constant dense<0.000000e+00> : vector<1x64xf32>
    %29 = tpu.matmul %24, %28, %cst_24 {dimension_numbers = #tpu.dot_dimension_numbers<[1], [0], [0], [1], [0, 0, 1, 1], [], []>, precision = #tpu.contract_precision<fp32>} : vector<1x4xf32>, vector<4x64xf32>, vector<1x64xf32> -> vector<1x64xf32>
    %c0_25 = arith.constant 0 : index
    %c0_26 = arith.constant 0 : index
    %30 = vector.load %arg14[%c0_25, %c0_26] : memref<4x64xf32, #tpu.memory_space<vmem>>, vector<4x64xf32>
    %cst_27 = arith.constant dense<0.000000e+00> : vector<1x64xf32>
    %31 = tpu.matmul %27, %30, %cst_27 {dimension_numbers = #tpu.dot_dimension_numbers<[1], [0], [0], [1], [0, 0, 1, 1], [], []>, precision = #tpu.contract_precision<fp32>} : vector<1x4xf32>, vector<4x64xf32>, vector<1x64xf32> -> vector<1x64xf32>
    %32 = vector.broadcast %29 : vector<1x64xf32> to vector<32x64xf32>
    %33 = arith.mulf %1, %32 : vector<32x64xf32>
    %34 = vector.broadcast %31 : vector<1x64xf32> to vector<32x64xf32>
    %35 = arith.addf %33, %34 : vector<32x64xf32>
    %36 = vector.shape_cast %35 : vector<32x64xf32> to vector<2x16x64xf32>
    %37 = arith.truncf %36 : vector<2x16x64xf32> to vector<2x16x64xbf16>
    %c0_28 = arith.constant 0 : index
    %c1 = arith.constant 1 : index
    %c0_29 = arith.constant 0 : index
    %38 = vector.load %arg18[%c0_28, %c1, %c0_29] : memref<2x18x128xbf16, #tpu.memory_space<vmem>>, vector<2x16x64xbf16>
    tpu.vector_store %arg18[%c0_28, %c1, %c0_29], %37 {strides = array<i32>} : memref<2x18x128xbf16, #tpu.memory_space<vmem>>, vector<2x16x64xbf16>,
    %c0_30 = arith.constant 0 : index
    %c0_31 = arith.constant 0 : index
    %39 = vector.load %arg4[%c0_30, %c0_31] : memref<1x128xf32, #tpu.memory_space<vmem>>, vector<1x128xf32>
    %40 = vector.shape_cast %39 : vector<1x128xf32> to vector<1x128xf32>
    %41 = vector.broadcast %40 : vector<1x128xf32> to vector<32x128xf32>
    %c0_32 = arith.constant 0 : index
    %c0_33 = arith.constant 0 : index
    %c0_34 = arith.constant 0 : index
    %42 = vector.load %arg18[%c0_32, %c0_33, %c0_34] : memref<2x18x128xbf16, #tpu.memory_space<vmem>>, vector<2x16x64xbf16>
    %43 = vector.shape_cast %42 : vector<2x16x64xbf16> to vector<32x64xbf16>
    %c0_35 = arith.constant 0 : index
    %c0_36 = arith.constant 0 : index
    %c0_37 = arith.constant 0 : index
    %44 = vector.load %arg3[%c0_35, %c0_36, %c0_37] : memref<3x64x128xbf16, #tpu.memory_space<vmem>>, vector<1x64x128xbf16>
    %45 = vector.shape_cast %44 : vector<1x64x128xbf16> to vector<64x128xbf16>
    %cst_38 = arith.constant dense<0.000000e+00> : vector<32x128xf32>
    %46 = tpu.matmul %43, %45, %cst_38 {dimension_numbers = #tpu.dot_dimension_numbers<[1], [0], [0], [1], [0, 0, 1, 1], [], []>} : vector<32x64xbf16>, vector<64x128xbf16>, vector<32x128xf32> -> vector<32x128xf32>
    %47 = arith.addf %41, %46 : vector<32x128xf32>
    %c0_39 = arith.constant 0 : index
    %c1_40 = arith.constant 1 : index
    %c0_41 = arith.constant 0 : index
    %48 = vector.load %arg18[%c0_39, %c1_40, %c0_41] : memref<2x18x128xbf16, #tpu.memory_space<vmem>>, vector<2x16x64xbf16>
    %49 = vector.shape_cast %48 : vector<2x16x64xbf16> to vector<32x64xbf16>
    %c1_42 = arith.constant 1 : index
    %c0_43 = arith.constant 0 : index
    %c0_44 = arith.constant 0 : index
    %50 = vector.load %arg3[%c1_42, %c0_43, %c0_44] : memref<3x64x128xbf16, #tpu.memory_space<vmem>>, vector<1x64x128xbf16>
    %51 = vector.shape_cast %50 : vector<1x64x128xbf16> to vector<64x128xbf16>
    %cst_45 = arith.constant dense<0.000000e+00> : vector<32x128xf32>
    %52 = tpu.matmul %49, %51, %cst_45 {dimension_numbers = #tpu.dot_dimension_numbers<[1], [0], [0], [1], [0, 0, 1, 1], [], []>} : vector<32x64xbf16>, vector<64x128xbf16>, vector<32x128xf32> -> vector<32x128xf32>
    %53 = arith.addf %47, %52 : vector<32x128xf32>
    %c0_46 = arith.constant 0 : index
    %c2 = arith.constant 2 : index
    %c0_47 = arith.constant 0 : index
    %54 = vector.load %arg18[%c0_46, %c2, %c0_47] : memref<2x18x128xbf16, #tpu.memory_space<vmem>>, vector<2x16x64xbf16>
    %55 = vector.shape_cast %54 : vector<2x16x64xbf16> to vector<32x64xbf16>
    %c2_48 = arith.constant 2 : index
    %c0_49 = arith.constant 0 : index
    %c0_50 = arith.constant 0 : index
    %56 = vector.load %arg3[%c2_48, %c0_49, %c0_50] : memref<3x64x128xbf16, #tpu.memory_space<vmem>>, vector<1x64x128xbf16>
    %57 = vector.shape_cast %56 : vector<1x64x128xbf16> to vector<64x128xbf16>
    %cst_51 = arith.constant dense<0.000000e+00> : vector<32x128xf32>
    %58 = tpu.matmul %55, %57, %cst_51 {dimension_numbers = #tpu.dot_dimension_numbers<[1], [0], [0], [1], [0, 0, 1, 1], [], []>} : vector<32x64xbf16>, vector<64x128xbf16>, vector<32x128xf32> -> vector<32x128xf32>
    %59 = arith.addf %53, %58 : vector<32x128xf32>
    %cst_52 = arith.constant dense<0.000000e+00> : vector<128xf32>
    %60 = vector.multi_reduction <add>, %59, %cst_52 [0] : vector<32x128xf32> to vector<128xf32>
    %61 = vector.shape_cast %60 : vector<128xf32> to vector<1x128xf32>
    %62 = arith.mulf %59, %59 : vector<32x128xf32>
    %cst_53 = arith.constant dense<0.000000e+00> : vector<128xf32>
    %63 = vector.multi_reduction <add>, %62, %cst_53 [0] : vector<32x128xf32> to vector<128xf32>
    %64 = vector.shape_cast %63 : vector<128xf32> to vector<1x128xf32>
    %c0_54 = arith.constant 0 : index
    %c0_55 = arith.constant 0 : index
    %65 = vector.load %arg15[%c0_54, %c0_55] : memref<128x8xf32, #tpu.memory_space<vmem>>, vector<128x8xf32>
    %cst_56 = arith.constant dense<0.000000e+00> : vector<1x8xf32>
    %66 = tpu.matmul %61, %65, %cst_56 {dimension_numbers = #tpu.dot_dimension_numbers<[1], [0], [0], [1], [0, 0, 1, 1], [], []>, precision = #tpu.contract_precision<fp32>} : vector<1x128xf32>, vector<128x8xf32>, vector<1x8xf32> -> vector<1x8xf32>
    %c0_57 = arith.constant 0 : index
    %c0_58 = arith.constant 0 : index
    %67 = vector.load %arg15[%c0_57, %c0_58] : memref<128x8xf32, #tpu.memory_space<vmem>>, vector<128x8xf32>
    %cst_59 = arith.constant dense<0.000000e+00> : vector<1x8xf32>
    %68 = tpu.matmul %64, %67, %cst_59 {dimension_numbers = #tpu.dot_dimension_numbers<[1], [0], [0], [1], [0, 0, 1, 1], [], []>, precision = #tpu.contract_precision<fp32>} : vector<1x128xf32>, vector<128x8xf32>, vector<1x8xf32> -> vector<1x8xf32>
    %cst_60 = arith.constant 5.120000e+02 : f32
    %69 = vector.broadcast %cst_60 : f32 to vector<1x8xf32>
    %70 = arith.divf %66, %69 : vector<1x8xf32>
    %cst_61 = arith.constant 5.120000e+02 : f32
    %71 = vector.broadcast %cst_61 : f32 to vector<1x8xf32>
    %72 = arith.divf %68, %71 : vector<1x8xf32>
    %73 = arith.mulf %70, %70 : vector<1x8xf32>
    %74 = arith.subf %72, %73 : vector<1x8xf32>
    %c0_62 = arith.constant 0 : index
    %c0_63 = arith.constant 0 : index
    %75 = vector.load %arg5[%c0_62, %c0_63] : memref<1x8xf32, #tpu.memory_space<vmem>>, vector<1x8xf32>
    %cst_64 = arith.constant 9.99999974E-6 : f32
    %76 = vector.broadcast %cst_64 : f32 to vector<1x8xf32>
    %77 = arith.addf %74, %76 : vector<1x8xf32>
    %78 = math.rsqrt %77 : vector<1x8xf32>
    %79 = arith.mulf %75, %78 : vector<1x8xf32>
    %c0_65 = arith.constant 0 : index
    %c0_66 = arith.constant 0 : index
    %80 = vector.load %arg6[%c0_65, %c0_66] : memref<1x8xf32, #tpu.memory_space<vmem>>, vector<1x8xf32>
    %81 = arith.mulf %70, %79 : vector<1x8xf32>
    %82 = arith.subf %80, %81 : vector<1x8xf32>
    %c0_67 = arith.constant 0 : index
    %c0_68 = arith.constant 0 : index
    %83 = vector.load %arg16[%c0_67, %c0_68] : memref<8x128xf32, #tpu.memory_space<vmem>>, vector<8x128xf32>
    %cst_69 = arith.constant dense<0.000000e+00> : vector<1x128xf32>
    %84 = tpu.matmul %79, %83, %cst_69 {dimension_numbers = #tpu.dot_dimension_numbers<[1], [0], [0], [1], [0, 0, 1, 1], [], []>, precision = #tpu.contract_precision<fp32>} : vector<1x8xf32>, vector<8x128xf32>, vector<1x128xf32> -> vector<1x128xf32>
    %c0_70 = arith.constant 0 : index
    %c0_71 = arith.constant 0 : index
    %85 = vector.load %arg16[%c0_70, %c0_71] : memref<8x128xf32, #tpu.memory_space<vmem>>, vector<8x128xf32>
    %cst_72 = arith.constant dense<0.000000e+00> : vector<1x128xf32>
    %86 = tpu.matmul %82, %85, %cst_72 {dimension_numbers = #tpu.dot_dimension_numbers<[1], [0], [0], [1], [0, 0, 1, 1], [], []>, precision = #tpu.contract_precision<fp32>} : vector<1x8xf32>, vector<8x128xf32>, vector<1x128xf32> -> vector<1x128xf32>
    %87 = vector.broadcast %84 : vector<1x128xf32> to vector<32x128xf32>
    %88 = arith.mulf %59, %87 : vector<32x128xf32>
    %89 = vector.broadcast %86 : vector<1x128xf32> to vector<32x128xf32>
    %90 = arith.addf %88, %89 : vector<32x128xf32>
    %cst_73 = arith.constant 0.000000e+00 : f32
    %91 = vector.broadcast %cst_73 : f32 to vector<32x128xf32>
    %92 = arith.maximumf %90, %91 : vector<32x128xf32>
    %93 = vector.shape_cast %92 : vector<32x128xf32> to vector<2x16x128xf32>
    %94 = arith.truncf %93 : vector<2x16x128xf32> to vector<2x16x128xbf16>
    %c0_74 = arith.constant 0 : index
    %c1_75 = arith.constant 1 : index
    %c0_76 = arith.constant 0 : index
    %95 = vector.load %arg18[%c0_74, %c1_75, %c0_76] : memref<2x18x128xbf16, #tpu.memory_space<vmem>>, vector<2x16x128xbf16>
    tpu.vector_store %arg18[%c0_74, %c1_75, %c0_76], %94 {strides = array<i32>} : memref<2x18x128xbf16, #tpu.memory_space<vmem>>, vector<2x16x128xbf16>,
    %c0_77 = arith.constant 0 : index
    %c0_78 = arith.constant 0 : index
    %96 = vector.load %arg8[%c0_77, %c0_78] : memref<1x128xf32, #tpu.memory_space<vmem>>, vector<1x128xf32>
    %97 = vector.shape_cast %96 : vector<1x128xf32> to vector<1x128xf32>
    %98 = vector.broadcast %97 : vector<1x128xf32> to vector<32x128xf32>
    %c0_79 = arith.constant 0 : index
    %c0_80 = arith.constant 0 : index
    %c0_81 = arith.constant 0 : index
    %99 = vector.load %arg18[%c0_79, %c0_80, %c0_81] : memref<2x18x128xbf16, #tpu.memory_space<vmem>>, vector<2x16x128xbf16>
    %100 = vector.shape_cast %99 : vector<2x16x128xbf16> to vector<32x128xbf16>
    %c0_82 = arith.constant 0 : index
    %c0_83 = arith.constant 0 : index
    %c0_84 = arith.constant 0 : index
    %101 = vector.load %arg7[%c0_82, %c0_83, %c0_84] : memref<3x128x128xbf16, #tpu.memory_space<vmem>>, vector<1x128x128xbf16>
    %102 = vector.shape_cast %101 : vector<1x128x128xbf16> to vector<128x128xbf16>
    %cst_85 = arith.constant dense<0.000000e+00> : vector<32x128xf32>
    %103 = tpu.matmul %100, %102, %cst_85 {dimension_numbers = #tpu.dot_dimension_numbers<[1], [0], [0], [1], [0, 0, 1, 1], [], []>} : vector<32x128xbf16>, vector<128x128xbf16>, vector<32x128xf32> -> vector<32x128xf32>
    %104 = arith.addf %98, %103 : vector<32x128xf32>
    %c0_86 = arith.constant 0 : index
    %c1_87 = arith.constant 1 : index
    %c0_88 = arith.constant 0 : index
    %105 = vector.load %arg18[%c0_86, %c1_87, %c0_88] : memref<2x18x128xbf16, #tpu.memory_space<vmem>>, vector<2x16x128xbf16>
    %106 = vector.shape_cast %105 : vector<2x16x128xbf16> to vector<32x128xbf16>
    %c1_89 = arith.constant 1 : index
    %c0_90 = arith.constant 0 : index
    %c0_91 = arith.constant 0 : index
    %107 = vector.load %arg7[%c1_89, %c0_90, %c0_91] : memref<3x128x128xbf16, #tpu.memory_space<vmem>>, vector<1x128x128xbf16>
    %108 = vector.shape_cast %107 : vector<1x128x128xbf16> to vector<128x128xbf16>
    %cst_92 = arith.constant dense<0.000000e+00> : vector<32x128xf32>
    %109 = tpu.matmul %106, %108, %cst_92 {dimension_numbers = #tpu.dot_dimension_numbers<[1], [0], [0], [1], [0, 0, 1, 1], [], []>} : vector<32x128xbf16>, vector<128x128xbf16>, vector<32x128xf32> -> vector<32x128xf32>
    %110 = arith.addf %104, %109 : vector<32x128xf32>
    %c0_93 = arith.constant 0 : index
    %c2_94 = arith.constant 2 : index
    %c0_95 = arith.constant 0 : index
    %111 = vector.load %arg18[%c0_93, %c2_94, %c0_95] : memref<2x18x128xbf16, #tpu.memory_space<vmem>>, vector<2x16x128xbf16>
    %112 = vector.shape_cast %111 : vector<2x16x128xbf16> to vector<32x128xbf16>
    %c2_96 = arith.constant 2 : index
    %c0_97 = arith.constant 0 : index
    %c0_98 = arith.constant 0 : index
    %113 = vector.load %arg7[%c2_96, %c0_97, %c0_98] : memref<3x128x128xbf16, #tpu.memory_space<vmem>>, vector<1x128x128xbf16>
    %114 = vector.shape_cast %113 : vector<1x128x128xbf16> to vector<128x128xbf16>
    %cst_99 = arith.constant dense<0.000000e+00> : vector<32x128xf32>
    %115 = tpu.matmul %112, %114, %cst_99 {dimension_numbers = #tpu.dot_dimension_numbers<[1], [0], [0], [1], [0, 0, 1, 1], [], []>} : vector<32x128xbf16>, vector<128x128xbf16>, vector<32x128xf32> -> vector<32x128xf32>
    %116 = arith.addf %110, %115 : vector<32x128xf32>
    %cst_100 = arith.constant dense<0.000000e+00> : vector<128xf32>
    %117 = vector.multi_reduction <add>, %116, %cst_100 [0] : vector<32x128xf32> to vector<128xf32>
    %118 = vector.shape_cast %117 : vector<128xf32> to vector<1x128xf32>
    %119 = arith.mulf %116, %116 : vector<32x128xf32>
    %cst_101 = arith.constant dense<0.000000e+00> : vector<128xf32>
    %120 = vector.multi_reduction <add>, %119, %cst_101 [0] : vector<32x128xf32> to vector<128xf32>
    %121 = vector.shape_cast %120 : vector<128xf32> to vector<1x128xf32>
    %c0_102 = arith.constant 0 : index
    %c0_103 = arith.constant 0 : index
    %122 = vector.load %arg15[%c0_102, %c0_103] : memref<128x8xf32, #tpu.memory_space<vmem>>, vector<128x8xf32>
    %cst_104 = arith.constant dense<0.000000e+00> : vector<1x8xf32>
    %123 = tpu.matmul %118, %122, %cst_104 {dimension_numbers = #tpu.dot_dimension_numbers<[1], [0], [0], [1], [0, 0, 1, 1], [], []>, precision = #tpu.contract_precision<fp32>} : vector<1x128xf32>, vector<128x8xf32>, vector<1x8xf32> -> vector<1x8xf32>
    %c0_105 = arith.constant 0 : index
    %c0_106 = arith.constant 0 : index
    %124 = vector.load %arg15[%c0_105, %c0_106] : memref<128x8xf32, #tpu.memory_space<vmem>>, vector<128x8xf32>
    %cst_107 = arith.constant dense<0.000000e+00> : vector<1x8xf32>
    %125 = tpu.matmul %121, %124, %cst_107 {dimension_numbers = #tpu.dot_dimension_numbers<[1], [0], [0], [1], [0, 0, 1, 1], [], []>, precision = #tpu.contract_precision<fp32>} : vector<1x128xf32>, vector<128x8xf32>, vector<1x8xf32> -> vector<1x8xf32>
    %cst_108 = arith.constant 5.120000e+02 : f32
    %126 = vector.broadcast %cst_108 : f32 to vector<1x8xf32>
    %127 = arith.divf %123, %126 : vector<1x8xf32>
    %cst_109 = arith.constant 5.120000e+02 : f32
    %128 = vector.broadcast %cst_109 : f32 to vector<1x8xf32>
    %129 = arith.divf %125, %128 : vector<1x8xf32>
    %130 = arith.mulf %127, %127 : vector<1x8xf32>
    %131 = arith.subf %129, %130 : vector<1x8xf32>
    %c0_110 = arith.constant 0 : index
    %c0_111 = arith.constant 0 : index
    %132 = vector.load %arg9[%c0_110, %c0_111] : memref<1x8xf32, #tpu.memory_space<vmem>>, vector<1x8xf32>
    %cst_112 = arith.constant 9.99999974E-6 : f32
    %133 = vector.broadcast %cst_112 : f32 to vector<1x8xf32>
    %134 = arith.addf %131, %133 : vector<1x8xf32>
    %135 = math.rsqrt %134 : vector<1x8xf32>
    %136 = arith.mulf %132, %135 : vector<1x8xf32>
    %c0_113 = arith.constant 0 : index
    %c0_114 = arith.constant 0 : index
    %137 = vector.load %arg10[%c0_113, %c0_114] : memref<1x8xf32, #tpu.memory_space<vmem>>, vector<1x8xf32>
    %138 = arith.mulf %127, %136 : vector<1x8xf32>
    %139 = arith.subf %137, %138 : vector<1x8xf32>
    %c0_115 = arith.constant 0 : index
    %c0_116 = arith.constant 0 : index
    %140 = vector.load %arg16[%c0_115, %c0_116] : memref<8x128xf32, #tpu.memory_space<vmem>>, vector<8x128xf32>
    %cst_117 = arith.constant dense<0.000000e+00> : vector<1x128xf32>
    %141 = tpu.matmul %136, %140, %cst_117 {dimension_numbers = #tpu.dot_dimension_numbers<[1], [0], [0], [1], [0, 0, 1, 1], [], []>, precision = #tpu.contract_precision<fp32>} : vector<1x8xf32>, vector<8x128xf32>, vector<1x128xf32> -> vector<1x128xf32>
    %c0_118 = arith.constant 0 : index
    %c0_119 = arith.constant 0 : index
    %142 = vector.load %arg16[%c0_118, %c0_119] : memref<8x128xf32, #tpu.memory_space<vmem>>, vector<8x128xf32>
    %cst_120 = arith.constant dense<0.000000e+00> : vector<1x128xf32>
    %143 = tpu.matmul %139, %142, %cst_120 {dimension_numbers = #tpu.dot_dimension_numbers<[1], [0], [0], [1], [0, 0, 1, 1], [], []>, precision = #tpu.contract_precision<fp32>} : vector<1x8xf32>, vector<8x128xf32>, vector<1x128xf32> -> vector<1x128xf32>
    %144 = vector.broadcast %141 : vector<1x128xf32> to vector<32x128xf32>
    %145 = arith.mulf %116, %144 : vector<32x128xf32>
    %146 = vector.broadcast %143 : vector<1x128xf32> to vector<32x128xf32>
    %147 = arith.addf %145, %146 : vector<32x128xf32>
    %148 = arith.truncf %1 : vector<32x64xf32> to vector<32x64xbf16>
    %c0_121 = arith.constant 0 : index
    %c0_122 = arith.constant 0 : index
    %149 = vector.load %arg11[%c0_121, %c0_122] : memref<64x128xbf16, #tpu.memory_space<vmem>>, vector<64x128xbf16>
    %cst_123 = arith.constant dense<0.000000e+00> : vector<32x128xf32>
    %150 = tpu.matmul %148, %149, %cst_123 {dimension_numbers = #tpu.dot_dimension_numbers<[1], [0], [0], [1], [0, 0, 1, 1], [], []>} : vector<32x64xbf16>, vector<64x128xbf16>, vector<32x128xf32> -> vector<32x128xf32>
    %c0_124 = arith.constant 0 : index
    %c0_125 = arith.constant 0 : index
    %151 = vector.load %arg12[%c0_124, %c0_125] : memref<1x128xf32, #tpu.memory_space<vmem>>, vector<1x128xf32>
    %152 = vector.broadcast %151 : vector<1x128xf32> to vector<32x128xf32>
    %153 = arith.addf %150, %152 : vector<32x128xf32>
    %154 = arith.addf %147, %153 : vector<32x128xf32>
    %155 = vector.shape_cast %154 : vector<32x128xf32> to vector<2x16x128xf32>
    %c0_126 = arith.constant 0 : index
    %c0_127 = arith.constant 0 : index
    %c0_128 = arith.constant 0 : index
    %156 = vector.load %arg17[%c0_126, %c0_127, %c0_128] : memref<2x16x128xf32, #tpu.memory_space<vmem>>, vector<2x16x128xf32>
    tpu.vector_store %arg17[%c0_126, %c0_127, %c0_128], %155 {strides = array<i32>} : memref<2x16x128xf32, #tpu.memory_space<vmem>>, vector<2x16x128xf32>,
    return
  }
}

</mosaic_0001>

<llo_original>
// kernel: tpu_custom_call.1
$region0: #{tpu_custom_call.1}
  #allocation0 [shape = 'u32[]', space=smem, size = 0x4, offset = 0x4, fixed_abs, tag = 'smem constant byte address 0x4 - core index']
  #allocation1 [shape = 'u32[144,128]{1,0:T(1,128)}', space=vmem, size = 0x12000, scoped, tag = 'internal scratch']
  #allocation2 [shape = 'bf16[2,18,128]{2,1,0:T(8,128)(2,1)}', space=vmem, size = 0x3000, scoped, tag = 'scratch operand']
  %s0 = inlined_call_operand.vmem [shape: f32[2,16,64], index: 0, kind: input, shape index: {}]
  %s1 = inlined_call_operand.vmem [shape: f32[1,4], index: 1, kind: input, shape index: {}]
  %s2 = inlined_call_operand.hbm [shape: f32[1,4], index: 2, kind: input, shape index: {}]
  %s3 = inlined_call_operand.hbm [shape: bf16[3,64,128], index: 3, kind: input, shape index: {}]
  %s4 = inlined_call_operand.hbm [shape: f32[1,128], index: 4, kind: input, shape index: {}]
  %s5 = inlined_call_operand.hbm [shape: f32[1,8], index: 5, kind: input, shape index: {}]
  %s6 = inlined_call_operand.hbm [shape: f32[1,8], index: 6, kind: input, shape index: {}]
  %s7 = inlined_call_operand.vmem [shape: bf16[3,128,128], index: 7, kind: input, shape index: {}]
  %s8 = inlined_call_operand.hbm [shape: f32[1,128], index: 8, kind: input, shape index: {}]
  %s9 = inlined_call_operand.hbm [shape: f32[1,8], index: 9, kind: input, shape index: {}]
  %s10 = inlined_call_operand.hbm [shape: f32[1,8], index: 10, kind: input, shape index: {}]
  %s11 = inlined_call_operand.hbm [shape: bf16[64,128], index: 11, kind: input, shape index: {}]
  %s12 = inlined_call_operand.hbm [shape: f32[1,128], index: 12, kind: input, shape index: {}]
  %s13 = inlined_call_operand.vmem [shape: f32[64,4], index: 13, kind: input, shape index: {}]
  %s14 = inlined_call_operand.vmem [shape: f32[4,64], index: 14, kind: input, shape index: {}]
  %s15 = inlined_call_operand.vmem [shape: f32[128,8], index: 15, kind: input, shape index: {}]
  %s16 = inlined_call_operand.vmem [shape: f32[8,128], index: 16, kind: input, shape index: {}]
  %s17 = inlined_call_operand.hbm [shape: f32[2,16,128], index: 17, kind: output, shape index: {}]
  %s18 = sld [smem:[#allocation0]]
  $region118: #{tpu_custom_call.1} parent=0
    _
  %s20 = ssub.s32 1, %s18
  %s21 = scalar_select 0, %s20, %s18
  $region1: #{tpu_custom_call.1} parent=0
    #allocation3 [shape = 'u8[512]{0}', space=vmem, size = 0x400, scoped, tag = 'input window, operand 2, single buffered']
    #allocation4 [shape = 's32[1]{0}', space=sflag, size = 0x4, scoped, tag = 'scoped memory for tpu_custom_call.1']
    #allocation5 [shape = 's32[1]{0}', space=sflag, size = 0x4, scoped, tag = 'scoped memory for tpu_custom_call.1']
    #allocation6 [shape = 'u8[49152]{0}', space=vmem, size = 0xc000, scoped, tag = 'input window, operand 3, single buffered']
    #allocation7 [shape = 's32[1]{0}', space=sflag, size = 0x4, scoped, tag = 'scoped memory for tpu_custom_call.1']
    #allocation8 [shape = 'u8[512]{0}', space=vmem, size = 0x400, scoped, tag = 'input window, operand 4, single buffered']
    #allocation9 [shape = 'u8[512]{0}', space=vmem, size = 0x400, scoped, tag = 'input window, operand 5, single buffered']
    #allocation10 [shape = 's32[1]{0}', space=sflag, size = 0x4, scoped, tag = 'scoped memory for tpu_custom_call.1']
    #allocation11 [shape = 'u8[512]{0}', space=vmem, size = 0x400, scoped, tag = 'input window, operand 6, single buffered']
    #allocation12 [shape = 'u8[512]{0}', space=vmem, size = 0x400, scoped, tag = 'input window, operand 8, single buffered']
    #allocation13 [shape = 's32[1]{0}', space=sflag, size = 0x4, scoped, tag = 'scoped memory for tpu_custom_call.1']
    #allocation14 [shape = 'u8[512]{0}', space=vmem, size = 0x400, scoped, tag = 'input window, operand 9, single buffered']
    #allocation15 [shape = 'u8[512]{0}', space=vmem, size = 0x400, scoped, tag = 'input window, operand 10, single buffered']
    #allocation16 [shape = 's32[1]{0}', space=sflag, size = 0x4, scoped, tag = 'scoped memory for tpu_custom_call.1']
    #allocation17 [shape = 'u8[16384]{0}', space=vmem, size = 0x4000, scoped, tag = 'input window, operand 11, single buffered']
    #allocation18 [shape = 'u8[512]{0}', space=vmem, size = 0x400, scoped, tag = 'input window, operand 12, single buffered']
    #allocation19 [shape = 's32[1]{0}', space=sflag, size = 0x4, scoped, tag = 'scoped memory for tpu_custom_call.1']
    #allocation20 [shape = 'u8[16384]{0}', space=vmem, size = 0x4000, scoped, tag = 'output window, operand 0, single buffered']
    %22 = vsyncpa [#allocation4], 0
    %23 = vsyncpa [#allocation7], 0
    %24 = vsyncpa [#allocation10], 0
    %25 = vsyncpa [#allocation13], 0
    %26 = vsyncpa [#allocation16], 0
    %27 = vsyncpa [#allocation19], 0
    %28 = vsyncpa [#allocation5], 0
    // Predicated region
    $region2: #{tpu_custom_call.1} parent=1 // pred_check
      _
    $region3: #{tpu_custom_call.1} parent=1 // pred_check_branch
      %30 = sbr.rel (0) target = $region5
    $region4: #{tpu_custom_call.1} parent=1 // pred_region
      _
    $region5: #{tpu_custom_call.1} parent=1 // pred_fallthru
      _
    // Predicated region
    $region6: #{tpu_custom_call.1} parent=1 // pred_check
      _
    $region7: #{tpu_custom_call.1} parent=1 // pred_check_branch
      %32 = sbr.rel (0) target = $region9
    $region8: #{tpu_custom_call.1} parent=1 // pred_region
      _
    $region9: #{tpu_custom_call.1} parent=1 // pred_fallthru
      _
    // Predicated region
    $region10: #{tpu_custom_call.1} parent=1 // pred_check
      _
    $region11: #{tpu_custom_call.1} parent=1 // pred_check_branch
      %34 = sbr.rel (0) target = $region13
    $region12: #{tpu_custom_call.1} parent=1 // pred_region
      %s36 = ssub.s32 16, 16
      %37 = vsyncadd [#allocation4], %s36
      %s39 = sshll.u32 [#allocation3], 4
      %s40 = int_to_ptr.vmem [resolvable:$true] %s39
      %42 = dma.hbm_to_vmem [thread:$0]  %s2, 16, %s40, [#allocation4]
    $region13: #{tpu_custom_call.1} parent=1 // pred_fallthru
      _
    // Predicated region
    $region14: #{tpu_custom_call.1} parent=1 // pred_check
      _
    $region15: #{tpu_custom_call.1} parent=1 // pred_check_branch
      %44 = sbr.rel (0) target = $region17
    $region16: #{tpu_custom_call.1} parent=1 // pred_region
      %s46 = ssub.s32 1536, 1536
      %47 = vsyncadd [#allocation7], %s46
      %s48 = sshll.u32 [#allocation6], 4
      %s49 = int_to_ptr.vmem [resolvable:$true] %s48
      %54 = dma.hbm_to_vmem [thread:$0]  %s3, 1536, %s49, [#allocation7], 64, 64, 4
    $region17: #{tpu_custom_call.1} parent=1 // pred_fallthru
      _
    // Predicated region
    $region18: #{tpu_custom_call.1} parent=1 // pred_check
      _
    $region19: #{tpu_custom_call.1} parent=1 // pred_check_branch
      %56 = sbr.rel (0) target = $region21
    $region20: #{tpu_custom_call.1} parent=1 // pred_region
      %s58 = ssub.s32 16, 16
      %59 = vsyncadd [#allocation7], %s58
      %s61 = sshll.u32 [#allocation8], 4
      %s62 = int_to_ptr.vmem [resolvable:$true] %s61
      %64 = dma.hbm_to_vmem [thread:$0]  %s4, 16, %s62, [#allocation7]
    $region21: #{tpu_custom_call.1} parent=1 // pred_fallthru
      _
    // Predicated region
    $region22: #{tpu_custom_call.1} parent=1 // pred_check
      _
    $region23: #{tpu_custom_call.1} parent=1 // pred_check_branch
      %66 = sbr.rel (0) target = $region25
    $region24: #{tpu_custom_call.1} parent=1 // pred_region
      %s68 = ssub.s32 16, 16
      %69 = vsyncadd [#allocation10], %s68
      %s71 = sshll.u32 [#allocation9], 4
      %s72 = int_to_ptr.vmem [resolvable:$true] %s71
      %74 = dma.hbm_to_vmem [thread:$0]  %s5, 16, %s72, [#allocation10]
    $region25: #{tpu_custom_call.1} parent=1 // pred_fallthru
      _
    // Predicated region
    $region26: #{tpu_custom_call.1} parent=1 // pred_check
      _
    $region27: #{tpu_custom_call.1} parent=1 // pred_check_branch
      %76 = sbr.rel (0) target = $region29
    $region28: #{tpu_custom_call.1} parent=1 // pred_region
      %s78 = ssub.s32 16, 16
      %79 = vsyncadd [#allocation10], %s78
      %s81 = sshll.u32 [#allocation11], 4
      %s82 = int_to_ptr.vmem [resolvable:$true] %s81
      %84 = dma.hbm_to_vmem [thread:$0]  %s6, 16, %s82, [#allocation10]
    $region29: #{tpu_custom_call.1} parent=1 // pred_fallthru
      _
    // Predicated region
    $region30: #{tpu_custom_call.1} parent=1 // pred_check
      _
    $region31: #{tpu_custom_call.1} parent=1 // pred_check_branch
      %86 = sbr.rel (0) target = $region33
    $region32: #{tpu_custom_call.1} parent=1 // pred_region
      _
    $region33: #{tpu_custom_call.1} parent=1 // pred_fallthru
      _
    // Predicated region
    $region34: #{tpu_custom_call.1} parent=1 // pred_check
      _
    $region35: #{tpu_custom_call.1} parent=1 // pred_check_branch
      %88 = sbr.rel (0) target = $region37
    $region36: #{tpu_custom_call.1} parent=1 // pred_region
      %s90 = ssub.s32 16, 16
      %91 = vsyncadd [#allocation13], %s90
      %s93 = sshll.u32 [#allocation12], 4
      %s94 = int_to_ptr.vmem [resolvable:$true] %s93
      %96 = dma.hbm_to_vmem [thread:$0]  %s8, 16, %s94, [#allocation13]
    $region37: #{tpu_custom_call.1} parent=1 // pred_fallthru
      _
    // Predicated region
    $region38: #{tpu_custom_call.1} parent=1 // pred_check
      _
    $region39: #{tpu_custom_call.1} parent=1 // pred_check_branch
      %98 = sbr.rel (0) target = $region41
    $region40: #{tpu_custom_call.1} parent=1 // pred_region
      %s100 = ssub.s32 16, 16
      %101 = vsyncadd [#allocation13], %s100
      %s103 = sshll.u32 [#allocation14], 4
      %s104 = int_to_ptr.vmem [resolvable:$true] %s103
      %106 = dma.hbm_to_vmem [thread:$0]  %s9, 16, %s104, [#allocation13]
    $region41: #{tpu_custom_call.1} parent=1 // pred_fallthru
      _
    // Predicated region
    $region42: #{tpu_custom_call.1} parent=1 // pred_check
      _
    $region43: #{tpu_custom_call.1} parent=1 // pred_check_branch
      %108 = sbr.rel (0) target = $region45
    $region44: #{tpu_custom_call.1} parent=1 // pred_region
      %s110 = ssub.s32 16, 16
      %111 = vsyncadd [#allocation16], %s110
      %s113 = sshll.u32 [#allocation15], 4
      %s114 = int_to_ptr.vmem [resolvable:$true] %s113
      %116 = dma.hbm_to_vmem [thread:$0]  %s10, 16, %s114, [#allocation16]
    $region45: #{tpu_custom_call.1} parent=1 // pred_fallthru
      _
    // Predicated region
    $region46: #{tpu_custom_call.1} parent=1 // pred_check
      _
    $region47: #{tpu_custom_call.1} parent=1 // pred_check_branch
      %118 = sbr.rel (0) target = $region49
    $region48: #{tpu_custom_call.1} parent=1 // pred_region
      %s120 = ssub.s32 512, 512
      %121 = vsyncadd [#allocation16], %s120
      %s122 = sshll.u32 [#allocation17], 4
      %s123 = int_to_ptr.vmem [resolvable:$true] %s122
      %128 = dma.hbm_to_vmem [thread:$0]  %s11, 512, %s123, [#allocation16], 64, 64, 4
    $region49: #{tpu_custom_call.1} parent=1 // pred_fallthru
      _
    // Predicated region
    $region50: #{tpu_custom_call.1} parent=1 // pred_check
      _
    $region51: #{tpu_custom_call.1} parent=1 // pred_check_branch
      %130 = sbr.rel (0) target = $region53
    $region52: #{tpu_custom_call.1} parent=1 // pred_region
      %s132 = ssub.s32 16, 16
      %133 = vsyncadd [#allocation19], %s132
      %s135 = sshll.u32 [#allocation18], 4
      %s136 = int_to_ptr.vmem [resolvable:$true] %s135
      %138 = dma.hbm_to_vmem [thread:$0]  %s12, 16, %s136, [#allocation19]
    $region53: #{tpu_custom_call.1} parent=1 // pred_fallthru
      _
    // Predicated region
    $region54: #{tpu_custom_call.1} parent=1 // pred_check
      _
    $region55: #{tpu_custom_call.1} parent=1 // pred_check_branch
      %140 = sbr.rel (0) target = $region57
    $region56: #{tpu_custom_call.1} parent=1 // pred_region
      _
    $region57: #{tpu_custom_call.1} parent=1 // pred_fallthru
      _
    // Predicated region
    $region58: #{tpu_custom_call.1} parent=1 // pred_check
      _
    $region59: #{tpu_custom_call.1} parent=1 // pred_check_branch
      %142 = sbr.rel (0) target = $region61
    $region60: #{tpu_custom_call.1} parent=1 // pred_region
      _
    $region61: #{tpu_custom_call.1} parent=1 // pred_fallthru
      _
    // Predicated region
    $region62: #{tpu_custom_call.1} parent=1 // pred_check
      _
    $region63: #{tpu_custom_call.1} parent=1 // pred_check_branch
      %144 = sbr.rel (0) target = $region65
    $region64: #{tpu_custom_call.1} parent=1 // pred_region
      _
    $region65: #{tpu_custom_call.1} parent=1 // pred_fallthru
      _
    // Predicated region
    $region66: #{tpu_custom_call.1} parent=1 // pred_check
      _
    $region67: #{tpu_custom_call.1} parent=1 // pred_check_branch
      %146 = sbr.rel (0) target = $region69
    $region68: #{tpu_custom_call.1} parent=1 // pred_region
      _
    $region69: #{tpu_custom_call.1} parent=1 // pred_fallthru
      _
    // Predicated region
    $region70: #{tpu_custom_call.1} parent=1 // pred_check
      _
    $region71: #{tpu_custom_call.1} parent=1 // pred_check_branch
      %148 = sbr.rel (0) target = $region73
    $region72: #{tpu_custom_call.1} parent=1 // pred_region
      %149 = dma.done [#allocation4], 16
    $region73: #{tpu_custom_call.1} parent=1 // pred_fallthru
      _
    // Predicated region
    $region74: #{tpu_custom_call.1} parent=1 // pred_check
      _
    $region75: #{tpu_custom_call.1} parent=1 // pred_check_branch
      %151 = sbr.rel (0) target = $region77
    $region76: #{tpu_custom_call.1} parent=1 // pred_region
      %152 = dma.done [#allocation7], 1536
    $region77: #{tpu_custom_call.1} parent=1 // pred_fallthru
      _
    // Predicated region
    $region78: #{tpu_custom_call.1} parent=1 // pred_check
      _
    $region79: #{tpu_custom_call.1} parent=1 // pred_check_branch
      %154 = sbr.rel (0) target = $region81
    $region80: #{tpu_custom_call.1} parent=1 // pred_region
      %155 = dma.done [#allocation7], 16
    $region81: #{tpu_custom_call.1} parent=1 // pred_fallthru
      _
    // Predicated region
    $region82: #{tpu_custom_call.1} parent=1 // pred_check
      _
    $region83: #{tpu_custom_call.1} parent=1 // pred_check_branch
      %157 = sbr.rel (0) target = $region85
    $region84: #{tpu_custom_call.1} parent=1 // pred_region
      %158 = dma.done [#allocation10], 16
    $region85: #{tpu_custom_call.1} parent=1 // pred_fallthru
      _
    // Predicated region
    $region86: #{tpu_custom_call.1} parent=1 // pred_check
      _
    $region87: #{tpu_custom_call.1} parent=1 // pred_check_branch
      %160 = sbr.rel (0) target = $region89
    $region88: #{tpu_custom_call.1} parent=1 // pred_region
      %161 = dma.done [#allocation10], 16
    $region89: #{tpu_custom_call.1} parent=1 // pred_fallthru
      _
    // Predicated region
    $region90: #{tpu_custom_call.1} parent=1 // pred_check
      _
    $region91: #{tpu_custom_call.1} parent=1 // pred_check_branch
      %163 = sbr.rel (0) target = $region93
    $region92: #{tpu_custom_call.1} parent=1 // pred_region
      %164 = dma.done [#allocation13], 16
    $region93: #{tpu_custom_call.1} parent=1 // pred_fallthru
      _
    // Predicated region
    $region94: #{tpu_custom_call.1} parent=1 // pred_check
      _
    $region95: #{tpu_custom_call.1} parent=1 // pred_check_branch
      %166 = sbr.rel (0) target = $region97
    $region96: #{tpu_custom_call.1} parent=1 // pred_region
      %167 = dma.done [#allocation13], 16
    $region97: #{tpu_custom_call.1} parent=1 // pred_fallthru
      _
    // Predicated region
    $region98: #{tpu_custom_call.1} parent=1 // pred_check
      _
    $region99: #{tpu_custom_call.1} parent=1 // pred_check_branch
      %169 = sbr.rel (0) target = $region101
    $region100: #{tpu_custom_call.1} parent=1 // pred_region
      %170 = dma.done [#allocation16], 16
    $region101: #{tpu_custom_call.1} parent=1 // pred_fallthru
      _
    // Predicated region
    $region102: #{tpu_custom_call.1} parent=1 // pred_check
      _
    $region103: #{tpu_custom_call.1} parent=1 // pred_check_branch
      %172 = sbr.rel (0) target = $region105
    $region104: #{tpu_custom_call.1} parent=1 // pred_region
      %173 = dma.done [#allocation16], 512
    $region105: #{tpu_custom_call.1} parent=1 // pred_fallthru
      _
    // Predicated region
    $region106: #{tpu_custom_call.1} parent=1 // pred_check
      _
    $region107: #{tpu_custom_call.1} parent=1 // pred_check_branch
      %175 = sbr.rel (0) target = $region109
    $region108: #{tpu_custom_call.1} parent=1 // pred_region
      %176 = dma.done [#allocation19], 16
    $region109: #{tpu_custom_call.1} parent=1 // pred_fallthru
      _
    %v178 = vld [vmem:[%s0] sm:$0xff]
    %v179 = vld [vmem:[%s0 + $0x8] sm:$0xff]
    %v180 = vld [vmem:[%s0 + $0x10] sm:$0xff]
    %v181 = vld [vmem:[%s0 + $0x18] sm:$0xff]
    %vm182 = vcmask 1040384
    %vm183 = vsmask.f32 256
    %vm184 = vmand %vm182, %vm183
    %v185 = vld [vmem:[#allocation2] sm:$0x1]
    %v186 = vsel %vm184, 0, %v185
    %187 = vst [vmem:[#allocation2] sm:$0x1] %v186
    %v188 = vld [vmem:[#allocation2 + $0xc] sm:$0x1]
    %v189 = vsel %vm184, 0, %v188
    %190 = vst [vmem:[#allocation2 + $0xc] sm:$0x1] %v189
    %vm191 = vsmask.f32 7938
    %vm192 = vmand %vm182, %vm191
    %v193 = vld [vmem:[#allocation2 + $0x8] sm:$0x1]
    %v194 = vsel %vm192, 0, %v193
    %195 = vst [vmem:[#allocation2 + $0x8] sm:$0x1] %v194
    %v196 = vld [vmem:[#allocation2 + $0x14] sm:$0x1]
    %v197 = vsel %vm192, 0, %v196
    %198 = vst [vmem:[#allocation2 + $0x14] sm:$0x1] %v197
    %vm199 = vcmask 523264
    %v200 = vsel %vm199, %v178, 0.0
    %v201 = vsel %vm199, %v179, 0.0
    %v202 = vadd.f32 %v200, %v201
    %v203 = vsel %vm199, %v180, 0.0
    %v204 = vadd.f32 %v202, %v203
    %v205 = vsel %vm199, %v181, 0.0
    %v206 = vadd.f32 %v204, %v205
    %v207 = vrot.slane %v206, 4
    %v208 = vadd.f32 %v206, %v207
    %v209 = vrot.slane %v208, 2
    %v210 = vadd.f32 %v208, %v209
    %v211 = vrot.slane %v210, 1
    %v212 = vadd.f32 %v210, %v211
    %v213 = vmul.f32 %v178, %v178
    %v214 = vmul.f32 %v179, %v179
    %v215 = vmul.f32 %v180, %v180
    %v216 = vmul.f32 %v181, %v181
    %v217 = vsel %vm199, %v213, 0.0
    %v218 = vsel %vm199, %v214, 0.0
    %v219 = vadd.f32 %v217, %v218
    %v220 = vsel %vm199, %v215, 0.0
    %v221 = vadd.f32 %v219, %v220
    %v222 = vsel %vm199, %v216, 0.0
    %v223 = vadd.f32 %v221, %v222
    %v224 = vrot.slane %v223, 4
    %v225 = vadd.f32 %v223, %v224
    %v226 = vrot.slane %v225, 2
    %v227 = vadd.f32 %v225, %v226
    %v228 = vrot.slane %v227, 1
    %v229 = vadd.f32 %v227, %v228
    %v230 = vld [vmem:[%s13] sm:$0xff]
    %v231 = vld [vmem:[%s13 + $0x8] sm:$0xff]
    %v232 = vld [vmem:[%s13 + $0x10] sm:$0xff]
    %v233 = vld [vmem:[%s13 + $0x18] sm:$0xff]
    %v234 = vld [vmem:[%s13 + $0x20] sm:$0xff]
    %v235 = vld [vmem:[%s13 + $0x28] sm:$0xff]
    %v236 = vld [vmem:[%s13 + $0x30] sm:$0xff]
    %v237 = vld [vmem:[%s13 + $0x38] sm:$0xff]
    %v239 = vsel %vm199, %v212, 0
    %241 = vmatprep.subr.mxu0 0.0
    %v242 = vand.u32 %v230, 4294901760
    %243 = vmatpush1.msra.mxu0 %v242
    %244 = vmatprep.subr.mxu0 0.0
    %v245 = vand.u32 %v231, 4294901760
    %246 = vmatpush1.msra.mxu0 %v245
    %247 = vmatprep.subr.mxu0 0.0
    %v248 = vand.u32 %v232, 4294901760
    %249 = vmatpush1.msra.mxu0 %v248
    %250 = vmatprep.subr.mxu0 0.0
    %v251 = vand.u32 %v233, 4294901760
    %252 = vmatpush1.msra.mxu0 %v251
    %253 = vmatprep.subr.mxu0 0.0
    %v254 = vand.u32 %v234, 4294901760
    %255 = vmatpush1.msra.mxu0 %v254
    %256 = vmatprep.subr.mxu0 0.0
    %v257 = vand.u32 %v235, 4294901760
    %258 = vmatpush1.msra.mxu0 %v257
    %259 = vmatprep.subr.mxu0 0.0
    %v260 = vand.u32 %v236, 4294901760
    %261 = vmatpush1.msra.mxu0 %v260
    %262 = vmatprep.subr.mxu0 0.0
    %v263 = vand.u32 %v237, 4294901760
    %264 = vmatpush1.msra.mxu0 %v263
    %265 = vmatprep.subr.mxu0 0.0
    %266 = vmatpush1.msra.mxu0 0.0
    %267 = vmatprep.subr.mxu0 0.0
    %268 = vmatpush1.msra.mxu0 0.0
    %269 = vmatprep.subr.mxu0 0.0
    %270 = vmatpush1.msra.mxu0 0.0
    %271 = vmatprep.subr.mxu0 0.0
    %272 = vmatpush1.msra.mxu0 0.0
    %273 = vmatprep.subr.mxu0 0.0
    %274 = vmatpush1.msra.mxu0 0.0
    %275 = vmatprep.subr.mxu0 0.0
    %276 = vmatpush1.msra.mxu0 0.0
    %277 = vmatprep.subr.mxu0 0.0
    %278 = vmatpush1.msra.mxu0 0.0
    %279 = vmatprep.subr.mxu0 0.0
    %280 = vmatpush1.msra.mxu0 0.0
    %281 = vmatprep.subr.mxu0 0.0
    %282 = vmatpush1.msra.mxu0 0.0
    %283 = vmatprep.subr.mxu0 0.0
    %284 = vmatpush1.msra.mxu0 0.0
    %285 = vmatprep.subr.mxu0 0.0
    %286 = vmatpush1.msra.mxu0 0.0
    %287 = vmatprep.subr.mxu0 0.0
    %288 = vmatpush1.msra.mxu0 0.0
    %289 = vmatprep.subr.mxu0 0.0
    %290 = vmatpush1.msra.mxu0 0.0
    %291 = vmatprep.subr.mxu0 0.0
    %292 = vmatpush1.msra.mxu0 0.0
    %293 = vmatprep.subr.mxu0 0.0
    %294 = vmatpush1.msra.mxu0 0.0
    %295 = vmatprep.subr.mxu0 0.0
    %296 = vmatpush1.msra.mxu0 0.0
    %297 = vmatprep.subr.mxu0 0.0
    %298 = vmatpush1.msra.mxu0 0.0
    %299 = vmatprep.subr.mxu0 0.0
    %300 = vmatpush1.msra.mxu0 0.0
    %301 = vmatprep.subr.mxu0 0.0
    %302 = vmatpush1.msra.mxu0 0.0
    %303 = vmatprep.subr.mxu0 0.0
    %304 = vmatpush1.msra.mxu0 0.0
    %305 = vmatprep.subr.mxu0 0.0
    %306 = vmatpush1.msra.mxu0 0.0
    %307 = vmatprep.subr.mxu0 0.0
    %308 = vmatpush1.msra.mxu0 0.0
    %309 = vmatprep.subr.mxu0 0.0
    %310 = vmatpush1.msra.mxu0 0.0
    %311 = vmatprep.subr.mxu0 0.0
    %312 = vmatpush1.msra.mxu0 0.0
    %313 = vmatprep.mubr.f32.mxu0 0.0
    %v314 = vand.u32 %v239, 4294901760
    %v315 = vsub.f32 %v239, %v314
    %v316 = vand.u32 %v315, 4294901760
    %v317 = vsub.f32 %v315, %v316
    %v318 = vand.u32 %v317, 4294901760
    %319 = vmatmul.mubr.f32.gmra.mrb[0].mxu0 %v318
    %v320 = vpop.f32.mrb[0].mxu0
    %v321 = vadd.f32 0.0, %v320
    %v322 = vpop.f32.mrb[0].mxu0
    %323 = vdwg.mxu0
    %324 = vmatprep.subr.mxu0 0.0
    %v325 = vand.u32 %v230, 4294901760
    %v326 = vsub.f32 %v230, %v325
    %v327 = vand.u32 %v326, 4294901760
    %v328 = vsub.f32 %v326, %v327
    %v329 = vand.u32 %v328, 4294901760
    %330 = vmatpush1.msra.mxu0 %v329
    %331 = vmatprep.subr.mxu0 0.0
    %v332 = vand.u32 %v231, 4294901760
    %v333 = vsub.f32 %v231, %v332
    %v334 = vand.u32 %v333, 4294901760
    %v335 = vsub.f32 %v333, %v334
    %v336 = vand.u32 %v335, 4294901760
    %337 = vmatpush1.msra.mxu0 %v336
    %338 = vmatprep.subr.mxu0 0.0
    %v339 = vand.u32 %v232, 4294901760
    %v340 = vsub.f32 %v232, %v339
    %v341 = vand.u32 %v340, 4294901760
    %v342 = vsub.f32 %v340, %v341
    %v343 = vand.u32 %v342, 4294901760
    %344 = vmatpush1.msra.mxu0 %v343
    %345 = vmatprep.subr.mxu0 0.0
    %v346 = vand.u32 %v233, 4294901760
    %v347 = vsub.f32 %v233, %v346
    %v348 = vand.u32 %v347, 4294901760
    %v349 = vsub.f32 %v347, %v348
    %v350 = vand.u32 %v349, 4294901760
    %351 = vmatpush1.msra.mxu0 %v350
    %352 = vmatprep.subr.mxu0 0.0
    %v353 = vand.u32 %v234, 4294901760
    %v354 = vsub.f32 %v234, %v353
    %v355 = vand.u32 %v354, 4294901760
    %v356 = vsub.f32 %v354, %v355
    %v357 = vand.u32 %v356, 4294901760
    %358 = vmatpush1.msra.mxu0 %v357
    %359 = vmatprep.subr.mxu0 0.0
    %v360 = vand.u32 %v235, 4294901760
    %v361 = vsub.f32 %v235, %v360
    %v362 = vand.u32 %v361, 4294901760
    %v363 = vsub.f32 %v361, %v362
    %v364 = vand.u32 %v363, 4294901760
    %365 = vmatpush1.msra.mxu0 %v364
    %366 = vmatprep.subr.mxu0 0.0
    %v367 = vand.u32 %v236, 4294901760
    %v368 = vsub.f32 %v236, %v367
    %v369 = vand.u32 %v368, 4294901760
    %v370 = vsub.f32 %v368, %v369
    %v371 = vand.u32 %v370, 4294901760
    %372 = vmatpush1.msra.mxu0 %v371
    %373 = vmatprep.subr.mxu0 0.0
    %v374 = vand.u32 %v237, 4294901760
    %v375 = vsub.f32 %v237, %v374
    %v376 = vand.u32 %v375, 4294901760
    %v377 = vsub.f32 %v375, %v376
    %v378 = vand.u32 %v377, 4294901760
    %379 = vmatpush1.msra.mxu0 %v378
    %380 = vmatprep.subr.mxu0 0.0
    %381 = vmatpush1.msra.mxu0 0.0
    %382 = vmatprep.subr.mxu0 0.0
    %383 = vmatpush1.msra.mxu0 0.0
    %384 = vmatprep.subr.mxu0 0.0
    %385 = vmatpush1.msra.mxu0 0.0
    %386 = vmatprep.subr.mxu0 0.0
    %387 = vmatpush1.msra.mxu0 0.0
    %388 = vmatprep.subr.mxu0 0.0
    %389 = vmatpush1.msra.mxu0 0.0
    %390 = vmatprep.subr.mxu0 0.0
    %391 = vmatpush1.msra.mxu0 0.0
    %392 = vmatprep.subr.mxu0 0.0
    %393 = vmatpush1.msra.mxu0 0.0
    %394 = vmatprep.subr.mxu0 0.0
    %395 = vmatpush1.msra.mxu0 0.0
    %396 = vmatprep.subr.mxu0 0.0
    %397 = vmatpush1.msra.mxu0 0.0
    %398 = vmatprep.subr.mxu0 0.0
    %399 = vmatpush1.msra.mxu0 0.0
    %400 = vmatprep.subr.mxu0 0.0
    %401 = vmatpush1.msra.mxu0 0.0
    %402 = vmatprep.subr.mxu0 0.0
    %403 = vmatpush1.msra.mxu0 0.0
    %404 = vmatprep.subr.mxu0 0.0
    %405 = vmatpush1.msra.mxu0 0.0
    %406 = vmatprep.subr.mxu0 0.0
    %407 = vmatpush1.msra.mxu0 0.0
    %408 = vmatprep.subr.mxu0 0.0
    %409 = vmatpush1.msra.mxu0 0.0
    %410 = vmatprep.subr.mxu0 0.0
    %411 = vmatpush1.msra.mxu0 0.0
    %412 = vmatprep.subr.mxu0 0.0
    %413 = vmatpush1.msra.mxu0 0.0
    %414 = vmatprep.subr.mxu0 0.0
    %415 = vmatpush1.msra.mxu0 0.0
    %416 = vmatprep.subr.mxu0 0.0
    %417 = vmatpush1.msra.mxu0 0.0
    %418 = vmatprep.subr.mxu0 0.0
    %419 = vmatpush1.msra.mxu0 0.0
    %420 = vmatprep.subr.mxu0 0.0
    %421 = vmatpush1.msra.mxu0 0.0
    %422 = vmatprep.subr.mxu0 0.0
    %423 = vmatpush1.msra.mxu0 0.0
    %424 = vmatprep.subr.mxu0 0.0
    %425 = vmatpush1.msra.mxu0 0.0
    %426 = vmatprep.subr.mxu0 0.0
    %427 = vmatpush1.msra.mxu0 0.0
    %428 = vmatprep.mubr.f32.mxu0 0.0
    %v429 = vand.u32 %v239, 4294901760
    %430 = vmatmul.mubr.f32.gmra.mrb[0].mxu0 %v429
    %v431 = vpop.f32.mrb[0].mxu0
    %v432 = vadd.f32 %v321, %v431
    %v433 = vpop.f32.mrb[0].mxu0
    %434 = vdwg.mxu0
    %435 = vmatprep.subr.mxu0 0.0
    %v436 = vand.u32 %v230, 4294901760
    %v437 = vsub.f32 %v230, %v436
    %438 = vmatpush1.msra.mxu0 %v437
    %439 = vmatprep.subr.mxu0 0.0
    %v440 = vand.u32 %v231, 4294901760
    %v441 = vsub.f32 %v231, %v440
    %442 = vmatpush1.msra.mxu0 %v441
    %443 = vmatprep.subr.mxu0 0.0
    %v444 = vand.u32 %v232, 4294901760
    %v445 = vsub.f32 %v232, %v444
    %446 = vmatpush1.msra.mxu0 %v445
    %447 = vmatprep.subr.mxu0 0.0
    %v448 = vand.u32 %v233, 4294901760
    %v449 = vsub.f32 %v233, %v448
    %450 = vmatpush1.msra.mxu0 %v449
    %451 = vmatprep.subr.mxu0 0.0
    %v452 = vand.u32 %v234, 4294901760
    %v453 = vsub.f32 %v234, %v452
    %454 = vmatpush1.msra.mxu0 %v453
    %455 = vmatprep.subr.mxu0 0.0
    %v456 = vand.u32 %v235, 4294901760
    %v457 = vsub.f32 %v235, %v456
    %458 = vmatpush1.msra.mxu0 %v457
    %459 = vmatprep.subr.mxu0 0.0
    %v460 = vand.u32 %v236, 4294901760
    %v461 = vsub.f32 %v236, %v460
    %462 = vmatpush1.msra.mxu0 %v461
    %463 = vmatprep.subr.mxu0 0.0
    %v464 = vand.u32 %v237, 4294901760
    %v465 = vsub.f32 %v237, %v464
    %466 = vmatpush1.msra.mxu0 %v465
    %467 = vmatprep.subr.mxu0 0.0
    %468 = vmatpush1.msra.mxu0 0.0
    %469 = vmatprep.subr.mxu0 0.0
    %470 = vmatpush1.msra.mxu0 0.0
    %471 = vmatprep.subr.mxu0 0.0
    %472 = vmatpush1.msra.mxu0 0.0
    %473 = vmatprep.subr.mxu0 0.0
    %474 = vmatpush1.msra.mxu0 0.0
    %475 = vmatprep.subr.mxu0 0.0
    %476 = vmatpush1.msra.mxu0 0.0
    %477 = vmatprep.subr.mxu0 0.0
    %478 = vmatpush1.msra.mxu0 0.0
    %479 = vmatprep.subr.mxu0 0.0
    %480 = vmatpush1.msra.mxu0 0.0
    %481 = vmatprep.subr.mxu0 0.0
    %482 = vmatpush1.msra.mxu0 0.0
    %483 = vmatprep.subr.mxu0 0.0
    %484 = vmatpush1.msra.mxu0 0.0
    %485 = vmatprep.subr.mxu0 0.0
    %486 = vmatpush1.msra.mxu0 0.0
    %487 = vmatprep.subr.mxu0 0.0
    %488 = vmatpush1.msra.mxu0 0.0
    %489 = vmatprep.subr.mxu0 0.0
    %490 = vmatpush1.msra.mxu0 0.0
    %491 = vmatprep.subr.mxu0 0.0
    %492 = vmatpush1.msra.mxu0 0.0
    %493 = vmatprep.subr.mxu0 0.0
    %494 = vmatpush1.msra.mxu0 0.0
    %495 = vmatprep.subr.mxu0 0.0
    %496 = vmatpush1.msra.mxu0 0.0
    %497 = vmatprep.subr.mxu0 0.0
    %498 = vmatpush1.msra.mxu0 0.0
    %499 = vmatprep.subr.mxu0 0.0
    %500 = vmatpush1.msra.mxu0 0.0
    %501 = vmatprep.subr.mxu0 0.0
    %502 = vmatpush1.msra.mxu0 0.0
    %503 = vmatprep.subr.mxu0 0.0
    %504 = vmatpush1.msra.mxu0 0.0
    %505 = vmatprep.subr.mxu0 0.0
    %506 = vmatpush1.msra.mxu0 0.0
    %507 = vmatprep.subr.mxu0 0.0
    %508 = vmatpush1.msra.mxu0 0.0
    %509 = vmatprep.subr.mxu0 0.0
    %510 = vmatpush1.msra.mxu0 0.0
    %511 = vmatprep.subr.mxu0 0.0
    %512 = vmatpush1.msra.mxu0 0.0
    %513 = vmatprep.subr.mxu0 0.0
    %514 = vmatpush1.msra.mxu0 0.0
    %515 = vmatprep.mubr.f32.mxu0 0.0
    %v516 = vand.u32 %v239, 4294901760
    %v517 = vsub.f32 %v239, %v516
    %518 = vmatmul.mubr.f32.gmra.mrb[0].mxu0 %v517
    %v519 = vpop.f32.mrb[0].mxu0
    %v520 = vadd.f32 %v432, %v519
    %v521 = vpop.f32.mrb[0].mxu0
    %522 = vdwg.mxu0
    %523 = vmatprep.subr.mxu0 0.0
    %v524 = vand.u32 %v230, 4294901760
    %525 = vmatpush1.msra.mxu0 %v524
    %526 = vmatprep.subr.mxu0 0.0
    %v527 = vand.u32 %v231, 4294901760
    %528 = vmatpush1.msra.mxu0 %v527
    %529 = vmatprep.subr.mxu0 0.0
    %v530 = vand.u32 %v232, 4294901760
    %531 = vmatpush1.msra.mxu0 %v530
    %532 = vmatprep.subr.mxu0 0.0
    %v533 = vand.u32 %v233, 4294901760
    %534 = vmatpush1.msra.mxu0 %v533
    %535 = vmatprep.subr.mxu0 0.0
    %v536 = vand.u32 %v234, 4294901760
    %537 = vmatpush1.msra.mxu0 %v536
    %538 = vmatprep.subr.mxu0 0.0
    %v539 = vand.u32 %v235, 4294901760
    %540 = vmatpush1.msra.mxu0 %v539
    %541 = vmatprep.subr.mxu0 0.0
    %v542 = vand.u32 %v236, 4294901760
    %543 = vmatpush1.msra.mxu0 %v542
    %544 = vmatprep.subr.mxu0 0.0
    %v545 = vand.u32 %v237, 4294901760
    %546 = vmatpush1.msra.mxu0 %v545
    %547 = vmatprep.subr.mxu0 0.0
    %548 = vmatpush1.msra.mxu0 0.0
    %549 = vmatprep.subr.mxu0 0.0
    %550 = vmatpush1.msra.mxu0 0.0
    %551 = vmatprep.subr.mxu0 0.0
    %552 = vmatpush1.msra.mxu0 0.0
    %553 = vmatprep.subr.mxu0 0.0
    %554 = vmatpush1.msra.mxu0 0.0
    %555 = vmatprep.subr.mxu0 0.0
    %556 = vmatpush1.msra.mxu0 0.0
    %557 = vmatprep.subr.mxu0 0.0
    %558 = vmatpush1.msra.mxu0 0.0
    %559 = vmatprep.subr.mxu0 0.0
    %560 = vmatpush1.msra.mxu0 0.0
    %561 = vmatprep.subr.mxu0 0.0
    %562 = vmatpush1.msra.mxu0 0.0
    %563 = vmatprep.subr.mxu0 0.0
    %564 = vmatpush1.msra.mxu0 0.0
    %565 = vmatprep.subr.mxu0 0.0
    %566 = vmatpush1.msra.mxu0 0.0
    %567 = vmatprep.subr.mxu0 0.0
    %568 = vmatpush1.msra.mxu0 0.0
    %569 = vmatprep.subr.mxu0 0.0
    %570 = vmatpush1.msra.mxu0 0.0
    %571 = vmatprep.subr.mxu0 0.0
    %572 = vmatpush1.msra.mxu0 0.0
    %573 = vmatprep.subr.mxu0 0.0
    %574 = vmatpush1.msra.mxu0 0.0
    %575 = vmatprep.subr.mxu0 0.0
    %576 = vmatpush1.msra.mxu0 0.0
    %577 = vmatprep.subr.mxu0 0.0
    %578 = vmatpush1.msra.mxu0 0.0
    %579 = vmatprep.subr.mxu0 0.0
    %580 = vmatpush1.msra.mxu0 0.0
    %581 = vmatprep.subr.mxu0 0.0
    %582 = vmatpush1.msra.mxu0 0.0
    %583 = vmatprep.subr.mxu0 0.0
    %584 = vmatpush1.msra.mxu0 0.0
    %585 = vmatprep.subr.mxu0 0.0
    %586 = vmatpush1.msra.mxu0 0.0
    %587 = vmatprep.subr.mxu0 0.0
    %588 = vmatpush1.msra.mxu0 0.0
    %589 = vmatprep.subr.mxu0 0.0
    %590 = vmatpush1.msra.mxu0 0.0
    %591 = vmatprep.subr.mxu0 0.0
    %592 = vmatpush1.msra.mxu0 0.0
    %593 = vmatprep.subr.mxu0 0.0
    %594 = vmatpush1.msra.mxu0 0.0
    %595 = vmatprep.mubr.f32.mxu0 0.0
    %v596 = vand.u32 %v239, 4294901760
    %v597 = vsub.f32 %v239, %v596
    %v598 = vand.u32 %v597, 4294901760
    %599 = vmatmul.mubr.f32.gmra.mrb[0].mxu0 %v598
    %v600 = vpop.f32.mrb[0].mxu0
    %v601 = vadd.f32 %v520, %v600
    %v602 = vpop.f32.mrb[0].mxu0
    %603 = vdwg.mxu0
    %604 = vmatprep.subr.mxu0 0.0
    %v605 = vand.u32 %v230, 4294901760
    %v606 = vsub.f32 %v230, %v605
    %v607 = vand.u32 %v606, 4294901760
    %608 = vmatpush1.msra.mxu0 %v607
    %609 = vmatprep.subr.mxu0 0.0
    %v610 = vand.u32 %v231, 4294901760
    %v611 = vsub.f32 %v231, %v610
    %v612 = vand.u32 %v611, 4294901760
    %613 = vmatpush1.msra.mxu0 %v612
    %614 = vmatprep.subr.mxu0 0.0
    %v615 = vand.u32 %v232, 4294901760
    %v616 = vsub.f32 %v232, %v615
    %v617 = vand.u32 %v616, 4294901760
    %618 = vmatpush1.msra.mxu0 %v617
    %619 = vmatprep.subr.mxu0 0.0
    %v620 = vand.u32 %v233, 4294901760
    %v621 = vsub.f32 %v233, %v620
    %v622 = vand.u32 %v621, 4294901760
    %623 = vmatpush1.msra.mxu0 %v622
    %624 = vmatprep.subr.mxu0 0.0
    %v625 = vand.u32 %v234, 4294901760
    %v626 = vsub.f32 %v234, %v625
    %v627 = vand.u32 %v626, 4294901760
    %628 = vmatpush1.msra.mxu0 %v627
    %629 = vmatprep.subr.mxu0 0.0
    %v630 = vand.u32 %v235, 4294901760
    %v631 = vsub.f32 %v235, %v630
    %v632 = vand.u32 %v631, 4294901760
    %633 = vmatpush1.msra.mxu0 %v632
    %634 = vmatprep.subr.mxu0 0.0
    %v635 = vand.u32 %v236, 4294901760
    %v636 = vsub.f32 %v236, %v635
    %v637 = vand.u32 %v636, 4294901760
    %638 = vmatpush1.msra.mxu0 %v637
    %639 = vmatprep.subr.mxu0 0.0
    %v640 = vand.u32 %v237, 4294901760
    %v641 = vsub.f32 %v237, %v640
    %v642 = vand.u32 %v641, 4294901760
    %643 = vmatpush1.msra.mxu0 %v642
    %644 = vmatprep.subr.mxu0 0.0
    %645 = vmatpush1.msra.mxu0 0.0
    %646 = vmatprep.subr.mxu0 0.0
    %647 = vmatpush1.msra.mxu0 0.0
    %648 = vmatprep.subr.mxu0 0.0
    %649 = vmatpush1.msra.mxu0 0.0
    %650 = vmatprep.subr.mxu0 0.0
    %651 = vmatpush1.msra.mxu0 0.0
    %652 = vmatprep.subr.mxu0 0.0
    %653 = vmatpush1.msra.mxu0 0.0
    %654 = vmatprep.subr.mxu0 0.0
    %655 = vmatpush1.msra.mxu0 0.0
    %656 = vmatprep.subr.mxu0 0.0
    %657 = vmatpush1.msra.mxu0 0.0
    %658 = vmatprep.subr.mxu0 0.0
    %659 = vmatpush1.msra.mxu0 0.0
    %660 = vmatprep.subr.mxu0 0.0
    %661 = vmatpush1.msra.mxu0 0.0
    %662 = vmatprep.subr.mxu0 0.0
    %663 = vmatpush1.msra.mxu0 0.0
    %664 = vmatprep.subr.mxu0 0.0
    %665 = vmatpush1.msra.mxu0 0.0
    %666 = vmatprep.subr.mxu0 0.0
    %667 = vmatpush1.msra.mxu0 0.0
    %668 = vmatprep.subr.mxu0 0.0
    %669 = vmatpush1.msra.mxu0 0.0
    %670 = vmatprep.subr.mxu0 0.0
    %671 = vmatpush1.msra.mxu0 0.0
    %672 = vmatprep.subr.mxu0 0.0
    %673 = vmatpush1.msra.mxu0 0.0
    %674 = vmatprep.subr.mxu0 0.0
    %675 = vmatpush1.msra.mxu0 0.0
    %676 = vmatprep.subr.mxu0 0.0
    %677 = vmatpush1.msra.mxu0 0.0
    %678 = vmatprep.subr.mxu0 0.0
    %679 = vmatpush1.msra.mxu0 0.0
    %680 = vmatprep.subr.mxu0 0.0
    %681 = vmatpush1.msra.mxu0 0.0
    %682 = vmatprep.subr.mxu0 0.0
    %683 = vmatpush1.msra.mxu0 0.0
    %684 = vmatprep.subr.mxu0 0.0
    %685 = vmatpush1.msra.mxu0 0.0
    %686 = vmatprep.subr.mxu0 0.0
    %687 = vmatpush1.msra.mxu0 0.0
    %688 = vmatprep.subr.mxu0 0.0
    %689 = vmatpush1.msra.mxu0 0.0
    %690 = vmatprep.subr.mxu0 0.0
    %691 = vmatpush1.msra.mxu0 0.0
    %692 = vmatprep.mubr.f32.mxu0 0.0
    %v693 = vand.u32 %v239, 4294901760
    %694 = vmatmul.mubr.f32.gmra.mrb[0].mxu0 %v693
    %v695 = vpop.f32.mrb[0].mxu0
    %v696 = vadd.f32 %v601, %v695
    %v697 = vpop.f32.mrb[0].mxu0
    %698 = vdwg.mxu0
    %699 = vmatprep.subr.mxu0 0.0
    %v700 = vand.u32 %v230, 4294901760
    %701 = vmatpush1.msra.mxu0 %v700
    %702 = vmatprep.subr.mxu0 0.0
    %v703 = vand.u32 %v231, 4294901760
    %704 = vmatpush1.msra.mxu0 %v703
    %705 = vmatprep.subr.mxu0 0.0
    %v706 = vand.u32 %v232, 4294901760
    %707 = vmatpush1.msra.mxu0 %v706
    %708 = vmatprep.subr.mxu0 0.0
    %v709 = vand.u32 %v233, 4294901760
    %710 = vmatpush1.msra.mxu0 %v709
    %711 = vmatprep.subr.mxu0 0.0
    %v712 = vand.u32 %v234, 4294901760
    %713 = vmatpush1.msra.mxu0 %v712
    %714 = vmatprep.subr.mxu0 0.0
    %v715 = vand.u32 %v235, 4294901760
    %716 = vmatpush1.msra.mxu0 %v715
    %717 = vmatprep.subr.mxu0 0.0
    %v718 = vand.u32 %v236, 4294901760
    %719 = vmatpush1.msra.mxu0 %v718
    %720 = vmatprep.subr.mxu0 0.0
    %v721 = vand.u32 %v237, 4294901760
    %722 = vmatpush1.msra.mxu0 %v721
    %723 = vmatprep.subr.mxu0 0.0
    %724 = vmatpush1.msra.mxu0 0.0
    %725 = vmatprep.subr.mxu0 0.0
    %726 = vmatpush1.msra.mxu0 0.0
    %727 = vmatprep.subr.mxu0 0.0
    %728 = vmatpush1.msra.mxu0 0.0
    %729 = vmatprep.subr.mxu0 0.0
    %730 = vmatpush1.msra.mxu0 0.0
    %731 = vmatprep.subr.mxu0 0.0
    %732 = vmatpush1.msra.mxu0 0.0
    %733 = vmatprep.subr.mxu0 0.0
    %734 = vmatpush1.msra.mxu0 0.0
    %735 = vmatprep.subr.mxu0 0.0
    %736 = vmatpush1.msra.mxu0 0.0
    %737 = vmatprep.subr.mxu0 0.0
    %738 = vmatpush1.msra.mxu0 0.0
    %739 = vmatprep.subr.mxu0 0.0
    %740 = vmatpush1.msra.mxu0 0.0
    %741 = vmatprep.subr.mxu0 0.0
    %742 = vmatpush1.msra.mxu0 0.0
    %743 = vmatprep.subr.mxu0 0.0
    %744 = vmatpush1.msra.mxu0 0.0
    %745 = vmatprep.subr.mxu0 0.0
    %746 = vmatpush1.msra.mxu0 0.0
    %747 = vmatprep.subr.mxu0 0.0
    %748 = vmatpush1.msra.mxu0 0.0
    %749 = vmatprep.subr.mxu0 0.0
    %750 = vmatpush1.msra.mxu0 0.0
    %751 = vmatprep.subr.mxu0 0.0
    %752 = vmatpush1.msra.mxu0 0.0
    %753 = vmatprep.subr.mxu0 0.0
    %754 = vmatpush1.msra.mxu0 0.0
    %755 = vmatprep.subr.mxu0 0.0
    %756 = vmatpush1.msra.mxu0 0.0
    %757 = vmatprep.subr.mxu0 0.0
    %758 = vmatpush1.msra.mxu0 0.0
    %759 = vmatprep.subr.mxu0 0.0
    %760 = vmatpush1.msra.mxu0 0.0
    %761 = vmatprep.subr.mxu0 0.0
    %762 = vmatpush1.msra.mxu0 0.0
    %763 = vmatprep.subr.mxu0 0.0
    %764 = vmatpush1.msra.mxu0 0.0
    %765 = vmatprep.subr.mxu0 0.0
    %766 = vmatpush1.msra.mxu0 0.0
    %767 = vmatprep.subr.mxu0 0.0
    %768 = vmatpush1.msra.mxu0 0.0
    %769 = vmatprep.subr.mxu0 0.0
    %770 = vmatpush1.msra.mxu0 0.0
    %771 = vmatprep.mubr.f32.mxu0 0.0
    %v772 = vand.u32 %v239, 4294901760
    %773 = vmatmul.mubr.f32.gmra.mrb[0].mxu0 %v772
    %v774 = vpop.f32.mrb[0].mxu0
    %v775 = vadd.f32 %v696, %v774
    %v776 = vpop.f32.mrb[0].mxu0
    %777 = vdwg.mxu0
    %v779 = vsel %vm199, %v229, 0
    %781 = vmatprep.subr.mxu0 0.0
    %v782 = vand.u32 %v230, 4294901760
    %783 = vmatpush1.msra.mxu0 %v782
    %784 = vmatprep.subr.mxu0 0.0
    %v785 = vand.u32 %v231, 4294901760
    %786 = vmatpush1.msra.mxu0 %v785
    %787 = vmatprep.subr.mxu0 0.0
    %v788 = vand.u32 %v232, 4294901760
    %789 = vmatpush1.msra.mxu0 %v788
    %790 = vmatprep.subr.mxu0 0.0
    %v791 = vand.u32 %v233, 4294901760
    %792 = vmatpush1.msra.mxu0 %v791
    %793 = vmatprep.subr.mxu0 0.0
    %v794 = vand.u32 %v234, 4294901760
    %795 = vmatpush1.msra.mxu0 %v794
    %796 = vmatprep.subr.mxu0 0.0
    %v797 = vand.u32 %v235, 4294901760
    %798 = vmatpush1.msra.mxu0 %v797
    %799 = vmatprep.subr.mxu0 0.0
    %v800 = vand.u32 %v236, 4294901760
    %801 = vmatpush1.msra.mxu0 %v800
    %802 = vmatprep.subr.mxu0 0.0
    %v803 = vand.u32 %v237, 4294901760
    %804 = vmatpush1.msra.mxu0 %v803
    %805 = vmatprep.subr.mxu0 0.0
    %806 = vmatpush1.msra.mxu0 0.0
    %807 = vmatprep.subr.mxu0 0.0
    %808 = vmatpush1.msra.mxu0 0.0
    %809 = vmatprep.subr.mxu0 0.0
    %810 = vmatpush1.msra.mxu0 0.0
    %811 = vmatprep.subr.mxu0 0.0
    %812 = vmatpush1.msra.mxu0 0.0
    %813 = vmatprep.subr.mxu0 0.0
    %814 = vmatpush1.msra.mxu0 0.0
    %815 = vmatprep.subr.mxu0 0.0
    %816 = vmatpush1.msra.mxu0 0.0
    %817 = vmatprep.subr.mxu0 0.0
    %818 = vmatpush1.msra.mxu0 0.0
    %819 = vmatprep.subr.mxu0 0.0
    %820 = vmatpush1.msra.mxu0 0.0
    %821 = vmatprep.subr.mxu0 0.0
    %822 = vmatpush1.msra.mxu0 0.0
    %823 = vmatprep.subr.mxu0 0.0
    %824 = vmatpush1.msra.mxu0 0.0
    %825 = vmatprep.subr.mxu0 0.0
    %826 = vmatpush1.msra.mxu0 0.0
    %827 = vmatprep.subr.mxu0 0.0
    %828 = vmatpush1.msra.mxu0 0.0
    %829 = vmatprep.subr.mxu0 0.0
    %830 = vmatpush1.msra.mxu0 0.0
    %831 = vmatprep.subr.mxu0 0.0
    %832 = vmatpush1.msra.mxu0 0.0
    %833 = vmatprep.subr.mxu0 0.0
    %834 = vmatpush1.msra.mxu0 0.0
    %835 = vmatprep.subr.mxu0 0.0
    %836 = vmatpush1.msra.mxu0 0.0
    %837 = vmatprep.subr.mxu0 0.0
    %838 = vmatpush1.msra.mxu0 0.0
    %839 = vmatprep.subr.mxu0 0.0
    %840 = vmatpush1.msra.mxu0 0.0
    %841 = vmatprep.subr.mxu0 0.0
    %842 = vmatpush1.msra.mxu0 0.0
    %843 = vmatprep.subr.mxu0 0.0
    %844 = vmatpush1.msra.mxu0 0.0
    %845 = vmatprep.subr.mxu0 0.0
    %846 = vmatpush1.msra.mxu0 0.0
    %847 = vmatprep.subr.mxu0 0.0
    %848 = vmatpush1.msra.mxu0 0.0
    %849 = vmatprep.subr.mxu0 0.0
    %850 = vmatpush1.msra.mxu0 0.0
    %851 = vmatprep.subr.mxu0 0.0
    %852 = vmatpush1.msra.mxu0 0.0
    %853 = vmatprep.mubr.f32.mxu0 0.0
    %v854 = vand.u32 %v779, 4294901760
    %v855 = vsub.f32 %v779, %v854
    %v856 = vand.u32 %v855, 4294901760
    %v857 = vsub.f32 %v855, %v856
    %v858 = vand.u32 %v857, 4294901760
    %859 = vmatmul.mubr.f32.gmra.mrb[0].mxu0 %v858
    %v860 = vpop.f32.mrb[0].mxu0
    %v861 = vadd.f32 0.0, %v860
    %v862 = vpop.f32.mrb[0].mxu0
    %863 = vdwg.mxu0
    %864 = vmatprep.subr.mxu0 0.0
    %v865 = vand.u32 %v230, 4294901760
    %v866 = vsub.f32 %v230, %v865
    %v867 = vand.u32 %v866, 4294901760
    %v868 = vsub.f32 %v866, %v867
    %v869 = vand.u32 %v868, 4294901760
    %870 = vmatpush1.msra.mxu0 %v869
    %871 = vmatprep.subr.mxu0 0.0
    %v872 = vand.u32 %v231, 4294901760
    %v873 = vsub.f32 %v231, %v872
    %v874 = vand.u32 %v873, 4294901760
    %v875 = vsub.f32 %v873, %v874
    %v876 = vand.u32 %v875, 4294901760
    %877 = vmatpush1.msra.mxu0 %v876
    %878 = vmatprep.subr.mxu0 0.0
    %v879 = vand.u32 %v232, 4294901760
    %v880 = vsub.f32 %v232, %v879
    %v881 = vand.u32 %v880, 4294901760
    %v882 = vsub.f32 %v880, %v881
    %v883 = vand.u32 %v882, 4294901760
    %884 = vmatpush1.msra.mxu0 %v883
    %885 = vmatprep.subr.mxu0 0.0
    %v886 = vand.u32 %v233, 4294901760
    %v887 = vsub.f32 %v233, %v886
    %v888 = vand.u32 %v887, 4294901760
    %v889 = vsub.f32 %v887, %v888
    %v890 = vand.u32 %v889, 4294901760
    %891 = vmatpush1.msra.mxu0 %v890
    %892 = vmatprep.subr.mxu0 0.0
    %v893 = vand.u32 %v234, 4294901760
    %v894 = vsub.f32 %v234, %v893
    %v895 = vand.u32 %v894, 4294901760
    %v896 = vsub.f32 %v894, %v895
    %v897 = vand.u32 %v896, 4294901760
    %898 = vmatpush1.msra.mxu0 %v897
    %899 = vmatprep.subr.mxu0 0.0
    %v900 = vand.u32 %v235, 4294901760
    %v901 = vsub.f32 %v235, %v900
    %v902 = vand.u32 %v901, 4294901760
    %v903 = vsub.f32 %v901, %v902
    %v904 = vand.u32 %v903, 4294901760
    %905 = vmatpush1.msra.mxu0 %v904
    %906 = vmatprep.subr.mxu0 0.0
    %v907 = vand.u32 %v236, 4294901760
    %v908 = vsub.f32 %v236, %v907
    %v909 = vand.u32 %v908, 4294901760
    %v910 = vsub.f32 %v908, %v909
    %v911 = vand.u32 %v910, 4294901760
    %912 = vmatpush1.msra.mxu0 %v911
    %913 = vmatprep.subr.mxu0 0.0
    %v914 = vand.u32 %v237, 4294901760
    %v915 = vsub.f32 %v237, %v914
    %v916 = vand.u32 %v915, 4294901760
    %v917 = vsub.f32 %v915, %v916
    %v918 = vand.u32 %v917, 4294901760
    %919 = vmatpush1.msra.mxu0 %v918
    %920 = vmatprep.subr.mxu0 0.0
    %921 = vmatpush1.msra.mxu0 0.0
    %922 = vmatprep.subr.mxu0 0.0
    %923 = vmatpush1.msra.mxu0 0.0
    %924 = vmatprep.subr.mxu0 0.0
    %925 = vmatpush1.msra.mxu0 0.0
    %926 = vmatprep.subr.mxu0 0.0
    %927 = vmatpush1.msra.mxu0 0.0
    %928 = vmatprep.subr.mxu0 0.0
    %929 = vmatpush1.msra.mxu0 0.0
    %930 = vmatprep.subr.mxu0 0.0
    %931 = vmatpush1.msra.mxu0 0.0
    %932 = vmatprep.subr.mxu0 0.0
    %933 = vmatpush1.msra.mxu0 0.0
    %934 = vmatprep.subr.mxu0 0.0
    %935 = vmatpush1.msra.mxu0 0.0
    %936 = vmatprep.subr.mxu0 0.0
    %937 = vmatpush1.msra.mxu0 0.0
    %938 = vmatprep.subr.mxu0 0.0
    %939 = vmatpush1.msra.mxu0 0.0
    %940 = vmatprep.subr.mxu0 0.0
    %941 = vmatpush1.msra.mxu0 0.0
    %942 = vmatprep.subr.mxu0 0.0
    %943 = vmatpush1.msra.mxu0 0.0
    %944 = vmatprep.subr.mxu0 0.0
    %945 = vmatpush1.msra.mxu0 0.0
    %946 = vmatprep.subr.mxu0 0.0
    %947 = vmatpush1.msra.mxu0 0.0
    %948 = vmatprep.subr.mxu0 0.0
    %949 = vmatpush1.msra.mxu0 0.0
    %950 = vmatprep.subr.mxu0 0.0
    %951 = vmatpush1.msra.mxu0 0.0
    %952 = vmatprep.subr.mxu0 0.0
    %953 = vmatpush1.msra.mxu0 0.0
    %954 = vmatprep.subr.mxu0 0.0
    %955 = vmatpush1.msra.mxu0 0.0
    %956 = vmatprep.subr.mxu0 0.0
    %957 = vmatpush1.msra.mxu0 0.0
    %958 = vmatprep.subr.mxu0 0.0
    %959 = vmatpush1.msra.mxu0 0.0
    %960 = vmatprep.subr.mxu0 0.0
    %961 = vmatpush1.msra.mxu0 0.0
    %962 = vmatprep.subr.mxu0 0.0
    %963 = vmatpush1.msra.mxu0 0.0
    %964 = vmatprep.subr.mxu0 0.0
    %965 = vmatpush1.msra.mxu0 0.0
    %966 = vmatprep.subr.mxu0 0.0
    %967 = vmatpush1.msra.mxu0 0.0
    %968 = vmatprep.mubr.f32.mxu0 0.0
    %v969 = vand.u32 %v779, 4294901760
    %970 = vmatmul.mubr.f32.gmra.mrb[0].mxu0 %v969
    %v971 = vpop.f32.mrb[0].mxu0
    %v972 = vadd.f32 %v861, %v971
    %v973 = vpop.f32.mrb[0].mxu0
    %974 = vdwg.mxu0
    %975 = vmatprep.subr.mxu0 0.0
    %v976 = vand.u32 %v230, 4294901760
    %v977 = vsub.f32 %v230, %v976
    %978 = vmatpush1.msra.mxu0 %v977
    %979 = vmatprep.subr.mxu0 0.0
    %v980 = vand.u32 %v231, 4294901760
    %v981 = vsub.f32 %v231, %v980
    %982 = vmatpush1.msra.mxu0 %v981
    %983 = vmatprep.subr.mxu0 0.0
    %v984 = vand.u32 %v232, 4294901760
    %v985 = vsub.f32 %v232, %v984
    %986 = vmatpush1.msra.mxu0 %v985
    %987 = vmatprep.subr.mxu0 0.0
    %v988 = vand.u32 %v233, 4294901760
    %v989 = vsub.f32 %v233, %v988
    %990 = vmatpush1.msra.mxu0 %v989
    %991 = vmatprep.subr.mxu0 0.0
    %v992 = vand.u32 %v234, 4294901760
    %v993 = vsub.f32 %v234, %v992
    %994 = vmatpush1.msra.mxu0 %v993
    %995 = vmatprep.subr.mxu0 0.0
    %v996 = vand.u32 %v235, 4294901760
    %v997 = vsub.f32 %v235, %v996
    %998 = vmatpush1.msra.mxu0 %v997
    %999 = vmatprep.subr.mxu0 0.0
    %v1000 = vand.u32 %v236, 4294901760
    %v1001 = vsub.f32 %v236, %v1000
    %1002 = vmatpush1.msra.mxu0 %v1001
    %1003 = vmatprep.subr.mxu0 0.0
    %v1004 = vand.u32 %v237, 4294901760
    %v1005 = vsub.f32 %v237, %v1004
    %1006 = vmatpush1.msra.mxu0 %v1005
    %1007 = vmatprep.subr.mxu0 0.0
    %1008 = vmatpush1.msra.mxu0 0.0
    %1009 = vmatprep.subr.mxu0 0.0
    %1010 = vmatpush1.msra.mxu0 0.0
    %1011 = vmatprep.subr.mxu0 0.0
    %1012 = vmatpush1.msra.mxu0 0.0
    %1013 = vmatprep.subr.mxu0 0.0
    %1014 = vmatpush1.msra.mxu0 0.0
    %1015 = vmatprep.subr.mxu0 0.0
    %1016 = vmatpush1.msra.mxu0 0.0
    %1017 = vmatprep.subr.mxu0 0.0
    %1018 = vmatpush1.msra.mxu0 0.0
    %1019 = vmatprep.subr.mxu0 0.0
    %1020 = vmatpush1.msra.mxu0 0.0
    %1021 = vmatprep.subr.mxu0 0.0
    %1022 = vmatpush1.msra.mxu0 0.0
    %1023 = vmatprep.subr.mxu0 0.0
    %1024 = vmatpush1.msra.mxu0 0.0
    %1025 = vmatprep.subr.mxu0 0.0
    %1026 = vmatpush1.msra.mxu0 0.0
    %1027 = vmatprep.subr.mxu0 0.0
    %1028 = vmatpush1.msra.mxu0 0.0
    %1029 = vmatprep.subr.mxu0 0.0
    %1030 = vmatpush1.msra.mxu0 0.0
    %1031 = vmatprep.subr.mxu0 0.0
    %1032 = vmatpush1.msra.mxu0 0.0
    %1033 = vmatprep.subr.mxu0 0.0
    %1034 = vmatpush1.msra.mxu0 0.0
    %1035 = vmatprep.subr.mxu0 0.0
    %1036 = vmatpush1.msra.mxu0 0.0
    %1037 = vmatprep.subr.mxu0 0.0
    %1038 = vmatpush1.msra.mxu0 0.0
    %1039 = vmatprep.subr.mxu0 0.0
    %1040 = vmatpush1.msra.mxu0 0.0
    %1041 = vmatprep.subr.mxu0 0.0
    %1042 = vmatpush1.msra.mxu0 0.0
    %1043 = vmatprep.subr.mxu0 0.0
    %1044 = vmatpush1.msra.mxu0 0.0
    %1045 = vmatprep.subr.mxu0 0.0
    %1046 = vmatpush1.msra.mxu0 0.0
    %1047 = vmatprep.subr.mxu0 0.0
    %1048 = vmatpush1.msra.mxu0 0.0
    %1049 = vmatprep.subr.mxu0 0.0
    %1050 = vmatpush1.msra.mxu0 0.0
    %1051 = vmatprep.subr.mxu0 0.0
    %1052 = vmatpush1.msra.mxu0 0.0
    %1053 = vmatprep.subr.mxu0 0.0
    %1054 = vmatpush1.msra.mxu0 0.0
    %1055 = vmatprep.mubr.f32.mxu0 0.0
    %v1056 = vand.u32 %v779, 4294901760
    %v1057 = vsub.f32 %v779, %v1056
    %1058 = vmatmul.mubr.f32.gmra.mrb[0].mxu0 %v1057
    %v1059 = vpop.f32.mrb[0].mxu0
    %v1060 = vadd.f32 %v972, %v1059
    %v1061 = vpop.f32.mrb[0].mxu0
    %1062 = vdwg.mxu0
    %1063 = vmatprep.subr.mxu0 0.0
    %v1064 = vand.u32 %v230, 4294901760
    %1065 = vmatpush1.msra.mxu0 %v1064
    %1066 = vmatprep.subr.mxu0 0.0
    %v1067 = vand.u32 %v231, 4294901760
    %1068 = vmatpush1.msra.mxu0 %v1067
    %1069 = vmatprep.subr.mxu0 0.0
    %v1070 = vand.u32 %v232, 4294901760
    %1071 = vmatpush1.msra.mxu0 %v1070
    %1072 = vmatprep.subr.mxu0 0.0
    %v1073 = vand.u32 %v233, 4294901760
    %1074 = vmatpush1.msra.mxu0 %v1073
    %1075 = vmatprep.subr.mxu0 0.0
    %v1076 = vand.u32 %v234, 4294901760
    %1077 = vmatpush1.msra.mxu0 %v1076
    %1078 = vmatprep.subr.mxu0 0.0
    %v1079 = vand.u32 %v235, 4294901760
    %1080 = vmatpush1.msra.mxu0 %v1079
    %1081 = vmatprep.subr.mxu0 0.0
    %v1082 = vand.u32 %v236, 4294901760
    %1083 = vmatpush1.msra.mxu0 %v1082
    %1084 = vmatprep.subr.mxu0 0.0
    %v1085 = vand.u32 %v237, 4294901760
    %1086 = vmatpush1.msra.mxu0 %v1085
    %1087 = vmatprep.subr.mxu0 0.0
    %1088 = vmatpush1.msra.mxu0 0.0
    %1089 = vmatprep.subr.mxu0 0.0
    %1090 = vmatpush1.msra.mxu0 0.0
    %1091 = vmatprep.subr.mxu0 0.0
    %1092 = vmatpush1.msra.mxu0 0.0
    %1093 = vmatprep.subr.mxu0 0.0
    %1094 = vmatpush1.msra.mxu0 0.0
    %1095 = vmatprep.subr.mxu0 0.0
    %1096 = vmatpush1.msra.mxu0 0.0
    %1097 = vmatprep.subr.mxu0 0.0
    %1098 = vmatpush1.msra.mxu0 0.0
    %1099 = vmatprep.subr.mxu0 0.0
    %1100 = vmatpush1.msra.mxu0 0.0
    %1101 = vmatprep.subr.mxu0 0.0
    %1102 = vmatpush1.msra.mxu0 0.0
    %1103 = vmatprep.subr.mxu0 0.0
    %1104 = vmatpush1.msra.mxu0 0.0
    %1105 = vmatprep.subr.mxu0 0.0
    %1106 = vmatpush1.msra.mxu0 0.0
    %1107 = vmatprep.subr.mxu0 0.0
    %1108 = vmatpush1.msra.mxu0 0.0
    %1109 = vmatprep.subr.mxu0 0.0
    %1110 = vmatpush1.msra.mxu0 0.0
    %1111 = vmatprep.subr.mxu0 0.0
    %1112 = vmatpush1.msra.mxu0 0.0
    %1113 = vmatprep.subr.mxu0 0.0
    %1114 = vmatpush1.msra.mxu0 0.0
    %1115 = vmatprep.subr.mxu0 0.0
    %1116 = vmatpush1.msra.mxu0 0.0
    %1117 = vmatprep.subr.mxu0 0.0
    %1118 = vmatpush1.msra.mxu0 0.0
    %1119 = vmatprep.subr.mxu0 0.0
    %1120 = vmatpush1.msra.mxu0 0.0
    %1121 = vmatprep.subr.mxu0 0.0
    %1122 = vmatpush1.msra.mxu0 0.0
    %1123 = vmatprep.subr.mxu0 0.0
    %1124 = vmatpush1.msra.mxu0 0.0
    %1125 = vmatprep.subr.mxu0 0.0
    %1126 = vmatpush1.msra.mxu0 0.0
    %1127 = vmatprep.subr.mxu0 0.0
    %1128 = vmatpush1.msra.mxu0 0.0
    %1129 = vmatprep.subr.mxu0 0.0
    %1130 = vmatpush1.msra.mxu0 0.0
    %1131 = vmatprep.subr.mxu0 0.0
    %1132 = vmatpush1.msra.mxu0 0.0
    %1133 = vmatprep.subr.mxu0 0.0
    %1134 = vmatpush1.msra.mxu0 0.0
    %1135 = vmatprep.mubr.f32.mxu0 0.0
    %v1136 = vand.u32 %v779, 4294901760
    %v1137 = vsub.f32 %v779, %v1136
    %v1138 = vand.u32 %v1137, 4294901760
    %1139 = vmatmul.mubr.f32.gmra.mrb[0].mxu0 %v1138
    %v1140 = vpop.f32.mrb[0].mxu0
    %v1141 = vadd.f32 %v1060, %v1140
    %v1142 = vpop.f32.mrb[0].mxu0
    %1143 = vdwg.mxu0
    %1144 = vmatprep.subr.mxu0 0.0
    %v1145 = vand.u32 %v230, 4294901760
    %v1146 = vsub.f32 %v230, %v1145
    %v1147 = vand.u32 %v1146, 4294901760
    %1148 = vmatpush1.msra.mxu0 %v1147
    %1149 = vmatprep.subr.mxu0 0.0
    %v1150 = vand.u32 %v231, 4294901760
    %v1151 = vsub.f32 %v231, %v1150
    %v1152 = vand.u32 %v1151, 4294901760
    %1153 = vmatpush1.msra.mxu0 %v1152
    %1154 = vmatprep.subr.mxu0 0.0
    %v1155 = vand.u32 %v232, 4294901760
    %v1156 = vsub.f32 %v232, %v1155
    %v1157 = vand.u32 %v1156, 4294901760
    %1158 = vmatpush1.msra.mxu0 %v1157
    %1159 = vmatprep.subr.mxu0 0.0
    %v1160 = vand.u32 %v233, 4294901760
    %v1161 = vsub.f32 %v233, %v1160
    %v1162 = vand.u32 %v1161, 4294901760
    %1163 = vmatpush1.msra.mxu0 %v1162
    %1164 = vmatprep.subr.mxu0 0.0
    %v1165 = vand.u32 %v234, 4294901760
    %v1166 = vsub.f32 %v234, %v1165
    %v1167 = vand.u32 %v1166, 4294901760
    %1168 = vmatpush1.msra.mxu0 %v1167
    %1169 = vmatprep.subr.mxu0 0.0
    %v1170 = vand.u32 %v235, 4294901760
    %v1171 = vsub.f32 %v235, %v1170
    %v1172 = vand.u32 %v1171, 4294901760
    %1173 = vmatpush1.msra.mxu0 %v1172
    %1174 = vmatprep.subr.mxu0 0.0
    %v1175 = vand.u32 %v236, 4294901760
    %v1176 = vsub.f32 %v236, %v1175
    %v1177 = vand.u32 %v1176, 4294901760
    %1178 = vmatpush1.msra.mxu0 %v1177
    %1179 = vmatprep.subr.mxu0 0.0
    %v1180 = vand.u32 %v237, 4294901760
    %v1181 = vsub.f32 %v237, %v1180
    %v1182 = vand.u32 %v1181, 4294901760
    %1183 = vmatpush1.msra.mxu0 %v1182
    %1184 = vmatprep.subr.mxu0 0.0
    %1185 = vmatpush1.msra.mxu0 0.0
    %1186 = vmatprep.subr.mxu0 0.0
    %1187 = vmatpush1.msra.mxu0 0.0
    %1188 = vmatprep.subr.mxu0 0.0
    %1189 = vmatpush1.msra.mxu0 0.0
    %1190 = vmatprep.subr.mxu0 0.0
    %1191 = vmatpush1.msra.mxu0 0.0
    %1192 = vmatprep.subr.mxu0 0.0
    %1193 = vmatpush1.msra.mxu0 0.0
    %1194 = vmatprep.subr.mxu0 0.0
    %1195 = vmatpush1.msra.mxu0 0.0
    %1196 = vmatprep.subr.mxu0 0.0
    %1197 = vmatpush1.msra.mxu0 0.0
    %1198 = vmatprep.subr.mxu0 0.0
    %1199 = vmatpush1.msra.mxu0 0.0
    %1200 = vmatprep.subr.mxu0 0.0
    %1201 = vmatpush1.msra.mxu0 0.0
    %1202 = vmatprep.subr.mxu0 0.0
    %1203 = vmatpush1.msra.mxu0 0.0
    %1204 = vmatprep.subr.mxu0 0.0
    %1205 = vmatpush1.msra.mxu0 0.0
    %1206 = vmatprep.subr.mxu0 0.0
    %1207 = vmatpush1.msra.mxu0 0.0
    %1208 = vmatprep.subr.mxu0 0.0
    %1209 = vmatpush1.msra.mxu0 0.0
    %1210 = vmatprep.subr.mxu0 0.0
    %1211 = vmatpush1.msra.mxu0 0.0
    %1212 = vmatprep.subr.mxu0 0.0
    %1213 = vmatpush1.msra.mxu0 0.0
    %1214 = vmatprep.subr.mxu0 0.0
    %1215 = vmatpush1.msra.mxu0 0.0
    %1216 = vmatprep.subr.mxu0 0.0
    %1217 = vmatpush1.msra.mxu0 0.0
    %1218 = vmatprep.subr.mxu0 0.0
    %1219 = vmatpush1.msra.mxu0 0.0
    %1220 = vmatprep.subr.mxu0 0.0
    %1221 = vmatpush1.msra.mxu0 0.0
    %1222 = vmatprep.subr.mxu0 0.0
    %1223 = vmatpush1.msra.mxu0 0.0
    %1224 = vmatprep.subr.mxu0 0.0
    %1225 = vmatpush1.msra.mxu0 0.0
    %1226 = vmatprep.subr.mxu0 0.0
    %1227 = vmatpush1.msra.mxu0 0.0
    %1228 = vmatprep.subr.mxu0 0.0
    %1229 = vmatpush1.msra.mxu0 0.0
    %1230 = vmatprep.subr.mxu0 0.0
    %1231 = vmatpush1.msra.mxu0 0.0
    %1232 = vmatprep.mubr.f32.mxu0 0.0
    %v1233 = vand.u32 %v779, 4294901760
    %1234 = vmatmul.mubr.f32.gmra.mrb[0].mxu0 %v1233
    %v1235 = vpop.f32.mrb[0].mxu0
    %v1236 = vadd.f32 %v1141, %v1235
    %v1237 = vpop.f32.mrb[0].mxu0
    %1238 = vdwg.mxu0
    %1239 = vmatprep.subr.mxu0 0.0
    %v1240 = vand.u32 %v230, 4294901760
    %1241 = vmatpush1.msra.mxu0 %v1240
    %1242 = vmatprep.subr.mxu0 0.0
    %v1243 = vand.u32 %v231, 4294901760
    %1244 = vmatpush1.msra.mxu0 %v1243
    %1245 = vmatprep.subr.mxu0 0.0
    %v1246 = vand.u32 %v232, 4294901760
    %1247 = vmatpush1.msra.mxu0 %v1246
    %1248 = vmatprep.subr.mxu0 0.0
    %v1249 = vand.u32 %v233, 4294901760
    %1250 = vmatpush1.msra.mxu0 %v1249
    %1251 = vmatprep.subr.mxu0 0.0
    %v1252 = vand.u32 %v234, 4294901760
    %1253 = vmatpush1.msra.mxu0 %v1252
    %1254 = vmatprep.subr.mxu0 0.0
    %v1255 = vand.u32 %v235, 4294901760
    %1256 = vmatpush1.msra.mxu0 %v1255
    %1257 = vmatprep.subr.mxu0 0.0
    %v1258 = vand.u32 %v236, 4294901760
    %1259 = vmatpush1.msra.mxu0 %v1258
    %1260 = vmatprep.subr.mxu0 0.0
    %v1261 = vand.u32 %v237, 4294901760
    %1262 = vmatpush1.msra.mxu0 %v1261
    %1263 = vmatprep.subr.mxu0 0.0
    %1264 = vmatpush1.msra.mxu0 0.0
    %1265 = vmatprep.subr.mxu0 0.0
    %1266 = vmatpush1.msra.mxu0 0.0
    %1267 = vmatprep.subr.mxu0 0.0
    %1268 = vmatpush1.msra.mxu0 0.0
    %1269 = vmatprep.subr.mxu0 0.0
    %1270 = vmatpush1.msra.mxu0 0.0
    %1271 = vmatprep.subr.mxu0 0.0
    %1272 = vmatpush1.msra.mxu0 0.0
    %1273 = vmatprep.subr.mxu0 0.0
    %1274 = vmatpush1.msra.mxu0 0.0
    %1275 = vmatprep.subr.mxu0 0.0
    %1276 = vmatpush1.msra.mxu0 0.0
    %1277 = vmatprep.subr.mxu0 0.0
    %1278 = vmatpush1.msra.mxu0 0.0
    %1279 = vmatprep.subr.mxu0 0.0
    %1280 = vmatpush1.msra.mxu0 0.0
    %1281 = vmatprep.subr.mxu0 0.0
    %1282 = vmatpush1.msra.mxu0 0.0
    %1283 = vmatprep.subr.mxu0 0.0
    %1284 = vmatpush1.msra.mxu0 0.0
    %1285 = vmatprep.subr.mxu0 0.0
    %1286 = vmatpush1.msra.mxu0 0.0
    %1287 = vmatprep.subr.mxu0 0.0
    %1288 = vmatpush1.msra.mxu0 0.0
    %1289 = vmatprep.subr.mxu0 0.0
    %1290 = vmatpush1.msra.mxu0 0.0
    %1291 = vmatprep.subr.mxu0 0.0
    %1292 = vmatpush1.msra.mxu0 0.0
    %1293 = vmatprep.subr.mxu0 0.0
    %1294 = vmatpush1.msra.mxu0 0.0
    %1295 = vmatprep.subr.mxu0 0.0
    %1296 = vmatpush1.msra.mxu0 0.0
    %1297 = vmatprep.subr.mxu0 0.0
    %1298 = vmatpush1.msra.mxu0 0.0
    %1299 = vmatprep.subr.mxu0 0.0
    %1300 = vmatpush1.msra.mxu0 0.0
    %1301 = vmatprep.subr.mxu0 0.0
    %1302 = vmatpush1.msra.mxu0 0.0
    %1303 = vmatprep.subr.mxu0 0.0
    %1304 = vmatpush1.msra.mxu0 0.0
    %1305 = vmatprep.subr.mxu0 0.0
    %1306 = vmatpush1.msra.mxu0 0.0
    %1307 = vmatprep.subr.mxu0 0.0
    %1308 = vmatpush1.msra.mxu0 0.0
    %1309 = vmatprep.subr.mxu0 0.0
    %1310 = vmatpush1.msra.mxu0 0.0
    %1311 = vmatprep.mubr.f32.mxu0 0.0
    %v1312 = vand.u32 %v779, 4294901760
    %1313 = vmatmul.mubr.f32.gmra.mrb[0].mxu0 %v1312
    %v1314 = vpop.f32.mrb[0].mxu0
    %v1315 = vadd.f32 %v1236, %v1314
    %v1316 = vpop.f32.mrb[0].mxu0
    %1317 = vdwg.mxu0
    %v1318 = vrcp.pop 512.0
    %v1319 = vmul.f32 %v775, %v1318
    %v1320 = vmul.f32 %v1315, %v1318
    %v1321 = vmul.f32 %v1319, %v1319
    %v1322 = vsub.f32 %v1320, %v1321
    %v1323 = vld [vmem:[%s1] sm:$0x1]
    %v1324 = vadd.f32 %v1322, 1e-05
    %v1325 = vrsqrt.pop %v1324
    %v1326 = vmul.f32 %v1323, %v1325
    %v1327 = vld [vmem:[#allocation3] sm:$0x1]
    %v1328 = vmul.f32 %v1319, %v1326
    %v1329 = vsub.f32 %v1327, %v1328
    %v1330 = vld [vmem:[%s14] sm:$0xf]
    %vm1331 = vcmask 31744
    %v1333 = vsel %vm1331, %v1326, 0
    %vm1335 = vcmask 1043456
    %v1337 = vsel %vm1335, %v1330, 0
    %1339 = vmatprep.subr.mxu0 0.0
    %v1340 = vand.u32 %v1337, 4294901760
    %1341 = vmatpush1.msra.mxu0 %v1340
    %1342 = vmatprep.subr.mxu0 0.0
    %1343 = vmatpush1.msra.mxu0 0.0
    %1344 = vmatprep.subr.mxu0 0.0
    %1345 = vmatpush1.msra.mxu0 0.0
    %1346 = vmatprep.subr.mxu0 0.0
    %1347 = vmatpush1.msra.mxu0 0.0
    %1348 = vmatprep.subr.mxu0 0.0
    %1349 = vmatpush1.msra.mxu0 0.0
    %1350 = vmatprep.subr.mxu0 0.0
    %1351 = vmatpush1.msra.mxu0 0.0
    %1352 = vmatprep.subr.mxu0 0.0
    %1353 = vmatpush1.msra.mxu0 0.0
    %1354 = vmatprep.subr.mxu0 0.0
    %1355 = vmatpush1.msra.mxu0 0.0
    %1356 = vmatprep.subr.mxu0 0.0
    %1357 = vmatpush1.msra.mxu0 0.0
    %1358 = vmatprep.subr.mxu0 0.0
    %1359 = vmatpush1.msra.mxu0 0.0
    %1360 = vmatprep.subr.mxu0 0.0
    %1361 = vmatpush1.msra.mxu0 0.0
    %1362 = vmatprep.subr.mxu0 0.0
    %1363 = vmatpush1.msra.mxu0 0.0
    %1364 = vmatprep.subr.mxu0 0.0
    %1365 = vmatpush1.msra.mxu0 0.0
    %1366 = vmatprep.subr.mxu0 0.0
    %1367 = vmatpush1.msra.mxu0 0.0
    %1368 = vmatprep.subr.mxu0 0.0
    %1369 = vmatpush1.msra.mxu0 0.0
    %1370 = vmatprep.subr.mxu0 0.0
    %1371 = vmatpush1.msra.mxu0 0.0
    %1372 = vmatprep.subr.mxu0 0.0
    %1373 = vmatpush1.msra.mxu0 0.0
    %1374 = vmatprep.subr.mxu0 0.0
    %1375 = vmatpush1.msra.mxu0 0.0
    %1376 = vmatprep.subr.mxu0 0.0
    %1377 = vmatpush1.msra.mxu0 0.0
    %1378 = vmatprep.subr.mxu0 0.0
    %1379 = vmatpush1.msra.mxu0 0.0
    %1380 = vmatprep.subr.mxu0 0.0
    %1381 = vmatpush1.msra.mxu0 0.0
    %1382 = vmatprep.subr.mxu0 0.0
    %1383 = vmatpush1.msra.mxu0 0.0
    %1384 = vmatprep.subr.mxu0 0.0
    %1385 = vmatpush1.msra.mxu0 0.0
    %1386 = vmatprep.subr.mxu0 0.0
    %1387 = vmatpush1.msra.mxu0 0.0
    %1388 = vmatprep.subr.mxu0 0.0
    %1389 = vmatpush1.msra.mxu0 0.0
    %1390 = vmatprep.subr.mxu0 0.0
    %1391 = vmatpush1.msra.mxu0 0.0
    %1392 = vmatprep.subr.mxu0 0.0
    %1393 = vmatpush1.msra.mxu0 0.0
    %1394 = vmatprep.subr.mxu0 0.0
    %1395 = vmatpush1.msra.mxu0 0.0
    %1396 = vmatprep.subr.mxu0 0.0
    %1397 = vmatpush1.msra.mxu0 0.0
    %1398 = vmatprep.subr.mxu0 0.0
    %1399 = vmatpush1.msra.mxu0 0.0
    %1400 = vmatprep.subr.mxu0 0.0
    %1401 = vmatpush1.msra.mxu0 0.0
    %1402 = vmatprep.subr.mxu0 0.0
    %1403 = vmatpush1.msra.mxu0 0.0
    %1404 = vmatprep.mubr.f32.mxu0 0.0
    %v1405 = vand.u32 %v1333, 4294901760
    %v1406 = vsub.f32 %v1333, %v1405
    %v1407 = vand.u32 %v1406, 4294901760
    %v1408 = vsub.f32 %v1406, %v1407
    %v1409 = vand.u32 %v1408, 4294901760
    %1410 = vmatmul.mubr.f32.gmra.mrb[0].mxu0 %v1409
    %v1411 = vpop.f32.mrb[0].mxu0
    %v1412 = vadd.f32 0.0, %v1411
    %v1413 = vpop.f32.mrb[0].mxu0
    %1414 = vdwg.mxu0
    %1415 = vmatprep.subr.mxu0 0.0
    %v1416 = vand.u32 %v1337, 4294901760
    %v1417 = vsub.f32 %v1337, %v1416
    %v1418 = vand.u32 %v1417, 4294901760
    %v1419 = vsub.f32 %v1417, %v1418
    %v1420 = vand.u32 %v1419, 4294901760
    %1421 = vmatpush1.msra.mxu0 %v1420
    %1422 = vmatprep.subr.mxu0 0.0
    %1423 = vmatpush1.msra.mxu0 0.0
    %1424 = vmatprep.subr.mxu0 0.0
    %1425 = vmatpush1.msra.mxu0 0.0
    %1426 = vmatprep.subr.mxu0 0.0
    %1427 = vmatpush1.msra.mxu0 0.0
    %1428 = vmatprep.subr.mxu0 0.0
    %1429 = vmatpush1.msra.mxu0 0.0
    %1430 = vmatprep.subr.mxu0 0.0
    %1431 = vmatpush1.msra.mxu0 0.0
    %1432 = vmatprep.subr.mxu0 0.0
    %1433 = vmatpush1.msra.mxu0 0.0
    %1434 = vmatprep.subr.mxu0 0.0
    %1435 = vmatpush1.msra.mxu0 0.0
    %1436 = vmatprep.subr.mxu0 0.0
    %1437 = vmatpush1.msra.mxu0 0.0
    %1438 = vmatprep.subr.mxu0 0.0
    %1439 = vmatpush1.msra.mxu0 0.0
    %1440 = vmatprep.subr.mxu0 0.0
    %1441 = vmatpush1.msra.mxu0 0.0
    %1442 = vmatprep.subr.mxu0 0.0
    %1443 = vmatpush1.msra.mxu0 0.0
    %1444 = vmatprep.subr.mxu0 0.0
    %1445 = vmatpush1.msra.mxu0 0.0
    %1446 = vmatprep.subr.mxu0 0.0
    %1447 = vmatpush1.msra.mxu0 0.0
    %1448 = vmatprep.subr.mxu0 0.0
    %1449 = vmatpush1.msra.mxu0 0.0
    %1450 = vmatprep.subr.mxu0 0.0
    %1451 = vmatpush1.msra.mxu0 0.0
    %1452 = vmatprep.subr.mxu0 0.0
    %1453 = vmatpush1.msra.mxu0 0.0
    %1454 = vmatprep.subr.mxu0 0.0
    %1455 = vmatpush1.msra.mxu0 0.0
    %1456 = vmatprep.subr.mxu0 0.0
    %1457 = vmatpush1.msra.mxu0 0.0
    %1458 = vmatprep.subr.mxu0 0.0
    %1459 = vmatpush1.msra.mxu0 0.0
    %1460 = vmatprep.subr.mxu0 0.0
    %1461 = vmatpush1.msra.mxu0 0.0
    %1462 = vmatprep.subr.mxu0 0.0
    %1463 = vmatpush1.msra.mxu0 0.0
    %1464 = vmatprep.subr.mxu0 0.0
    %1465 = vmatpush1.msra.mxu0 0.0
    %1466 = vmatprep.subr.mxu0 0.0
    %1467 = vmatpush1.msra.mxu0 0.0
    %1468 = vmatprep.subr.mxu0 0.0
    %1469 = vmatpush1.msra.mxu0 0.0
    %1470 = vmatprep.subr.mxu0 0.0
    %1471 = vmatpush1.msra.mxu0 0.0
    %1472 = vmatprep.subr.mxu0 0.0
    %1473 = vmatpush1.msra.mxu0 0.0
    %1474 = vmatprep.subr.mxu0 0.0
    %1475 = vmatpush1.msra.mxu0 0.0
    %1476 = vmatprep.subr.mxu0 0.0
    %1477 = vmatpush1.msra.mxu0 0.0
    %1478 = vmatprep.subr.mxu0 0.0
    %1479 = vmatpush1.msra.mxu0 0.0
    %1480 = vmatprep.subr.mxu0 0.0
    %1481 = vmatpush1.msra.mxu0 0.0
    %1482 = vmatprep.subr.mxu0 0.0
    %1483 = vmatpush1.msra.mxu0 0.0
    %1484 = vmatprep.mubr.f32.mxu0 0.0
    %v1485 = vand.u32 %v1333, 4294901760
    %1486 = vmatmul.mubr.f32.gmra.mrb[0].mxu0 %v1485
    %v1487 = vpop.f32.mrb[0].mxu0
    %v1488 = vadd.f32 %v1412, %v1487
    %v1489 = vpop.f32.mrb[0].mxu0
    %1490 = vdwg.mxu0
    %1491 = vmatprep.subr.mxu0 0.0
    %v1492 = vand.u32 %v1337, 4294901760
    %v1493 = vsub.f32 %v1337, %v1492
    %1494 = vmatpush1.msra.mxu0 %v1493
    %1495 = vmatprep.subr.mxu0 0.0
    %1496 = vmatpush1.msra.mxu0 0.0
    %1497 = vmatprep.subr.mxu0 0.0
    %1498 = vmatpush1.msra.mxu0 0.0
    %1499 = vmatprep.subr.mxu0 0.0
    %1500 = vmatpush1.msra.mxu0 0.0
    %1501 = vmatprep.subr.mxu0 0.0
    %1502 = vmatpush1.msra.mxu0 0.0
    %1503 = vmatprep.subr.mxu0 0.0
    %1504 = vmatpush1.msra.mxu0 0.0
    %1505 = vmatprep.subr.mxu0 0.0
    %1506 = vmatpush1.msra.mxu0 0.0
    %1507 = vmatprep.subr.mxu0 0.0
    %1508 = vmatpush1.msra.mxu0 0.0
    %1509 = vmatprep.subr.mxu0 0.0
    %1510 = vmatpush1.msra.mxu0 0.0
    %1511 = vmatprep.subr.mxu0 0.0
    %1512 = vmatpush1.msra.mxu0 0.0
    %1513 = vmatprep.subr.mxu0 0.0
    %1514 = vmatpush1.msra.mxu0 0.0
    %1515 = vmatprep.subr.mxu0 0.0
    %1516 = vmatpush1.msra.mxu0 0.0
    %1517 = vmatprep.subr.mxu0 0.0
    %1518 = vmatpush1.msra.mxu0 0.0
    %1519 = vmatprep.subr.mxu0 0.0
    %1520 = vmatpush1.msra.mxu0 0.0
    %1521 = vmatprep.subr.mxu0 0.0
    %1522 = vmatpush1.msra.mxu0 0.0
    %1523 = vmatprep.subr.mxu0 0.0
    %1524 = vmatpush1.msra.mxu0 0.0
    %1525 = vmatprep.subr.mxu0 0.0
    %1526 = vmatpush1.msra.mxu0 0.0
    %1527 = vmatprep.subr.mxu0 0.0
    %1528 = vmatpush1.msra.mxu0 0.0
    %1529 = vmatprep.subr.mxu0 0.0
    %1530 = vmatpush1.msra.mxu0 0.0
    %1531 = vmatprep.subr.mxu0 0.0
    %1532 = vmatpush1.msra.mxu0 0.0
    %1533 = vmatprep.subr.mxu0 0.0
    %1534 = vmatpush1.msra.mxu0 0.0
    %1535 = vmatprep.subr.mxu0 0.0
    %1536 = vmatpush1.msra.mxu0 0.0
    %1537 = vmatprep.subr.mxu0 0.0
    %1538 = vmatpush1.msra.mxu0 0.0
    %1539 = vmatprep.subr.mxu0 0.0
    %1540 = vmatpush1.msra.mxu0 0.0
    %1541 = vmatprep.subr.mxu0 0.0
    %1542 = vmatpush1.msra.mxu0 0.0
    %1543 = vmatprep.subr.mxu0 0.0
    %1544 = vmatpush1.msra.mxu0 0.0
    %1545 = vmatprep.subr.mxu0 0.0
    %1546 = vmatpush1.msra.mxu0 0.0
    %1547 = vmatprep.subr.mxu0 0.0
    %1548 = vmatpush1.msra.mxu0 0.0
    %1549 = vmatprep.subr.mxu0 0.0
    %1550 = vmatpush1.msra.mxu0 0.0
    %1551 = vmatprep.subr.mxu0 0.0
    %1552 = vmatpush1.msra.mxu0 0.0
    %1553 = vmatprep.subr.mxu0 0.0
    %1554 = vmatpush1.msra.mxu0 0.0
    %1555 = vmatprep.subr.mxu0 0.0
    %1556 = vmatpush1.msra.mxu0 0.0
    %1557 = vmatprep.mubr.f32.mxu0 0.0
    %v1558 = vand.u32 %v1333, 4294901760
    %v1559 = vsub.f32 %v1333, %v1558
    %1560 = vmatmul.mubr.f32.gmra.mrb[0].mxu0 %v1559
    %v1561 = vpop.f32.mrb[0].mxu0
    %v1562 = vadd.f32 %v1488, %v1561
    %v1563 = vpop.f32.mrb[0].mxu0
    %1564 = vdwg.mxu0
    %1565 = vmatprep.subr.mxu0 0.0
    %v1566 = vand.u32 %v1337, 4294901760
    %1567 = vmatpush1.msra.mxu0 %v1566
    %1568 = vmatprep.subr.mxu0 0.0
    %1569 = vmatpush1.msra.mxu0 0.0
    %1570 = vmatprep.subr.mxu0 0.0
    %1571 = vmatpush1.msra.mxu0 0.0
    %1572 = vmatprep.subr.mxu0 0.0
    %1573 = vmatpush1.msra.mxu0 0.0
    %1574 = vmatprep.subr.mxu0 0.0
    %1575 = vmatpush1.msra.mxu0 0.0
    %1576 = vmatprep.subr.mxu0 0.0
    %1577 = vmatpush1.msra.mxu0 0.0
    %1578 = vmatprep.subr.mxu0 0.0
    %1579 = vmatpush1.msra.mxu0 0.0
    %1580 = vmatprep.subr.mxu0 0.0
    %1581 = vmatpush1.msra.mxu0 0.0
    %1582 = vmatprep.subr.mxu0 0.0
    %1583 = vmatpush1.msra.mxu0 0.0
    %1584 = vmatprep.subr.mxu0 0.0
    %1585 = vmatpush1.msra.mxu0 0.0
    %1586 = vmatprep.subr.mxu0 0.0
    %1587 = vmatpush1.msra.mxu0 0.0
    %1588 = vmatprep.subr.mxu0 0.0
    %1589 = vmatpush1.msra.mxu0 0.0
    %1590 = vmatprep.subr.mxu0 0.0
    %1591 = vmatpush1.msra.mxu0 0.0
    %1592 = vmatprep.subr.mxu0 0.0
    %1593 = vmatpush1.msra.mxu0 0.0
    %1594 = vmatprep.subr.mxu0 0.0
    %1595 = vmatpush1.msra.mxu0 0.0
    %1596 = vmatprep.subr.mxu0 0.0
    %1597 = vmatpush1.msra.mxu0 0.0
    %1598 = vmatprep.subr.mxu0 0.0
    %1599 = vmatpush1.msra.mxu0 0.0
    %1600 = vmatprep.subr.mxu0 0.0
    %1601 = vmatpush1.msra.mxu0 0.0
    %1602 = vmatprep.subr.mxu0 0.0
    %1603 = vmatpush1.msra.mxu0 0.0
    %1604 = vmatprep.subr.mxu0 0.0
    %1605 = vmatpush1.msra.mxu0 0.0
    %1606 = vmatprep.subr.mxu0 0.0
    %1607 = vmatpush1.msra.mxu0 0.0
    %1608 = vmatprep.subr.mxu0 0.0
    %1609 = vmatpush1.msra.mxu0 0.0
    %1610 = vmatprep.subr.mxu0 0.0
    %1611 = vmatpush1.msra.mxu0 0.0
    %1612 = vmatprep.subr.mxu0 0.0
    %1613 = vmatpush1.msra.mxu0 0.0
    %1614 = vmatprep.subr.mxu0 0.0
    %1615 = vmatpush1.msra.mxu0 0.0
    %1616 = vmatprep.subr.mxu0 0.0
    %1617 = vmatpush1.msra.mxu0 0.0
    %1618 = vmatprep.subr.mxu0 0.0
    %1619 = vmatpush1.msra.mxu0 0.0
    %1620 = vmatprep.subr.mxu0 0.0
    %1621 = vmatpush1.msra.mxu0 0.0
    %1622 = vmatprep.subr.mxu0 0.0
    %1623 = vmatpush1.msra.mxu0 0.0
    %1624 = vmatprep.subr.mxu0 0.0
    %1625 = vmatpush1.msra.mxu0 0.0
    %1626 = vmatprep.subr.mxu0 0.0
    %1627 = vmatpush1.msra.mxu0 0.0
    %1628 = vmatprep.subr.mxu0 0.0
    %1629 = vmatpush1.msra.mxu0 0.0
    %1630 = vmatprep.mubr.f32.mxu0 0.0
    %v1631 = vand.u32 %v1333, 4294901760
    %v1632 = vsub.f32 %v1333, %v1631
    %v1633 = vand.u32 %v1632, 4294901760
    %1634 = vmatmul.mubr.f32.gmra.mrb[0].mxu0 %v1633
    %v1635 = vpop.f32.mrb[0].mxu0
    %v1636 = vadd.f32 %v1562, %v1635
    %v1637 = vpop.f32.mrb[0].mxu0
    %1638 = vdwg.mxu0
    %1639 = vmatprep.subr.mxu0 0.0
    %v1640 = vand.u32 %v1337, 4294901760
    %v1641 = vsub.f32 %v1337, %v1640
    %v1642 = vand.u32 %v1641, 4294901760
    %1643 = vmatpush1.msra.mxu0 %v1642
    %1644 = vmatprep.subr.mxu0 0.0
    %1645 = vmatpush1.msra.mxu0 0.0
    %1646 = vmatprep.subr.mxu0 0.0
    %1647 = vmatpush1.msra.mxu0 0.0
    %1648 = vmatprep.subr.mxu0 0.0
    %1649 = vmatpush1.msra.mxu0 0.0
    %1650 = vmatprep.subr.mxu0 0.0
    %1651 = vmatpush1.msra.mxu0 0.0
    %1652 = vmatprep.subr.mxu0 0.0
    %1653 = vmatpush1.msra.mxu0 0.0
    %1654 = vmatprep.subr.mxu0 0.0
    %1655 = vmatpush1.msra.mxu0 0.0
    %1656 = vmatprep.subr.mxu0 0.0
    %1657 = vmatpush1.msra.mxu0 0.0
    %1658 = vmatprep.subr.mxu0 0.0
    %1659 = vmatpush1.msra.mxu0 0.0
    %1660 = vmatprep.subr.mxu0 0.0
    %1661 = vmatpush1.msra.mxu0 0.0
    %1662 = vmatprep.subr.mxu0 0.0
    %1663 = vmatpush1.msra.mxu0 0.0
    %1664 = vmatprep.subr.mxu0 0.0
    %1665 = vmatpush1.msra.mxu0 0.0
    %1666 = vmatprep.subr.mxu0 0.0
    %1667 = vmatpush1.msra.mxu0 0.0
    %1668 = vmatprep.subr.mxu0 0.0
    %1669 = vmatpush1.msra.mxu0 0.0
    %1670 = vmatprep.subr.mxu0 0.0
    %1671 = vmatpush1.msra.mxu0 0.0
    %1672 = vmatprep.subr.mxu0 0.0
    %1673 = vmatpush1.msra.mxu0 0.0
    %1674 = vmatprep.subr.mxu0 0.0
    %1675 = vmatpush1.msra.mxu0 0.0
    %1676 = vmatprep.subr.mxu0 0.0
    %1677 = vmatpush1.msra.mxu0 0.0
    %1678 = vmatprep.subr.mxu0 0.0
    %1679 = vmatpush1.msra.mxu0 0.0
    %1680 = vmatprep.subr.mxu0 0.0
    %1681 = vmatpush1.msra.mxu0 0.0
    %1682 = vmatprep.subr.mxu0 0.0
    %1683 = vmatpush1.msra.mxu0 0.0
    %1684 = vmatprep.subr.mxu0 0.0
    %1685 = vmatpush1.msra.mxu0 0.0
    %1686 = vmatprep.subr.mxu0 0.0
    %1687 = vmatpush1.msra.mxu0 0.0
    %1688 = vmatprep.subr.mxu0 0.0
    %1689 = vmatpush1.msra.mxu0 0.0
    %1690 = vmatprep.subr.mxu0 0.0
    %1691 = vmatpush1.msra.mxu0 0.0
    %1692 = vmatprep.subr.mxu0 0.0
    %1693 = vmatpush1.msra.mxu0 0.0
    %1694 = vmatprep.subr.mxu0 0.0
    %1695 = vmatpush1.msra.mxu0 0.0
    %1696 = vmatprep.subr.mxu0 0.0
    %1697 = vmatpush1.msra.mxu0 0.0
    %1698 = vmatprep.subr.mxu0 0.0
    %1699 = vmatpush1.msra.mxu0 0.0
    %1700 = vmatprep.subr.mxu0 0.0
    %1701 = vmatpush1.msra.mxu0 0.0
    %1702 = vmatprep.subr.mxu0 0.0
    %1703 = vmatpush1.msra.mxu0 0.0
    %1704 = vmatprep.subr.mxu0 0.0
    %1705 = vmatpush1.msra.mxu0 0.0
    %1706 = vmatprep.mubr.f32.mxu0 0.0
    %v1707 = vand.u32 %v1333, 4294901760
    %1708 = vmatmul.mubr.f32.gmra.mrb[0].mxu0 %v1707
    %v1709 = vpop.f32.mrb[0].mxu0
    %v1710 = vadd.f32 %v1636, %v1709
    %v1711 = vpop.f32.mrb[0].mxu0
    %1712 = vdwg.mxu0
    %1713 = vmatprep.subr.mxu0 0.0
    %v1714 = vand.u32 %v1337, 4294901760
    %1715 = vmatpush1.msra.mxu0 %v1714
    %1716 = vmatprep.subr.mxu0 0.0
    %1717 = vmatpush1.msra.mxu0 0.0
    %1718 = vmatprep.subr.mxu0 0.0
    %1719 = vmatpush1.msra.mxu0 0.0
    %1720 = vmatprep.subr.mxu0 0.0
    %1721 = vmatpush1.msra.mxu0 0.0
    %1722 = vmatprep.subr.mxu0 0.0
    %1723 = vmatpush1.msra.mxu0 0.0
    %1724 = vmatprep.subr.mxu0 0.0
    %1725 = vmatpush1.msra.mxu0 0.0
    %1726 = vmatprep.subr.mxu0 0.0
    %1727 = vmatpush1.msra.mxu0 0.0
    %1728 = vmatprep.subr.mxu0 0.0
    %1729 = vmatpush1.msra.mxu0 0.0
    %1730 = vmatprep.subr.mxu0 0.0
    %1731 = vmatpush1.msra.mxu0 0.0
    %1732 = vmatprep.subr.mxu0 0.0
    %1733 = vmatpush1.msra.mxu0 0.0
    %1734 = vmatprep.subr.mxu0 0.0
    %1735 = vmatpush1.msra.mxu0 0.0
    %1736 = vmatprep.subr.mxu0 0.0
    %1737 = vmatpush1.msra.mxu0 0.0
    %1738 = vmatprep.subr.mxu0 0.0
    %1739 = vmatpush1.msra.mxu0 0.0
    %1740 = vmatprep.subr.mxu0 0.0
    %1741 = vmatpush1.msra.mxu0 0.0
    %1742 = vmatprep.subr.mxu0 0.0
    %1743 = vmatpush1.msra.mxu0 0.0
    %1744 = vmatprep.subr.mxu0 0.0
    %1745 = vmatpush1.msra.mxu0 0.0
    %1746 = vmatprep.subr.mxu0 0.0
    %1747 = vmatpush1.msra.mxu0 0.0
    %1748 = vmatprep.subr.mxu0 0.0
    %1749 = vmatpush1.msra.mxu0 0.0
    %1750 = vmatprep.subr.mxu0 0.0
    %1751 = vmatpush1.msra.mxu0 0.0
    %1752 = vmatprep.subr.mxu0 0.0
    %1753 = vmatpush1.msra.mxu0 0.0
    %1754 = vmatprep.subr.mxu0 0.0
    %1755 = vmatpush1.msra.mxu0 0.0
    %1756 = vmatprep.subr.mxu0 0.0
    %1757 = vmatpush1.msra.mxu0 0.0
    %1758 = vmatprep.subr.mxu0 0.0
    %1759 = vmatpush1.msra.mxu0 0.0
    %1760 = vmatprep.subr.mxu0 0.0
    %1761 = vmatpush1.msra.mxu0 0.0
    %1762 = vmatprep.subr.mxu0 0.0
    %1763 = vmatpush1.msra.mxu0 0.0
    %1764 = vmatprep.subr.mxu0 0.0
    %1765 = vmatpush1.msra.mxu0 0.0
    %1766 = vmatprep.subr.mxu0 0.0
    %1767 = vmatpush1.msra.mxu0 0.0
    %1768 = vmatprep.subr.mxu0 0.0
    %1769 = vmatpush1.msra.mxu0 0.0
    %1770 = vmatprep.subr.mxu0 0.0
    %1771 = vmatpush1.msra.mxu0 0.0
    %1772 = vmatprep.subr.mxu0 0.0
    %1773 = vmatpush1.msra.mxu0 0.0
    %1774 = vmatprep.subr.mxu0 0.0
    %1775 = vmatpush1.msra.mxu0 0.0
    %1776 = vmatprep.subr.mxu0 0.0
    %1777 = vmatpush1.msra.mxu0 0.0
    %1778 = vmatprep.mubr.f32.mxu0 0.0
    %v1779 = vand.u32 %v1333, 4294901760
    %1780 = vmatmul.mubr.f32.gmra.mrb[0].mxu0 %v1779
    %v1781 = vpop.f32.mrb[0].mxu0
    %v1782 = vadd.f32 %v1710, %v1781
    %v1783 = vpop.f32.mrb[0].mxu0
    %1784 = vdwg.mxu0
    %v1786 = vsel %vm1331, %v1329, 0
    %1788 = vmatprep.subr.mxu0 0.0
    %v1789 = vand.u32 %v1337, 4294901760
    %1790 = vmatpush1.msra.mxu0 %v1789
    %1791 = vmatprep.subr.mxu0 0.0
    %1792 = vmatpush1.msra.mxu0 0.0
    %1793 = vmatprep.subr.mxu0 0.0
    %1794 = vmatpush1.msra.mxu0 0.0
    %1795 = vmatprep.subr.mxu0 0.0
    %1796 = vmatpush1.msra.mxu0 0.0
    %1797 = vmatprep.subr.mxu0 0.0
    %1798 = vmatpush1.msra.mxu0 0.0
    %1799 = vmatprep.subr.mxu0 0.0
    %1800 = vmatpush1.msra.mxu0 0.0
    %1801 = vmatprep.subr.mxu0 0.0
    %1802 = vmatpush1.msra.mxu0 0.0
    %1803 = vmatprep.subr.mxu0 0.0
    %1804 = vmatpush1.msra.mxu0 0.0
    %1805 = vmatprep.subr.mxu0 0.0
    %1806 = vmatpush1.msra.mxu0 0.0
    %1807 = vmatprep.subr.mxu0 0.0
    %1808 = vmatpush1.msra.mxu0 0.0
    %1809 = vmatprep.subr.mxu0 0.0
    %1810 = vmatpush1.msra.mxu0 0.0
    %1811 = vmatprep.subr.mxu0 0.0
    %1812 = vmatpush1.msra.mxu0 0.0
    %1813 = vmatprep.subr.mxu0 0.0
    %1814 = vmatpush1.msra.mxu0 0.0
    %1815 = vmatprep.subr.mxu0 0.0
    %1816 = vmatpush1.msra.mxu0 0.0
    %1817 = vmatprep.subr.mxu0 0.0
    %1818 = vmatpush1.msra.mxu0 0.0
    %1819 = vmatprep.subr.mxu0 0.0
    %1820 = vmatpush1.msra.mxu0 0.0
    %1821 = vmatprep.subr.mxu0 0.0
    %1822 = vmatpush1.msra.mxu0 0.0
    %1823 = vmatprep.subr.mxu0 0.0
    %1824 = vmatpush1.msra.mxu0 0.0
    %1825 = vmatprep.subr.mxu0 0.0
    %1826 = vmatpush1.msra.mxu0 0.0
    %1827 = vmatprep.subr.mxu0 0.0
    %1828 = vmatpush1.msra.mxu0 0.0
    %1829 = vmatprep.subr.mxu0 0.0
    %1830 = vmatpush1.msra.mxu0 0.0
    %1831 = vmatprep.subr.mxu0 0.0
    %1832 = vmatpush1.msra.mxu0 0.0
    %1833 = vmatprep.subr.mxu0 0.0
    %1834 = vmatpush1.msra.mxu0 0.0
    %1835 = vmatprep.subr.mxu0 0.0
    %1836 = vmatpush1.msra.mxu0 0.0
    %1837 = vmatprep.subr.mxu0 0.0
    %1838 = vmatpush1.msra.mxu0 0.0
    %1839 = vmatprep.subr.mxu0 0.0
    %1840 = vmatpush1.msra.mxu0 0.0
    %1841 = vmatprep.subr.mxu0 0.0
    %1842 = vmatpush1.msra.mxu0 0.0
    %1843 = vmatprep.subr.mxu0 0.0
    %1844 = vmatpush1.msra.mxu0 0.0
    %1845 = vmatprep.subr.mxu0 0.0
    %1846 = vmatpush1.msra.mxu0 0.0
    %1847 = vmatprep.subr.mxu0 0.0
    %1848 = vmatpush1.msra.mxu0 0.0
    %1849 = vmatprep.subr.mxu0 0.0
    %1850 = vmatpush1.msra.mxu0 0.0
    %1851 = vmatprep.subr.mxu0 0.0
    %1852 = vmatpush1.msra.mxu0 0.0
    %1853 = vmatprep.mubr.f32.mxu0 0.0
    %v1854 = vand.u32 %v1786, 4294901760
    %v1855 = vsub.f32 %v1786, %v1854
    %v1856 = vand.u32 %v1855, 4294901760
    %v1857 = vsub.f32 %v1855, %v1856
    %v1858 = vand.u32 %v1857, 4294901760
    %1859 = vmatmul.mubr.f32.gmra.mrb[0].mxu0 %v1858
    %v1860 = vpop.f32.mrb[0].mxu0
    %v1861 = vadd.f32 0.0, %v1860
    %v1862 = vpop.f32.mrb[0].mxu0
    %1863 = vdwg.mxu0
    %1864 = vmatprep.subr.mxu0 0.0
    %v1865 = vand.u32 %v1337, 4294901760
    %v1866 = vsub.f32 %v1337, %v1865
    %v1867 = vand.u32 %v1866, 4294901760
    %v1868 = vsub.f32 %v1866, %v1867
    %v1869 = vand.u32 %v1868, 4294901760
    %1870 = vmatpush1.msra.mxu0 %v1869
    %1871 = vmatprep.subr.mxu0 0.0
    %1872 = vmatpush1.msra.mxu0 0.0
    %1873 = vmatprep.subr.mxu0 0.0
    %1874 = vmatpush1.msra.mxu0 0.0
    %1875 = vmatprep.subr.mxu0 0.0
    %1876 = vmatpush1.msra.mxu0 0.0
    %1877 = vmatprep.subr.mxu0 0.0
    %1878 = vmatpush1.msra.mxu0 0.0
    %1879 = vmatprep.subr.mxu0 0.0
    %1880 = vmatpush1.msra.mxu0 0.0
    %1881 = vmatprep.subr.mxu0 0.0
    %1882 = vmatpush1.msra.mxu0 0.0
    %1883 = vmatprep.subr.mxu0 0.0
    %1884 = vmatpush1.msra.mxu0 0.0
    %1885 = vmatprep.subr.mxu0 0.0
    %1886 = vmatpush1.msra.mxu0 0.0
    %1887 = vmatprep.subr.mxu0 0.0
    %1888 = vmatpush1.msra.mxu0 0.0
    %1889 = vmatprep.subr.mxu0 0.0
    %1890 = vmatpush1.msra.mxu0 0.0
    %1891 = vmatprep.subr.mxu0 0.0
    %1892 = vmatpush1.msra.mxu0 0.0
    %1893 = vmatprep.subr.mxu0 0.0
    %1894 = vmatpush1.msra.mxu0 0.0
    %1895 = vmatprep.subr.mxu0 0.0
    %1896 = vmatpush1.msra.mxu0 0.0
    %1897 = vmatprep.subr.mxu0 0.0
    %1898 = vmatpush1.msra.mxu0 0.0
    %1899 = vmatprep.subr.mxu0 0.0
    %1900 = vmatpush1.msra.mxu0 0.0
    %1901 = vmatprep.subr.mxu0 0.0
    %1902 = vmatpush1.msra.mxu0 0.0
    %1903 = vmatprep.subr.mxu0 0.0
    %1904 = vmatpush1.msra.mxu0 0.0
    %1905 = vmatprep.subr.mxu0 0.0
    %1906 = vmatpush1.msra.mxu0 0.0
    %1907 = vmatprep.subr.mxu0 0.0
    %1908 = vmatpush1.msra.mxu0 0.0
    %1909 = vmatprep.subr.mxu0 0.0
    %1910 = vmatpush1.msra.mxu0 0.0
    %1911 = vmatprep.subr.mxu0 0.0
    %1912 = vmatpush1.msra.mxu0 0.0
    %1913 = vmatprep.subr.mxu0 0.0
    %1914 = vmatpush1.msra.mxu0 0.0
    %1915 = vmatprep.subr.mxu0 0.0
    %1916 = vmatpush1.msra.mxu0 0.0
    %1917 = vmatprep.subr.mxu0 0.0
    %1918 = vmatpush1.msra.mxu0 0.0
    %1919 = vmatprep.subr.mxu0 0.0
    %1920 = vmatpush1.msra.mxu0 0.0
    %1921 = vmatprep.subr.mxu0 0.0
    %1922 = vmatpush1.msra.mxu0 0.0
    %1923 = vmatprep.subr.mxu0 0.0
    %1924 = vmatpush1.msra.mxu0 0.0
    %1925 = vmatprep.subr.mxu0 0.0
    %1926 = vmatpush1.msra.mxu0 0.0
    %1927 = vmatprep.subr.mxu0 0.0
    %1928 = vmatpush1.msra.mxu0 0.0
    %1929 = vmatprep.subr.mxu0 0.0
    %1930 = vmatpush1.msra.mxu0 0.0
    %1931 = vmatprep.subr.mxu0 0.0
    %1932 = vmatpush1.msra.mxu0 0.0
    %1933 = vmatprep.mubr.f32.mxu0 0.0
    %v1934 = vand.u32 %v1786, 4294901760
    %1935 = vmatmul.mubr.f32.gmra.mrb[0].mxu0 %v1934
    %v1936 = vpop.f32.mrb[0].mxu0
    %v1937 = vadd.f32 %v1861, %v1936
    %v1938 = vpop.f32.mrb[0].mxu0
    %1939 = vdwg.mxu0
    %1940 = vmatprep.subr.mxu0 0.0
    %v1941 = vand.u32 %v1337, 4294901760
    %v1942 = vsub.f32 %v1337, %v1941
    %1943 = vmatpush1.msra.mxu0 %v1942
    %1944 = vmatprep.subr.mxu0 0.0
    %1945 = vmatpush1.msra.mxu0 0.0
    %1946 = vmatprep.subr.mxu0 0.0
    %1947 = vmatpush1.msra.mxu0 0.0
    %1948 = vmatprep.subr.mxu0 0.0
    %1949 = vmatpush1.msra.mxu0 0.0
    %1950 = vmatprep.subr.mxu0 0.0
    %1951 = vmatpush1.msra.mxu0 0.0
    %1952 = vmatprep.subr.mxu0 0.0
    %1953 = vmatpush1.msra.mxu0 0.0
    %1954 = vmatprep.subr.mxu0 0.0
    %1955 = vmatpush1.msra.mxu0 0.0
    %1956 = vmatprep.subr.mxu0 0.0
    %1957 = vmatpush1.msra.mxu0 0.0
    %1958 = vmatprep.subr.mxu0 0.0
    %1959 = vmatpush1.msra.mxu0 0.0
    %1960 = vmatprep.subr.mxu0 0.0
    %1961 = vmatpush1.msra.mxu0 0.0
    %1962 = vmatprep.subr.mxu0 0.0
    %1963 = vmatpush1.msra.mxu0 0.0
    %1964 = vmatprep.subr.mxu0 0.0
    %1965 = vmatpush1.msra.mxu0 0.0
    %1966 = vmatprep.subr.mxu0 0.0
    %1967 = vmatpush1.msra.mxu0 0.0
    %1968 = vmatprep.subr.mxu0 0.0
    %1969 = vmatpush1.msra.mxu0 0.0
    %1970 = vmatprep.subr.mxu0 0.0
    %1971 = vmatpush1.msra.mxu0 0.0
    %1972 = vmatprep.subr.mxu0 0.0
    %1973 = vmatpush1.msra.mxu0 0.0
    %1974 = vmatprep.subr.mxu0 0.0
    %1975 = vmatpush1.msra.mxu0 0.0
    %1976 = vmatprep.subr.mxu0 0.0
    %1977 = vmatpush1.msra.mxu0 0.0
    %1978 = vmatprep.subr.mxu0 0.0
    %1979 = vmatpush1.msra.mxu0 0.0
    %1980 = vmatprep.subr.mxu0 0.0
    %1981 = vmatpush1.msra.mxu0 0.0
    %1982 = vmatprep.subr.mxu0 0.0
    %1983 = vmatpush1.msra.mxu0 0.0
    %1984 = vmatprep.subr.mxu0 0.0
    %1985 = vmatpush1.msra.mxu0 0.0
    %1986 = vmatprep.subr.mxu0 0.0
    %1987 = vmatpush1.msra.mxu0 0.0
    %1988 = vmatprep.subr.mxu0 0.0
    %1989 = vmatpush1.msra.mxu0 0.0
    %1990 = vmatprep.subr.mxu0 0.0
    %1991 = vmatpush1.msra.mxu0 0.0
    %1992 = vmatprep.subr.mxu0 0.0
    %1993 = vmatpush1.msra.mxu0 0.0
    %1994 = vmatprep.subr.mxu0 0.0
    %1995 = vmatpush1.msra.mxu0 0.0
    %1996 = vmatprep.subr.mxu0 0.0
    %1997 = vmatpush1.msra.mxu0 0.0
    %1998 = vmatprep.subr.mxu0 0.0
    %1999 = vmatpush1.msra.mxu0 0.0
    %2000 = vmatprep.subr.mxu0 0.0
    %2001 = vmatpush1.msra.mxu0 0.0
    %2002 = vmatprep.subr.mxu0 0.0
    %2003 = vmatpush1.msra.mxu0 0.0
    %2004 = vmatprep.subr.mxu0 0.0
    %2005 = vmatpush1.msra.mxu0 0.0
    %2006 = vmatprep.mubr.f32.mxu0 0.0
    %v2007 = vand.u32 %v1786, 4294901760
    %v2008 = vsub.f32 %v1786, %v2007
    %2009 = vmatmul.mubr.f32.gmra.mrb[0].mxu0 %v2008
    %v2010 = vpop.f32.mrb[0].mxu0
    %v2011 = vadd.f32 %v1937, %v2010
    %v2012 = vpop.f32.mrb[0].mxu0
    %2013 = vdwg.mxu0
    %2014 = vmatprep.subr.mxu0 0.0
    %v2015 = vand.u32 %v1337, 4294901760
    %2016 = vmatpush1.msra.mxu0 %v2015
    %2017 = vmatprep.subr.mxu0 0.0
    %2018 = vmatpush1.msra.mxu0 0.0
    %2019 = vmatprep.subr.mxu0 0.0
    %2020 = vmatpush1.msra.mxu0 0.0
    %2021 = vmatprep.subr.mxu0 0.0
    %2022 = vmatpush1.msra.mxu0 0.0
    %2023 = vmatprep.subr.mxu0 0.0
    %2024 = vmatpush1.msra.mxu0 0.0
    %2025 = vmatprep.subr.mxu0 0.0
    %2026 = vmatpush1.msra.mxu0 0.0
    %2027 = vmatprep.subr.mxu0 0.0
    %2028 = vmatpush1.msra.mxu0 0.0
    %2029 = vmatprep.subr.mxu0 0.0
    %2030 = vmatpush1.msra.mxu0 0.0
    %2031 = vmatprep.subr.mxu0 0.0
    %2032 = vmatpush1.msra.mxu0 0.0
    %2033 = vmatprep.subr.mxu0 0.0
    %2034 = vmatpush1.msra.mxu0 0.0
    %2035 = vmatprep.subr.mxu0 0.0
    %2036 = vmatpush1.msra.mxu0 0.0
    %2037 = vmatprep.subr.mxu0 0.0
    %2038 = vmatpush1.msra.mxu0 0.0
    %2039 = vmatprep.subr.mxu0 0.0
    %2040 = vmatpush1.msra.mxu0 0.0
    %2041 = vmatprep.subr.mxu0 0.0
    %2042 = vmatpush1.msra.mxu0 0.0
    %2043 = vmatprep.subr.mxu0 0.0
    %2044 = vmatpush1.msra.mxu0 0.0
    %2045 = vmatprep.subr.mxu0 0.0
    %2046 = vmatpush1.msra.mxu0 0.0
    %2047 = vmatprep.subr.mxu0 0.0
    %2048 = vmatpush1.msra.mxu0 0.0
    %2049 = vmatprep.subr.mxu0 0.0
    %2050 = vmatpush1.msra.mxu0 0.0
    %2051 = vmatprep.subr.mxu0 0.0
    %2052 = vmatpush1.msra.mxu0 0.0
    %2053 = vmatprep.subr.mxu0 0.0
    %2054 = vmatpush1.msra.mxu0 0.0
    %2055 = vmatprep.subr.mxu0 0.0
    %2056 = vmatpush1.msra.mxu0 0.0
    %2057 = vmatprep.subr.mxu0 0.0
    %2058 = vmatpush1.msra.mxu0 0.0
    %2059 = vmatprep.subr.mxu0 0.0
    %2060 = vmatpush1.msra.mxu0 0.0
    %2061 = vmatprep.subr.mxu0 0.0
    %2062 = vmatpush1.msra.mxu0 0.0
    %2063 = vmatprep.subr.mxu0 0.0
    %2064 = vmatpush1.msra.mxu0 0.0
    %2065 = vmatprep.subr.mxu0 0.0
    %2066 = vmatpush1.msra.mxu0 0.0
    %2067 = vmatprep.subr.mxu0 0.0
    %2068 = vmatpush1.msra.mxu0 0.0
    %2069 = vmatprep.subr.mxu0 0.0
    %2070 = vmatpush1.msra.mxu0 0.0
    %2071 = vmatprep.subr.mxu0 0.0
    %2072 = vmatpush1.msra.mxu0 0.0
    %2073 = vmatprep.subr.mxu0 0.0
    %2074 = vmatpush1.msra.mxu0 0.0
    %2075 = vmatprep.subr.mxu0 0.0
    %2076 = vmatpush1.msra.mxu0 0.0
    %2077 = vmatprep.subr.mxu0 0.0
    %2078 = vmatpush1.msra.mxu0 0.0
    %2079 = vmatprep.mubr.f32.mxu0 0.0
    %v2080 = vand.u32 %v1786, 4294901760
    %v2081 = vsub.f32 %v1786, %v2080
    %v2082 = vand.u32 %v2081, 4294901760
    %2083 = vmatmul.mubr.f32.gmra.mrb[0].mxu0 %v2082
    %v2084 = vpop.f32.mrb[0].mxu0
    %v2085 = vadd.f32 %v2011, %v2084
    %v2086 = vpop.f32.mrb[0].mxu0
    %2087 = vdwg.mxu0
    %2088 = vmatprep.subr.mxu0 0.0
    %v2089 = vand.u32 %v1337, 4294901760
    %v2090 = vsub.f32 %v1337, %v2089
    %v2091 = vand.u32 %v2090, 4294901760
    %2092 = vmatpush1.msra.mxu0 %v2091
    %2093 = vmatprep.subr.mxu0 0.0
    %2094 = vmatpush1.msra.mxu0 0.0
    %2095 = vmatprep.subr.mxu0 0.0
    %2096 = vmatpush1.msra.mxu0 0.0
    %2097 = vmatprep.subr.mxu0 0.0
    %2098 = vmatpush1.msra.mxu0 0.0
    %2099 = vmatprep.subr.mxu0 0.0
    %2100 = vmatpush1.msra.mxu0 0.0
    %2101 = vmatprep.subr.mxu0 0.0
    %2102 = vmatpush1.msra.mxu0 0.0
    %2103 = vmatprep.subr.mxu0 0.0
    %2104 = vmatpush1.msra.mxu0 0.0
    %2105 = vmatprep.subr.mxu0 0.0
    %2106 = vmatpush1.msra.mxu0 0.0
    %2107 = vmatprep.subr.mxu0 0.0
    %2108 = vmatpush1.msra.mxu0 0.0
    %2109 = vmatprep.subr.mxu0 0.0
    %2110 = vmatpush1.msra.mxu0 0.0
    %2111 = vmatprep.subr.mxu0 0.0
    %2112 = vmatpush1.msra.mxu0 0.0
    %2113 = vmatprep.subr.mxu0 0.0
    %2114 = vmatpush1.msra.mxu0 0.0
    %2115 = vmatprep.subr.mxu0 0.0
    %2116 = vmatpush1.msra.mxu0 0.0
    %2117 = vmatprep.subr.mxu0 0.0
    %2118 = vmatpush1.msra.mxu0 0.0
    %2119 = vmatprep.subr.mxu0 0.0
    %2120 = vmatpush1.msra.mxu0 0.0
    %2121 = vmatprep.subr.mxu0 0.0
    %2122 = vmatpush1.msra.mxu0 0.0
    %2123 = vmatprep.subr.mxu0 0.0
    %2124 = vmatpush1.msra.mxu0 0.0
    %2125 = vmatprep.subr.mxu0 0.0
    %2126 = vmatpush1.msra.mxu0 0.0
    %2127 = vmatprep.subr.mxu0 0.0
    %2128 = vmatpush1.msra.mxu0 0.0
    %2129 = vmatprep.subr.mxu0 0.0
    %2130 = vmatpush1.msra.mxu0 0.0
    %2131 = vmatprep.subr.mxu0 0.0
    %2132 = vmatpush1.msra.mxu0 0.0
    %2133 = vmatprep.subr.mxu0 0.0
    %2134 = vmatpush1.msra.mxu0 0.0
    %2135 = vmatprep.subr.mxu0 0.0
    %2136 = vmatpush1.msra.mxu0 0.0
    %2137 = vmatprep.subr.mxu0 0.0
    %2138 = vmatpush1.msra.mxu0 0.0
    %2139 = vmatprep.subr.mxu0 0.0
    %2140 = vmatpush1.msra.mxu0 0.0
    %2141 = vmatprep.subr.mxu0 0.0
    %2142 = vmatpush1.msra.mxu0 0.0
    %2143 = vmatprep.subr.mxu0 0.0
    %2144 = vmatpush1.msra.mxu0 0.0
    %2145 = vmatprep.subr.mxu0 0.0
    %2146 = vmatpush1.msra.mxu0 0.0
    %2147 = vmatprep.subr.mxu0 0.0
    %2148 = vmatpush1.msra.mxu0 0.0
    %2149 = vmatprep.subr.mxu0 0.0
    %2150 = vmatpush1.msra.mxu0 0.0
    %2151 = vmatprep.subr.mxu0 0.0
    %2152 = vmatpush1.msra.mxu0 0.0
    %2153 = vmatprep.subr.mxu0 0.0
    %2154 = vmatpush1.msra.mxu0 0.0
    %2155 = vmatprep.mubr.f32.mxu0 0.0
    %v2156 = vand.u32 %v1786, 4294901760
    %2157 = vmatmul.mubr.f32.gmra.mrb[0].mxu0 %v2156
    %v2158 = vpop.f32.mrb[0].mxu0
    %v2159 = vadd.f32 %v2085, %v2158
    %v2160 = vpop.f32.mrb[0].mxu0
    %2161 = vdwg.mxu0
    %2162 = vmatprep.subr.mxu0 0.0
    %v2163 = vand.u32 %v1337, 4294901760
    %2164 = vmatpush1.msra.mxu0 %v2163
    %2165 = vmatprep.subr.mxu0 0.0
    %2166 = vmatpush1.msra.mxu0 0.0
    %2167 = vmatprep.subr.mxu0 0.0
    %2168 = vmatpush1.msra.mxu0 0.0
    %2169 = vmatprep.subr.mxu0 0.0
    %2170 = vmatpush1.msra.mxu0 0.0
    %2171 = vmatprep.subr.mxu0 0.0
    %2172 = vmatpush1.msra.mxu0 0.0
    %2173 = vmatprep.subr.mxu0 0.0
    %2174 = vmatpush1.msra.mxu0 0.0
    %2175 = vmatprep.subr.mxu0 0.0
    %2176 = vmatpush1.msra.mxu0 0.0
    %2177 = vmatprep.subr.mxu0 0.0
    %2178 = vmatpush1.msra.mxu0 0.0
    %2179 = vmatprep.subr.mxu0 0.0
    %2180 = vmatpush1.msra.mxu0 0.0
    %2181 = vmatprep.subr.mxu0 0.0
    %2182 = vmatpush1.msra.mxu0 0.0
    %2183 = vmatprep.subr.mxu0 0.0
    %2184 = vmatpush1.msra.mxu0 0.0
    %2185 = vmatprep.subr.mxu0 0.0
    %2186 = vmatpush1.msra.mxu0 0.0
    %2187 = vmatprep.subr.mxu0 0.0
    %2188 = vmatpush1.msra.mxu0 0.0
    %2189 = vmatprep.subr.mxu0 0.0
    %2190 = vmatpush1.msra.mxu0 0.0
    %2191 = vmatprep.subr.mxu0 0.0
    %2192 = vmatpush1.msra.mxu0 0.0
    %2193 = vmatprep.subr.mxu0 0.0
    %2194 = vmatpush1.msra.mxu0 0.0
    %2195 = vmatprep.subr.mxu0 0.0
    %2196 = vmatpush1.msra.mxu0 0.0
    %2197 = vmatprep.subr.mxu0 0.0
    %2198 = vmatpush1.msra.mxu0 0.0
    %2199 = vmatprep.subr.mxu0 0.0
    %2200 = vmatpush1.msra.mxu0 0.0
    %2201 = vmatprep.subr.mxu0 0.0
    %2202 = vmatpush1.msra.mxu0 0.0
    %2203 = vmatprep.subr.mxu0 0.0
    %2204 = vmatpush1.msra.mxu0 0.0
    %2205 = vmatprep.subr.mxu0 0.0
    %2206 = vmatpush1.msra.mxu0 0.0
    %2207 = vmatprep.subr.mxu0 0.0
    %2208 = vmatpush1.msra.mxu0 0.0
    %2209 = vmatprep.subr.mxu0 0.0
    %2210 = vmatpush1.msra.mxu0 0.0
    %2211 = vmatprep.subr.mxu0 0.0
    %2212 = vmatpush1.msra.mxu0 0.0
    %2213 = vmatprep.subr.mxu0 0.0
    %2214 = vmatpush1.msra.mxu0 0.0
    %2215 = vmatprep.subr.mxu0 0.0
    %2216 = vmatpush1.msra.mxu0 0.0
    %2217 = vmatprep.subr.mxu0 0.0
    %2218 = vmatpush1.msra.mxu0 0.0
    %2219 = vmatprep.subr.mxu0 0.0
    %2220 = vmatpush1.msra.mxu0 0.0
    %2221 = vmatprep.subr.mxu0 0.0
    %2222 = vmatpush1.msra.mxu0 0.0
    %2223 = vmatprep.subr.mxu0 0.0
    %2224 = vmatpush1.msra.mxu0 0.0
    %2225 = vmatprep.subr.mxu0 0.0
    %2226 = vmatpush1.msra.mxu0 0.0
    %2227 = vmatprep.mubr.f32.mxu0 0.0
    %v2228 = vand.u32 %v1786, 4294901760
    %2229 = vmatmul.mubr.f32.gmra.mrb[0].mxu0 %v2228
    %v2230 = vpop.f32.mrb[0].mxu0
    %v2231 = vadd.f32 %v2159, %v2230
    %v2232 = vpop.f32.mrb[0].mxu0
    %2233 = vdwg.mxu0
    %v2234 = vlaneseq
    %v2235 = vshrl.u32 %v2234, 7
    %v2236 = vsub.s32 0, %v2235
    %v2237 = vrot.slane %v1782, %v2236
    %v2238 = vmul.f32 %v178, %v2237
    %v2239 = vmul.f32 %v179, %v2237
    %v2240 = vmul.f32 %v180, %v2237
    %v2241 = vmul.f32 %v181, %v2237
    %v2242 = vlaneseq
    %v2243 = vshrl.u32 %v2242, 7
    %v2244 = vsub.s32 0, %v2243
    %v2245 = vrot.slane %v2231, %v2244
    %v2246 = vadd.f32 %v2238, %v2245
    %v2247 = vadd.f32 %v2239, %v2245
    %v2248 = vadd.f32 %v2240, %v2245
    %v2249 = vadd.f32 %v2241, %v2245
    %v2250 = vpack.c.bf16 %v2247, %v2246
    %v2251 = vpack.c.bf16 %v2249, %v2248
    %v2254 = vunpack.c.l.b16 %v2250
    %v2255 = vunpack.c.h.b16 %v2250
    %v2256 = vunpack.c.l.b16 %v2251
    %v2257 = vunpack.c.h.b16 %v2251
    %v2258 = vpack.c.b16 %v2254, %v2254
    %v2259 = vpack.c.b16 %v2255, %v2255
    %v2260 = vpack.c.b16 %v2256, %v2256
    %v2261 = vpack.c.b16 %v2257, %v2257
    %vm2262 = vsmask.f32 4368
    %vm2263 = vmor %vm183, %vm2262
    %v2265 = vshrl.u32 %v2258, 16
    %v2267 = vrot.slane %v2265, 7
    %v2268 = vshll.u32 %v2258, 16
    %v2270 = vor.u32 %v2267, %v2268
    %v2271 = vrot.slane %v2267, 4
    %v2273 = vshrl.u32 %v2259, 16
    %v2275 = vrot.slane %v2273, 7
    %v2276 = vshll.u32 %v2259, 16
    %v2278 = vor.u32 %v2275, %v2276
    %v2279 = vsel %vm2263, %v2271, %v2278
    %v2280 = vrot.slane %v2275, 4
    %v2282 = vshrl.u32 %v2260, 16
    %v2284 = vrot.slane %v2282, 7
    %v2285 = vshll.u32 %v2260, 16
    %v2287 = vor.u32 %v2284, %v2285
    %v2288 = vrot.slane %v2284, 4
    %v2290 = vshrl.u32 %v2261, 16
    %v2292 = vrot.slane %v2290, 7
    %v2293 = vshll.u32 %v2261, 16
    %v2295 = vor.u32 %v2292, %v2293
    %v2296 = vsel %vm2263, %v2288, %v2295
    %v2297 = vrot.slane %v2292, 4
    %vm2304 = vcmask 519168
    %vm2305 = vmand %vm2304, %vm191
    %v2306 = vld [vmem:[#allocation2] sm:$0xf]
    %v2307 = vsel %vm2305, %v2270, %v2306
    %2308 = vst [vmem:[#allocation2] sm:$0xf] %v2307
    %vm2309 = vcmask 519168
    %2310 = vst.msk [vmem:[#allocation2 + $0x4] sm:$0xf] %vm2309, %v2279
    %vm2311 = vcmask 516096
    %vm2312 = vmand %vm2311, %vm183
    %v2313 = vld [vmem:[#allocation2 + $0x8] sm:$0x1]
    %v2314 = vsel %vm2312, %v2280, %v2313
    %2315 = vst [vmem:[#allocation2 + $0x8] sm:$0x1] %v2314
    %v2316 = vld [vmem:[#allocation2 + $0xc] sm:$0xf]
    %v2317 = vsel %vm2305, %v2287, %v2316
    %2318 = vst [vmem:[#allocation2 + $0xc] sm:$0xf] %v2317
    %2319 = vst.msk [vmem:[#allocation2 + $0x10] sm:$0xf] %vm2309, %v2296
    %v2320 = vld [vmem:[#allocation2 + $0x14] sm:$0x1]
    %v2321 = vsel %vm2312, %v2297, %v2320
    %2322 = vst [vmem:[#allocation2 + $0x14] sm:$0x1] %v2321
    %v2323 = vld [vmem:[#allocation8] sm:$0x1]
    %v2325 = vlaneseq
    %v2326 = vshrl.u32 %v2325, 7
    %v2327 = vsub.s32 0, %v2326
    %v2328 = vrot.slane %v2323, %v2327
    %v2330 = vld [vmem:[#allocation2] sm:$0xf]
    %v2331 = vld [vmem:[#allocation2 + $0x4] sm:$0xf]
    %v2332 = vld [vmem:[#allocation2 + $0xc] sm:$0xf]
    %v2333 = vld [vmem:[#allocation2 + $0x10] sm:$0xf]
    %v2334 = vld [vmem:[#allocation6] sm:$0xf]
    %v2335 = vld [vmem:[#allocation6 + $0x4] sm:$0xf]
    %v2336 = vld [vmem:[#allocation6 + $0x8] sm:$0xf]
    %v2337 = vld [vmem:[#allocation6 + $0xc] sm:$0xf]
    %v2338 = vld [vmem:[#allocation6 + $0x10] sm:$0xf]
    %v2339 = vld [vmem:[#allocation6 + $0x14] sm:$0xf]
    %v2340 = vld [vmem:[#allocation6 + $0x18] sm:$0xf]
    %v2341 = vld [vmem:[#allocation6 + $0x1c] sm:$0xf]
    %v2346 = vunpack.c.l.b16 %v2330
    %v2347 = vunpack.c.l.b16 %v2331
    %v2348 = vunpack.c.l.b16 %v2332
    %v2349 = vunpack.c.l.b16 %v2333
    %v2350 = vpack.c.b16 %v2347, %v2346
    %v2351 = vpack.c.b16 %v2349, %v2348
    %v2360 = vunpack.c.l.b16 %v2334
    %v2361 = vunpack.c.l.b16 %v2335
    %v2362 = vunpack.c.l.b16 %v2336
    %v2363 = vunpack.c.l.b16 %v2337
    %v2364 = vunpack.c.l.b16 %v2338
    %v2365 = vunpack.c.l.b16 %v2339
    %v2366 = vunpack.c.l.b16 %v2340
    %v2367 = vunpack.c.l.b16 %v2341
    %v2368 = vpack.c.b16 %v2361, %v2360
    %v2369 = vpack.c.b16 %v2363, %v2362
    %v2370 = vpack.c.b16 %v2365, %v2364
    %v2371 = vpack.c.b16 %v2367, %v2366
    %v2377 = vsel %vm199, %v2350, 0
    %v2380 = vsel %vm199, %v2351, 0
    %2382 = vmatprep.subr.bf16.mxu0 0
    %2383 = vmatpush1.bf16.msra.mxu0 %v2368
    %2384 = vmatprep.subr.bf16.mxu0 0
    %2385 = vmatpush1.bf16.msra.mxu0 %v2369
    %2386 = vmatprep.subr.bf16.mxu0 0
    %2387 = vmatpush1.bf16.msra.mxu0 %v2370
    %2388 = vmatprep.subr.bf16.mxu0 0
    %2389 = vmatpush1.bf16.msra.mxu0 %v2371
    %2390 = vmatprep.subr.bf16.mxu0 0
    %2391 = vmatpush1.bf16.msra.mxu0 0
    %2392 = vmatprep.subr.bf16.mxu0 0
    %2393 = vmatpush1.bf16.msra.mxu0 0
    %2394 = vmatprep.subr.bf16.mxu0 0
    %2395 = vmatpush1.bf16.msra.mxu0 0
    %2396 = vmatprep.subr.bf16.mxu0 0
    %2397 = vmatpush1.bf16.msra.mxu0 0
    %2398 = vmatprep.subr.bf16.mxu0 0
    %2399 = vmatpush1.bf16.msra.mxu0 0
    %2400 = vmatprep.subr.bf16.mxu0 0
    %2401 = vmatpush1.bf16.msra.mxu0 0
    %2402 = vmatprep.subr.bf16.mxu0 0
    %2403 = vmatpush1.bf16.msra.mxu0 0
    %2404 = vmatprep.subr.bf16.mxu0 0
    %2405 = vmatpush1.bf16.msra.mxu0 0
    %2406 = vmatprep.subr.bf16.mxu0 0
    %2407 = vmatpush1.bf16.msra.mxu0 0
    %2408 = vmatprep.subr.bf16.mxu0 0
    %2409 = vmatpush1.bf16.msra.mxu0 0
    %2410 = vmatprep.subr.bf16.mxu0 0
    %2411 = vmatpush1.bf16.msra.mxu0 0
    %2412 = vmatprep.subr.bf16.mxu0 0
    %2413 = vmatpush1.bf16.msra.mxu0 0
    %2414 = vmatprep.mubr.bf16.mxu0 0
    %2415 = vmatmul.mubr.bf16.gmra.mrb[0].mxu0 %v2377
    %v2416 = vpop.f32.mrb[0].mxu0
    %v2417 = vadd.f32 0.0, %v2416
    %v2418 = vpop.f32.mrb[0].mxu0
    %v2419 = vpop.f32.mrb[0].mxu0
    %v2420 = vadd.f32 0.0, %v2419
    %v2421 = vpop.f32.mrb[0].mxu0
    %2422 = vmatprep.mubr.bf16.mxu0 0
    %2423 = vmatmul.mubr.bf16.gmra.mrb[0].mxu0 %v2380
    %v2424 = vpop.f32.mrb[0].mxu0
    %v2425 = vadd.f32 0.0, %v2424
    %v2426 = vpop.f32.mrb[0].mxu0
    %v2427 = vpop.f32.mrb[0].mxu0
    %v2428 = vadd.f32 0.0, %v2427
    %v2429 = vpop.f32.mrb[0].mxu0
    %2430 = vdwg.mxu0
    %v2431 = vadd.f32 %v2328, %v2417
    %v2432 = vadd.f32 %v2328, %v2420
    %v2433 = vadd.f32 %v2328, %v2425
    %v2434 = vadd.f32 %v2328, %v2428
    %v2435 = vld [vmem:[#allocation2] sm:$0xf]
    %v2436 = vld [vmem:[#allocation2 + $0x4] sm:$0xf]
    %v2437 = vld [vmem:[#allocation2 + $0x8] sm:$0x1]
    %v2438 = vld [vmem:[#allocation2 + $0xc] sm:$0xf]
    %v2439 = vld [vmem:[#allocation2 + $0x10] sm:$0xf]
    %v2440 = vld [vmem:[#allocation2 + $0x14] sm:$0x1]
    %vm2441 = vsmask.f32 3328
    %vm2442 = vsmask.f32 7440
    %vm2443 = vmor %vm2441, %vm2442
    %v2445 = vshrl.u32 %v2435, 16
    %v2447 = vrot.slane %v2445, 4
    %v2448 = vshll.u32 %v2435, 16
    %v2450 = vrot.slane %v2448, 5
    %v2451 = vor.u32 %v2447, %v2450
    %v2452 = vrot.slane %v2451, 4
    %v2454 = vshll.u32 %v2436, 16
    %v2456 = vrot.slane %v2454, 5
    %v2457 = vsel %vm2443, %v2452, %v2456
    %v2458 = vshrl.u32 %v2436, 16
    %v2460 = vrot.slane %v2458, 4
    %v2461 = vor.u32 %v2460, %v2456
    %v2462 = vrot.slane %v2461, 4
    %v2464 = vshll.u32 %v2437, 16
    %v2466 = vrot.slane %v2464, 5
    %v2467 = vsel %vm2443, %v2462, %v2466
    %v2469 = vshrl.u32 %v2438, 16
    %v2471 = vrot.slane %v2469, 4
    %v2472 = vshll.u32 %v2438, 16
    %v2474 = vrot.slane %v2472, 5
    %v2475 = vor.u32 %v2471, %v2474
    %v2476 = vrot.slane %v2475, 4
    %v2478 = vshll.u32 %v2439, 16
    %v2480 = vrot.slane %v2478, 5
    %v2481 = vsel %vm2443, %v2476, %v2480
    %v2482 = vshrl.u32 %v2439, 16
    %v2484 = vrot.slane %v2482, 4
    %v2485 = vor.u32 %v2484, %v2480
    %v2486 = vrot.slane %v2485, 4
    %v2488 = vshll.u32 %v2440, 16
    %v2490 = vrot.slane %v2488, 5
    %v2491 = vsel %vm2443, %v2486, %v2490
    %s2492 = scalar_lea.vmem [#allocation6], 32
    %v2493 = vld [vmem:[%s2492] sm:$0xf]
    %v2494 = vld [vmem:[%s2492 + $0x4] sm:$0xf]
    %v2495 = vld [vmem:[%s2492 + $0x8] sm:$0xf]
    %v2496 = vld [vmem:[%s2492 + $0xc] sm:$0xf]
    %v2497 = vld [vmem:[%s2492 + $0x10] sm:$0xf]
    %v2498 = vld [vmem:[%s2492 + $0x14] sm:$0xf]
    %v2499 = vld [vmem:[%s2492 + $0x18] sm:$0xf]
    %v2500 = vld [vmem:[%s2492 + $0x1c] sm:$0xf]
    %v2501 = vunpack.c.l.b16 %v2457
    %v2502 = vunpack.c.l.b16 %v2467
    %v2503 = vunpack.c.l.b16 %v2481
    %v2504 = vunpack.c.l.b16 %v2491
    %v2505 = vpack.c.b16 %v2502, %v2501
    %v2506 = vpack.c.b16 %v2504, %v2503
    %v2515 = vunpack.c.l.b16 %v2493
    %v2516 = vunpack.c.l.b16 %v2494
    %v2517 = vunpack.c.l.b16 %v2495
    %v2518 = vunpack.c.l.b16 %v2496
    %v2519 = vunpack.c.l.b16 %v2497
    %v2520 = vunpack.c.l.b16 %v2498
    %v2521 = vunpack.c.l.b16 %v2499
    %v2522 = vunpack.c.l.b16 %v2500
    %v2523 = vpack.c.b16 %v2516, %v2515
    %v2524 = vpack.c.b16 %v2518, %v2517
    %v2525 = vpack.c.b16 %v2520, %v2519
    %v2526 = vpack.c.b16 %v2522, %v2521
    %v2532 = vsel %vm199, %v2505, 0
    %v2535 = vsel %vm199, %v2506, 0
    %2537 = vmatprep.subr.bf16.mxu0 0
    %2538 = vmatpush1.bf16.msra.mxu0 %v2523
    %2539 = vmatprep.subr.bf16.mxu0 0
    %2540 = vmatpush1.bf16.msra.mxu0 %v2524
    %2541 = vmatprep.subr.bf16.mxu0 0
    %2542 = vmatpush1.bf16.msra.mxu0 %v2525
    %2543 = vmatprep.subr.bf16.mxu0 0
    %2544 = vmatpush1.bf16.msra.mxu0 %v2526
    %2545 = vmatprep.subr.bf16.mxu0 0
    %2546 = vmatpush1.bf16.msra.mxu0 0
    %2547 = vmatprep.subr.bf16.mxu0 0
    %2548 = vmatpush1.bf16.msra.mxu0 0
    %2549 = vmatprep.subr.bf16.mxu0 0
    %2550 = vmatpush1.bf16.msra.mxu0 0
    %2551 = vmatprep.subr.bf16.mxu0 0
    %2552 = vmatpush1.bf16.msra.mxu0 0
    %2553 = vmatprep.subr.bf16.mxu0 0
    %2554 = vmatpush1.bf16.msra.mxu0 0
    %2555 = vmatprep.subr.bf16.mxu0 0
    %2556 = vmatpush1.bf16.msra.mxu0 0
    %2557 = vmatprep.subr.bf16.mxu0 0
    %2558 = vmatpush1.bf16.msra.mxu0 0
    %2559 = vmatprep.subr.bf16.mxu0 0
    %2560 = vmatpush1.bf16.msra.mxu0 0
    %2561 = vmatprep.subr.bf16.mxu0 0
    %2562 = vmatpush1.bf16.msra.mxu0 0
    %2563 = vmatprep.subr.bf16.mxu0 0
    %2564 = vmatpush1.bf16.msra.mxu0 0
    %2565 = vmatprep.subr.bf16.mxu0 0
    %2566 = vmatpush1.bf16.msra.mxu0 0
    %2567 = vmatprep.subr.bf16.mxu0 0
    %2568 = vmatpush1.bf16.msra.mxu0 0
    %2569 = vmatprep.mubr.bf16.mxu0 0
    %2570 = vmatmul.mubr.bf16.gmra.mrb[0].mxu0 %v2532
    %v2571 = vpop.f32.mrb[0].mxu0
    %v2572 = vadd.f32 0.0, %v2571
    %v2573 = vpop.f32.mrb[0].mxu0
    %v2574 = vpop.f32.mrb[0].mxu0
    %v2575 = vadd.f32 0.0, %v2574
    %v2576 = vpop.f32.mrb[0].mxu0
    %2577 = vmatprep.mubr.bf16.mxu0 0
    %2578 = vmatmul.mubr.bf16.gmra.mrb[0].mxu0 %v2535
    %v2579 = vpop.f32.mrb[0].mxu0
    %v2580 = vadd.f32 0.0, %v2579
    %v2581 = vpop.f32.mrb[0].mxu0
    %v2582 = vpop.f32.mrb[0].mxu0
    %v2583 = vadd.f32 0.0, %v2582
    %v2584 = vpop.f32.mrb[0].mxu0
    %2585 = vdwg.mxu0
    %v2586 = vadd.f32 %v2431, %v2572
    %v2587 = vadd.f32 %v2432, %v2575
    %v2588 = vadd.f32 %v2433, %v2580
    %v2589 = vadd.f32 %v2434, %v2583
    %v2590 = vld [vmem:[#allocation2] sm:$0xe]
    %v2591 = vld [vmem:[#allocation2 + $0xc] sm:$0xe]
    %vm2598 = vcmask 1042432
    %vm2599 = vcmask 1046532
    %vm2600 = vmor %vm2598, %vm2599
    %v2601 = vrot.slane %v2590, 5
    %v2602 = vrot.slane %v2601, 4
    %v2603 = vrot.slane %v2436, 5
    %v2604 = vsel %vm2600, %v2602, %v2603
    %v2605 = vrot.slane %v2603, 4
    %v2606 = vrot.slane %v2437, 5
    %v2607 = vsel %vm2600, %v2605, %v2606
    %v2608 = vrot.slane %v2591, 5
    %v2609 = vrot.slane %v2608, 4
    %v2610 = vrot.slane %v2439, 5
    %v2611 = vsel %vm2600, %v2609, %v2610
    %v2612 = vrot.slane %v2610, 4
    %v2613 = vrot.slane %v2440, 5
    %v2614 = vsel %vm2600, %v2612, %v2613
    %s2615 = scalar_lea.vmem [#allocation6], 64
    %v2616 = vld [vmem:[%s2615] sm:$0xf]
    %v2617 = vld [vmem:[%s2615 + $0x4] sm:$0xf]
    %v2618 = vld [vmem:[%s2615 + $0x8] sm:$0xf]
    %v2619 = vld [vmem:[%s2615 + $0xc] sm:$0xf]
    %v2620 = vld [vmem:[%s2615 + $0x10] sm:$0xf]
    %v2621 = vld [vmem:[%s2615 + $0x14] sm:$0xf]
    %v2622 = vld [vmem:[%s2615 + $0x18] sm:$0xf]
    %v2623 = vld [vmem:[%s2615 + $0x1c] sm:$0xf]
    %v2624 = vunpack.c.l.b16 %v2604
    %v2625 = vunpack.c.l.b16 %v2607
    %v2626 = vunpack.c.l.b16 %v2611
    %v2627 = vunpack.c.l.b16 %v2614
    %v2628 = vpack.c.b16 %v2625, %v2624
    %v2629 = vpack.c.b16 %v2627, %v2626
    %v2638 = vunpack.c.l.b16 %v2616
    %v2639 = vunpack.c.l.b16 %v2617
    %v2640 = vunpack.c.l.b16 %v2618
    %v2641 = vunpack.c.l.b16 %v2619
    %v2642 = vunpack.c.l.b16 %v2620
    %v2643 = vunpack.c.l.b16 %v2621
    %v2644 = vunpack.c.l.b16 %v2622
    %v2645 = vunpack.c.l.b16 %v2623
    %v2646 = vpack.c.b16 %v2639, %v2638
    %v2647 = vpack.c.b16 %v2641, %v2640
    %v2648 = vpack.c.b16 %v2643, %v2642
    %v2649 = vpack.c.b16 %v2645, %v2644
    %v2655 = vsel %vm199, %v2628, 0
    %v2658 = vsel %vm199, %v2629, 0
    %2660 = vmatprep.subr.bf16.mxu0 0
    %2661 = vmatpush1.bf16.msra.mxu0 %v2646
    %2662 = vmatprep.subr.bf16.mxu0 0
    %2663 = vmatpush1.bf16.msra.mxu0 %v2647
    %2664 = vmatprep.subr.bf16.mxu0 0
    %2665 = vmatpush1.bf16.msra.mxu0 %v2648
    %2666 = vmatprep.subr.bf16.mxu0 0
    %2667 = vmatpush1.bf16.msra.mxu0 %v2649
    %2668 = vmatprep.subr.bf16.mxu0 0
    %2669 = vmatpush1.bf16.msra.mxu0 0
    %2670 = vmatprep.subr.bf16.mxu0 0
    %2671 = vmatpush1.bf16.msra.mxu0 0
    %2672 = vmatprep.subr.bf16.mxu0 0
    %2673 = vmatpush1.bf16.msra.mxu0 0
    %2674 = vmatprep.subr.bf16.mxu0 0
    %2675 = vmatpush1.bf16.msra.mxu0 0
    %2676 = vmatprep.subr.bf16.mxu0 0
    %2677 = vmatpush1.bf16.msra.mxu0 0
    %2678 = vmatprep.subr.bf16.mxu0 0
    %2679 = vmatpush1.bf16.msra.mxu0 0
    %2680 = vmatprep.subr.bf16.mxu0 0
    %2681 = vmatpush1.bf16.msra.mxu0 0
    %2682 = vmatprep.subr.bf16.mxu0 0
    %2683 = vmatpush1.bf16.msra.mxu0 0
    %2684 = vmatprep.subr.bf16.mxu0 0
    %2685 = vmatpush1.bf16.msra.mxu0 0
    %2686 = vmatprep.subr.bf16.mxu0 0
    %2687 = vmatpush1.bf16.msra.mxu0 0
    %2688 = vmatprep.subr.bf16.mxu0 0
    %2689 = vmatpush1.bf16.msra.mxu0 0
    %2690 = vmatprep.subr.bf16.mxu0 0
    %2691 = vmatpush1.bf16.msra.mxu0 0
    %2692 = vmatprep.mubr.bf16.mxu0 0
    %2693 = vmatmul.mubr.bf16.gmra.mrb[0].mxu0 %v2655
    %v2694 = vpop.f32.mrb[0].mxu0
    %v2695 = vadd.f32 0.0, %v2694
    %v2696 = vpop.f32.mrb[0].mxu0
    %v2697 = vpop.f32.mrb[0].mxu0
    %v2698 = vadd.f32 0.0, %v2697
    %v2699 = vpop.f32.mrb[0].mxu0
    %2700 = vmatprep.mubr.bf16.mxu0 0
    %2701 = vmatmul.mubr.bf16.gmra.mrb[0].mxu0 %v2658
    %v2702 = vpop.f32.mrb[0].mxu0
    %v2703 = vadd.f32 0.0, %v2702
    %v2704 = vpop.f32.mrb[0].mxu0
    %v2705 = vpop.f32.mrb[0].mxu0
    %v2706 = vadd.f32 0.0, %v2705
    %v2707 = vpop.f32.mrb[0].mxu0
    %2708 = vdwg.mxu0
    %v2709 = vadd.f32 %v2586, %v2695
    %v2710 = vadd.f32 %v2587, %v2698
    %v2711 = vadd.f32 %v2588, %v2703
    %v2712 = vadd.f32 %v2589, %v2706
    %v2713 = vadd.f32 %v2709, %v2710
    %v2714 = vadd.f32 %v2713, %v2711
    %v2715 = vadd.f32 %v2714, %v2712
    %v2716 = vrot.slane %v2715, 4
    %v2717 = vadd.f32 %v2715, %v2716
    %v2718 = vrot.slane %v2717, 2
    %v2719 = vadd.f32 %v2717, %v2718
    %v2720 = vrot.slane %v2719, 1
    %v2721 = vadd.f32 %v2719, %v2720
    %v2722 = vmul.f32 %v2709, %v2709
    %v2723 = vmul.f32 %v2710, %v2710
    %v2724 = vmul.f32 %v2711, %v2711
    %v2725 = vmul.f32 %v2712, %v2712
    %v2726 = vadd.f32 %v2722, %v2723
    %v2727 = vadd.f32 %v2726, %v2724
    %v2728 = vadd.f32 %v2727, %v2725
    %v2729 = vrot.slane %v2728, 4
    %v2730 = vadd.f32 %v2728, %v2729
    %v2731 = vrot.slane %v2730, 2
    %v2732 = vadd.f32 %v2730, %v2731
    %v2733 = vrot.slane %v2732, 1
    %v2734 = vadd.f32 %v2732, %v2733
    %v2735 = vld [vmem:[%s15] sm:$0xff]
    %v2736 = vld [vmem:[%s15 + $0x8] sm:$0xff]
    %v2737 = vld [vmem:[%s15 + $0x10] sm:$0xff]
    %v2738 = vld [vmem:[%s15 + $0x18] sm:$0xff]
    %v2739 = vld [vmem:[%s15 + $0x20] sm:$0xff]
    %v2740 = vld [vmem:[%s15 + $0x28] sm:$0xff]
    %v2741 = vld [vmem:[%s15 + $0x30] sm:$0xff]
    %v2742 = vld [vmem:[%s15 + $0x38] sm:$0xff]
    %v2743 = vld [vmem:[%s15 + $0x40] sm:$0xff]
    %v2744 = vld [vmem:[%s15 + $0x48] sm:$0xff]
    %v2745 = vld [vmem:[%s15 + $0x50] sm:$0xff]
    %v2746 = vld [vmem:[%s15 + $0x58] sm:$0xff]
    %v2747 = vld [vmem:[%s15 + $0x60] sm:$0xff]
    %v2748 = vld [vmem:[%s15 + $0x68] sm:$0xff]
    %v2749 = vld [vmem:[%s15 + $0x70] sm:$0xff]
    %v2750 = vld [vmem:[%s15 + $0x78] sm:$0xff]
    %2751 = vmatprep.subr.mxu0 0.0
    %v2752 = vand.u32 %v2735, 4294901760
    %2753 = vmatpush1.msra.mxu0 %v2752
    %2754 = vmatprep.subr.mxu0 0.0
    %v2755 = vand.u32 %v2736, 4294901760
    %2756 = vmatpush1.msra.mxu0 %v2755
    %2757 = vmatprep.subr.mxu0 0.0
    %v2758 = vand.u32 %v2737, 4294901760
    %2759 = vmatpush1.msra.mxu0 %v2758
    %2760 = vmatprep.subr.mxu0 0.0
    %v2761 = vand.u32 %v2738, 4294901760
    %2762 = vmatpush1.msra.mxu0 %v2761
    %2763 = vmatprep.subr.mxu0 0.0
    %v2764 = vand.u32 %v2739, 4294901760
    %2765 = vmatpush1.msra.mxu0 %v2764
    %2766 = vmatprep.subr.mxu0 0.0
    %v2767 = vand.u32 %v2740, 4294901760
    %2768 = vmatpush1.msra.mxu0 %v2767
    %2769 = vmatprep.subr.mxu0 0.0
    %v2770 = vand.u32 %v2741, 4294901760
    %2771 = vmatpush1.msra.mxu0 %v2770
    %2772 = vmatprep.subr.mxu0 0.0
    %v2773 = vand.u32 %v2742, 4294901760
    %2774 = vmatpush1.msra.mxu0 %v2773
    %2775 = vmatprep.subr.mxu0 0.0
    %v2776 = vand.u32 %v2743, 4294901760
    %2777 = vmatpush1.msra.mxu0 %v2776
    %2778 = vmatprep.subr.mxu0 0.0
    %v2779 = vand.u32 %v2744, 4294901760
    %2780 = vmatpush1.msra.mxu0 %v2779
    %2781 = vmatprep.subr.mxu0 0.0
    %v2782 = vand.u32 %v2745, 4294901760
    %2783 = vmatpush1.msra.mxu0 %v2782
    %2784 = vmatprep.subr.mxu0 0.0
    %v2785 = vand.u32 %v2746, 4294901760
    %2786 = vmatpush1.msra.mxu0 %v2785
    %2787 = vmatprep.subr.mxu0 0.0
    %v2788 = vand.u32 %v2747, 4294901760
    %2789 = vmatpush1.msra.mxu0 %v2788
    %2790 = vmatprep.subr.mxu0 0.0
    %v2791 = vand.u32 %v2748, 4294901760
    %2792 = vmatpush1.msra.mxu0 %v2791
    %2793 = vmatprep.subr.mxu0 0.0
    %v2794 = vand.u32 %v2749, 4294901760
    %2795 = vmatpush1.msra.mxu0 %v2794
    %2796 = vmatprep.subr.mxu0 0.0
    %v2797 = vand.u32 %v2750, 4294901760
    %2798 = vmatpush1.msra.mxu0 %v2797
    %2799 = vmatprep.subr.mxu0 0.0
    %2800 = vmatpush1.msra.mxu0 0.0
    %2801 = vmatprep.subr.mxu0 0.0
    %2802 = vmatpush1.msra.mxu0 0.0
    %2803 = vmatprep.subr.mxu0 0.0
    %2804 = vmatpush1.msra.mxu0 0.0
    %2805 = vmatprep.subr.mxu0 0.0
    %2806 = vmatpush1.msra.mxu0 0.0
    %2807 = vmatprep.subr.mxu0 0.0
    %2808 = vmatpush1.msra.mxu0 0.0
    %2809 = vmatprep.subr.mxu0 0.0
    %2810 = vmatpush1.msra.mxu0 0.0
    %2811 = vmatprep.subr.mxu0 0.0
    %2812 = vmatpush1.msra.mxu0 0.0
    %2813 = vmatprep.subr.mxu0 0.0
    %2814 = vmatpush1.msra.mxu0 0.0
    %2815 = vmatprep.subr.mxu0 0.0
    %2816 = vmatpush1.msra.mxu0 0.0
    %2817 = vmatprep.subr.mxu0 0.0
    %2818 = vmatpush1.msra.mxu0 0.0
    %2819 = vmatprep.subr.mxu0 0.0
    %2820 = vmatpush1.msra.mxu0 0.0
    %2821 = vmatprep.subr.mxu0 0.0
    %2822 = vmatpush1.msra.mxu0 0.0
    %2823 = vmatprep.subr.mxu0 0.0
    %2824 = vmatpush1.msra.mxu0 0.0
    %2825 = vmatprep.subr.mxu0 0.0
    %2826 = vmatpush1.msra.mxu0 0.0
    %2827 = vmatprep.subr.mxu0 0.0
    %2828 = vmatpush1.msra.mxu0 0.0
    %2829 = vmatprep.subr.mxu0 0.0
    %2830 = vmatpush1.msra.mxu0 0.0
    %2831 = vmatprep.mubr.f32.mxu0 0.0
    %v2832 = vand.u32 %v2721, 4294901760
    %v2833 = vsub.f32 %v2721, %v2832
    %v2834 = vand.u32 %v2833, 4294901760
    %v2835 = vsub.f32 %v2833, %v2834
    %v2836 = vand.u32 %v2835, 4294901760
    %2837 = vmatmul.mubr.f32.gmra.mrb[0].mxu0 %v2836
    %v2838 = vpop.f32.mrb[0].mxu0
    %v2839 = vadd.f32 0.0, %v2838
    %v2840 = vpop.f32.mrb[0].mxu0
    %2841 = vdwg.mxu0
    %2842 = vmatprep.subr.mxu0 0.0
    %v2843 = vand.u32 %v2735, 4294901760
    %v2844 = vsub.f32 %v2735, %v2843
    %v2845 = vand.u32 %v2844, 4294901760
    %v2846 = vsub.f32 %v2844, %v2845
    %v2847 = vand.u32 %v2846, 4294901760
    %2848 = vmatpush1.msra.mxu0 %v2847
    %2849 = vmatprep.subr.mxu0 0.0
    %v2850 = vand.u32 %v2736, 4294901760
    %v2851 = vsub.f32 %v2736, %v2850
    %v2852 = vand.u32 %v2851, 4294901760
    %v2853 = vsub.f32 %v2851, %v2852
    %v2854 = vand.u32 %v2853, 4294901760
    %2855 = vmatpush1.msra.mxu0 %v2854
    %2856 = vmatprep.subr.mxu0 0.0
    %v2857 = vand.u32 %v2737, 4294901760
    %v2858 = vsub.f32 %v2737, %v2857
    %v2859 = vand.u32 %v2858, 4294901760
    %v2860 = vsub.f32 %v2858, %v2859
    %v2861 = vand.u32 %v2860, 4294901760
    %2862 = vmatpush1.msra.mxu0 %v2861
    %2863 = vmatprep.subr.mxu0 0.0
    %v2864 = vand.u32 %v2738, 4294901760
    %v2865 = vsub.f32 %v2738, %v2864
    %v2866 = vand.u32 %v2865, 4294901760
    %v2867 = vsub.f32 %v2865, %v2866
    %v2868 = vand.u32 %v2867, 4294901760
    %2869 = vmatpush1.msra.mxu0 %v2868
    %2870 = vmatprep.subr.mxu0 0.0
    %v2871 = vand.u32 %v2739, 4294901760
    %v2872 = vsub.f32 %v2739, %v2871
    %v2873 = vand.u32 %v2872, 4294901760
    %v2874 = vsub.f32 %v2872, %v2873
    %v2875 = vand.u32 %v2874, 4294901760
    %2876 = vmatpush1.msra.mxu0 %v2875
    %2877 = vmatprep.subr.mxu0 0.0
    %v2878 = vand.u32 %v2740, 4294901760
    %v2879 = vsub.f32 %v2740, %v2878
    %v2880 = vand.u32 %v2879, 4294901760
    %v2881 = vsub.f32 %v2879, %v2880
    %v2882 = vand.u32 %v2881, 4294901760
    %2883 = vmatpush1.msra.mxu0 %v2882
    %2884 = vmatprep.subr.mxu0 0.0
    %v2885 = vand.u32 %v2741, 4294901760
    %v2886 = vsub.f32 %v2741, %v2885
    %v2887 = vand.u32 %v2886, 4294901760
    %v2888 = vsub.f32 %v2886, %v2887
    %v2889 = vand.u32 %v2888, 4294901760
    %2890 = vmatpush1.msra.mxu0 %v2889
    %2891 = vmatprep.subr.mxu0 0.0
    %v2892 = vand.u32 %v2742, 4294901760
    %v2893 = vsub.f32 %v2742, %v2892
    %v2894 = vand.u32 %v2893, 4294901760
    %v2895 = vsub.f32 %v2893, %v2894
    %v2896 = vand.u32 %v2895, 4294901760
    %2897 = vmatpush1.msra.mxu0 %v2896
    %2898 = vmatprep.subr.mxu0 0.0
    %v2899 = vand.u32 %v2743, 4294901760
    %v2900 = vsub.f32 %v2743, %v2899
    %v2901 = vand.u32 %v2900, 4294901760
    %v2902 = vsub.f32 %v2900, %v2901
    %v2903 = vand.u32 %v2902, 4294901760
    %2904 = vmatpush1.msra.mxu0 %v2903
    %2905 = vmatprep.subr.mxu0 0.0
    %v2906 = vand.u32 %v2744, 4294901760
    %v2907 = vsub.f32 %v2744, %v2906
    %v2908 = vand.u32 %v2907, 4294901760
    %v2909 = vsub.f32 %v2907, %v2908
    %v2910 = vand.u32 %v2909, 4294901760
    %2911 = vmatpush1.msra.mxu0 %v2910
    %2912 = vmatprep.subr.mxu0 0.0
    %v2913 = vand.u32 %v2745, 4294901760
    %v2914 = vsub.f32 %v2745, %v2913
    %v2915 = vand.u32 %v2914, 4294901760
    %v2916 = vsub.f32 %v2914, %v2915
    %v2917 = vand.u32 %v2916, 4294901760
    %2918 = vmatpush1.msra.mxu0 %v2917
    %2919 = vmatprep.subr.mxu0 0.0
    %v2920 = vand.u32 %v2746, 4294901760
    %v2921 = vsub.f32 %v2746, %v2920
    %v2922 = vand.u32 %v2921, 4294901760
    %v2923 = vsub.f32 %v2921, %v2922
    %v2924 = vand.u32 %v2923, 4294901760
    %2925 = vmatpush1.msra.mxu0 %v2924
    %2926 = vmatprep.subr.mxu0 0.0
    %v2927 = vand.u32 %v2747, 4294901760
    %v2928 = vsub.f32 %v2747, %v2927
    %v2929 = vand.u32 %v2928, 4294901760
    %v2930 = vsub.f32 %v2928, %v2929
    %v2931 = vand.u32 %v2930, 4294901760
    %2932 = vmatpush1.msra.mxu0 %v2931
    %2933 = vmatprep.subr.mxu0 0.0
    %v2934 = vand.u32 %v2748, 4294901760
    %v2935 = vsub.f32 %v2748, %v2934
    %v2936 = vand.u32 %v2935, 4294901760
    %v2937 = vsub.f32 %v2935, %v2936
    %v2938 = vand.u32 %v2937, 4294901760
    %2939 = vmatpush1.msra.mxu0 %v2938
    %2940 = vmatprep.subr.mxu0 0.0
    %v2941 = vand.u32 %v2749, 4294901760
    %v2942 = vsub.f32 %v2749, %v2941
    %v2943 = vand.u32 %v2942, 4294901760
    %v2944 = vsub.f32 %v2942, %v2943
    %v2945 = vand.u32 %v2944, 4294901760
    %2946 = vmatpush1.msra.mxu0 %v2945
    %2947 = vmatprep.subr.mxu0 0.0
    %v2948 = vand.u32 %v2750, 4294901760
    %v2949 = vsub.f32 %v2750, %v2948
    %v2950 = vand.u32 %v2949, 4294901760
    %v2951 = vsub.f32 %v2949, %v2950
    %v2952 = vand.u32 %v2951, 4294901760
    %2953 = vmatpush1.msra.mxu0 %v2952
    %2954 = vmatprep.subr.mxu0 0.0
    %2955 = vmatpush1.msra.mxu0 0.0
    %2956 = vmatprep.subr.mxu0 0.0
    %2957 = vmatpush1.msra.mxu0 0.0
    %2958 = vmatprep.subr.mxu0 0.0
    %2959 = vmatpush1.msra.mxu0 0.0
    %2960 = vmatprep.subr.mxu0 0.0
    %2961 = vmatpush1.msra.mxu0 0.0
    %2962 = vmatprep.subr.mxu0 0.0
    %2963 = vmatpush1.msra.mxu0 0.0
    %2964 = vmatprep.subr.mxu0 0.0
    %2965 = vmatpush1.msra.mxu0 0.0
    %2966 = vmatprep.subr.mxu0 0.0
    %2967 = vmatpush1.msra.mxu0 0.0
    %2968 = vmatprep.subr.mxu0 0.0
    %2969 = vmatpush1.msra.mxu0 0.0
    %2970 = vmatprep.subr.mxu0 0.0
    %2971 = vmatpush1.msra.mxu0 0.0
    %2972 = vmatprep.subr.mxu0 0.0
    %2973 = vmatpush1.msra.mxu0 0.0
    %2974 = vmatprep.subr.mxu0 0.0
    %2975 = vmatpush1.msra.mxu0 0.0
    %2976 = vmatprep.subr.mxu0 0.0
    %2977 = vmatpush1.msra.mxu0 0.0
    %2978 = vmatprep.subr.mxu0 0.0
    %2979 = vmatpush1.msra.mxu0 0.0
    %2980 = vmatprep.subr.mxu0 0.0
    %2981 = vmatpush1.msra.mxu0 0.0
    %2982 = vmatprep.subr.mxu0 0.0
    %2983 = vmatpush1.msra.mxu0 0.0
    %2984 = vmatprep.subr.mxu0 0.0
    %2985 = vmatpush1.msra.mxu0 0.0
    %2986 = vmatprep.mubr.f32.mxu0 0.0
    %v2987 = vand.u32 %v2721, 4294901760
    %2988 = vmatmul.mubr.f32.gmra.mrb[0].mxu0 %v2987
    %v2989 = vpop.f32.mrb[0].mxu0
    %v2990 = vadd.f32 %v2839, %v2989
    %v2991 = vpop.f32.mrb[0].mxu0
    %2992 = vdwg.mxu0
    %2993 = vmatprep.subr.mxu0 0.0
    %v2994 = vand.u32 %v2735, 4294901760
    %v2995 = vsub.f32 %v2735, %v2994
    %2996 = vmatpush1.msra.mxu0 %v2995
    %2997 = vmatprep.subr.mxu0 0.0
    %v2998 = vand.u32 %v2736, 4294901760
    %v2999 = vsub.f32 %v2736, %v2998
    %3000 = vmatpush1.msra.mxu0 %v2999
    %3001 = vmatprep.subr.mxu0 0.0
    %v3002 = vand.u32 %v2737, 4294901760
    %v3003 = vsub.f32 %v2737, %v3002
    %3004 = vmatpush1.msra.mxu0 %v3003
    %3005 = vmatprep.subr.mxu0 0.0
    %v3006 = vand.u32 %v2738, 4294901760
    %v3007 = vsub.f32 %v2738, %v3006
    %3008 = vmatpush1.msra.mxu0 %v3007
    %3009 = vmatprep.subr.mxu0 0.0
    %v3010 = vand.u32 %v2739, 4294901760
    %v3011 = vsub.f32 %v2739, %v3010
    %3012 = vmatpush1.msra.mxu0 %v3011
    %3013 = vmatprep.subr.mxu0 0.0
    %v3014 = vand.u32 %v2740, 4294901760
    %v3015 = vsub.f32 %v2740, %v3014
    %3016 = vmatpush1.msra.mxu0 %v3015
    %3017 = vmatprep.subr.mxu0 0.0
    %v3018 = vand.u32 %v2741, 4294901760
    %v3019 = vsub.f32 %v2741, %v3018
    %3020 = vmatpush1.msra.mxu0 %v3019
    %3021 = vmatprep.subr.mxu0 0.0
    %v3022 = vand.u32 %v2742, 4294901760
    %v3023 = vsub.f32 %v2742, %v3022
    %3024 = vmatpush1.msra.mxu0 %v3023
    %3025 = vmatprep.subr.mxu0 0.0
    %v3026 = vand.u32 %v2743, 4294901760
    %v3027 = vsub.f32 %v2743, %v3026
    %3028 = vmatpush1.msra.mxu0 %v3027
    %3029 = vmatprep.subr.mxu0 0.0
    %v3030 = vand.u32 %v2744, 4294901760
    %v3031 = vsub.f32 %v2744, %v3030
    %3032 = vmatpush1.msra.mxu0 %v3031
    %3033 = vmatprep.subr.mxu0 0.0
    %v3034 = vand.u32 %v2745, 4294901760
    %v3035 = vsub.f32 %v2745, %v3034
    %3036 = vmatpush1.msra.mxu0 %v3035
    %3037 = vmatprep.subr.mxu0 0.0
    %v3038 = vand.u32 %v2746, 4294901760
    %v3039 = vsub.f32 %v2746, %v3038
    %3040 = vmatpush1.msra.mxu0 %v3039
    %3041 = vmatprep.subr.mxu0 0.0
    %v3042 = vand.u32 %v2747, 4294901760
    %v3043 = vsub.f32 %v2747, %v3042
    %3044 = vmatpush1.msra.mxu0 %v3043
    %3045 = vmatprep.subr.mxu0 0.0
    %v3046 = vand.u32 %v2748, 4294901760
    %v3047 = vsub.f32 %v2748, %v3046
    %3048 = vmatpush1.msra.mxu0 %v3047
    %3049 = vmatprep.subr.mxu0 0.0
    %v3050 = vand.u32 %v2749, 4294901760
    %v3051 = vsub.f32 %v2749, %v3050
    %3052 = vmatpush1.msra.mxu0 %v3051
    %3053 = vmatprep.subr.mxu0 0.0
    %v3054 = vand.u32 %v2750, 4294901760
    %v3055 = vsub.f32 %v2750, %v3054
    %3056 = vmatpush1.msra.mxu0 %v3055
    %3057 = vmatprep.subr.mxu0 0.0
    %3058 = vmatpush1.msra.mxu0 0.0
    %3059 = vmatprep.subr.mxu0 0.0
    %3060 = vmatpush1.msra.mxu0 0.0
    %3061 = vmatprep.subr.mxu0 0.0
    %3062 = vmatpush1.msra.mxu0 0.0
    %3063 = vmatprep.subr.mxu0 0.0
    %3064 = vmatpush1.msra.mxu0 0.0
    %3065 = vmatprep.subr.mxu0 0.0
    %3066 = vmatpush1.msra.mxu0 0.0
    %3067 = vmatprep.subr.mxu0 0.0
    %3068 = vmatpush1.msra.mxu0 0.0
    %3069 = vmatprep.subr.mxu0 0.0
    %3070 = vmatpush1.msra.mxu0 0.0
    %3071 = vmatprep.subr.mxu0 0.0
    %3072 = vmatpush1.msra.mxu0 0.0
    %3073 = vmatprep.subr.mxu0 0.0
    %3074 = vmatpush1.msra.mxu0 0.0
    %3075 = vmatprep.subr.mxu0 0.0
    %3076 = vmatpush1.msra.mxu0 0.0
    %3077 = vmatprep.subr.mxu0 0.0
    %3078 = vmatpush1.msra.mxu0 0.0
    %3079 = vmatprep.subr.mxu0 0.0
    %3080 = vmatpush1.msra.mxu0 0.0
    %3081 = vmatprep.subr.mxu0 0.0
    %3082 = vmatpush1.msra.mxu0 0.0
    %3083 = vmatprep.subr.mxu0 0.0
    %3084 = vmatpush1.msra.mxu0 0.0
    %3085 = vmatprep.subr.mxu0 0.0
    %3086 = vmatpush1.msra.mxu0 0.0
    %3087 = vmatprep.subr.mxu0 0.0
    %3088 = vmatpush1.msra.mxu0 0.0
    %3089 = vmatprep.mubr.f32.mxu0 0.0
    %v3090 = vand.u32 %v2721, 4294901760
    %v3091 = vsub.f32 %v2721, %v3090
    %3092 = vmatmul.mubr.f32.gmra.mrb[0].mxu0 %v3091
    %v3093 = vpop.f32.mrb[0].mxu0
    %v3094 = vadd.f32 %v2990, %v3093
    %v3095 = vpop.f32.mrb[0].mxu0
    %3096 = vdwg.mxu0
    %3097 = vmatprep.subr.mxu0 0.0
    %v3098 = vand.u32 %v2735, 4294901760
    %3099 = vmatpush1.msra.mxu0 %v3098
    %3100 = vmatprep.subr.mxu0 0.0
    %v3101 = vand.u32 %v2736, 4294901760
    %3102 = vmatpush1.msra.mxu0 %v3101
    %3103 = vmatprep.subr.mxu0 0.0
    %v3104 = vand.u32 %v2737, 4294901760
    %3105 = vmatpush1.msra.mxu0 %v3104
    %3106 = vmatprep.subr.mxu0 0.0
    %v3107 = vand.u32 %v2738, 4294901760
    %3108 = vmatpush1.msra.mxu0 %v3107
    %3109 = vmatprep.subr.mxu0 0.0
    %v3110 = vand.u32 %v2739, 4294901760
    %3111 = vmatpush1.msra.mxu0 %v3110
    %3112 = vmatprep.subr.mxu0 0.0
    %v3113 = vand.u32 %v2740, 4294901760
    %3114 = vmatpush1.msra.mxu0 %v3113
    %3115 = vmatprep.subr.mxu0 0.0
    %v3116 = vand.u32 %v2741, 4294901760
    %3117 = vmatpush1.msra.mxu0 %v3116
    %3118 = vmatprep.subr.mxu0 0.0
    %v3119 = vand.u32 %v2742, 4294901760
    %3120 = vmatpush1.msra.mxu0 %v3119
    %3121 = vmatprep.subr.mxu0 0.0
    %v3122 = vand.u32 %v2743, 4294901760
    %3123 = vmatpush1.msra.mxu0 %v3122
    %3124 = vmatprep.subr.mxu0 0.0
    %v3125 = vand.u32 %v2744, 4294901760
    %3126 = vmatpush1.msra.mxu0 %v3125
    %3127 = vmatprep.subr.mxu0 0.0
    %v3128 = vand.u32 %v2745, 4294901760
    %3129 = vmatpush1.msra.mxu0 %v3128
    %3130 = vmatprep.subr.mxu0 0.0
    %v3131 = vand.u32 %v2746, 4294901760
    %3132 = vmatpush1.msra.mxu0 %v3131
    %3133 = vmatprep.subr.mxu0 0.0
    %v3134 = vand.u32 %v2747, 4294901760
    %3135 = vmatpush1.msra.mxu0 %v3134
    %3136 = vmatprep.subr.mxu0 0.0
    %v3137 = vand.u32 %v2748, 4294901760
    %3138 = vmatpush1.msra.mxu0 %v3137
    %3139 = vmatprep.subr.mxu0 0.0
    %v3140 = vand.u32 %v2749, 4294901760
    %3141 = vmatpush1.msra.mxu0 %v3140
    %3142 = vmatprep.subr.mxu0 0.0
    %v3143 = vand.u32 %v2750, 4294901760
    %3144 = vmatpush1.msra.mxu0 %v3143
    %3145 = vmatprep.subr.mxu0 0.0
    %3146 = vmatpush1.msra.mxu0 0.0
    %3147 = vmatprep.subr.mxu0 0.0
    %3148 = vmatpush1.msra.mxu0 0.0
    %3149 = vmatprep.subr.mxu0 0.0
    %3150 = vmatpush1.msra.mxu0 0.0
    %3151 = vmatprep.subr.mxu0 0.0
    %3152 = vmatpush1.msra.mxu0 0.0
    %3153 = vmatprep.subr.mxu0 0.0
    %3154 = vmatpush1.msra.mxu0 0.0
    %3155 = vmatprep.subr.mxu0 0.0
    %3156 = vmatpush1.msra.mxu0 0.0
    %3157 = vmatprep.subr.mxu0 0.0
    %3158 = vmatpush1.msra.mxu0 0.0
    %3159 = vmatprep.subr.mxu0 0.0
    %3160 = vmatpush1.msra.mxu0 0.0
    %3161 = vmatprep.subr.mxu0 0.0
    %3162 = vmatpush1.msra.mxu0 0.0
    %3163 = vmatprep.subr.mxu0 0.0
    %3164 = vmatpush1.msra.mxu0 0.0
    %3165 = vmatprep.subr.mxu0 0.0
    %3166 = vmatpush1.msra.mxu0 0.0
    %3167 = vmatprep.subr.mxu0 0.0
    %3168 = vmatpush1.msra.mxu0 0.0
    %3169 = vmatprep.subr.mxu0 0.0
    %3170 = vmatpush1.msra.mxu0 0.0
    %3171 = vmatprep.subr.mxu0 0.0
    %3172 = vmatpush1.msra.mxu0 0.0
    %3173 = vmatprep.subr.mxu0 0.0
    %3174 = vmatpush1.msra.mxu0 0.0
    %3175 = vmatprep.subr.mxu0 0.0
    %3176 = vmatpush1.msra.mxu0 0.0
    %3177 = vmatprep.mubr.f32.mxu0 0.0
    %v3178 = vand.u32 %v2721, 4294901760
    %v3179 = vsub.f32 %v2721, %v3178
    %v3180 = vand.u32 %v3179, 4294901760
    %3181 = vmatmul.mubr.f32.gmra.mrb[0].mxu0 %v3180
    %v3182 = vpop.f32.mrb[0].mxu0
    %v3183 = vadd.f32 %v3094, %v3182
    %v3184 = vpop.f32.mrb[0].mxu0
    %3185 = vdwg.mxu0
    %3186 = vmatprep.subr.mxu0 0.0
    %v3187 = vand.u32 %v2735, 4294901760
    %v3188 = vsub.f32 %v2735, %v3187
    %v3189 = vand.u32 %v3188, 4294901760
    %3190 = vmatpush1.msra.mxu0 %v3189
    %3191 = vmatprep.subr.mxu0 0.0
    %v3192 = vand.u32 %v2736, 4294901760
    %v3193 = vsub.f32 %v2736, %v3192
    %v3194 = vand.u32 %v3193, 4294901760
    %3195 = vmatpush1.msra.mxu0 %v3194
    %3196 = vmatprep.subr.mxu0 0.0
    %v3197 = vand.u32 %v2737, 4294901760
    %v3198 = vsub.f32 %v2737, %v3197
    %v3199 = vand.u32 %v3198, 4294901760
    %3200 = vmatpush1.msra.mxu0 %v3199
    %3201 = vmatprep.subr.mxu0 0.0
    %v3202 = vand.u32 %v2738, 4294901760
    %v3203 = vsub.f32 %v2738, %v3202
    %v3204 = vand.u32 %v3203, 4294901760
    %3205 = vmatpush1.msra.mxu0 %v3204
    %3206 = vmatprep.subr.mxu0 0.0
    %v3207 = vand.u32 %v2739, 4294901760
    %v3208 = vsub.f32 %v2739, %v3207
    %v3209 = vand.u32 %v3208, 4294901760
    %3210 = vmatpush1.msra.mxu0 %v3209
    %3211 = vmatprep.subr.mxu0 0.0
    %v3212 = vand.u32 %v2740, 4294901760
    %v3213 = vsub.f32 %v2740, %v3212
    %v3214 = vand.u32 %v3213, 4294901760
    %3215 = vmatpush1.msra.mxu0 %v3214
    %3216 = vmatprep.subr.mxu0 0.0
    %v3217 = vand.u32 %v2741, 4294901760
    %v3218 = vsub.f32 %v2741, %v3217
    %v3219 = vand.u32 %v3218, 4294901760
    %3220 = vmatpush1.msra.mxu0 %v3219
    %3221 = vmatprep.subr.mxu0 0.0
    %v3222 = vand.u32 %v2742, 4294901760
    %v3223 = vsub.f32 %v2742, %v3222
    %v3224 = vand.u32 %v3223, 4294901760
    %3225 = vmatpush1.msra.mxu0 %v3224
    %3226 = vmatprep.subr.mxu0 0.0
    %v3227 = vand.u32 %v2743, 4294901760
    %v3228 = vsub.f32 %v2743, %v3227
    %v3229 = vand.u32 %v3228, 4294901760
    %3230 = vmatpush1.msra.mxu0 %v3229
    %3231 = vmatprep.subr.mxu0 0.0
    %v3232 = vand.u32 %v2744, 4294901760
    %v3233 = vsub.f32 %v2744, %v3232
    %v3234 = vand.u32 %v3233, 4294901760
    %3235 = vmatpush1.msra.mxu0 %v3234
    %3236 = vmatprep.subr.mxu0 0.0
    %v3237 = vand.u32 %v2745, 4294901760
    %v3238 = vsub.f32 %v2745, %v3237
    %v3239 = vand.u32 %v3238, 4294901760
    %3240 = vmatpush1.msra.mxu0 %v3239
    %3241 = vmatprep.subr.mxu0 0.0
    %v3242 = vand.u32 %v2746, 4294901760
    %v3243 = vsub.f32 %v2746, %v3242
    %v3244 = vand.u32 %v3243, 4294901760
    %3245 = vmatpush1.msra.mxu0 %v3244
    %3246 = vmatprep.subr.mxu0 0.0
    %v3247 = vand.u32 %v2747, 4294901760
    %v3248 = vsub.f32 %v2747, %v3247
    %v3249 = vand.u32 %v3248, 4294901760
    %3250 = vmatpush1.msra.mxu0 %v3249
    %3251 = vmatprep.subr.mxu0 0.0
    %v3252 = vand.u32 %v2748, 4294901760
    %v3253 = vsub.f32 %v2748, %v3252
    %v3254 = vand.u32 %v3253, 4294901760
    %3255 = vmatpush1.msra.mxu0 %v3254
    %3256 = vmatprep.subr.mxu0 0.0
    %v3257 = vand.u32 %v2749, 4294901760
    %v3258 = vsub.f32 %v2749, %v3257
    %v3259 = vand.u32 %v3258, 4294901760
    %3260 = vmatpush1.msra.mxu0 %v3259
    %3261 = vmatprep.subr.mxu0 0.0
    %v3262 = vand.u32 %v2750, 4294901760
    %v3263 = vsub.f32 %v2750, %v3262
    %v3264 = vand.u32 %v3263, 4294901760
    %3265 = vmatpush1.msra.mxu0 %v3264
    %3266 = vmatprep.subr.mxu0 0.0
    %3267 = vmatpush1.msra.mxu0 0.0
    %3268 = vmatprep.subr.mxu0 0.0
    %3269 = vmatpush1.msra.mxu0 0.0
    %3270 = vmatprep.subr.mxu0 0.0
    %3271 = vmatpush1.msra.mxu0 0.0
    %3272 = vmatprep.subr.mxu0 0.0
    %3273 = vmatpush1.msra.mxu0 0.0
    %3274 = vmatprep.subr.mxu0 0.0
    %3275 = vmatpush1.msra.mxu0 0.0
    %3276 = vmatprep.subr.mxu0 0.0
    %3277 = vmatpush1.msra.mxu0 0.0
    %3278 = vmatprep.subr.mxu0 0.0
    %3279 = vmatpush1.msra.mxu0 0.0
    %3280 = vmatprep.subr.mxu0 0.0
    %3281 = vmatpush1.msra.mxu0 0.0
    %3282 = vmatprep.subr.mxu0 0.0
    %3283 = vmatpush1.msra.mxu0 0.0
    %3284 = vmatprep.subr.mxu0 0.0
    %3285 = vmatpush1.msra.mxu0 0.0
    %3286 = vmatprep.subr.mxu0 0.0
    %3287 = vmatpush1.msra.mxu0 0.0
    %3288 = vmatprep.subr.mxu0 0.0
    %3289 = vmatpush1.msra.mxu0 0.0
    %3290 = vmatprep.subr.mxu0 0.0
    %3291 = vmatpush1.msra.mxu0 0.0
    %3292 = vmatprep.subr.mxu0 0.0
    %3293 = vmatpush1.msra.mxu0 0.0
    %3294 = vmatprep.subr.mxu0 0.0
    %3295 = vmatpush1.msra.mxu0 0.0
    %3296 = vmatprep.subr.mxu0 0.0
    %3297 = vmatpush1.msra.mxu0 0.0
    %3298 = vmatprep.mubr.f32.mxu0 0.0
    %v3299 = vand.u32 %v2721, 4294901760
    %3300 = vmatmul.mubr.f32.gmra.mrb[0].mxu0 %v3299
    %v3301 = vpop.f32.mrb[0].mxu0
    %v3302 = vadd.f32 %v3183, %v3301
    %v3303 = vpop.f32.mrb[0].mxu0
    %3304 = vdwg.mxu0
    %3305 = vmatprep.subr.mxu0 0.0
    %v3306 = vand.u32 %v2735, 4294901760
    %3307 = vmatpush1.msra.mxu0 %v3306
    %3308 = vmatprep.subr.mxu0 0.0
    %v3309 = vand.u32 %v2736, 4294901760
    %3310 = vmatpush1.msra.mxu0 %v3309
    %3311 = vmatprep.subr.mxu0 0.0
    %v3312 = vand.u32 %v2737, 4294901760
    %3313 = vmatpush1.msra.mxu0 %v3312
    %3314 = vmatprep.subr.mxu0 0.0
    %v3315 = vand.u32 %v2738, 4294901760
    %3316 = vmatpush1.msra.mxu0 %v3315
    %3317 = vmatprep.subr.mxu0 0.0
    %v3318 = vand.u32 %v2739, 4294901760
    %3319 = vmatpush1.msra.mxu0 %v3318
    %3320 = vmatprep.subr.mxu0 0.0
    %v3321 = vand.u32 %v2740, 4294901760
    %3322 = vmatpush1.msra.mxu0 %v3321
    %3323 = vmatprep.subr.mxu0 0.0
    %v3324 = vand.u32 %v2741, 4294901760
    %3325 = vmatpush1.msra.mxu0 %v3324
    %3326 = vmatprep.subr.mxu0 0.0
    %v3327 = vand.u32 %v2742, 4294901760
    %3328 = vmatpush1.msra.mxu0 %v3327
    %3329 = vmatprep.subr.mxu0 0.0
    %v3330 = vand.u32 %v2743, 4294901760
    %3331 = vmatpush1.msra.mxu0 %v3330
    %3332 = vmatprep.subr.mxu0 0.0
    %v3333 = vand.u32 %v2744, 4294901760
    %3334 = vmatpush1.msra.mxu0 %v3333
    %3335 = vmatprep.subr.mxu0 0.0
    %v3336 = vand.u32 %v2745, 4294901760
    %3337 = vmatpush1.msra.mxu0 %v3336
    %3338 = vmatprep.subr.mxu0 0.0
    %v3339 = vand.u32 %v2746, 4294901760
    %3340 = vmatpush1.msra.mxu0 %v3339
    %3341 = vmatprep.subr.mxu0 0.0
    %v3342 = vand.u32 %v2747, 4294901760
    %3343 = vmatpush1.msra.mxu0 %v3342
    %3344 = vmatprep.subr.mxu0 0.0
    %v3345 = vand.u32 %v2748, 4294901760
    %3346 = vmatpush1.msra.mxu0 %v3345
    %3347 = vmatprep.subr.mxu0 0.0
    %v3348 = vand.u32 %v2749, 4294901760
    %3349 = vmatpush1.msra.mxu0 %v3348
    %3350 = vmatprep.subr.mxu0 0.0
    %v3351 = vand.u32 %v2750, 4294901760
    %3352 = vmatpush1.msra.mxu0 %v3351
    %3353 = vmatprep.subr.mxu0 0.0
    %3354 = vmatpush1.msra.mxu0 0.0
    %3355 = vmatprep.subr.mxu0 0.0
    %3356 = vmatpush1.msra.mxu0 0.0
    %3357 = vmatprep.subr.mxu0 0.0
    %3358 = vmatpush1.msra.mxu0 0.0
    %3359 = vmatprep.subr.mxu0 0.0
    %3360 = vmatpush1.msra.mxu0 0.0
    %3361 = vmatprep.subr.mxu0 0.0
    %3362 = vmatpush1.msra.mxu0 0.0
    %3363 = vmatprep.subr.mxu0 0.0
    %3364 = vmatpush1.msra.mxu0 0.0
    %3365 = vmatprep.subr.mxu0 0.0
    %3366 = vmatpush1.msra.mxu0 0.0
    %3367 = vmatprep.subr.mxu0 0.0
    %3368 = vmatpush1.msra.mxu0 0.0
    %3369 = vmatprep.subr.mxu0 0.0
    %3370 = vmatpush1.msra.mxu0 0.0
    %3371 = vmatprep.subr.mxu0 0.0
    %3372 = vmatpush1.msra.mxu0 0.0
    %3373 = vmatprep.subr.mxu0 0.0
    %3374 = vmatpush1.msra.mxu0 0.0
    %3375 = vmatprep.subr.mxu0 0.0
    %3376 = vmatpush1.msra.mxu0 0.0
    %3377 = vmatprep.subr.mxu0 0.0
    %3378 = vmatpush1.msra.mxu0 0.0
    %3379 = vmatprep.subr.mxu0 0.0
    %3380 = vmatpush1.msra.mxu0 0.0
    %3381 = vmatprep.subr.mxu0 0.0
    %3382 = vmatpush1.msra.mxu0 0.0
    %3383 = vmatprep.subr.mxu0 0.0
    %3384 = vmatpush1.msra.mxu0 0.0
    %3385 = vmatprep.mubr.f32.mxu0 0.0
    %v3386 = vand.u32 %v2721, 4294901760
    %3387 = vmatmul.mubr.f32.gmra.mrb[0].mxu0 %v3386
    %v3388 = vpop.f32.mrb[0].mxu0
    %v3389 = vadd.f32 %v3302, %v3388
    %v3390 = vpop.f32.mrb[0].mxu0
    %3391 = vdwg.mxu0
    %3392 = vmatprep.subr.mxu0 0.0
    %v3393 = vand.u32 %v2735, 4294901760
    %3394 = vmatpush1.msra.mxu0 %v3393
    %3395 = vmatprep.subr.mxu0 0.0
    %v3396 = vand.u32 %v2736, 4294901760
    %3397 = vmatpush1.msra.mxu0 %v3396
    %3398 = vmatprep.subr.mxu0 0.0
    %v3399 = vand.u32 %v2737, 4294901760
    %3400 = vmatpush1.msra.mxu0 %v3399
    %3401 = vmatprep.subr.mxu0 0.0
    %v3402 = vand.u32 %v2738, 4294901760
    %3403 = vmatpush1.msra.mxu0 %v3402
    %3404 = vmatprep.subr.mxu0 0.0
    %v3405 = vand.u32 %v2739, 4294901760
    %3406 = vmatpush1.msra.mxu0 %v3405
    %3407 = vmatprep.subr.mxu0 0.0
    %v3408 = vand.u32 %v2740, 4294901760
    %3409 = vmatpush1.msra.mxu0 %v3408
    %3410 = vmatprep.subr.mxu0 0.0
    %v3411 = vand.u32 %v2741, 4294901760
    %3412 = vmatpush1.msra.mxu0 %v3411
    %3413 = vmatprep.subr.mxu0 0.0
    %v3414 = vand.u32 %v2742, 4294901760
    %3415 = vmatpush1.msra.mxu0 %v3414
    %3416 = vmatprep.subr.mxu0 0.0
    %v3417 = vand.u32 %v2743, 4294901760
    %3418 = vmatpush1.msra.mxu0 %v3417
    %3419 = vmatprep.subr.mxu0 0.0
    %v3420 = vand.u32 %v2744, 4294901760
    %3421 = vmatpush1.msra.mxu0 %v3420
    %3422 = vmatprep.subr.mxu0 0.0
    %v3423 = vand.u32 %v2745, 4294901760
    %3424 = vmatpush1.msra.mxu0 %v3423
    %3425 = vmatprep.subr.mxu0 0.0
    %v3426 = vand.u32 %v2746, 4294901760
    %3427 = vmatpush1.msra.mxu0 %v3426
    %3428 = vmatprep.subr.mxu0 0.0
    %v3429 = vand.u32 %v2747, 4294901760
    %3430 = vmatpush1.msra.mxu0 %v3429
    %3431 = vmatprep.subr.mxu0 0.0
    %v3432 = vand.u32 %v2748, 4294901760
    %3433 = vmatpush1.msra.mxu0 %v3432
    %3434 = vmatprep.subr.mxu0 0.0
    %v3435 = vand.u32 %v2749, 4294901760
    %3436 = vmatpush1.msra.mxu0 %v3435
    %3437 = vmatprep.subr.mxu0 0.0
    %v3438 = vand.u32 %v2750, 4294901760
    %3439 = vmatpush1.msra.mxu0 %v3438
    %3440 = vmatprep.subr.mxu0 0.0
    %3441 = vmatpush1.msra.mxu0 0.0
    %3442 = vmatprep.subr.mxu0 0.0
    %3443 = vmatpush1.msra.mxu0 0.0
    %3444 = vmatprep.subr.mxu0 0.0
    %3445 = vmatpush1.msra.mxu0 0.0
    %3446 = vmatprep.subr.mxu0 0.0
    %3447 = vmatpush1.msra.mxu0 0.0
    %3448 = vmatprep.subr.mxu0 0.0
    %3449 = vmatpush1.msra.mxu0 0.0
    %3450 = vmatprep.subr.mxu0 0.0
    %3451 = vmatpush1.msra.mxu0 0.0
    %3452 = vmatprep.subr.mxu0 0.0
    %3453 = vmatpush1.msra.mxu0 0.0
    %3454 = vmatprep.subr.mxu0 0.0
    %3455 = vmatpush1.msra.mxu0 0.0
    %3456 = vmatprep.subr.mxu0 0.0
    %3457 = vmatpush1.msra.mxu0 0.0
    %3458 = vmatprep.subr.mxu0 0.0
    %3459 = vmatpush1.msra.mxu0 0.0
    %3460 = vmatprep.subr.mxu0 0.0
    %3461 = vmatpush1.msra.mxu0 0.0
    %3462 = vmatprep.subr.mxu0 0.0
    %3463 = vmatpush1.msra.mxu0 0.0
    %3464 = vmatprep.subr.mxu0 0.0
    %3465 = vmatpush1.msra.mxu0 0.0
    %3466 = vmatprep.subr.mxu0 0.0
    %3467 = vmatpush1.msra.mxu0 0.0
    %3468 = vmatprep.subr.mxu0 0.0
    %3469 = vmatpush1.msra.mxu0 0.0
    %3470 = vmatprep.subr.mxu0 0.0
    %3471 = vmatpush1.msra.mxu0 0.0
    %3472 = vmatprep.mubr.f32.mxu0 0.0
    %v3473 = vand.u32 %v2734, 4294901760
    %v3474 = vsub.f32 %v2734, %v3473
    %v3475 = vand.u32 %v3474, 4294901760
    %v3476 = vsub.f32 %v3474, %v3475
    %v3477 = vand.u32 %v3476, 4294901760
    %3478 = vmatmul.mubr.f32.gmra.mrb[0].mxu0 %v3477
    %v3479 = vpop.f32.mrb[0].mxu0
    %v3480 = vadd.f32 0.0, %v3479
    %v3481 = vpop.f32.mrb[0].mxu0
    %3482 = vdwg.mxu0
    %3483 = vmatprep.subr.mxu0 0.0
    %v3484 = vand.u32 %v2735, 4294901760
    %v3485 = vsub.f32 %v2735, %v3484
    %v3486 = vand.u32 %v3485, 4294901760
    %v3487 = vsub.f32 %v3485, %v3486
    %v3488 = vand.u32 %v3487, 4294901760
    %3489 = vmatpush1.msra.mxu0 %v3488
    %3490 = vmatprep.subr.mxu0 0.0
    %v3491 = vand.u32 %v2736, 4294901760
    %v3492 = vsub.f32 %v2736, %v3491
    %v3493 = vand.u32 %v3492, 4294901760
    %v3494 = vsub.f32 %v3492, %v3493
    %v3495 = vand.u32 %v3494, 4294901760
    %3496 = vmatpush1.msra.mxu0 %v3495
    %3497 = vmatprep.subr.mxu0 0.0
    %v3498 = vand.u32 %v2737, 4294901760
    %v3499 = vsub.f32 %v2737, %v3498
    %v3500 = vand.u32 %v3499, 4294901760
    %v3501 = vsub.f32 %v3499, %v3500
    %v3502 = vand.u32 %v3501, 4294901760
    %3503 = vmatpush1.msra.mxu0 %v3502
    %3504 = vmatprep.subr.mxu0 0.0
    %v3505 = vand.u32 %v2738, 4294901760
    %v3506 = vsub.f32 %v2738, %v3505
    %v3507 = vand.u32 %v3506, 4294901760
    %v3508 = vsub.f32 %v3506, %v3507
    %v3509 = vand.u32 %v3508, 4294901760
    %3510 = vmatpush1.msra.mxu0 %v3509
    %3511 = vmatprep.subr.mxu0 0.0
    %v3512 = vand.u32 %v2739, 4294901760
    %v3513 = vsub.f32 %v2739, %v3512
    %v3514 = vand.u32 %v3513, 4294901760
    %v3515 = vsub.f32 %v3513, %v3514
    %v3516 = vand.u32 %v3515, 4294901760
    %3517 = vmatpush1.msra.mxu0 %v3516
    %3518 = vmatprep.subr.mxu0 0.0
    %v3519 = vand.u32 %v2740, 4294901760
    %v3520 = vsub.f32 %v2740, %v3519
    %v3521 = vand.u32 %v3520, 4294901760
    %v3522 = vsub.f32 %v3520, %v3521
    %v3523 = vand.u32 %v3522, 4294901760
    %3524 = vmatpush1.msra.mxu0 %v3523
    %3525 = vmatprep.subr.mxu0 0.0
    %v3526 = vand.u32 %v2741, 4294901760
    %v3527 = vsub.f32 %v2741, %v3526
    %v3528 = vand.u32 %v3527, 4294901760
    %v3529 = vsub.f32 %v3527, %v3528
    %v3530 = vand.u32 %v3529, 4294901760
    %3531 = vmatpush1.msra.mxu0 %v3530
    %3532 = vmatprep.subr.mxu0 0.0
    %v3533 = vand.u32 %v2742, 4294901760
    %v3534 = vsub.f32 %v2742, %v3533
    %v3535 = vand.u32 %v3534, 4294901760
    %v3536 = vsub.f32 %v3534, %v3535
    %v3537 = vand.u32 %v3536, 4294901760
    %3538 = vmatpush1.msra.mxu0 %v3537
    %3539 = vmatprep.subr.mxu0 0.0
    %v3540 = vand.u32 %v2743, 4294901760
    %v3541 = vsub.f32 %v2743, %v3540
    %v3542 = vand.u32 %v3541, 4294901760
    %v3543 = vsub.f32 %v3541, %v3542
    %v3544 = vand.u32 %v3543, 4294901760
    %3545 = vmatpush1.msra.mxu0 %v3544
    %3546 = vmatprep.subr.mxu0 0.0
    %v3547 = vand.u32 %v2744, 4294901760
    %v3548 = vsub.f32 %v2744, %v3547
    %v3549 = vand.u32 %v3548, 4294901760
    %v3550 = vsub.f32 %v3548, %v3549
    %v3551 = vand.u32 %v3550, 4294901760
    %3552 = vmatpush1.msra.mxu0 %v3551
    %3553 = vmatprep.subr.mxu0 0.0
    %v3554 = vand.u32 %v2745, 4294901760
    %v3555 = vsub.f32 %v2745, %v3554
    %v3556 = vand.u32 %v3555, 4294901760
    %v3557 = vsub.f32 %v3555, %v3556
    %v3558 = vand.u32 %v3557, 4294901760
    %3559 = vmatpush1.msra.mxu0 %v3558
    %3560 = vmatprep.subr.mxu0 0.0
    %v3561 = vand.u32 %v2746, 4294901760
    %v3562 = vsub.f32 %v2746, %v3561
    %v3563 = vand.u32 %v3562, 4294901760
    %v3564 = vsub.f32 %v3562, %v3563
    %v3565 = vand.u32 %v3564, 4294901760
    %3566 = vmatpush1.msra.mxu0 %v3565
    %3567 = vmatprep.subr.mxu0 0.0
    %v3568 = vand.u32 %v2747, 4294901760
    %v3569 = vsub.f32 %v2747, %v3568
    %v3570 = vand.u32 %v3569, 4294901760
    %v3571 = vsub.f32 %v3569, %v3570
    %v3572 = vand.u32 %v3571, 4294901760
    %3573 = vmatpush1.msra.mxu0 %v3572
    %3574 = vmatprep.subr.mxu0 0.0
    %v3575 = vand.u32 %v2748, 4294901760
    %v3576 = vsub.f32 %v2748, %v3575
    %v3577 = vand.u32 %v3576, 4294901760
    %v3578 = vsub.f32 %v3576, %v3577
    %v3579 = vand.u32 %v3578, 4294901760
    %3580 = vmatpush1.msra.mxu0 %v3579
    %3581 = vmatprep.subr.mxu0 0.0
    %v3582 = vand.u32 %v2749, 4294901760
    %v3583 = vsub.f32 %v2749, %v3582
    %v3584 = vand.u32 %v3583, 4294901760
    %v3585 = vsub.f32 %v3583, %v3584
    %v3586 = vand.u32 %v3585, 4294901760
    %3587 = vmatpush1.msra.mxu0 %v3586
    %3588 = vmatprep.subr.mxu0 0.0
    %v3589 = vand.u32 %v2750, 4294901760
    %v3590 = vsub.f32 %v2750, %v3589
    %v3591 = vand.u32 %v3590, 4294901760
    %v3592 = vsub.f32 %v3590, %v3591
    %v3593 = vand.u32 %v3592, 4294901760
    %3594 = vmatpush1.msra.mxu0 %v3593
    %3595 = vmatprep.subr.mxu0 0.0
    %3596 = vmatpush1.msra.mxu0 0.0
    %3597 = vmatprep.subr.mxu0 0.0
    %3598 = vmatpush1.msra.mxu0 0.0
    %3599 = vmatprep.subr.mxu0 0.0
    %3600 = vmatpush1.msra.mxu0 0.0
    %3601 = vmatprep.subr.mxu0 0.0
    %3602 = vmatpush1.msra.mxu0 0.0
    %3603 = vmatprep.subr.mxu0 0.0
    %3604 = vmatpush1.msra.mxu0 0.0
    %3605 = vmatprep.subr.mxu0 0.0
    %3606 = vmatpush1.msra.mxu0 0.0
    %3607 = vmatprep.subr.mxu0 0.0
    %3608 = vmatpush1.msra.mxu0 0.0
    %3609 = vmatprep.subr.mxu0 0.0
    %3610 = vmatpush1.msra.mxu0 0.0
    %3611 = vmatprep.subr.mxu0 0.0
    %3612 = vmatpush1.msra.mxu0 0.0
    %3613 = vmatprep.subr.mxu0 0.0
    %3614 = vmatpush1.msra.mxu0 0.0
    %3615 = vmatprep.subr.mxu0 0.0
    %3616 = vmatpush1.msra.mxu0 0.0
    %3617 = vmatprep.subr.mxu0 0.0
    %3618 = vmatpush1.msra.mxu0 0.0
    %3619 = vmatprep.subr.mxu0 0.0
    %3620 = vmatpush1.msra.mxu0 0.0
    %3621 = vmatprep.subr.mxu0 0.0
    %3622 = vmatpush1.msra.mxu0 0.0
    %3623 = vmatprep.subr.mxu0 0.0
    %3624 = vmatpush1.msra.mxu0 0.0
    %3625 = vmatprep.subr.mxu0 0.0
    %3626 = vmatpush1.msra.mxu0 0.0
    %3627 = vmatprep.mubr.f32.mxu0 0.0
    %v3628 = vand.u32 %v2734, 4294901760
    %3629 = vmatmul.mubr.f32.gmra.mrb[0].mxu0 %v3628
    %v3630 = vpop.f32.mrb[0].mxu0
    %v3631 = vadd.f32 %v3480, %v3630
    %v3632 = vpop.f32.mrb[0].mxu0
    %3633 = vdwg.mxu0
    %3634 = vmatprep.subr.mxu0 0.0
    %v3635 = vand.u32 %v2735, 4294901760
    %v3636 = vsub.f32 %v2735, %v3635
    %3637 = vmatpush1.msra.mxu0 %v3636
    %3638 = vmatprep.subr.mxu0 0.0
    %v3639 = vand.u32 %v2736, 4294901760
    %v3640 = vsub.f32 %v2736, %v3639
    %3641 = vmatpush1.msra.mxu0 %v3640
    %3642 = vmatprep.subr.mxu0 0.0
    %v3643 = vand.u32 %v2737, 4294901760
    %v3644 = vsub.f32 %v2737, %v3643
    %3645 = vmatpush1.msra.mxu0 %v3644
    %3646 = vmatprep.subr.mxu0 0.0
    %v3647 = vand.u32 %v2738, 4294901760
    %v3648 = vsub.f32 %v2738, %v3647
    %3649 = vmatpush1.msra.mxu0 %v3648
    %3650 = vmatprep.subr.mxu0 0.0
    %v3651 = vand.u32 %v2739, 4294901760
    %v3652 = vsub.f32 %v2739, %v3651
    %3653 = vmatpush1.msra.mxu0 %v3652
    %3654 = vmatprep.subr.mxu0 0.0
    %v3655 = vand.u32 %v2740, 4294901760
    %v3656 = vsub.f32 %v2740, %v3655
    %3657 = vmatpush1.msra.mxu0 %v3656
    %3658 = vmatprep.subr.mxu0 0.0
    %v3659 = vand.u32 %v2741, 4294901760
    %v3660 = vsub.f32 %v2741, %v3659
    %3661 = vmatpush1.msra.mxu0 %v3660
    %3662 = vmatprep.subr.mxu0 0.0
    %v3663 = vand.u32 %v2742, 4294901760
    %v3664 = vsub.f32 %v2742, %v3663
    %3665 = vmatpush1.msra.mxu0 %v3664
    %3666 = vmatprep.subr.mxu0 0.0
    %v3667 = vand.u32 %v2743, 4294901760
    %v3668 = vsub.f32 %v2743, %v3667
    %3669 = vmatpush1.msra.mxu0 %v3668
    %3670 = vmatprep.subr.mxu0 0.0
    %v3671 = vand.u32 %v2744, 4294901760
    %v3672 = vsub.f32 %v2744, %v3671
    %3673 = vmatpush1.msra.mxu0 %v3672
    %3674 = vmatprep.subr.mxu0 0.0
    %v3675 = vand.u32 %v2745, 4294901760
    %v3676 = vsub.f32 %v2745, %v3675
    %3677 = vmatpush1.msra.mxu0 %v3676
    %3678 = vmatprep.subr.mxu0 0.0
    %v3679 = vand.u32 %v2746, 4294901760
    %v3680 = vsub.f32 %v2746, %v3679
    %3681 = vmatpush1.msra.mxu0 %v3680
    %3682 = vmatprep.subr.mxu0 0.0
    %v3683 = vand.u32 %v2747, 4294901760
    %v3684 = vsub.f32 %v2747, %v3683
    %3685 = vmatpush1.msra.mxu0 %v3684
    %3686 = vmatprep.subr.mxu0 0.0
    %v3687 = vand.u32 %v2748, 4294901760
    %v3688 = vsub.f32 %v2748, %v3687
    %3689 = vmatpush1.msra.mxu0 %v3688
    %3690 = vmatprep.subr.mxu0 0.0
    %v3691 = vand.u32 %v2749, 4294901760
    %v3692 = vsub.f32 %v2749, %v3691
    %3693 = vmatpush1.msra.mxu0 %v3692
    %3694 = vmatprep.subr.mxu0 0.0
    %v3695 = vand.u32 %v2750, 4294901760
    %v3696 = vsub.f32 %v2750, %v3695
    %3697 = vmatpush1.msra.mxu0 %v3696
    %3698 = vmatprep.subr.mxu0 0.0
    %3699 = vmatpush1.msra.mxu0 0.0
    %3700 = vmatprep.subr.mxu0 0.0
    %3701 = vmatpush1.msra.mxu0 0.0
    %3702 = vmatprep.subr.mxu0 0.0
    %3703 = vmatpush1.msra.mxu0 0.0
    %3704 = vmatprep.subr.mxu0 0.0
    %3705 = vmatpush1.msra.mxu0 0.0
    %3706 = vmatprep.subr.mxu0 0.0
    %3707 = vmatpush1.msra.mxu0 0.0
    %3708 = vmatprep.subr.mxu0 0.0
    %3709 = vmatpush1.msra.mxu0 0.0
    %3710 = vmatprep.subr.mxu0 0.0
    %3711 = vmatpush1.msra.mxu0 0.0
    %3712 = vmatprep.subr.mxu0 0.0
    %3713 = vmatpush1.msra.mxu0 0.0
    %3714 = vmatprep.subr.mxu0 0.0
    %3715 = vmatpush1.msra.mxu0 0.0
    %3716 = vmatprep.subr.mxu0 0.0
    %3717 = vmatpush1.msra.mxu0 0.0
    %3718 = vmatprep.subr.mxu0 0.0
    %3719 = vmatpush1.msra.mxu0 0.0
    %3720 = vmatprep.subr.mxu0 0.0
    %3721 = vmatpush1.msra.mxu0 0.0
    %3722 = vmatprep.subr.mxu0 0.0
    %3723 = vmatpush1.msra.mxu0 0.0
    %3724 = vmatprep.subr.mxu0 0.0
    %3725 = vmatpush1.msra.mxu0 0.0
    %3726 = vmatprep.subr.mxu0 0.0
    %3727 = vmatpush1.msra.mxu0 0.0
    %3728 = vmatprep.subr.mxu0 0.0
    %3729 = vmatpush1.msra.mxu0 0.0
    %3730 = vmatprep.mubr.f32.mxu0 0.0
    %v3731 = vand.u32 %v2734, 4294901760
    %v3732 = vsub.f32 %v2734, %v3731
    %3733 = vmatmul.mubr.f32.gmra.mrb[0].mxu0 %v3732
    %v3734 = vpop.f32.mrb[0].mxu0
    %v3735 = vadd.f32 %v3631, %v3734
    %v3736 = vpop.f32.mrb[0].mxu0
    %3737 = vdwg.mxu0
    %3738 = vmatprep.subr.mxu0 0.0
    %v3739 = vand.u32 %v2735, 4294901760
    %3740 = vmatpush1.msra.mxu0 %v3739
    %3741 = vmatprep.subr.mxu0 0.0
    %v3742 = vand.u32 %v2736, 4294901760
    %3743 = vmatpush1.msra.mxu0 %v3742
    %3744 = vmatprep.subr.mxu0 0.0
    %v3745 = vand.u32 %v2737, 4294901760
    %3746 = vmatpush1.msra.mxu0 %v3745
    %3747 = vmatprep.subr.mxu0 0.0
    %v3748 = vand.u32 %v2738, 4294901760
    %3749 = vmatpush1.msra.mxu0 %v3748
    %3750 = vmatprep.subr.mxu0 0.0
    %v3751 = vand.u32 %v2739, 4294901760
    %3752 = vmatpush1.msra.mxu0 %v3751
    %3753 = vmatprep.subr.mxu0 0.0
    %v3754 = vand.u32 %v2740, 4294901760
    %3755 = vmatpush1.msra.mxu0 %v3754
    %3756 = vmatprep.subr.mxu0 0.0
    %v3757 = vand.u32 %v2741, 4294901760
    %3758 = vmatpush1.msra.mxu0 %v3757
    %3759 = vmatprep.subr.mxu0 0.0
    %v3760 = vand.u32 %v2742, 4294901760
    %3761 = vmatpush1.msra.mxu0 %v3760
    %3762 = vmatprep.subr.mxu0 0.0
    %v3763 = vand.u32 %v2743, 4294901760
    %3764 = vmatpush1.msra.mxu0 %v3763
    %3765 = vmatprep.subr.mxu0 0.0
    %v3766 = vand.u32 %v2744, 4294901760
    %3767 = vmatpush1.msra.mxu0 %v3766
    %3768 = vmatprep.subr.mxu0 0.0
    %v3769 = vand.u32 %v2745, 4294901760
    %3770 = vmatpush1.msra.mxu0 %v3769
    %3771 = vmatprep.subr.mxu0 0.0
    %v3772 = vand.u32 %v2746, 4294901760
    %3773 = vmatpush1.msra.mxu0 %v3772
    %3774 = vmatprep.subr.mxu0 0.0
    %v3775 = vand.u32 %v2747, 4294901760
    %3776 = vmatpush1.msra.mxu0 %v3775
    %3777 = vmatprep.subr.mxu0 0.0
    %v3778 = vand.u32 %v2748, 4294901760
    %3779 = vmatpush1.msra.mxu0 %v3778
    %3780 = vmatprep.subr.mxu0 0.0
    %v3781 = vand.u32 %v2749, 4294901760
    %3782 = vmatpush1.msra.mxu0 %v3781
    %3783 = vmatprep.subr.mxu0 0.0
    %v3784 = vand.u32 %v2750, 4294901760
    %3785 = vmatpush1.msra.mxu0 %v3784
    %3786 = vmatprep.subr.mxu0 0.0
    %3787 = vmatpush1.msra.mxu0 0.0
    %3788 = vmatprep.subr.mxu0 0.0
    %3789 = vmatpush1.msra.mxu0 0.0
    %3790 = vmatprep.subr.mxu0 0.0
    %3791 = vmatpush1.msra.mxu0 0.0
    %3792 = vmatprep.subr.mxu0 0.0
    %3793 = vmatpush1.msra.mxu0 0.0
    %3794 = vmatprep.subr.mxu0 0.0
    %3795 = vmatpush1.msra.mxu0 0.0
    %3796 = vmatprep.subr.mxu0 0.0
    %3797 = vmatpush1.msra.mxu0 0.0
    %3798 = vmatprep.subr.mxu0 0.0
    %3799 = vmatpush1.msra.mxu0 0.0
    %3800 = vmatprep.subr.mxu0 0.0
    %3801 = vmatpush1.msra.mxu0 0.0
    %3802 = vmatprep.subr.mxu0 0.0
    %3803 = vmatpush1.msra.mxu0 0.0
    %3804 = vmatprep.subr.mxu0 0.0
    %3805 = vmatpush1.msra.mxu0 0.0
    %3806 = vmatprep.subr.mxu0 0.0
    %3807 = vmatpush1.msra.mxu0 0.0
    %3808 = vmatprep.subr.mxu0 0.0
    %3809 = vmatpush1.msra.mxu0 0.0
    %3810 = vmatprep.subr.mxu0 0.0
    %3811 = vmatpush1.msra.mxu0 0.0
    %3812 = vmatprep.subr.mxu0 0.0
    %3813 = vmatpush1.msra.mxu0 0.0
    %3814 = vmatprep.subr.mxu0 0.0
    %3815 = vmatpush1.msra.mxu0 0.0
    %3816 = vmatprep.subr.mxu0 0.0
    %3817 = vmatpush1.msra.mxu0 0.0
    %3818 = vmatprep.mubr.f32.mxu0 0.0
    %v3819 = vand.u32 %v2734, 4294901760
    %v3820 = vsub.f32 %v2734, %v3819
    %v3821 = vand.u32 %v3820, 4294901760
    %3822 = vmatmul.mubr.f32.gmra.mrb[0].mxu0 %v3821
    %v3823 = vpop.f32.mrb[0].mxu0
    %v3824 = vadd.f32 %v3735, %v3823
    %v3825 = vpop.f32.mrb[0].mxu0
    %3826 = vdwg.mxu0
    %3827 = vmatprep.subr.mxu0 0.0
    %v3828 = vand.u32 %v2735, 4294901760
    %v3829 = vsub.f32 %v2735, %v3828
    %v3830 = vand.u32 %v3829, 4294901760
    %3831 = vmatpush1.msra.mxu0 %v3830
    %3832 = vmatprep.subr.mxu0 0.0
    %v3833 = vand.u32 %v2736, 4294901760
    %v3834 = vsub.f32 %v2736, %v3833
    %v3835 = vand.u32 %v3834, 4294901760
    %3836 = vmatpush1.msra.mxu0 %v3835
    %3837 = vmatprep.subr.mxu0 0.0
    %v3838 = vand.u32 %v2737, 4294901760
    %v3839 = vsub.f32 %v2737, %v3838
    %v3840 = vand.u32 %v3839, 4294901760
    %3841 = vmatpush1.msra.mxu0 %v3840
    %3842 = vmatprep.subr.mxu0 0.0
    %v3843 = vand.u32 %v2738, 4294901760
    %v3844 = vsub.f32 %v2738, %v3843
    %v3845 = vand.u32 %v3844, 4294901760
    %3846 = vmatpush1.msra.mxu0 %v3845
    %3847 = vmatprep.subr.mxu0 0.0
    %v3848 = vand.u32 %v2739, 4294901760
    %v3849 = vsub.f32 %v2739, %v3848
    %v3850 = vand.u32 %v3849, 4294901760
    %3851 = vmatpush1.msra.mxu0 %v3850
    %3852 = vmatprep.subr.mxu0 0.0
    %v3853 = vand.u32 %v2740, 4294901760
    %v3854 = vsub.f32 %v2740, %v3853
    %v3855 = vand.u32 %v3854, 4294901760
    %3856 = vmatpush1.msra.mxu0 %v3855
    %3857 = vmatprep.subr.mxu0 0.0
    %v3858 = vand.u32 %v2741, 4294901760
    %v3859 = vsub.f32 %v2741, %v3858
    %v3860 = vand.u32 %v3859, 4294901760
    %3861 = vmatpush1.msra.mxu0 %v3860
    %3862 = vmatprep.subr.mxu0 0.0
    %v3863 = vand.u32 %v2742, 4294901760
    %v3864 = vsub.f32 %v2742, %v3863
    %v3865 = vand.u32 %v3864, 4294901760
    %3866 = vmatpush1.msra.mxu0 %v3865
    %3867 = vmatprep.subr.mxu0 0.0
    %v3868 = vand.u32 %v2743, 4294901760
    %v3869 = vsub.f32 %v2743, %v3868
    %v3870 = vand.u32 %v3869, 4294901760
    %3871 = vmatpush1.msra.mxu0 %v3870
    %3872 = vmatprep.subr.mxu0 0.0
    %v3873 = vand.u32 %v2744, 4294901760
    %v3874 = vsub.f32 %v2744, %v3873
    %v3875 = vand.u32 %v3874, 4294901760
    %3876 = vmatpush1.msra.mxu0 %v3875
    %3877 = vmatprep.subr.mxu0 0.0
    %v3878 = vand.u32 %v2745, 4294901760
    %v3879 = vsub.f32 %v2745, %v3878
    %v3880 = vand.u32 %v3879, 4294901760
    %3881 = vmatpush1.msra.mxu0 %v3880
    %3882 = vmatprep.subr.mxu0 0.0
    %v3883 = vand.u32 %v2746, 4294901760
    %v3884 = vsub.f32 %v2746, %v3883
    %v3885 = vand.u32 %v3884, 4294901760
    %3886 = vmatpush1.msra.mxu0 %v3885
    %3887 = vmatprep.subr.mxu0 0.0
    %v3888 = vand.u32 %v2747, 4294901760
    %v3889 = vsub.f32 %v2747, %v3888
    %v3890 = vand.u32 %v3889, 4294901760
    %3891 = vmatpush1.msra.mxu0 %v3890
    %3892 = vmatprep.subr.mxu0 0.0
    %v3893 = vand.u32 %v2748, 4294901760
    %v3894 = vsub.f32 %v2748, %v3893
    %v3895 = vand.u32 %v3894, 4294901760
    %3896 = vmatpush1.msra.mxu0 %v3895
    %3897 = vmatprep.subr.mxu0 0.0
    %v3898 = vand.u32 %v2749, 4294901760
    %v3899 = vsub.f32 %v2749, %v3898
    %v3900 = vand.u32 %v3899, 4294901760
    %3901 = vmatpush1.msra.mxu0 %v3900
    %3902 = vmatprep.subr.mxu0 0.0
    %v3903 = vand.u32 %v2750, 4294901760
    %v3904 = vsub.f32 %v2750, %v3903
    %v3905 = vand.u32 %v3904, 4294901760
    %3906 = vmatpush1.msra.mxu0 %v3905
    %3907 = vmatprep.subr.mxu0 0.0
    %3908 = vmatpush1.msra.mxu0 0.0
    %3909 = vmatprep.subr.mxu0 0.0
    %3910 = vmatpush1.msra.mxu0 0.0
    %3911 = vmatprep.subr.mxu0 0.0
    %3912 = vmatpush1.msra.mxu0 0.0
    %3913 = vmatprep.subr.mxu0 0.0
    %3914 = vmatpush1.msra.mxu0 0.0
    %3915 = vmatprep.subr.mxu0 0.0
    %3916 = vmatpush1.msra.mxu0 0.0
    %3917 = vmatprep.subr.mxu0 0.0
    %3918 = vmatpush1.msra.mxu0 0.0
    %3919 = vmatprep.subr.mxu0 0.0
    %3920 = vmatpush1.msra.mxu0 0.0
    %3921 = vmatprep.subr.mxu0 0.0
    %3922 = vmatpush1.msra.mxu0 0.0
    %3923 = vmatprep.subr.mxu0 0.0
    %3924 = vmatpush1.msra.mxu0 0.0
    %3925 = vmatprep.subr.mxu0 0.0
    %3926 = vmatpush1.msra.mxu0 0.0
    %3927 = vmatprep.subr.mxu0 0.0
    %3928 = vmatpush1.msra.mxu0 0.0
    %3929 = vmatprep.subr.mxu0 0.0
    %3930 = vmatpush1.msra.mxu0 0.0
    %3931 = vmatprep.subr.mxu0 0.0
    %3932 = vmatpush1.msra.mxu0 0.0
    %3933 = vmatprep.subr.mxu0 0.0
    %3934 = vmatpush1.msra.mxu0 0.0
    %3935 = vmatprep.subr.mxu0 0.0
    %3936 = vmatpush1.msra.mxu0 0.0
    %3937 = vmatprep.subr.mxu0 0.0
    %3938 = vmatpush1.msra.mxu0 0.0
    %3939 = vmatprep.mubr.f32.mxu0 0.0
    %v3940 = vand.u32 %v2734, 4294901760
    %3941 = vmatmul.mubr.f32.gmra.mrb[0].mxu0 %v3940
    %v3942 = vpop.f32.mrb[0].mxu0
    %v3943 = vadd.f32 %v3824, %v3942
    %v3944 = vpop.f32.mrb[0].mxu0
    %3945 = vdwg.mxu0
    %3946 = vmatprep.subr.mxu0 0.0
    %v3947 = vand.u32 %v2735, 4294901760
    %3948 = vmatpush1.msra.mxu0 %v3947
    %3949 = vmatprep.subr.mxu0 0.0
    %v3950 = vand.u32 %v2736, 4294901760
    %3951 = vmatpush1.msra.mxu0 %v3950
    %3952 = vmatprep.subr.mxu0 0.0
    %v3953 = vand.u32 %v2737, 4294901760
    %3954 = vmatpush1.msra.mxu0 %v3953
    %3955 = vmatprep.subr.mxu0 0.0
    %v3956 = vand.u32 %v2738, 4294901760
    %3957 = vmatpush1.msra.mxu0 %v3956
    %3958 = vmatprep.subr.mxu0 0.0
    %v3959 = vand.u32 %v2739, 4294901760
    %3960 = vmatpush1.msra.mxu0 %v3959
    %3961 = vmatprep.subr.mxu0 0.0
    %v3962 = vand.u32 %v2740, 4294901760
    %3963 = vmatpush1.msra.mxu0 %v3962
    %3964 = vmatprep.subr.mxu0 0.0
    %v3965 = vand.u32 %v2741, 4294901760
    %3966 = vmatpush1.msra.mxu0 %v3965
    %3967 = vmatprep.subr.mxu0 0.0
    %v3968 = vand.u32 %v2742, 4294901760
    %3969 = vmatpush1.msra.mxu0 %v3968
    %3970 = vmatprep.subr.mxu0 0.0
    %v3971 = vand.u32 %v2743, 4294901760
    %3972 = vmatpush1.msra.mxu0 %v3971
    %3973 = vmatprep.subr.mxu0 0.0
    %v3974 = vand.u32 %v2744, 4294901760
    %3975 = vmatpush1.msra.mxu0 %v3974
    %3976 = vmatprep.subr.mxu0 0.0
    %v3977 = vand.u32 %v2745, 4294901760
    %3978 = vmatpush1.msra.mxu0 %v3977
    %3979 = vmatprep.subr.mxu0 0.0
    %v3980 = vand.u32 %v2746, 4294901760
    %3981 = vmatpush1.msra.mxu0 %v3980
    %3982 = vmatprep.subr.mxu0 0.0
    %v3983 = vand.u32 %v2747, 4294901760
    %3984 = vmatpush1.msra.mxu0 %v3983
    %3985 = vmatprep.subr.mxu0 0.0
    %v3986 = vand.u32 %v2748, 4294901760
    %3987 = vmatpush1.msra.mxu0 %v3986
    %3988 = vmatprep.subr.mxu0 0.0
    %v3989 = vand.u32 %v2749, 4294901760
    %3990 = vmatpush1.msra.mxu0 %v3989
    %3991 = vmatprep.subr.mxu0 0.0
    %v3992 = vand.u32 %v2750, 4294901760
    %3993 = vmatpush1.msra.mxu0 %v3992
    %3994 = vmatprep.subr.mxu0 0.0
    %3995 = vmatpush1.msra.mxu0 0.0
    %3996 = vmatprep.subr.mxu0 0.0
    %3997 = vmatpush1.msra.mxu0 0.0
    %3998 = vmatprep.subr.mxu0 0.0
    %3999 = vmatpush1.msra.mxu0 0.0
    %4000 = vmatprep.subr.mxu0 0.0
    %4001 = vmatpush1.msra.mxu0 0.0
    %4002 = vmatprep.subr.mxu0 0.0
    %4003 = vmatpush1.msra.mxu0 0.0
    %4004 = vmatprep.subr.mxu0 0.0
    %4005 = vmatpush1.msra.mxu0 0.0
    %4006 = vmatprep.subr.mxu0 0.0
    %4007 = vmatpush1.msra.mxu0 0.0
    %4008 = vmatprep.subr.mxu0 0.0
    %4009 = vmatpush1.msra.mxu0 0.0
    %4010 = vmatprep.subr.mxu0 0.0
    %4011 = vmatpush1.msra.mxu0 0.0
    %4012 = vmatprep.subr.mxu0 0.0
    %4013 = vmatpush1.msra.mxu0 0.0
    %4014 = vmatprep.subr.mxu0 0.0
    %4015 = vmatpush1.msra.mxu0 0.0
    %4016 = vmatprep.subr.mxu0 0.0
    %4017 = vmatpush1.msra.mxu0 0.0
    %4018 = vmatprep.subr.mxu0 0.0
    %4019 = vmatpush1.msra.mxu0 0.0
    %4020 = vmatprep.subr.mxu0 0.0
    %4021 = vmatpush1.msra.mxu0 0.0
    %4022 = vmatprep.subr.mxu0 0.0
    %4023 = vmatpush1.msra.mxu0 0.0
    %4024 = vmatprep.subr.mxu0 0.0
    %4025 = vmatpush1.msra.mxu0 0.0
    %4026 = vmatprep.mubr.f32.mxu0 0.0
    %v4027 = vand.u32 %v2734, 4294901760
    %4028 = vmatmul.mubr.f32.gmra.mrb[0].mxu0 %v4027
    %v4029 = vpop.f32.mrb[0].mxu0
    %v4030 = vadd.f32 %v3943, %v4029
    %v4031 = vpop.f32.mrb[0].mxu0
    %4032 = vdwg.mxu0
    %v4033 = vmul.f32 %v3389, %v1318
    %v4034 = vmul.f32 %v4030, %v1318
    %v4035 = vmul.f32 %v4033, %v4033
    %v4036 = vsub.f32 %v4034, %v4035
    %v4037 = vld [vmem:[#allocation9] sm:$0x1]
    %v4038 = vadd.f32 %v4036, 1e-05
    %v4039 = vrsqrt.pop %v4038
    %v4040 = vmul.f32 %v4037, %v4039
    %v4041 = vld [vmem:[#allocation11] sm:$0x1]
    %v4042 = vmul.f32 %v4033, %v4040
    %v4043 = vsub.f32 %v4041, %v4042
    %v4044 = vld [vmem:[%s16] sm:$0xff]
    %vm4045 = vcmask 64512
    %v4047 = vsel %vm4045, %v4040, 0
    %4049 = vmatprep.subr.mxu0 0.0
    %v4050 = vand.u32 %v4044, 4294901760
    %4051 = vmatpush1.msra.mxu0 %v4050
    %4052 = vmatprep.subr.mxu0 0.0
    %4053 = vmatpush1.msra.mxu0 0.0
    %4054 = vmatprep.subr.mxu0 0.0
    %4055 = vmatpush1.msra.mxu0 0.0
    %4056 = vmatprep.subr.mxu0 0.0
    %4057 = vmatpush1.msra.mxu0 0.0
    %4058 = vmatprep.subr.mxu0 0.0
    %4059 = vmatpush1.msra.mxu0 0.0
    %4060 = vmatprep.subr.mxu0 0.0
    %4061 = vmatpush1.msra.mxu0 0.0
    %4062 = vmatprep.subr.mxu0 0.0
    %4063 = vmatpush1.msra.mxu0 0.0
    %4064 = vmatprep.subr.mxu0 0.0
    %4065 = vmatpush1.msra.mxu0 0.0
    %4066 = vmatprep.subr.mxu0 0.0
    %4067 = vmatpush1.msra.mxu0 0.0
    %4068 = vmatprep.subr.mxu0 0.0
    %4069 = vmatpush1.msra.mxu0 0.0
    %4070 = vmatprep.subr.mxu0 0.0
    %4071 = vmatpush1.msra.mxu0 0.0
    %4072 = vmatprep.subr.mxu0 0.0
    %4073 = vmatpush1.msra.mxu0 0.0
    %4074 = vmatprep.subr.mxu0 0.0
    %4075 = vmatpush1.msra.mxu0 0.0
    %4076 = vmatprep.subr.mxu0 0.0
    %4077 = vmatpush1.msra.mxu0 0.0
    %4078 = vmatprep.subr.mxu0 0.0
    %4079 = vmatpush1.msra.mxu0 0.0
    %4080 = vmatprep.subr.mxu0 0.0
    %4081 = vmatpush1.msra.mxu0 0.0
    %4082 = vmatprep.subr.mxu0 0.0
    %4083 = vmatpush1.msra.mxu0 0.0
    %4084 = vmatprep.subr.mxu0 0.0
    %4085 = vmatpush1.msra.mxu0 0.0
    %4086 = vmatprep.subr.mxu0 0.0
    %4087 = vmatpush1.msra.mxu0 0.0
    %4088 = vmatprep.subr.mxu0 0.0
    %4089 = vmatpush1.msra.mxu0 0.0
    %4090 = vmatprep.subr.mxu0 0.0
    %4091 = vmatpush1.msra.mxu0 0.0
    %4092 = vmatprep.subr.mxu0 0.0
    %4093 = vmatpush1.msra.mxu0 0.0
    %4094 = vmatprep.subr.mxu0 0.0
    %4095 = vmatpush1.msra.mxu0 0.0
    %4096 = vmatprep.subr.mxu0 0.0
    %4097 = vmatpush1.msra.mxu0 0.0
    %4098 = vmatprep.subr.mxu0 0.0
    %4099 = vmatpush1.msra.mxu0 0.0
    %4100 = vmatprep.subr.mxu0 0.0
    %4101 = vmatpush1.msra.mxu0 0.0
    %4102 = vmatprep.subr.mxu0 0.0
    %4103 = vmatpush1.msra.mxu0 0.0
    %4104 = vmatprep.subr.mxu0 0.0
    %4105 = vmatpush1.msra.mxu0 0.0
    %4106 = vmatprep.subr.mxu0 0.0
    %4107 = vmatpush1.msra.mxu0 0.0
    %4108 = vmatprep.subr.mxu0 0.0
    %4109 = vmatpush1.msra.mxu0 0.0
    %4110 = vmatprep.subr.mxu0 0.0
    %4111 = vmatpush1.msra.mxu0 0.0
    %4112 = vmatprep.subr.mxu0 0.0
    %4113 = vmatpush1.msra.mxu0 0.0
    %4114 = vmatprep.mubr.f32.mxu0 0.0
    %v4115 = vand.u32 %v4047, 4294901760
    %v4116 = vsub.f32 %v4047, %v4115
    %v4117 = vand.u32 %v4116, 4294901760
    %v4118 = vsub.f32 %v4116, %v4117
    %v4119 = vand.u32 %v4118, 4294901760
    %4120 = vmatmul.mubr.f32.gmra.mrb[0].mxu0 %v4119
    %v4121 = vpop.f32.mrb[0].mxu0
    %v4122 = vadd.f32 0.0, %v4121
    %v4123 = vpop.f32.mrb[0].mxu0
    %4124 = vdwg.mxu0
    %4125 = vmatprep.subr.mxu0 0.0
    %v4126 = vand.u32 %v4044, 4294901760
    %v4127 = vsub.f32 %v4044, %v4126
    %v4128 = vand.u32 %v4127, 4294901760
    %v4129 = vsub.f32 %v4127, %v4128
    %v4130 = vand.u32 %v4129, 4294901760
    %4131 = vmatpush1.msra.mxu0 %v4130
    %4132 = vmatprep.subr.mxu0 0.0
    %4133 = vmatpush1.msra.mxu0 0.0
    %4134 = vmatprep.subr.mxu0 0.0
    %4135 = vmatpush1.msra.mxu0 0.0
    %4136 = vmatprep.subr.mxu0 0.0
    %4137 = vmatpush1.msra.mxu0 0.0
    %4138 = vmatprep.subr.mxu0 0.0
    %4139 = vmatpush1.msra.mxu0 0.0
    %4140 = vmatprep.subr.mxu0 0.0
    %4141 = vmatpush1.msra.mxu0 0.0
    %4142 = vmatprep.subr.mxu0 0.0
    %4143 = vmatpush1.msra.mxu0 0.0
    %4144 = vmatprep.subr.mxu0 0.0
    %4145 = vmatpush1.msra.mxu0 0.0
    %4146 = vmatprep.subr.mxu0 0.0
    %4147 = vmatpush1.msra.mxu0 0.0
    %4148 = vmatprep.subr.mxu0 0.0
    %4149 = vmatpush1.msra.mxu0 0.0
    %4150 = vmatprep.subr.mxu0 0.0
    %4151 = vmatpush1.msra.mxu0 0.0
    %4152 = vmatprep.subr.mxu0 0.0
    %4153 = vmatpush1.msra.mxu0 0.0
    %4154 = vmatprep.subr.mxu0 0.0
    %4155 = vmatpush1.msra.mxu0 0.0
    %4156 = vmatprep.subr.mxu0 0.0
    %4157 = vmatpush1.msra.mxu0 0.0
    %4158 = vmatprep.subr.mxu0 0.0
    %4159 = vmatpush1.msra.mxu0 0.0
    %4160 = vmatprep.subr.mxu0 0.0
    %4161 = vmatpush1.msra.mxu0 0.0
    %4162 = vmatprep.subr.mxu0 0.0
    %4163 = vmatpush1.msra.mxu0 0.0
    %4164 = vmatprep.subr.mxu0 0.0
    %4165 = vmatpush1.msra.mxu0 0.0
    %4166 = vmatprep.subr.mxu0 0.0
    %4167 = vmatpush1.msra.mxu0 0.0
    %4168 = vmatprep.subr.mxu0 0.0
    %4169 = vmatpush1.msra.mxu0 0.0
    %4170 = vmatprep.subr.mxu0 0.0
    %4171 = vmatpush1.msra.mxu0 0.0
    %4172 = vmatprep.subr.mxu0 0.0
    %4173 = vmatpush1.msra.mxu0 0.0
    %4174 = vmatprep.subr.mxu0 0.0
    %4175 = vmatpush1.msra.mxu0 0.0
    %4176 = vmatprep.subr.mxu0 0.0
    %4177 = vmatpush1.msra.mxu0 0.0
    %4178 = vmatprep.subr.mxu0 0.0
    %4179 = vmatpush1.msra.mxu0 0.0
    %4180 = vmatprep.subr.mxu0 0.0
    %4181 = vmatpush1.msra.mxu0 0.0
    %4182 = vmatprep.subr.mxu0 0.0
    %4183 = vmatpush1.msra.mxu0 0.0
    %4184 = vmatprep.subr.mxu0 0.0
    %4185 = vmatpush1.msra.mxu0 0.0
    %4186 = vmatprep.subr.mxu0 0.0
    %4187 = vmatpush1.msra.mxu0 0.0
    %4188 = vmatprep.subr.mxu0 0.0
    %4189 = vmatpush1.msra.mxu0 0.0
    %4190 = vmatprep.subr.mxu0 0.0
    %4191 = vmatpush1.msra.mxu0 0.0
    %4192 = vmatprep.subr.mxu0 0.0
    %4193 = vmatpush1.msra.mxu0 0.0
    %4194 = vmatprep.mubr.f32.mxu0 0.0
    %v4195 = vand.u32 %v4047, 4294901760
    %4196 = vmatmul.mubr.f32.gmra.mrb[0].mxu0 %v4195
    %v4197 = vpop.f32.mrb[0].mxu0
    %v4198 = vadd.f32 %v4122, %v4197
    %v4199 = vpop.f32.mrb[0].mxu0
    %4200 = vdwg.mxu0
    %4201 = vmatprep.subr.mxu0 0.0
    %v4202 = vand.u32 %v4044, 4294901760
    %v4203 = vsub.f32 %v4044, %v4202
    %4204 = vmatpush1.msra.mxu0 %v4203
    %4205 = vmatprep.subr.mxu0 0.0
    %4206 = vmatpush1.msra.mxu0 0.0
    %4207 = vmatprep.subr.mxu0 0.0
    %4208 = vmatpush1.msra.mxu0 0.0
    %4209 = vmatprep.subr.mxu0 0.0
    %4210 = vmatpush1.msra.mxu0 0.0
    %4211 = vmatprep.subr.mxu0 0.0
    %4212 = vmatpush1.msra.mxu0 0.0
    %4213 = vmatprep.subr.mxu0 0.0
    %4214 = vmatpush1.msra.mxu0 0.0
    %4215 = vmatprep.subr.mxu0 0.0
    %4216 = vmatpush1.msra.mxu0 0.0
    %4217 = vmatprep.subr.mxu0 0.0
    %4218 = vmatpush1.msra.mxu0 0.0
    %4219 = vmatprep.subr.mxu0 0.0
    %4220 = vmatpush1.msra.mxu0 0.0
    %4221 = vmatprep.subr.mxu0 0.0
    %4222 = vmatpush1.msra.mxu0 0.0
    %4223 = vmatprep.subr.mxu0 0.0
    %4224 = vmatpush1.msra.mxu0 0.0
    %4225 = vmatprep.subr.mxu0 0.0
    %4226 = vmatpush1.msra.mxu0 0.0
    %4227 = vmatprep.subr.mxu0 0.0
    %4228 = vmatpush1.msra.mxu0 0.0
    %4229 = vmatprep.subr.mxu0 0.0
    %4230 = vmatpush1.msra.mxu0 0.0
    %4231 = vmatprep.subr.mxu0 0.0
    %4232 = vmatpush1.msra.mxu0 0.0
    %4233 = vmatprep.subr.mxu0 0.0
    %4234 = vmatpush1.msra.mxu0 0.0
    %4235 = vmatprep.subr.mxu0 0.0
    %4236 = vmatpush1.msra.mxu0 0.0
    %4237 = vmatprep.subr.mxu0 0.0
    %4238 = vmatpush1.msra.mxu0 0.0
    %4239 = vmatprep.subr.mxu0 0.0
    %4240 = vmatpush1.msra.mxu0 0.0
    %4241 = vmatprep.subr.mxu0 0.0
    %4242 = vmatpush1.msra.mxu0 0.0
    %4243 = vmatprep.subr.mxu0 0.0
    %4244 = vmatpush1.msra.mxu0 0.0
    %4245 = vmatprep.subr.mxu0 0.0
    %4246 = vmatpush1.msra.mxu0 0.0
    %4247 = vmatprep.subr.mxu0 0.0
    %4248 = vmatpush1.msra.mxu0 0.0
    %4249 = vmatprep.subr.mxu0 0.0
    %4250 = vmatpush1.msra.mxu0 0.0
    %4251 = vmatprep.subr.mxu0 0.0
    %4252 = vmatpush1.msra.mxu0 0.0
    %4253 = vmatprep.subr.mxu0 0.0
    %4254 = vmatpush1.msra.mxu0 0.0
    %4255 = vmatprep.subr.mxu0 0.0
    %4256 = vmatpush1.msra.mxu0 0.0
    %4257 = vmatprep.subr.mxu0 0.0
    %4258 = vmatpush1.msra.mxu0 0.0
    %4259 = vmatprep.subr.mxu0 0.0
    %4260 = vmatpush1.msra.mxu0 0.0
    %4261 = vmatprep.subr.mxu0 0.0
    %4262 = vmatpush1.msra.mxu0 0.0
    %4263 = vmatprep.subr.mxu0 0.0
    %4264 = vmatpush1.msra.mxu0 0.0
    %4265 = vmatprep.subr.mxu0 0.0
    %4266 = vmatpush1.msra.mxu0 0.0
    %4267 = vmatprep.mubr.f32.mxu0 0.0
    %v4268 = vand.u32 %v4047, 4294901760
    %v4269 = vsub.f32 %v4047, %v4268
    %4270 = vmatmul.mubr.f32.gmra.mrb[0].mxu0 %v4269
    %v4271 = vpop.f32.mrb[0].mxu0
    %v4272 = vadd.f32 %v4198, %v4271
    %v4273 = vpop.f32.mrb[0].mxu0
    %4274 = vdwg.mxu0
    %4275 = vmatprep.subr.mxu0 0.0
    %v4276 = vand.u32 %v4044, 4294901760
    %4277 = vmatpush1.msra.mxu0 %v4276
    %4278 = vmatprep.subr.mxu0 0.0
    %4279 = vmatpush1.msra.mxu0 0.0
    %4280 = vmatprep.subr.mxu0 0.0
    %4281 = vmatpush1.msra.mxu0 0.0
    %4282 = vmatprep.subr.mxu0 0.0
    %4283 = vmatpush1.msra.mxu0 0.0
    %4284 = vmatprep.subr.mxu0 0.0
    %4285 = vmatpush1.msra.mxu0 0.0
    %4286 = vmatprep.subr.mxu0 0.0
    %4287 = vmatpush1.msra.mxu0 0.0
    %4288 = vmatprep.subr.mxu0 0.0
    %4289 = vmatpush1.msra.mxu0 0.0
    %4290 = vmatprep.subr.mxu0 0.0
    %4291 = vmatpush1.msra.mxu0 0.0
    %4292 = vmatprep.subr.mxu0 0.0
    %4293 = vmatpush1.msra.mxu0 0.0
    %4294 = vmatprep.subr.mxu0 0.0
    %4295 = vmatpush1.msra.mxu0 0.0
    %4296 = vmatprep.subr.mxu0 0.0
    %4297 = vmatpush1.msra.mxu0 0.0
    %4298 = vmatprep.subr.mxu0 0.0
    %4299 = vmatpush1.msra.mxu0 0.0
    %4300 = vmatprep.subr.mxu0 0.0
    %4301 = vmatpush1.msra.mxu0 0.0
    %4302 = vmatprep.subr.mxu0 0.0
    %4303 = vmatpush1.msra.mxu0 0.0
    %4304 = vmatprep.subr.mxu0 0.0
    %4305 = vmatpush1.msra.mxu0 0.0
    %4306 = vmatprep.subr.mxu0 0.0
    %4307 = vmatpush1.msra.mxu0 0.0
    %4308 = vmatprep.subr.mxu0 0.0
    %4309 = vmatpush1.msra.mxu0 0.0
    %4310 = vmatprep.subr.mxu0 0.0
    %4311 = vmatpush1.msra.mxu0 0.0
    %4312 = vmatprep.subr.mxu0 0.0
    %4313 = vmatpush1.msra.mxu0 0.0
    %4314 = vmatprep.subr.mxu0 0.0
    %4315 = vmatpush1.msra.mxu0 0.0
    %4316 = vmatprep.subr.mxu0 0.0
    %4317 = vmatpush1.msra.mxu0 0.0
    %4318 = vmatprep.subr.mxu0 0.0
    %4319 = vmatpush1.msra.mxu0 0.0
    %4320 = vmatprep.subr.mxu0 0.0
    %4321 = vmatpush1.msra.mxu0 0.0
    %4322 = vmatprep.subr.mxu0 0.0
    %4323 = vmatpush1.msra.mxu0 0.0
    %4324 = vmatprep.subr.mxu0 0.0
    %4325 = vmatpush1.msra.mxu0 0.0
    %4326 = vmatprep.subr.mxu0 0.0
    %4327 = vmatpush1.msra.mxu0 0.0
    %4328 = vmatprep.subr.mxu0 0.0
    %4329 = vmatpush1.msra.mxu0 0.0
    %4330 = vmatprep.subr.mxu0 0.0
    %4331 = vmatpush1.msra.mxu0 0.0
    %4332 = vmatprep.subr.mxu0 0.0
    %4333 = vmatpush1.msra.mxu0 0.0
    %4334 = vmatprep.subr.mxu0 0.0
    %4335 = vmatpush1.msra.mxu0 0.0
    %4336 = vmatprep.subr.mxu0 0.0
    %4337 = vmatpush1.msra.mxu0 0.0
    %4338 = vmatprep.subr.mxu0 0.0
    %4339 = vmatpush1.msra.mxu0 0.0
    %4340 = vmatprep.mubr.f32.mxu0 0.0
    %v4341 = vand.u32 %v4047, 4294901760
    %v4342 = vsub.f32 %v4047, %v4341
    %v4343 = vand.u32 %v4342, 4294901760
    %4344 = vmatmul.mubr.f32.gmra.mrb[0].mxu0 %v4343
    %v4345 = vpop.f32.mrb[0].mxu0
    %v4346 = vadd.f32 %v4272, %v4345
    %v4347 = vpop.f32.mrb[0].mxu0
    %4348 = vdwg.mxu0
    %4349 = vmatprep.subr.mxu0 0.0
    %v4350 = vand.u32 %v4044, 4294901760
    %v4351 = vsub.f32 %v4044, %v4350
    %v4352 = vand.u32 %v4351, 4294901760
    %4353 = vmatpush1.msra.mxu0 %v4352
    %4354 = vmatprep.subr.mxu0 0.0
    %4355 = vmatpush1.msra.mxu0 0.0
    %4356 = vmatprep.subr.mxu0 0.0
    %4357 = vmatpush1.msra.mxu0 0.0
    %4358 = vmatprep.subr.mxu0 0.0
    %4359 = vmatpush1.msra.mxu0 0.0
    %4360 = vmatprep.subr.mxu0 0.0
    %4361 = vmatpush1.msra.mxu0 0.0
    %4362 = vmatprep.subr.mxu0 0.0
    %4363 = vmatpush1.msra.mxu0 0.0
    %4364 = vmatprep.subr.mxu0 0.0
    %4365 = vmatpush1.msra.mxu0 0.0
    %4366 = vmatprep.subr.mxu0 0.0
    %4367 = vmatpush1.msra.mxu0 0.0
    %4368 = vmatprep.subr.mxu0 0.0
    %4369 = vmatpush1.msra.mxu0 0.0
    %4370 = vmatprep.subr.mxu0 0.0
    %4371 = vmatpush1.msra.mxu0 0.0
    %4372 = vmatprep.subr.mxu0 0.0
    %4373 = vmatpush1.msra.mxu0 0.0
    %4374 = vmatprep.subr.mxu0 0.0
    %4375 = vmatpush1.msra.mxu0 0.0
    %4376 = vmatprep.subr.mxu0 0.0
    %4377 = vmatpush1.msra.mxu0 0.0
    %4378 = vmatprep.subr.mxu0 0.0
    %4379 = vmatpush1.msra.mxu0 0.0
    %4380 = vmatprep.subr.mxu0 0.0
    %4381 = vmatpush1.msra.mxu0 0.0
    %4382 = vmatprep.subr.mxu0 0.0
    %4383 = vmatpush1.msra.mxu0 0.0
    %4384 = vmatprep.subr.mxu0 0.0
    %4385 = vmatpush1.msra.mxu0 0.0
    %4386 = vmatprep.subr.mxu0 0.0
    %4387 = vmatpush1.msra.mxu0 0.0
    %4388 = vmatprep.subr.mxu0 0.0
    %4389 = vmatpush1.msra.mxu0 0.0
    %4390 = vmatprep.subr.mxu0 0.0
    %4391 = vmatpush1.msra.mxu0 0.0
    %4392 = vmatprep.subr.mxu0 0.0
    %4393 = vmatpush1.msra.mxu0 0.0
    %4394 = vmatprep.subr.mxu0 0.0
    %4395 = vmatpush1.msra.mxu0 0.0
    %4396 = vmatprep.subr.mxu0 0.0
    %4397 = vmatpush1.msra.mxu0 0.0
    %4398 = vmatprep.subr.mxu0 0.0
    %4399 = vmatpush1.msra.mxu0 0.0
    %4400 = vmatprep.subr.mxu0 0.0
    %4401 = vmatpush1.msra.mxu0 0.0
    %4402 = vmatprep.subr.mxu0 0.0
    %4403 = vmatpush1.msra.mxu0 0.0
    %4404 = vmatprep.subr.mxu0 0.0
    %4405 = vmatpush1.msra.mxu0 0.0
    %4406 = vmatprep.subr.mxu0 0.0
    %4407 = vmatpush1.msra.mxu0 0.0
    %4408 = vmatprep.subr.mxu0 0.0
    %4409 = vmatpush1.msra.mxu0 0.0
    %4410 = vmatprep.subr.mxu0 0.0
    %4411 = vmatpush1.msra.mxu0 0.0
    %4412 = vmatprep.subr.mxu0 0.0
    %4413 = vmatpush1.msra.mxu0 0.0
    %4414 = vmatprep.subr.mxu0 0.0
    %4415 = vmatpush1.msra.mxu0 0.0
    %4416 = vmatprep.mubr.f32.mxu0 0.0
    %v4417 = vand.u32 %v4047, 4294901760
    %4418 = vmatmul.mubr.f32.gmra.mrb[0].mxu0 %v4417
    %v4419 = vpop.f32.mrb[0].mxu0
    %v4420 = vadd.f32 %v4346, %v4419
    %v4421 = vpop.f32.mrb[0].mxu0
    %4422 = vdwg.mxu0
    %4423 = vmatprep.subr.mxu0 0.0
    %v4424 = vand.u32 %v4044, 4294901760
    %4425 = vmatpush1.msra.mxu0 %v4424
    %4426 = vmatprep.subr.mxu0 0.0
    %4427 = vmatpush1.msra.mxu0 0.0
    %4428 = vmatprep.subr.mxu0 0.0
    %4429 = vmatpush1.msra.mxu0 0.0
    %4430 = vmatprep.subr.mxu0 0.0
    %4431 = vmatpush1.msra.mxu0 0.0
    %4432 = vmatprep.subr.mxu0 0.0
    %4433 = vmatpush1.msra.mxu0 0.0
    %4434 = vmatprep.subr.mxu0 0.0
    %4435 = vmatpush1.msra.mxu0 0.0
    %4436 = vmatprep.subr.mxu0 0.0
    %4437 = vmatpush1.msra.mxu0 0.0
    %4438 = vmatprep.subr.mxu0 0.0
    %4439 = vmatpush1.msra.mxu0 0.0
    %4440 = vmatprep.subr.mxu0 0.0
    %4441 = vmatpush1.msra.mxu0 0.0
    %4442 = vmatprep.subr.mxu0 0.0
    %4443 = vmatpush1.msra.mxu0 0.0
    %4444 = vmatprep.subr.mxu0 0.0
    %4445 = vmatpush1.msra.mxu0 0.0
    %4446 = vmatprep.subr.mxu0 0.0
    %4447 = vmatpush1.msra.mxu0 0.0
    %4448 = vmatprep.subr.mxu0 0.0
    %4449 = vmatpush1.msra.mxu0 0.0
    %4450 = vmatprep.subr.mxu0 0.0
    %4451 = vmatpush1.msra.mxu0 0.0
    %4452 = vmatprep.subr.mxu0 0.0
    %4453 = vmatpush1.msra.mxu0 0.0
    %4454 = vmatprep.subr.mxu0 0.0
    %4455 = vmatpush1.msra.mxu0 0.0
    %4456 = vmatprep.subr.mxu0 0.0
    %4457 = vmatpush1.msra.mxu0 0.0
    %4458 = vmatprep.subr.mxu0 0.0
    %4459 = vmatpush1.msra.mxu0 0.0
    %4460 = vmatprep.subr.mxu0 0.0
    %4461 = vmatpush1.msra.mxu0 0.0
    %4462 = vmatprep.subr.mxu0 0.0
    %4463 = vmatpush1.msra.mxu0 0.0
    %4464 = vmatprep.subr.mxu0 0.0
    %4465 = vmatpush1.msra.mxu0 0.0
    %4466 = vmatprep.subr.mxu0 0.0
    %4467 = vmatpush1.msra.mxu0 0.0
    %4468 = vmatprep.subr.mxu0 0.0
    %4469 = vmatpush1.msra.mxu0 0.0
    %4470 = vmatprep.subr.mxu0 0.0
    %4471 = vmatpush1.msra.mxu0 0.0
    %4472 = vmatprep.subr.mxu0 0.0
    %4473 = vmatpush1.msra.mxu0 0.0
    %4474 = vmatprep.subr.mxu0 0.0
    %4475 = vmatpush1.msra.mxu0 0.0
    %4476 = vmatprep.subr.mxu0 0.0
    %4477 = vmatpush1.msra.mxu0 0.0
    %4478 = vmatprep.subr.mxu0 0.0
    %4479 = vmatpush1.msra.mxu0 0.0
    %4480 = vmatprep.subr.mxu0 0.0
    %4481 = vmatpush1.msra.mxu0 0.0
    %4482 = vmatprep.subr.mxu0 0.0
    %4483 = vmatpush1.msra.mxu0 0.0
    %4484 = vmatprep.subr.mxu0 0.0
    %4485 = vmatpush1.msra.mxu0 0.0
    %4486 = vmatprep.subr.mxu0 0.0
    %4487 = vmatpush1.msra.mxu0 0.0
    %4488 = vmatprep.mubr.f32.mxu0 0.0
    %v4489 = vand.u32 %v4047, 4294901760
    %4490 = vmatmul.mubr.f32.gmra.mrb[0].mxu0 %v4489
    %v4491 = vpop.f32.mrb[0].mxu0
    %v4492 = vadd.f32 %v4420, %v4491
    %v4493 = vpop.f32.mrb[0].mxu0
    %4494 = vdwg.mxu0
    %v4496 = vsel %vm4045, %v4043, 0
    %4498 = vmatprep.subr.mxu0 0.0
    %v4499 = vand.u32 %v4044, 4294901760
    %4500 = vmatpush1.msra.mxu0 %v4499
    %4501 = vmatprep.subr.mxu0 0.0
    %4502 = vmatpush1.msra.mxu0 0.0
    %4503 = vmatprep.subr.mxu0 0.0
    %4504 = vmatpush1.msra.mxu0 0.0
    %4505 = vmatprep.subr.mxu0 0.0
    %4506 = vmatpush1.msra.mxu0 0.0
    %4507 = vmatprep.subr.mxu0 0.0
    %4508 = vmatpush1.msra.mxu0 0.0
    %4509 = vmatprep.subr.mxu0 0.0
    %4510 = vmatpush1.msra.mxu0 0.0
    %4511 = vmatprep.subr.mxu0 0.0
    %4512 = vmatpush1.msra.mxu0 0.0
    %4513 = vmatprep.subr.mxu0 0.0
    %4514 = vmatpush1.msra.mxu0 0.0
    %4515 = vmatprep.subr.mxu0 0.0
    %4516 = vmatpush1.msra.mxu0 0.0
    %4517 = vmatprep.subr.mxu0 0.0
    %4518 = vmatpush1.msra.mxu0 0.0
    %4519 = vmatprep.subr.mxu0 0.0
    %4520 = vmatpush1.msra.mxu0 0.0
    %4521 = vmatprep.subr.mxu0 0.0
    %4522 = vmatpush1.msra.mxu0 0.0
    %4523 = vmatprep.subr.mxu0 0.0
    %4524 = vmatpush1.msra.mxu0 0.0
    %4525 = vmatprep.subr.mxu0 0.0
    %4526 = vmatpush1.msra.mxu0 0.0
    %4527 = vmatprep.subr.mxu0 0.0
    %4528 = vmatpush1.msra.mxu0 0.0
    %4529 = vmatprep.subr.mxu0 0.0
    %4530 = vmatpush1.msra.mxu0 0.0
    %4531 = vmatprep.subr.mxu0 0.0
    %4532 = vmatpush1.msra.mxu0 0.0
    %4533 = vmatprep.subr.mxu0 0.0
    %4534 = vmatpush1.msra.mxu0 0.0
    %4535 = vmatprep.subr.mxu0 0.0
    %4536 = vmatpush1.msra.mxu0 0.0
    %4537 = vmatprep.subr.mxu0 0.0
    %4538 = vmatpush1.msra.mxu0 0.0
    %4539 = vmatprep.subr.mxu0 0.0
    %4540 = vmatpush1.msra.mxu0 0.0
    %4541 = vmatprep.subr.mxu0 0.0
    %4542 = vmatpush1.msra.mxu0 0.0
    %4543 = vmatprep.subr.mxu0 0.0
    %4544 = vmatpush1.msra.mxu0 0.0
    %4545 = vmatprep.subr.mxu0 0.0
    %4546 = vmatpush1.msra.mxu0 0.0
    %4547 = vmatprep.subr.mxu0 0.0
    %4548 = vmatpush1.msra.mxu0 0.0
    %4549 = vmatprep.subr.mxu0 0.0
    %4550 = vmatpush1.msra.mxu0 0.0
    %4551 = vmatprep.subr.mxu0 0.0
    %4552 = vmatpush1.msra.mxu0 0.0
    %4553 = vmatprep.subr.mxu0 0.0
    %4554 = vmatpush1.msra.mxu0 0.0
    %4555 = vmatprep.subr.mxu0 0.0
    %4556 = vmatpush1.msra.mxu0 0.0
    %4557 = vmatprep.subr.mxu0 0.0
    %4558 = vmatpush1.msra.mxu0 0.0
    %4559 = vmatprep.subr.mxu0 0.0
    %4560 = vmatpush1.msra.mxu0 0.0
    %4561 = vmatprep.subr.mxu0 0.0
    %4562 = vmatpush1.msra.mxu0 0.0
    %4563 = vmatprep.mubr.f32.mxu0 0.0
    %v4564 = vand.u32 %v4496, 4294901760
    %v4565 = vsub.f32 %v4496, %v4564
    %v4566 = vand.u32 %v4565, 4294901760
    %v4567 = vsub.f32 %v4565, %v4566
    %v4568 = vand.u32 %v4567, 4294901760
    %4569 = vmatmul.mubr.f32.gmra.mrb[0].mxu0 %v4568
    %v4570 = vpop.f32.mrb[0].mxu0
    %v4571 = vadd.f32 0.0, %v4570
    %v4572 = vpop.f32.mrb[0].mxu0
    %4573 = vdwg.mxu0
    %4574 = vmatprep.subr.mxu0 0.0
    %v4575 = vand.u32 %v4044, 4294901760
    %v4576 = vsub.f32 %v4044, %v4575
    %v4577 = vand.u32 %v4576, 4294901760
    %v4578 = vsub.f32 %v4576, %v4577
    %v4579 = vand.u32 %v4578, 4294901760
    %4580 = vmatpush1.msra.mxu0 %v4579
    %4581 = vmatprep.subr.mxu0 0.0
    %4582 = vmatpush1.msra.mxu0 0.0
    %4583 = vmatprep.subr.mxu0 0.0
    %4584 = vmatpush1.msra.mxu0 0.0
    %4585 = vmatprep.subr.mxu0 0.0
    %4586 = vmatpush1.msra.mxu0 0.0
    %4587 = vmatprep.subr.mxu0 0.0
    %4588 = vmatpush1.msra.mxu0 0.0
    %4589 = vmatprep.subr.mxu0 0.0
    %4590 = vmatpush1.msra.mxu0 0.0
    %4591 = vmatprep.subr.mxu0 0.0
    %4592 = vmatpush1.msra.mxu0 0.0
    %4593 = vmatprep.subr.mxu0 0.0
    %4594 = vmatpush1.msra.mxu0 0.0
    %4595 = vmatprep.subr.mxu0 0.0
    %4596 = vmatpush1.msra.mxu0 0.0
    %4597 = vmatprep.subr.mxu0 0.0
    %4598 = vmatpush1.msra.mxu0 0.0
    %4599 = vmatprep.subr.mxu0 0.0
    %4600 = vmatpush1.msra.mxu0 0.0
    %4601 = vmatprep.subr.mxu0 0.0
    %4602 = vmatpush1.msra.mxu0 0.0
    %4603 = vmatprep.subr.mxu0 0.0
    %4604 = vmatpush1.msra.mxu0 0.0
    %4605 = vmatprep.subr.mxu0 0.0
    %4606 = vmatpush1.msra.mxu0 0.0
    %4607 = vmatprep.subr.mxu0 0.0
    %4608 = vmatpush1.msra.mxu0 0.0
    %4609 = vmatprep.subr.mxu0 0.0
    %4610 = vmatpush1.msra.mxu0 0.0
    %4611 = vmatprep.subr.mxu0 0.0
    %4612 = vmatpush1.msra.mxu0 0.0
    %4613 = vmatprep.subr.mxu0 0.0
    %4614 = vmatpush1.msra.mxu0 0.0
    %4615 = vmatprep.subr.mxu0 0.0
    %4616 = vmatpush1.msra.mxu0 0.0
    %4617 = vmatprep.subr.mxu0 0.0
    %4618 = vmatpush1.msra.mxu0 0.0
    %4619 = vmatprep.subr.mxu0 0.0
    %4620 = vmatpush1.msra.mxu0 0.0
    %4621 = vmatprep.subr.mxu0 0.0
    %4622 = vmatpush1.msra.mxu0 0.0
    %4623 = vmatprep.subr.mxu0 0.0
    %4624 = vmatpush1.msra.mxu0 0.0
    %4625 = vmatprep.subr.mxu0 0.0
    %4626 = vmatpush1.msra.mxu0 0.0
    %4627 = vmatprep.subr.mxu0 0.0
    %4628 = vmatpush1.msra.mxu0 0.0
    %4629 = vmatprep.subr.mxu0 0.0
    %4630 = vmatpush1.msra.mxu0 0.0
    %4631 = vmatprep.subr.mxu0 0.0
    %4632 = vmatpush1.msra.mxu0 0.0
    %4633 = vmatprep.subr.mxu0 0.0
    %4634 = vmatpush1.msra.mxu0 0.0
    %4635 = vmatprep.subr.mxu0 0.0
    %4636 = vmatpush1.msra.mxu0 0.0
    %4637 = vmatprep.subr.mxu0 0.0
    %4638 = vmatpush1.msra.mxu0 0.0
    %4639 = vmatprep.subr.mxu0 0.0
    %4640 = vmatpush1.msra.mxu0 0.0
    %4641 = vmatprep.subr.mxu0 0.0
    %4642 = vmatpush1.msra.mxu0 0.0
    %4643 = vmatprep.mubr.f32.mxu0 0.0
    %v4644 = vand.u32 %v4496, 4294901760
    %4645 = vmatmul.mubr.f32.gmra.mrb[0].mxu0 %v4644
    %v4646 = vpop.f32.mrb[0].mxu0
    %v4647 = vadd.f32 %v4571, %v4646
    %v4648 = vpop.f32.mrb[0].mxu0
    %4649 = vdwg.mxu0
    %4650 = vmatprep.subr.mxu0 0.0
    %v4651 = vand.u32 %v4044, 4294901760
    %v4652 = vsub.f32 %v4044, %v4651
    %4653 = vmatpush1.msra.mxu0 %v4652
    %4654 = vmatprep.subr.mxu0 0.0
    %4655 = vmatpush1.msra.mxu0 0.0
    %4656 = vmatprep.subr.mxu0 0.0
    %4657 = vmatpush1.msra.mxu0 0.0
    %4658 = vmatprep.subr.mxu0 0.0
    %4659 = vmatpush1.msra.mxu0 0.0
    %4660 = vmatprep.subr.mxu0 0.0
    %4661 = vmatpush1.msra.mxu0 0.0
    %4662 = vmatprep.subr.mxu0 0.0
    %4663 = vmatpush1.msra.mxu0 0.0
    %4664 = vmatprep.subr.mxu0 0.0
    %4665 = vmatpush1.msra.mxu0 0.0
    %4666 = vmatprep.subr.mxu0 0.0
    %4667 = vmatpush1.msra.mxu0 0.0
    %4668 = vmatprep.subr.mxu0 0.0
    %4669 = vmatpush1.msra.mxu0 0.0
    %4670 = vmatprep.subr.mxu0 0.0
    %4671 = vmatpush1.msra.mxu0 0.0
    %4672 = vmatprep.subr.mxu0 0.0
    %4673 = vmatpush1.msra.mxu0 0.0
    %4674 = vmatprep.subr.mxu0 0.0
    %4675 = vmatpush1.msra.mxu0 0.0
    %4676 = vmatprep.subr.mxu0 0.0
    %4677 = vmatpush1.msra.mxu0 0.0
    %4678 = vmatprep.subr.mxu0 0.0
    %4679 = vmatpush1.msra.mxu0 0.0
    %4680 = vmatprep.subr.mxu0 0.0
    %4681 = vmatpush1.msra.mxu0 0.0
    %4682 = vmatprep.subr.mxu0 0.0
    %4683 = vmatpush1.msra.mxu0 0.0
    %4684 = vmatprep.subr.mxu0 0.0
    %4685 = vmatpush1.msra.mxu0 0.0
    %4686 = vmatprep.subr.mxu0 0.0
    %4687 = vmatpush1.msra.mxu0 0.0
    %4688 = vmatprep.subr.mxu0 0.0
    %4689 = vmatpush1.msra.mxu0 0.0
    %4690 = vmatprep.subr.mxu0 0.0
    %4691 = vmatpush1.msra.mxu0 0.0
    %4692 = vmatprep.subr.mxu0 0.0
    %4693 = vmatpush1.msra.mxu0 0.0
    %4694 = vmatprep.subr.mxu0 0.0
    %4695 = vmatpush1.msra.mxu0 0.0
    %4696 = vmatprep.subr.mxu0 0.0
    %4697 = vmatpush1.msra.mxu0 0.0
    %4698 = vmatprep.subr.mxu0 0.0
    %4699 = vmatpush1.msra.mxu0 0.0
    %4700 = vmatprep.subr.mxu0 0.0
    %4701 = vmatpush1.msra.mxu0 0.0
    %4702 = vmatprep.subr.mxu0 0.0
    %4703 = vmatpush1.msra.mxu0 0.0
    %4704 = vmatprep.subr.mxu0 0.0
    %4705 = vmatpush1.msra.mxu0 0.0
    %4706 = vmatprep.subr.mxu0 0.0
    %4707 = vmatpush1.msra.mxu0 0.0
    %4708 = vmatprep.subr.mxu0 0.0
    %4709 = vmatpush1.msra.mxu0 0.0
    %4710 = vmatprep.subr.mxu0 0.0
    %4711 = vmatpush1.msra.mxu0 0.0
    %4712 = vmatprep.subr.mxu0 0.0
    %4713 = vmatpush1.msra.mxu0 0.0
    %4714 = vmatprep.subr.mxu0 0.0
    %4715 = vmatpush1.msra.mxu0 0.0
    %4716 = vmatprep.mubr.f32.mxu0 0.0
    %v4717 = vand.u32 %v4496, 4294901760
    %v4718 = vsub.f32 %v4496, %v4717
    %4719 = vmatmul.mubr.f32.gmra.mrb[0].mxu0 %v4718
    %v4720 = vpop.f32.mrb[0].mxu0
    %v4721 = vadd.f32 %v4647, %v4720
    %v4722 = vpop.f32.mrb[0].mxu0
    %4723 = vdwg.mxu0
    %4724 = vmatprep.subr.mxu0 0.0
    %v4725 = vand.u32 %v4044, 4294901760
    %4726 = vmatpush1.msra.mxu0 %v4725
    %4727 = vmatprep.subr.mxu0 0.0
    %4728 = vmatpush1.msra.mxu0 0.0
    %4729 = vmatprep.subr.mxu0 0.0
    %4730 = vmatpush1.msra.mxu0 0.0
    %4731 = vmatprep.subr.mxu0 0.0
    %4732 = vmatpush1.msra.mxu0 0.0
    %4733 = vmatprep.subr.mxu0 0.0
    %4734 = vmatpush1.msra.mxu0 0.0
    %4735 = vmatprep.subr.mxu0 0.0
    %4736 = vmatpush1.msra.mxu0 0.0
    %4737 = vmatprep.subr.mxu0 0.0
    %4738 = vmatpush1.msra.mxu0 0.0
    %4739 = vmatprep.subr.mxu0 0.0
    %4740 = vmatpush1.msra.mxu0 0.0
    %4741 = vmatprep.subr.mxu0 0.0
    %4742 = vmatpush1.msra.mxu0 0.0
    %4743 = vmatprep.subr.mxu0 0.0
    %4744 = vmatpush1.msra.mxu0 0.0
    %4745 = vmatprep.subr.mxu0 0.0
    %4746 = vmatpush1.msra.mxu0 0.0
    %4747 = vmatprep.subr.mxu0 0.0
    %4748 = vmatpush1.msra.mxu0 0.0
    %4749 = vmatprep.subr.mxu0 0.0
    %4750 = vmatpush1.msra.mxu0 0.0
    %4751 = vmatprep.subr.mxu0 0.0
    %4752 = vmatpush1.msra.mxu0 0.0
    %4753 = vmatprep.subr.mxu0 0.0
    %4754 = vmatpush1.msra.mxu0 0.0
    %4755 = vmatprep.subr.mxu0 0.0
    %4756 = vmatpush1.msra.mxu0 0.0
    %4757 = vmatprep.subr.mxu0 0.0
    %4758 = vmatpush1.msra.mxu0 0.0
    %4759 = vmatprep.subr.mxu0 0.0
    %4760 = vmatpush1.msra.mxu0 0.0
    %4761 = vmatprep.subr.mxu0 0.0
    %4762 = vmatpush1.msra.mxu0 0.0
    %4763 = vmatprep.subr.mxu0 0.0
    %4764 = vmatpush1.msra.mxu0 0.0
    %4765 = vmatprep.subr.mxu0 0.0
    %4766 = vmatpush1.msra.mxu0 0.0
    %4767 = vmatprep.subr.mxu0 0.0
    %4768 = vmatpush1.msra.mxu0 0.0
    %4769 = vmatprep.subr.mxu0 0.0
    %4770 = vmatpush1.msra.mxu0 0.0
    %4771 = vmatprep.subr.mxu0 0.0
    %4772 = vmatpush1.msra.mxu0 0.0
    %4773 = vmatprep.subr.mxu0 0.0
    %4774 = vmatpush1.msra.mxu0 0.0
    %4775 = vmatprep.subr.mxu0 0.0
    %4776 = vmatpush1.msra.mxu0 0.0
    %4777 = vmatprep.subr.mxu0 0.0
    %4778 = vmatpush1.msra.mxu0 0.0
    %4779 = vmatprep.subr.mxu0 0.0
    %4780 = vmatpush1.msra.mxu0 0.0
    %4781 = vmatprep.subr.mxu0 0.0
    %4782 = vmatpush1.msra.mxu0 0.0
    %4783 = vmatprep.subr.mxu0 0.0
    %4784 = vmatpush1.msra.mxu0 0.0
    %4785 = vmatprep.subr.mxu0 0.0
    %4786 = vmatpush1.msra.mxu0 0.0
    %4787 = vmatprep.subr.mxu0 0.0
    %4788 = vmatpush1.msra.mxu0 0.0
    %4789 = vmatprep.mubr.f32.mxu0 0.0
    %v4790 = vand.u32 %v4496, 4294901760
    %v4791 = vsub.f32 %v4496, %v4790
    %v4792 = vand.u32 %v4791, 4294901760
    %4793 = vmatmul.mubr.f32.gmra.mrb[0].mxu0 %v4792
    %v4794 = vpop.f32.mrb[0].mxu0
    %v4795 = vadd.f32 %v4721, %v4794
    %v4796 = vpop.f32.mrb[0].mxu0
    %4797 = vdwg.mxu0
    %4798 = vmatprep.subr.mxu0 0.0
    %v4799 = vand.u32 %v4044, 4294901760
    %v4800 = vsub.f32 %v4044, %v4799
    %v4801 = vand.u32 %v4800, 4294901760
    %4802 = vmatpush1.msra.mxu0 %v4801
    %4803 = vmatprep.subr.mxu0 0.0
    %4804 = vmatpush1.msra.mxu0 0.0
    %4805 = vmatprep.subr.mxu0 0.0
    %4806 = vmatpush1.msra.mxu0 0.0
    %4807 = vmatprep.subr.mxu0 0.0
    %4808 = vmatpush1.msra.mxu0 0.0
    %4809 = vmatprep.subr.mxu0 0.0
    %4810 = vmatpush1.msra.mxu0 0.0
    %4811 = vmatprep.subr.mxu0 0.0
    %4812 = vmatpush1.msra.mxu0 0.0
    %4813 = vmatprep.subr.mxu0 0.0
    %4814 = vmatpush1.msra.mxu0 0.0
    %4815 = vmatprep.subr.mxu0 0.0
    %4816 = vmatpush1.msra.mxu0 0.0
    %4817 = vmatprep.subr.mxu0 0.0
    %4818 = vmatpush1.msra.mxu0 0.0
    %4819 = vmatprep.subr.mxu0 0.0
    %4820 = vmatpush1.msra.mxu0 0.0
    %4821 = vmatprep.subr.mxu0 0.0
    %4822 = vmatpush1.msra.mxu0 0.0
    %4823 = vmatprep.subr.mxu0 0.0
    %4824 = vmatpush1.msra.mxu0 0.0
    %4825 = vmatprep.subr.mxu0 0.0
    %4826 = vmatpush1.msra.mxu0 0.0
    %4827 = vmatprep.subr.mxu0 0.0
    %4828 = vmatpush1.msra.mxu0 0.0
    %4829 = vmatprep.subr.mxu0 0.0
    %4830 = vmatpush1.msra.mxu0 0.0
    %4831 = vmatprep.subr.mxu0 0.0
    %4832 = vmatpush1.msra.mxu0 0.0
    %4833 = vmatprep.subr.mxu0 0.0
    %4834 = vmatpush1.msra.mxu0 0.0
    %4835 = vmatprep.subr.mxu0 0.0
    %4836 = vmatpush1.msra.mxu0 0.0
    %4837 = vmatprep.subr.mxu0 0.0
    %4838 = vmatpush1.msra.mxu0 0.0
    %4839 = vmatprep.subr.mxu0 0.0
    %4840 = vmatpush1.msra.mxu0 0.0
    %4841 = vmatprep.subr.mxu0 0.0
    %4842 = vmatpush1.msra.mxu0 0.0
    %4843 = vmatprep.subr.mxu0 0.0
    %4844 = vmatpush1.msra.mxu0 0.0
    %4845 = vmatprep.subr.mxu0 0.0
    %4846 = vmatpush1.msra.mxu0 0.0
    %4847 = vmatprep.subr.mxu0 0.0
    %4848 = vmatpush1.msra.mxu0 0.0
    %4849 = vmatprep.subr.mxu0 0.0
    %4850 = vmatpush1.msra.mxu0 0.0
    %4851 = vmatprep.subr.mxu0 0.0
    %4852 = vmatpush1.msra.mxu0 0.0
    %4853 = vmatprep.subr.mxu0 0.0
    %4854 = vmatpush1.msra.mxu0 0.0
    %4855 = vmatprep.subr.mxu0 0.0
    %4856 = vmatpush1.msra.mxu0 0.0
    %4857 = vmatprep.subr.mxu0 0.0
    %4858 = vmatpush1.msra.mxu0 0.0
    %4859 = vmatprep.subr.mxu0 0.0
    %4860 = vmatpush1.msra.mxu0 0.0
    %4861 = vmatprep.subr.mxu0 0.0
    %4862 = vmatpush1.msra.mxu0 0.0
    %4863 = vmatprep.subr.mxu0 0.0
    %4864 = vmatpush1.msra.mxu0 0.0
    %4865 = vmatprep.mubr.f32.mxu0 0.0
    %v4866 = vand.u32 %v4496, 4294901760
    %4867 = vmatmul.mubr.f32.gmra.mrb[0].mxu0 %v4866
    %v4868 = vpop.f32.mrb[0].mxu0
    %v4869 = vadd.f32 %v4795, %v4868
    %v4870 = vpop.f32.mrb[0].mxu0
    %4871 = vdwg.mxu0
    %4872 = vmatprep.subr.mxu0 0.0
    %v4873 = vand.u32 %v4044, 4294901760
    %4874 = vmatpush1.msra.mxu0 %v4873
    %4875 = vmatprep.subr.mxu0 0.0
    %4876 = vmatpush1.msra.mxu0 0.0
    %4877 = vmatprep.subr.mxu0 0.0
    %4878 = vmatpush1.msra.mxu0 0.0
    %4879 = vmatprep.subr.mxu0 0.0
    %4880 = vmatpush1.msra.mxu0 0.0
    %4881 = vmatprep.subr.mxu0 0.0
    %4882 = vmatpush1.msra.mxu0 0.0
    %4883 = vmatprep.subr.mxu0 0.0
    %4884 = vmatpush1.msra.mxu0 0.0
    %4885 = vmatprep.subr.mxu0 0.0
    %4886 = vmatpush1.msra.mxu0 0.0
    %4887 = vmatprep.subr.mxu0 0.0
    %4888 = vmatpush1.msra.mxu0 0.0
    %4889 = vmatprep.subr.mxu0 0.0
    %4890 = vmatpush1.msra.mxu0 0.0
    %4891 = vmatprep.subr.mxu0 0.0
    %4892 = vmatpush1.msra.mxu0 0.0
    %4893 = vmatprep.subr.mxu0 0.0
    %4894 = vmatpush1.msra.mxu0 0.0
    %4895 = vmatprep.subr.mxu0 0.0
    %4896 = vmatpush1.msra.mxu0 0.0
    %4897 = vmatprep.subr.mxu0 0.0
    %4898 = vmatpush1.msra.mxu0 0.0
    %4899 = vmatprep.subr.mxu0 0.0
    %4900 = vmatpush1.msra.mxu0 0.0
    %4901 = vmatprep.subr.mxu0 0.0
    %4902 = vmatpush1.msra.mxu0 0.0
    %4903 = vmatprep.subr.mxu0 0.0
    %4904 = vmatpush1.msra.mxu0 0.0
    %4905 = vmatprep.subr.mxu0 0.0
    %4906 = vmatpush1.msra.mxu0 0.0
    %4907 = vmatprep.subr.mxu0 0.0
    %4908 = vmatpush1.msra.mxu0 0.0
    %4909 = vmatprep.subr.mxu0 0.0
    %4910 = vmatpush1.msra.mxu0 0.0
    %4911 = vmatprep.subr.mxu0 0.0
    %4912 = vmatpush1.msra.mxu0 0.0
    %4913 = vmatprep.subr.mxu0 0.0
    %4914 = vmatpush1.msra.mxu0 0.0
    %4915 = vmatprep.subr.mxu0 0.0
    %4916 = vmatpush1.msra.mxu0 0.0
    %4917 = vmatprep.subr.mxu0 0.0
    %4918 = vmatpush1.msra.mxu0 0.0
    %4919 = vmatprep.subr.mxu0 0.0
    %4920 = vmatpush1.msra.mxu0 0.0
    %4921 = vmatprep.subr.mxu0 0.0
    %4922 = vmatpush1.msra.mxu0 0.0
    %4923 = vmatprep.subr.mxu0 0.0
    %4924 = vmatpush1.msra.mxu0 0.0
    %4925 = vmatprep.subr.mxu0 0.0
    %4926 = vmatpush1.msra.mxu0 0.0
    %4927 = vmatprep.subr.mxu0 0.0
    %4928 = vmatpush1.msra.mxu0 0.0
    %4929 = vmatprep.subr.mxu0 0.0
    %4930 = vmatpush1.msra.mxu0 0.0
    %4931 = vmatprep.subr.mxu0 0.0
    %4932 = vmatpush1.msra.mxu0 0.0
    %4933 = vmatprep.subr.mxu0 0.0
    %4934 = vmatpush1.msra.mxu0 0.0
    %4935 = vmatprep.subr.mxu0 0.0
    %4936 = vmatpush1.msra.mxu0 0.0
    %4937 = vmatprep.mubr.f32.mxu0 0.0
    %v4938 = vand.u32 %v4496, 4294901760
    %4939 = vmatmul.mubr.f32.gmra.mrb[0].mxu0 %v4938
    %v4940 = vpop.f32.mrb[0].mxu0
    %v4941 = vadd.f32 %v4869, %v4940
    %v4942 = vpop.f32.mrb[0].mxu0
    %4943 = vdwg.mxu0
    %v4944 = vlaneseq
    %v4945 = vshrl.u32 %v4944, 7
    %v4946 = vsub.s32 0, %v4945
    %v4947 = vrot.slane %v4492, %v4946
    %v4948 = vmul.f32 %v2709, %v4947
    %v4949 = vmul.f32 %v2710, %v4947
    %v4950 = vmul.f32 %v2711, %v4947
    %v4951 = vmul.f32 %v2712, %v4947
    %v4952 = vlaneseq
    %v4953 = vshrl.u32 %v4952, 7
    %v4954 = vsub.s32 0, %v4953
    %v4955 = vrot.slane %v4941, %v4954
    %v4956 = vadd.f32 %v4948, %v4955
    %v4957 = vadd.f32 %v4949, %v4955
    %v4958 = vadd.f32 %v4950, %v4955
    %v4959 = vadd.f32 %v4951, %v4955
    %v4960 = vmax.f32 %v4956, 0.0
    %v4961 = vmax.f32 %v4957, 0.0
    %v4962 = vmax.f32 %v4958, 0.0
    %v4963 = vmax.f32 %v4959, 0.0
    %v4964 = vpack.c.bf16 %v4961, %v4960
    %v4965 = vpack.c.bf16 %v4963, %v4962
    %v4968 = vunpack.c.l.b16 %v4964
    %v4969 = vunpack.c.h.b16 %v4964
    %v4970 = vunpack.c.l.b16 %v4965
    %v4971 = vunpack.c.h.b16 %v4965
    %v4972 = vpack.c.b16 %v4968, %v4968
    %v4973 = vpack.c.b16 %v4969, %v4969
    %v4974 = vpack.c.b16 %v4970, %v4970
    %v4975 = vpack.c.b16 %v4971, %v4971
    %v4977 = vshrl.u32 %v4972, 16
    %v4979 = vrot.slane %v4977, 7
    %v4980 = vshll.u32 %v4972, 16
    %v4982 = vor.u32 %v4979, %v4980
    %v4983 = vrot.slane %v4979, 4
    %v4985 = vshrl.u32 %v4973, 16
    %v4987 = vrot.slane %v4985, 7
    %v4988 = vshll.u32 %v4973, 16
    %v4990 = vor.u32 %v4987, %v4988
    %v4991 = vsel %vm2263, %v4983, %v4990
    %v4992 = vrot.slane %v4987, 4
    %v4994 = vshrl.u32 %v4974, 16
    %v4996 = vrot.slane %v4994, 7
    %v4997 = vshll.u32 %v4974, 16
    %v4999 = vor.u32 %v4996, %v4997
    %v5000 = vrot.slane %v4996, 4
    %v5002 = vshrl.u32 %v4975, 16
    %v5004 = vrot.slane %v5002, 7
    %v5005 = vshll.u32 %v4975, 16
    %v5007 = vor.u32 %v5004, %v5005
    %v5008 = vsel %vm2263, %v5000, %v5007
    %v5009 = vrot.slane %v5004, 4
    %vm5016 = vcmask 1043456
    %vm5017 = vmand %vm5016, %vm191
    %v5018 = vsel %vm5017, %v4982, %v2435
    %5019 = vst [vmem:[#allocation2] sm:$0xf] %v5018
    %5020 = vst [vmem:[#allocation2 + $0x4] sm:$0xf] %v4991
    %v5021 = vld [vmem:[#allocation2 + $0x8] sm:$0x1]
    %v5022 = vsel %vm184, %v4992, %v5021
    %5023 = vst [vmem:[#allocation2 + $0x8] sm:$0x1] %v5022
    %v5024 = vld [vmem:[#allocation2 + $0xc] sm:$0xf]
    %v5025 = vsel %vm5017, %v4999, %v5024
    %5026 = vst [vmem:[#allocation2 + $0xc] sm:$0xf] %v5025
    %5027 = vst [vmem:[#allocation2 + $0x10] sm:$0xf] %v5008
    %v5028 = vld [vmem:[#allocation2 + $0x14] sm:$0x1]
    %v5029 = vsel %vm184, %v5009, %v5028
    %5030 = vst [vmem:[#allocation2 + $0x14] sm:$0x1] %v5029
    %v5031 = vld [vmem:[#allocation12] sm:$0x1]
    %v5033 = vlaneseq
    %v5034 = vshrl.u32 %v5033, 7
    %v5035 = vsub.s32 0, %v5034
    %v5036 = vrot.slane %v5031, %v5035
    %v5038 = vld [vmem:[#allocation2] sm:$0xf]
    %v5039 = vld [vmem:[#allocation2 + $0x4] sm:$0xf]
    %v5040 = vld [vmem:[#allocation2 + $0xc] sm:$0xf]
    %v5041 = vld [vmem:[#allocation2 + $0x10] sm:$0xf]
    %v5042 = vld [vmem:[%s7] sm:$0xf]
    %v5043 = vld [vmem:[%s7 + $0x4] sm:$0xf]
    %v5044 = vld [vmem:[%s7 + $0x8] sm:$0xf]
    %v5045 = vld [vmem:[%s7 + $0xc] sm:$0xf]
    %v5046 = vld [vmem:[%s7 + $0x10] sm:$0xf]
    %v5047 = vld [vmem:[%s7 + $0x14] sm:$0xf]
    %v5048 = vld [vmem:[%s7 + $0x18] sm:$0xf]
    %v5049 = vld [vmem:[%s7 + $0x1c] sm:$0xf]
    %v5050 = vld [vmem:[%s7 + $0x20] sm:$0xf]
    %v5051 = vld [vmem:[%s7 + $0x24] sm:$0xf]
    %v5052 = vld [vmem:[%s7 + $0x28] sm:$0xf]
    %v5053 = vld [vmem:[%s7 + $0x2c] sm:$0xf]
    %v5054 = vld [vmem:[%s7 + $0x30] sm:$0xf]
    %v5055 = vld [vmem:[%s7 + $0x34] sm:$0xf]
    %v5056 = vld [vmem:[%s7 + $0x38] sm:$0xf]
    %v5057 = vld [vmem:[%s7 + $0x3c] sm:$0xf]
    %v5062 = vunpack.c.l.b16 %v5038
    %v5063 = vunpack.c.l.b16 %v5039
    %v5064 = vunpack.c.l.b16 %v5040
    %v5065 = vunpack.c.l.b16 %v5041
    %v5066 = vpack.c.b16 %v5063, %v5062
    %v5067 = vpack.c.b16 %v5065, %v5064
    %v5086 = vunpack.c.l.b16 %v5042
    %v5087 = vunpack.c.l.b16 %v5043
    %v5088 = vunpack.c.l.b16 %v5044
    %v5089 = vunpack.c.l.b16 %v5045
    %v5090 = vunpack.c.l.b16 %v5046
    %v5091 = vunpack.c.l.b16 %v5047
    %v5092 = vunpack.c.l.b16 %v5048
    %v5093 = vunpack.c.l.b16 %v5049
    %v5094 = vunpack.c.l.b16 %v5050
    %v5095 = vunpack.c.l.b16 %v5051
    %v5096 = vunpack.c.l.b16 %v5052
    %v5097 = vunpack.c.l.b16 %v5053
    %v5098 = vunpack.c.l.b16 %v5054
    %v5099 = vunpack.c.l.b16 %v5055
    %v5100 = vunpack.c.l.b16 %v5056
    %v5101 = vunpack.c.l.b16 %v5057
    %v5102 = vpack.c.b16 %v5087, %v5086
    %v5103 = vpack.c.b16 %v5089, %v5088
    %v5104 = vpack.c.b16 %v5091, %v5090
    %v5105 = vpack.c.b16 %v5093, %v5092
    %v5106 = vpack.c.b16 %v5095, %v5094
    %v5107 = vpack.c.b16 %v5097, %v5096
    %v5108 = vpack.c.b16 %v5099, %v5098
    %v5109 = vpack.c.b16 %v5101, %v5100
    %5118 = vmatprep.subr.bf16.mxu0 0
    %5119 = vmatpush1.bf16.msra.mxu0 %v5102
    %5120 = vmatprep.subr.bf16.mxu0 0
    %5121 = vmatpush1.bf16.msra.mxu0 %v5103
    %5122 = vmatprep.subr.bf16.mxu0 0
    %5123 = vmatpush1.bf16.msra.mxu0 %v5104
    %5124 = vmatprep.subr.bf16.mxu0 0
    %5125 = vmatpush1.bf16.msra.mxu0 %v5105
    %5126 = vmatprep.subr.bf16.mxu0 0
    %5127 = vmatpush1.bf16.msra.mxu0 %v5106
    %5128 = vmatprep.subr.bf16.mxu0 0
    %5129 = vmatpush1.bf16.msra.mxu0 %v5107
    %5130 = vmatprep.subr.bf16.mxu0 0
    %5131 = vmatpush1.bf16.msra.mxu0 %v5108
    %5132 = vmatprep.subr.bf16.mxu0 0
    %5133 = vmatpush1.bf16.msra.mxu0 %v5109
    %5134 = vmatprep.subr.bf16.mxu0 0
    %5135 = vmatpush1.bf16.msra.mxu0 0
    %5136 = vmatprep.subr.bf16.mxu0 0
    %5137 = vmatpush1.bf16.msra.mxu0 0
    %5138 = vmatprep.subr.bf16.mxu0 0
    %5139 = vmatpush1.bf16.msra.mxu0 0
    %5140 = vmatprep.subr.bf16.mxu0 0
    %5141 = vmatpush1.bf16.msra.mxu0 0
    %5142 = vmatprep.subr.bf16.mxu0 0
    %5143 = vmatpush1.bf16.msra.mxu0 0
    %5144 = vmatprep.subr.bf16.mxu0 0
    %5145 = vmatpush1.bf16.msra.mxu0 0
    %5146 = vmatprep.subr.bf16.mxu0 0
    %5147 = vmatpush1.bf16.msra.mxu0 0
    %5148 = vmatprep.subr.bf16.mxu0 0
    %5149 = vmatpush1.bf16.msra.mxu0 0
    %5150 = vmatprep.mubr.bf16.mxu0 0
    %5151 = vmatmul.mubr.bf16.gmra.mrb[0].mxu0 %v5066
    %v5152 = vpop.f32.mrb[0].mxu0
    %v5153 = vadd.f32 0.0, %v5152
    %v5154 = vpop.f32.mrb[0].mxu0
    %v5155 = vpop.f32.mrb[0].mxu0
    %v5156 = vadd.f32 0.0, %v5155
    %v5157 = vpop.f32.mrb[0].mxu0
    %5158 = vmatprep.mubr.bf16.mxu0 0
    %5159 = vmatmul.mubr.bf16.gmra.mrb[0].mxu0 %v5067
    %v5160 = vpop.f32.mrb[0].mxu0
    %v5161 = vadd.f32 0.0, %v5160
    %v5162 = vpop.f32.mrb[0].mxu0
    %v5163 = vpop.f32.mrb[0].mxu0
    %v5164 = vadd.f32 0.0, %v5163
    %v5165 = vpop.f32.mrb[0].mxu0
    %5166 = vdwg.mxu0
    %v5167 = vadd.f32 %v5036, %v5153
    %v5168 = vadd.f32 %v5036, %v5156
    %v5169 = vadd.f32 %v5036, %v5161
    %v5170 = vadd.f32 %v5036, %v5164
    %v5171 = vld [vmem:[#allocation2] sm:$0xf]
    %v5172 = vld [vmem:[#allocation2 + $0x4] sm:$0xf]
    %v5173 = vld [vmem:[#allocation2 + $0x8] sm:$0x1]
    %v5174 = vld [vmem:[#allocation2 + $0xc] sm:$0xf]
    %v5175 = vld [vmem:[#allocation2 + $0x10] sm:$0xf]
    %v5176 = vld [vmem:[#allocation2 + $0x14] sm:$0x1]
    %v5178 = vshrl.u32 %v5171, 16
    %v5180 = vrot.slane %v5178, 4
    %v5181 = vshll.u32 %v5171, 16
    %v5183 = vrot.slane %v5181, 5
    %v5184 = vor.u32 %v5180, %v5183
    %v5185 = vrot.slane %v5184, 4
    %v5187 = vshll.u32 %v5172, 16
    %v5189 = vrot.slane %v5187, 5
    %v5190 = vsel %vm2443, %v5185, %v5189
    %v5191 = vshrl.u32 %v5172, 16
    %v5193 = vrot.slane %v5191, 4
    %v5194 = vor.u32 %v5193, %v5189
    %v5195 = vrot.slane %v5194, 4
    %v5197 = vshll.u32 %v5173, 16
    %v5199 = vrot.slane %v5197, 5
    %v5200 = vsel %vm2443, %v5195, %v5199
    %v5202 = vshrl.u32 %v5174, 16
    %v5204 = vrot.slane %v5202, 4
    %v5205 = vshll.u32 %v5174, 16
    %v5207 = vrot.slane %v5205, 5
    %v5208 = vor.u32 %v5204, %v5207
    %v5209 = vrot.slane %v5208, 4
    %v5211 = vshll.u32 %v5175, 16
    %v5213 = vrot.slane %v5211, 5
    %v5214 = vsel %vm2443, %v5209, %v5213
    %v5215 = vshrl.u32 %v5175, 16
    %v5217 = vrot.slane %v5215, 4
    %v5218 = vor.u32 %v5217, %v5213
    %v5219 = vrot.slane %v5218, 4
    %v5221 = vshll.u32 %v5176, 16
    %v5223 = vrot.slane %v5221, 5
    %v5224 = vsel %vm2443, %v5219, %v5223
    %s5225 = scalar_lea.vmem %s7, 64
    %v5226 = vld [vmem:[%s5225] sm:$0xf]
    %v5227 = vld [vmem:[%s5225 + $0x4] sm:$0xf]
    %v5228 = vld [vmem:[%s5225 + $0x8] sm:$0xf]
    %v5229 = vld [vmem:[%s5225 + $0xc] sm:$0xf]
    %v5230 = vld [vmem:[%s5225 + $0x10] sm:$0xf]
    %v5231 = vld [vmem:[%s5225 + $0x14] sm:$0xf]
    %v5232 = vld [vmem:[%s5225 + $0x18] sm:$0xf]
    %v5233 = vld [vmem:[%s5225 + $0x1c] sm:$0xf]
    %v5234 = vld [vmem:[%s5225 + $0x20] sm:$0xf]
    %v5235 = vld [vmem:[%s5225 + $0x24] sm:$0xf]
    %v5236 = vld [vmem:[%s5225 + $0x28] sm:$0xf]
    %v5237 = vld [vmem:[%s5225 + $0x2c] sm:$0xf]
    %v5238 = vld [vmem:[%s5225 + $0x30] sm:$0xf]
    %v5239 = vld [vmem:[%s5225 + $0x34] sm:$0xf]
    %v5240 = vld [vmem:[%s5225 + $0x38] sm:$0xf]
    %v5241 = vld [vmem:[%s5225 + $0x3c] sm:$0xf]
    %v5242 = vunpack.c.l.b16 %v5190
    %v5243 = vunpack.c.l.b16 %v5200
    %v5244 = vunpack.c.l.b16 %v5214
    %v5245 = vunpack.c.l.b16 %v5224
    %v5246 = vpack.c.b16 %v5243, %v5242
    %v5247 = vpack.c.b16 %v5245, %v5244
    %v5266 = vunpack.c.l.b16 %v5226
    %v5267 = vunpack.c.l.b16 %v5227
    %v5268 = vunpack.c.l.b16 %v5228
    %v5269 = vunpack.c.l.b16 %v5229
    %v5270 = vunpack.c.l.b16 %v5230
    %v5271 = vunpack.c.l.b16 %v5231
    %v5272 = vunpack.c.l.b16 %v5232
    %v5273 = vunpack.c.l.b16 %v5233
    %v5274 = vunpack.c.l.b16 %v5234
    %v5275 = vunpack.c.l.b16 %v5235
    %v5276 = vunpack.c.l.b16 %v5236
    %v5277 = vunpack.c.l.b16 %v5237
    %v5278 = vunpack.c.l.b16 %v5238
    %v5279 = vunpack.c.l.b16 %v5239
    %v5280 = vunpack.c.l.b16 %v5240
    %v5281 = vunpack.c.l.b16 %v5241
    %v5282 = vpack.c.b16 %v5267, %v5266
    %v5283 = vpack.c.b16 %v5269, %v5268
    %v5284 = vpack.c.b16 %v5271, %v5270
    %v5285 = vpack.c.b16 %v5273, %v5272
    %v5286 = vpack.c.b16 %v5275, %v5274
    %v5287 = vpack.c.b16 %v5277, %v5276
    %v5288 = vpack.c.b16 %v5279, %v5278
    %v5289 = vpack.c.b16 %v5281, %v5280
    %5298 = vmatprep.subr.bf16.mxu0 0
    %5299 = vmatpush1.bf16.msra.mxu0 %v5282
    %5300 = vmatprep.subr.bf16.mxu0 0
    %5301 = vmatpush1.bf16.msra.mxu0 %v5283
    %5302 = vmatprep.subr.bf16.mxu0 0
    %5303 = vmatpush1.bf16.msra.mxu0 %v5284
    %5304 = vmatprep.subr.bf16.mxu0 0
    %5305 = vmatpush1.bf16.msra.mxu0 %v5285
    %5306 = vmatprep.subr.bf16.mxu0 0
    %5307 = vmatpush1.bf16.msra.mxu0 %v5286
    %5308 = vmatprep.subr.bf16.mxu0 0
    %5309 = vmatpush1.bf16.msra.mxu0 %v5287
    %5310 = vmatprep.subr.bf16.mxu0 0
    %5311 = vmatpush1.bf16.msra.mxu0 %v5288
    %5312 = vmatprep.subr.bf16.mxu0 0
    %5313 = vmatpush1.bf16.msra.mxu0 %v5289
    %5314 = vmatprep.subr.bf16.mxu0 0
    %5315 = vmatpush1.bf16.msra.mxu0 0
    %5316 = vmatprep.subr.bf16.mxu0 0
    %5317 = vmatpush1.bf16.msra.mxu0 0
    %5318 = vmatprep.subr.bf16.mxu0 0
    %5319 = vmatpush1.bf16.msra.mxu0 0
    %5320 = vmatprep.subr.bf16.mxu0 0
    %5321 = vmatpush1.bf16.msra.mxu0 0
    %5322 = vmatprep.subr.bf16.mxu0 0
    %5323 = vmatpush1.bf16.msra.mxu0 0
    %5324 = vmatprep.subr.bf16.mxu0 0
    %5325 = vmatpush1.bf16.msra.mxu0 0
    %5326 = vmatprep.subr.bf16.mxu0 0
    %5327 = vmatpush1.bf16.msra.mxu0 0
    %5328 = vmatprep.subr.bf16.mxu0 0
    %5329 = vmatpush1.bf16.msra.mxu0 0
    %5330 = vmatprep.mubr.bf16.mxu0 0
    %5331 = vmatmul.mubr.bf16.gmra.mrb[0].mxu0 %v5246
    %v5332 = vpop.f32.mrb[0].mxu0
    %v5333 = vadd.f32 0.0, %v5332
    %v5334 = vpop.f32.mrb[0].mxu0
    %v5335 = vpop.f32.mrb[0].mxu0
    %v5336 = vadd.f32 0.0, %v5335
    %v5337 = vpop.f32.mrb[0].mxu0
    %5338 = vmatprep.mubr.bf16.mxu0 0
    %5339 = vmatmul.mubr.bf16.gmra.mrb[0].mxu0 %v5247
    %v5340 = vpop.f32.mrb[0].mxu0
    %v5341 = vadd.f32 0.0, %v5340
    %v5342 = vpop.f32.mrb[0].mxu0
    %v5343 = vpop.f32.mrb[0].mxu0
    %v5344 = vadd.f32 0.0, %v5343
    %v5345 = vpop.f32.mrb[0].mxu0
    %5346 = vdwg.mxu0
    %v5347 = vadd.f32 %v5167, %v5333
    %v5348 = vadd.f32 %v5168, %v5336
    %v5349 = vadd.f32 %v5169, %v5341
    %v5350 = vadd.f32 %v5170, %v5344
    %v5351 = vld [vmem:[#allocation2] sm:$0xe]
    %v5352 = vld [vmem:[#allocation2 + $0xc] sm:$0xe]
    %v5359 = vrot.slane %v5351, 5
    %v5360 = vrot.slane %v5359, 4
    %v5361 = vrot.slane %v5172, 5
    %v5362 = vsel %vm2600, %v5360, %v5361
    %v5363 = vrot.slane %v5361, 4
    %v5364 = vrot.slane %v5173, 5
    %v5365 = vsel %vm2600, %v5363, %v5364
    %v5366 = vrot.slane %v5352, 5
    %v5367 = vrot.slane %v5366, 4
    %v5368 = vrot.slane %v5175, 5
    %v5369 = vsel %vm2600, %v5367, %v5368
    %v5370 = vrot.slane %v5368, 4
    %v5371 = vrot.slane %v5176, 5
    %v5372 = vsel %vm2600, %v5370, %v5371
    %s5373 = scalar_lea.vmem %s7, 128
    %v5374 = vld [vmem:[%s5373] sm:$0xf]
    %v5375 = vld [vmem:[%s5373 + $0x4] sm:$0xf]
    %v5376 = vld [vmem:[%s5373 + $0x8] sm:$0xf]
    %v5377 = vld [vmem:[%s5373 + $0xc] sm:$0xf]
    %v5378 = vld [vmem:[%s5373 + $0x10] sm:$0xf]
    %v5379 = vld [vmem:[%s5373 + $0x14] sm:$0xf]
    %v5380 = vld [vmem:[%s5373 + $0x18] sm:$0xf]
    %v5381 = vld [vmem:[%s5373 + $0x1c] sm:$0xf]
    %v5382 = vld [vmem:[%s5373 + $0x20] sm:$0xf]
    %v5383 = vld [vmem:[%s5373 + $0x24] sm:$0xf]
    %v5384 = vld [vmem:[%s5373 + $0x28] sm:$0xf]
    %v5385 = vld [vmem:[%s5373 + $0x2c] sm:$0xf]
    %v5386 = vld [vmem:[%s5373 + $0x30] sm:$0xf]
    %v5387 = vld [vmem:[%s5373 + $0x34] sm:$0xf]
    %v5388 = vld [vmem:[%s5373 + $0x38] sm:$0xf]
    %v5389 = vld [vmem:[%s5373 + $0x3c] sm:$0xf]
    %v5390 = vunpack.c.l.b16 %v5362
    %v5391 = vunpack.c.l.b16 %v5365
    %v5392 = vunpack.c.l.b16 %v5369
    %v5393 = vunpack.c.l.b16 %v5372
    %v5394 = vpack.c.b16 %v5391, %v5390
    %v5395 = vpack.c.b16 %v5393, %v5392
    %v5414 = vunpack.c.l.b16 %v5374
    %v5415 = vunpack.c.l.b16 %v5375
    %v5416 = vunpack.c.l.b16 %v5376
    %v5417 = vunpack.c.l.b16 %v5377
    %v5418 = vunpack.c.l.b16 %v5378
    %v5419 = vunpack.c.l.b16 %v5379
    %v5420 = vunpack.c.l.b16 %v5380
    %v5421 = vunpack.c.l.b16 %v5381
    %v5422 = vunpack.c.l.b16 %v5382
    %v5423 = vunpack.c.l.b16 %v5383
    %v5424 = vunpack.c.l.b16 %v5384
    %v5425 = vunpack.c.l.b16 %v5385
    %v5426 = vunpack.c.l.b16 %v5386
    %v5427 = vunpack.c.l.b16 %v5387
    %v5428 = vunpack.c.l.b16 %v5388
    %v5429 = vunpack.c.l.b16 %v5389
    %v5430 = vpack.c.b16 %v5415, %v5414
    %v5431 = vpack.c.b16 %v5417, %v5416
    %v5432 = vpack.c.b16 %v5419, %v5418
    %v5433 = vpack.c.b16 %v5421, %v5420
    %v5434 = vpack.c.b16 %v5423, %v5422
    %v5435 = vpack.c.b16 %v5425, %v5424
    %v5436 = vpack.c.b16 %v5427, %v5426
    %v5437 = vpack.c.b16 %v5429, %v5428
    %5446 = vmatprep.subr.bf16.mxu0 0
    %5447 = vmatpush1.bf16.msra.mxu0 %v5430
    %5448 = vmatprep.subr.bf16.mxu0 0
    %5449 = vmatpush1.bf16.msra.mxu0 %v5431
    %5450 = vmatprep.subr.bf16.mxu0 0
    %5451 = vmatpush1.bf16.msra.mxu0 %v5432
    %5452 = vmatprep.subr.bf16.mxu0 0
    %5453 = vmatpush1.bf16.msra.mxu0 %v5433
    %5454 = vmatprep.subr.bf16.mxu0 0
    %5455 = vmatpush1.bf16.msra.mxu0 %v5434
    %5456 = vmatprep.subr.bf16.mxu0 0
    %5457 = vmatpush1.bf16.msra.mxu0 %v5435
    %5458 = vmatprep.subr.bf16.mxu0 0
    %5459 = vmatpush1.bf16.msra.mxu0 %v5436
    %5460 = vmatprep.subr.bf16.mxu0 0
    %5461 = vmatpush1.bf16.msra.mxu0 %v5437
    %5462 = vmatprep.subr.bf16.mxu0 0
    %5463 = vmatpush1.bf16.msra.mxu0 0
    %5464 = vmatprep.subr.bf16.mxu0 0
    %5465 = vmatpush1.bf16.msra.mxu0 0
    %5466 = vmatprep.subr.bf16.mxu0 0
    %5467 = vmatpush1.bf16.msra.mxu0 0
    %5468 = vmatprep.subr.bf16.mxu0 0
    %5469 = vmatpush1.bf16.msra.mxu0 0
    %5470 = vmatprep.subr.bf16.mxu0 0
    %5471 = vmatpush1.bf16.msra.mxu0 0
    %5472 = vmatprep.subr.bf16.mxu0 0
    %5473 = vmatpush1.bf16.msra.mxu0 0
    %5474 = vmatprep.subr.bf16.mxu0 0
    %5475 = vmatpush1.bf16.msra.mxu0 0
    %5476 = vmatprep.subr.bf16.mxu0 0
    %5477 = vmatpush1.bf16.msra.mxu0 0
    %5478 = vmatprep.mubr.bf16.mxu0 0
    %5479 = vmatmul.mubr.bf16.gmra.mrb[0].mxu0 %v5394
    %v5480 = vpop.f32.mrb[0].mxu0
    %v5481 = vadd.f32 0.0, %v5480
    %v5482 = vpop.f32.mrb[0].mxu0
    %v5483 = vpop.f32.mrb[0].mxu0
    %v5484 = vadd.f32 0.0, %v5483
    %v5485 = vpop.f32.mrb[0].mxu0
    %5486 = vmatprep.mubr.bf16.mxu0 0
    %5487 = vmatmul.mubr.bf16.gmra.mrb[0].mxu0 %v5395
    %v5488 = vpop.f32.mrb[0].mxu0
    %v5489 = vadd.f32 0.0, %v5488
    %v5490 = vpop.f32.mrb[0].mxu0
    %v5491 = vpop.f32.mrb[0].mxu0
    %v5492 = vadd.f32 0.0, %v5491
    %v5493 = vpop.f32.mrb[0].mxu0
    %5494 = vdwg.mxu0
    %v5495 = vadd.f32 %v5347, %v5481
    %v5496 = vadd.f32 %v5348, %v5484
    %v5497 = vadd.f32 %v5349, %v5489
    %v5498 = vadd.f32 %v5350, %v5492
    %v5499 = vadd.f32 %v5495, %v5496
    %v5500 = vadd.f32 %v5499, %v5497
    %v5501 = vadd.f32 %v5500, %v5498
    %v5502 = vrot.slane %v5501, 4
    %v5503 = vadd.f32 %v5501, %v5502
    %v5504 = vrot.slane %v5503, 2
    %v5505 = vadd.f32 %v5503, %v5504
    %v5506 = vrot.slane %v5505, 1
    %v5507 = vadd.f32 %v5505, %v5506
    %v5508 = vmul.f32 %v5495, %v5495
    %v5509 = vmul.f32 %v5496, %v5496
    %v5510 = vmul.f32 %v5497, %v5497
    %v5511 = vmul.f32 %v5498, %v5498
    %v5512 = vadd.f32 %v5508, %v5509
    %v5513 = vadd.f32 %v5512, %v5510
    %v5514 = vadd.f32 %v5513, %v5511
    %v5515 = vrot.slane %v5514, 4
    %v5516 = vadd.f32 %v5514, %v5515
    %v5517 = vrot.slane %v5516, 2
    %v5518 = vadd.f32 %v5516, %v5517
    %v5519 = vrot.slane %v5518, 1
    %v5520 = vadd.f32 %v5518, %v5519
    %v5521 = vld [vmem:[%s15] sm:$0xff]
    %v5522 = vld [vmem:[%s15 + $0x8] sm:$0xff]
    %v5523 = vld [vmem:[%s15 + $0x10] sm:$0xff]
    %v5524 = vld [vmem:[%s15 + $0x18] sm:$0xff]
    %v5525 = vld [vmem:[%s15 + $0x20] sm:$0xff]
    %v5526 = vld [vmem:[%s15 + $0x28] sm:$0xff]
    %v5527 = vld [vmem:[%s15 + $0x30] sm:$0xff]
    %v5528 = vld [vmem:[%s15 + $0x38] sm:$0xff]
    %v5529 = vld [vmem:[%s15 + $0x40] sm:$0xff]
    %v5530 = vld [vmem:[%s15 + $0x48] sm:$0xff]
    %v5531 = vld [vmem:[%s15 + $0x50] sm:$0xff]
    %v5532 = vld [vmem:[%s15 + $0x58] sm:$0xff]
    %v5533 = vld [vmem:[%s15 + $0x60] sm:$0xff]
    %v5534 = vld [vmem:[%s15 + $0x68] sm:$0xff]
    %v5535 = vld [vmem:[%s15 + $0x70] sm:$0xff]
    %v5536 = vld [vmem:[%s15 + $0x78] sm:$0xff]
    %5537 = vmatprep.subr.mxu0 0.0
    %v5538 = vand.u32 %v5521, 4294901760
    %5539 = vmatpush1.msra.mxu0 %v5538
    %5540 = vmatprep.subr.mxu0 0.0
    %v5541 = vand.u32 %v5522, 4294901760
    %5542 = vmatpush1.msra.mxu0 %v5541
    %5543 = vmatprep.subr.mxu0 0.0
    %v5544 = vand.u32 %v5523, 4294901760
    %5545 = vmatpush1.msra.mxu0 %v5544
    %5546 = vmatprep.subr.mxu0 0.0
    %v5547 = vand.u32 %v5524, 4294901760
    %5548 = vmatpush1.msra.mxu0 %v5547
    %5549 = vmatprep.subr.mxu0 0.0
    %v5550 = vand.u32 %v5525, 4294901760
    %5551 = vmatpush1.msra.mxu0 %v5550
    %5552 = vmatprep.subr.mxu0 0.0
    %v5553 = vand.u32 %v5526, 4294901760
    %5554 = vmatpush1.msra.mxu0 %v5553
    %5555 = vmatprep.subr.mxu0 0.0
    %v5556 = vand.u32 %v5527, 4294901760
    %5557 = vmatpush1.msra.mxu0 %v5556
    %5558 = vmatprep.subr.mxu0 0.0
    %v5559 = vand.u32 %v5528, 4294901760
    %5560 = vmatpush1.msra.mxu0 %v5559
    %5561 = vmatprep.subr.mxu0 0.0
    %v5562 = vand.u32 %v5529, 4294901760
    %5563 = vmatpush1.msra.mxu0 %v5562
    %5564 = vmatprep.subr.mxu0 0.0
    %v5565 = vand.u32 %v5530, 4294901760
    %5566 = vmatpush1.msra.mxu0 %v5565
    %5567 = vmatprep.subr.mxu0 0.0
    %v5568 = vand.u32 %v5531, 4294901760
    %5569 = vmatpush1.msra.mxu0 %v5568
    %5570 = vmatprep.subr.mxu0 0.0
    %v5571 = vand.u32 %v5532, 4294901760
    %5572 = vmatpush1.msra.mxu0 %v5571
    %5573 = vmatprep.subr.mxu0 0.0
    %v5574 = vand.u32 %v5533, 4294901760
    %5575 = vmatpush1.msra.mxu0 %v5574
    %5576 = vmatprep.subr.mxu0 0.0
    %v5577 = vand.u32 %v5534, 4294901760
    %5578 = vmatpush1.msra.mxu0 %v5577
    %5579 = vmatprep.subr.mxu0 0.0
    %v5580 = vand.u32 %v5535, 4294901760
    %5581 = vmatpush1.msra.mxu0 %v5580
    %5582 = vmatprep.subr.mxu0 0.0
    %v5583 = vand.u32 %v5536, 4294901760
    %5584 = vmatpush1.msra.mxu0 %v5583
    %5585 = vmatprep.subr.mxu0 0.0
    %5586 = vmatpush1.msra.mxu0 0.0
    %5587 = vmatprep.subr.mxu0 0.0
    %5588 = vmatpush1.msra.mxu0 0.0
    %5589 = vmatprep.subr.mxu0 0.0
    %5590 = vmatpush1.msra.mxu0 0.0
    %5591 = vmatprep.subr.mxu0 0.0
    %5592 = vmatpush1.msra.mxu0 0.0
    %5593 = vmatprep.subr.mxu0 0.0
    %5594 = vmatpush1.msra.mxu0 0.0
    %5595 = vmatprep.subr.mxu0 0.0
    %5596 = vmatpush1.msra.mxu0 0.0
    %5597 = vmatprep.subr.mxu0 0.0
    %5598 = vmatpush1.msra.mxu0 0.0
    %5599 = vmatprep.subr.mxu0 0.0
    %5600 = vmatpush1.msra.mxu0 0.0
    %5601 = vmatprep.subr.mxu0 0.0
    %5602 = vmatpush1.msra.mxu0 0.0
    %5603 = vmatprep.subr.mxu0 0.0
    %5604 = vmatpush1.msra.mxu0 0.0
    %5605 = vmatprep.subr.mxu0 0.0
    %5606 = vmatpush1.msra.mxu0 0.0
    %5607 = vmatprep.subr.mxu0 0.0
    %5608 = vmatpush1.msra.mxu0 0.0
    %5609 = vmatprep.subr.mxu0 0.0
    %5610 = vmatpush1.msra.mxu0 0.0
    %5611 = vmatprep.subr.mxu0 0.0
    %5612 = vmatpush1.msra.mxu0 0.0
    %5613 = vmatprep.subr.mxu0 0.0
    %5614 = vmatpush1.msra.mxu0 0.0
    %5615 = vmatprep.subr.mxu0 0.0
    %5616 = vmatpush1.msra.mxu0 0.0
    %5617 = vmatprep.mubr.f32.mxu0 0.0
    %v5618 = vand.u32 %v5507, 4294901760
    %v5619 = vsub.f32 %v5507, %v5618
    %v5620 = vand.u32 %v5619, 4294901760
    %v5621 = vsub.f32 %v5619, %v5620
    %v5622 = vand.u32 %v5621, 4294901760
    %5623 = vmatmul.mubr.f32.gmra.mrb[0].mxu0 %v5622
    %v5624 = vpop.f32.mrb[0].mxu0
    %v5625 = vadd.f32 0.0, %v5624
    %v5626 = vpop.f32.mrb[0].mxu0
    %5627 = vdwg.mxu0
    %5628 = vmatprep.subr.mxu0 0.0
    %v5629 = vand.u32 %v5521, 4294901760
    %v5630 = vsub.f32 %v5521, %v5629
    %v5631 = vand.u32 %v5630, 4294901760
    %v5632 = vsub.f32 %v5630, %v5631
    %v5633 = vand.u32 %v5632, 4294901760
    %5634 = vmatpush1.msra.mxu0 %v5633
    %5635 = vmatprep.subr.mxu0 0.0
    %v5636 = vand.u32 %v5522, 4294901760
    %v5637 = vsub.f32 %v5522, %v5636
    %v5638 = vand.u32 %v5637, 4294901760
    %v5639 = vsub.f32 %v5637, %v5638
    %v5640 = vand.u32 %v5639, 4294901760
    %5641 = vmatpush1.msra.mxu0 %v5640
    %5642 = vmatprep.subr.mxu0 0.0
    %v5643 = vand.u32 %v5523, 4294901760
    %v5644 = vsub.f32 %v5523, %v5643
    %v5645 = vand.u32 %v5644, 4294901760
    %v5646 = vsub.f32 %v5644, %v5645
    %v5647 = vand.u32 %v5646, 4294901760
    %5648 = vmatpush1.msra.mxu0 %v5647
    %5649 = vmatprep.subr.mxu0 0.0
    %v5650 = vand.u32 %v5524, 4294901760
    %v5651 = vsub.f32 %v5524, %v5650
    %v5652 = vand.u32 %v5651, 4294901760
    %v5653 = vsub.f32 %v5651, %v5652
    %v5654 = vand.u32 %v5653, 4294901760
    %5655 = vmatpush1.msra.mxu0 %v5654
    %5656 = vmatprep.subr.mxu0 0.0
    %v5657 = vand.u32 %v5525, 4294901760
    %v5658 = vsub.f32 %v5525, %v5657
    %v5659 = vand.u32 %v5658, 4294901760
    %v5660 = vsub.f32 %v5658, %v5659
    %v5661 = vand.u32 %v5660, 4294901760
    %5662 = vmatpush1.msra.mxu0 %v5661
    %5663 = vmatprep.subr.mxu0 0.0
    %v5664 = vand.u32 %v5526, 4294901760
    %v5665 = vsub.f32 %v5526, %v5664
    %v5666 = vand.u32 %v5665, 4294901760
    %v5667 = vsub.f32 %v5665, %v5666
    %v5668 = vand.u32 %v5667, 4294901760
    %5669 = vmatpush1.msra.mxu0 %v5668
    %5670 = vmatprep.subr.mxu0 0.0
    %v5671 = vand.u32 %v5527, 4294901760
    %v5672 = vsub.f32 %v5527, %v5671
    %v5673 = vand.u32 %v5672, 4294901760
    %v5674 = vsub.f32 %v5672, %v5673
    %v5675 = vand.u32 %v5674, 4294901760
    %5676 = vmatpush1.msra.mxu0 %v5675
    %5677 = vmatprep.subr.mxu0 0.0
    %v5678 = vand.u32 %v5528, 4294901760
    %v5679 = vsub.f32 %v5528, %v5678
    %v5680 = vand.u32 %v5679, 4294901760
    %v5681 = vsub.f32 %v5679, %v5680
    %v5682 = vand.u32 %v5681, 4294901760
    %5683 = vmatpush1.msra.mxu0 %v5682
    %5684 = vmatprep.subr.mxu0 0.0
    %v5685 = vand.u32 %v5529, 4294901760
    %v5686 = vsub.f32 %v5529, %v5685
    %v5687 = vand.u32 %v5686, 4294901760
    %v5688 = vsub.f32 %v5686, %v5687
    %v5689 = vand.u32 %v5688, 4294901760
    %5690 = vmatpush1.msra.mxu0 %v5689
    %5691 = vmatprep.subr.mxu0 0.0
    %v5692 = vand.u32 %v5530, 4294901760
    %v5693 = vsub.f32 %v5530, %v5692
    %v5694 = vand.u32 %v5693, 4294901760
    %v5695 = vsub.f32 %v5693, %v5694
    %v5696 = vand.u32 %v5695, 4294901760
    %5697 = vmatpush1.msra.mxu0 %v5696
    %5698 = vmatprep.subr.mxu0 0.0
    %v5699 = vand.u32 %v5531, 4294901760
    %v5700 = vsub.f32 %v5531, %v5699
    %v5701 = vand.u32 %v5700, 4294901760
    %v5702 = vsub.f32 %v5700, %v5701
    %v5703 = vand.u32 %v5702, 4294901760
    %5704 = vmatpush1.msra.mxu0 %v5703
    %5705 = vmatprep.subr.mxu0 0.0
    %v5706 = vand.u32 %v5532, 4294901760
    %v5707 = vsub.f32 %v5532, %v5706
    %v5708 = vand.u32 %v5707, 4294901760
    %v5709 = vsub.f32 %v5707, %v5708
    %v5710 = vand.u32 %v5709, 4294901760
    %5711 = vmatpush1.msra.mxu0 %v5710
    %5712 = vmatprep.subr.mxu0 0.0
    %v5713 = vand.u32 %v5533, 4294901760
    %v5714 = vsub.f32 %v5533, %v5713
    %v5715 = vand.u32 %v5714, 4294901760
    %v5716 = vsub.f32 %v5714, %v5715
    %v5717 = vand.u32 %v5716, 4294901760
    %5718 = vmatpush1.msra.mxu0 %v5717
    %5719 = vmatprep.subr.mxu0 0.0
    %v5720 = vand.u32 %v5534, 4294901760
    %v5721 = vsub.f32 %v5534, %v5720
    %v5722 = vand.u32 %v5721, 4294901760
    %v5723 = vsub.f32 %v5721, %v5722
    %v5724 = vand.u32 %v5723, 4294901760
    %5725 = vmatpush1.msra.mxu0 %v5724
    %5726 = vmatprep.subr.mxu0 0.0
    %v5727 = vand.u32 %v5535, 4294901760
    %v5728 = vsub.f32 %v5535, %v5727
    %v5729 = vand.u32 %v5728, 4294901760
    %v5730 = vsub.f32 %v5728, %v5729
    %v5731 = vand.u32 %v5730, 4294901760
    %5732 = vmatpush1.msra.mxu0 %v5731
    %5733 = vmatprep.subr.mxu0 0.0
    %v5734 = vand.u32 %v5536, 4294901760
    %v5735 = vsub.f32 %v5536, %v5734
    %v5736 = vand.u32 %v5735, 4294901760
    %v5737 = vsub.f32 %v5735, %v5736
    %v5738 = vand.u32 %v5737, 4294901760
    %5739 = vmatpush1.msra.mxu0 %v5738
    %5740 = vmatprep.subr.mxu0 0.0
    %5741 = vmatpush1.msra.mxu0 0.0
    %5742 = vmatprep.subr.mxu0 0.0
    %5743 = vmatpush1.msra.mxu0 0.0
    %5744 = vmatprep.subr.mxu0 0.0
    %5745 = vmatpush1.msra.mxu0 0.0
    %5746 = vmatprep.subr.mxu0 0.0
    %5747 = vmatpush1.msra.mxu0 0.0
    %5748 = vmatprep.subr.mxu0 0.0
    %5749 = vmatpush1.msra.mxu0 0.0
    %5750 = vmatprep.subr.mxu0 0.0
    %5751 = vmatpush1.msra.mxu0 0.0
    %5752 = vmatprep.subr.mxu0 0.0
    %5753 = vmatpush1.msra.mxu0 0.0
    %5754 = vmatprep.subr.mxu0 0.0
    %5755 = vmatpush1.msra.mxu0 0.0
    %5756 = vmatprep.subr.mxu0 0.0
    %5757 = vmatpush1.msra.mxu0 0.0
    %5758 = vmatprep.subr.mxu0 0.0
    %5759 = vmatpush1.msra.mxu0 0.0
    %5760 = vmatprep.subr.mxu0 0.0
    %5761 = vmatpush1.msra.mxu0 0.0
    %5762 = vmatprep.subr.mxu0 0.0
    %5763 = vmatpush1.msra.mxu0 0.0
    %5764 = vmatprep.subr.mxu0 0.0
    %5765 = vmatpush1.msra.mxu0 0.0
    %5766 = vmatprep.subr.mxu0 0.0
    %5767 = vmatpush1.msra.mxu0 0.0
    %5768 = vmatprep.subr.mxu0 0.0
    %5769 = vmatpush1.msra.mxu0 0.0
    %5770 = vmatprep.subr.mxu0 0.0
    %5771 = vmatpush1.msra.mxu0 0.0
    %5772 = vmatprep.mubr.f32.mxu0 0.0
    %v5773 = vand.u32 %v5507, 4294901760
    %5774 = vmatmul.mubr.f32.gmra.mrb[0].mxu0 %v5773
    %v5775 = vpop.f32.mrb[0].mxu0
    %v5776 = vadd.f32 %v5625, %v5775
    %v5777 = vpop.f32.mrb[0].mxu0
    %5778 = vdwg.mxu0
    %5779 = vmatprep.subr.mxu0 0.0
    %v5780 = vand.u32 %v5521, 4294901760
    %v5781 = vsub.f32 %v5521, %v5780
    %5782 = vmatpush1.msra.mxu0 %v5781
    %5783 = vmatprep.subr.mxu0 0.0
    %v5784 = vand.u32 %v5522, 4294901760
    %v5785 = vsub.f32 %v5522, %v5784
    %5786 = vmatpush1.msra.mxu0 %v5785
    %5787 = vmatprep.subr.mxu0 0.0
    %v5788 = vand.u32 %v5523, 4294901760
    %v5789 = vsub.f32 %v5523, %v5788
    %5790 = vmatpush1.msra.mxu0 %v5789
    %5791 = vmatprep.subr.mxu0 0.0
    %v5792 = vand.u32 %v5524, 4294901760
    %v5793 = vsub.f32 %v5524, %v5792
    %5794 = vmatpush1.msra.mxu0 %v5793
    %5795 = vmatprep.subr.mxu0 0.0
    %v5796 = vand.u32 %v5525, 4294901760
    %v5797 = vsub.f32 %v5525, %v5796
    %5798 = vmatpush1.msra.mxu0 %v5797
    %5799 = vmatprep.subr.mxu0 0.0
    %v5800 = vand.u32 %v5526, 4294901760
    %v5801 = vsub.f32 %v5526, %v5800
    %5802 = vmatpush1.msra.mxu0 %v5801
    %5803 = vmatprep.subr.mxu0 0.0
    %v5804 = vand.u32 %v5527, 4294901760
    %v5805 = vsub.f32 %v5527, %v5804
    %5806 = vmatpush1.msra.mxu0 %v5805
    %5807 = vmatprep.subr.mxu0 0.0
    %v5808 = vand.u32 %v5528, 4294901760
    %v5809 = vsub.f32 %v5528, %v5808
    %5810 = vmatpush1.msra.mxu0 %v5809
    %5811 = vmatprep.subr.mxu0 0.0
    %v5812 = vand.u32 %v5529, 4294901760
    %v5813 = vsub.f32 %v5529, %v5812
    %5814 = vmatpush1.msra.mxu0 %v5813
    %5815 = vmatprep.subr.mxu0 0.0
    %v5816 = vand.u32 %v5530, 4294901760
    %v5817 = vsub.f32 %v5530, %v5816
    %5818 = vmatpush1.msra.mxu0 %v5817
    %5819 = vmatprep.subr.mxu0 0.0
    %v5820 = vand.u32 %v5531, 4294901760
    %v5821 = vsub.f32 %v5531, %v5820
    %5822 = vmatpush1.msra.mxu0 %v5821
    %5823 = vmatprep.subr.mxu0 0.0
    %v5824 = vand.u32 %v5532, 4294901760
    %v5825 = vsub.f32 %v5532, %v5824
    %5826 = vmatpush1.msra.mxu0 %v5825
    %5827 = vmatprep.subr.mxu0 0.0
    %v5828 = vand.u32 %v5533, 4294901760
    %v5829 = vsub.f32 %v5533, %v5828
    %5830 = vmatpush1.msra.mxu0 %v5829
    %5831 = vmatprep.subr.mxu0 0.0
    %v5832 = vand.u32 %v5534, 4294901760
    %v5833 = vsub.f32 %v5534, %v5832
    %5834 = vmatpush1.msra.mxu0 %v5833
    %5835 = vmatprep.subr.mxu0 0.0
    %v5836 = vand.u32 %v5535, 4294901760
    %v5837 = vsub.f32 %v5535, %v5836
    %5838 = vmatpush1.msra.mxu0 %v5837
    %5839 = vmatprep.subr.mxu0 0.0
    %v5840 = vand.u32 %v5536, 4294901760
    %v5841 = vsub.f32 %v5536, %v5840
    %5842 = vmatpush1.msra.mxu0 %v5841
    %5843 = vmatprep.subr.mxu0 0.0
    %5844 = vmatpush1.msra.mxu0 0.0
    %5845 = vmatprep.subr.mxu0 0.0
    %5846 = vmatpush1.msra.mxu0 0.0
    %5847 = vmatprep.subr.mxu0 0.0
    %5848 = vmatpush1.msra.mxu0 0.0
    %5849 = vmatprep.subr.mxu0 0.0
    %5850 = vmatpush1.msra.mxu0 0.0
    %5851 = vmatprep.subr.mxu0 0.0
    %5852 = vmatpush1.msra.mxu0 0.0
    %5853 = vmatprep.subr.mxu0 0.0
    %5854 = vmatpush1.msra.mxu0 0.0
    %5855 = vmatprep.subr.mxu0 0.0
    %5856 = vmatpush1.msra.mxu0 0.0
    %5857 = vmatprep.subr.mxu0 0.0
    %5858 = vmatpush1.msra.mxu0 0.0
    %5859 = vmatprep.subr.mxu0 0.0
    %5860 = vmatpush1.msra.mxu0 0.0
    %5861 = vmatprep.subr.mxu0 0.0
    %5862 = vmatpush1.msra.mxu0 0.0
    %5863 = vmatprep.subr.mxu0 0.0
    %5864 = vmatpush1.msra.mxu0 0.0
    %5865 = vmatprep.subr.mxu0 0.0
    %5866 = vmatpush1.msra.mxu0 0.0
    %5867 = vmatprep.subr.mxu0 0.0
    %5868 = vmatpush1.msra.mxu0 0.0
    %5869 = vmatprep.subr.mxu0 0.0
    %5870 = vmatpush1.msra.mxu0 0.0
    %5871 = vmatprep.subr.mxu0 0.0
    %5872 = vmatpush1.msra.mxu0 0.0
    %5873 = vmatprep.subr.mxu0 0.0
    %5874 = vmatpush1.msra.mxu0 0.0
    %5875 = vmatprep.mubr.f32.mxu0 0.0
    %v5876 = vand.u32 %v5507, 4294901760
    %v5877 = vsub.f32 %v5507, %v5876
    %5878 = vmatmul.mubr.f32.gmra.mrb[0].mxu0 %v5877
    %v5879 = vpop.f32.mrb[0].mxu0
    %v5880 = vadd.f32 %v5776, %v5879
    %v5881 = vpop.f32.mrb[0].mxu0
    %5882 = vdwg.mxu0
    %5883 = vmatprep.subr.mxu0 0.0
    %v5884 = vand.u32 %v5521, 4294901760
    %5885 = vmatpush1.msra.mxu0 %v5884
    %5886 = vmatprep.subr.mxu0 0.0
    %v5887 = vand.u32 %v5522, 4294901760
    %5888 = vmatpush1.msra.mxu0 %v5887
    %5889 = vmatprep.subr.mxu0 0.0
    %v5890 = vand.u32 %v5523, 4294901760
    %5891 = vmatpush1.msra.mxu0 %v5890
    %5892 = vmatprep.subr.mxu0 0.0
    %v5893 = vand.u32 %v5524, 4294901760
    %5894 = vmatpush1.msra.mxu0 %v5893
    %5895 = vmatprep.subr.mxu0 0.0
    %v5896 = vand.u32 %v5525, 4294901760
    %5897 = vmatpush1.msra.mxu0 %v5896
    %5898 = vmatprep.subr.mxu0 0.0
    %v5899 = vand.u32 %v5526, 4294901760
    %5900 = vmatpush1.msra.mxu0 %v5899
    %5901 = vmatprep.subr.mxu0 0.0
    %v5902 = vand.u32 %v5527, 4294901760
    %5903 = vmatpush1.msra.mxu0 %v5902
    %5904 = vmatprep.subr.mxu0 0.0
    %v5905 = vand.u32 %v5528, 4294901760
    %5906 = vmatpush1.msra.mxu0 %v5905
    %5907 = vmatprep.subr.mxu0 0.0
    %v5908 = vand.u32 %v5529, 4294901760
    %5909 = vmatpush1.msra.mxu0 %v5908
    %5910 = vmatprep.subr.mxu0 0.0
    %v5911 = vand.u32 %v5530, 4294901760
    %5912 = vmatpush1.msra.mxu0 %v5911
    %5913 = vmatprep.subr.mxu0 0.0
    %v5914 = vand.u32 %v5531, 4294901760
    %5915 = vmatpush1.msra.mxu0 %v5914
    %5916 = vmatprep.subr.mxu0 0.0
    %v5917 = vand.u32 %v5532, 4294901760
    %5918 = vmatpush1.msra.mxu0 %v5917
    %5919 = vmatprep.subr.mxu0 0.0
    %v5920 = vand.u32 %v5533, 4294901760
    %5921 = vmatpush1.msra.mxu0 %v5920
    %5922 = vmatprep.subr.mxu0 0.0
    %v5923 = vand.u32 %v5534, 4294901760
    %5924 = vmatpush1.msra.mxu0 %v5923
    %5925 = vmatprep.subr.mxu0 0.0
    %v5926 = vand.u32 %v5535, 4294901760
    %5927 = vmatpush1.msra.mxu0 %v5926
    %5928 = vmatprep.subr.mxu0 0.0
    %v5929 = vand.u32 %v5536, 4294901760
    %5930 = vmatpush1.msra.mxu0 %v5929
    %5931 = vmatprep.subr.mxu0 0.0
    %5932 = vmatpush1.msra.mxu0 0.0
    %5933 = vmatprep.subr.mxu0 0.0
    %5934 = vmatpush1.msra.mxu0 0.0
    %5935 = vmatprep.subr.mxu0 0.0
    %5936 = vmatpush1.msra.mxu0 0.0
    %5937 = vmatprep.subr.mxu0 0.0
    %5938 = vmatpush1.msra.mxu0 0.0
    %5939 = vmatprep.subr.mxu0 0.0
    %5940 = vmatpush1.msra.mxu0 0.0
    %5941 = vmatprep.subr.mxu0 0.0
    %5942 = vmatpush1.msra.mxu0 0.0
    %5943 = vmatprep.subr.mxu0 0.0
    %5944 = vmatpush1.msra.mxu0 0.0
    %5945 = vmatprep.subr.mxu0 0.0
    %5946 = vmatpush1.msra.mxu0 0.0
    %5947 = vmatprep.subr.mxu0 0.0
    %5948 = vmatpush1.msra.mxu0 0.0
    %5949 = vmatprep.subr.mxu0 0.0
    %5950 = vmatpush1.msra.mxu0 0.0
    %5951 = vmatprep.subr.mxu0 0.0
    %5952 = vmatpush1.msra.mxu0 0.0
    %5953 = vmatprep.subr.mxu0 0.0
    %5954 = vmatpush1.msra.mxu0 0.0
    %5955 = vmatprep.subr.mxu0 0.0
    %5956 = vmatpush1.msra.mxu0 0.0
    %5957 = vmatprep.subr.mxu0 0.0
    %5958 = vmatpush1.msra.mxu0 0.0
    %5959 = vmatprep.subr.mxu0 0.0
    %5960 = vmatpush1.msra.mxu0 0.0
    %5961 = vmatprep.subr.mxu0 0.0
    %5962 = vmatpush1.msra.mxu0 0.0
    %5963 = vmatprep.mubr.f32.mxu0 0.0
    %v5964 = vand.u32 %v5507, 4294901760
    %v5965 = vsub.f32 %v5507, %v5964
    %v5966 = vand.u32 %v5965, 4294901760
    %5967 = vmatmul.mubr.f32.gmra.mrb[0].mxu0 %v5966
    %v5968 = vpop.f32.mrb[0].mxu0
    %v5969 = vadd.f32 %v5880, %v5968
    %v5970 = vpop.f32.mrb[0].mxu0
    %5971 = vdwg.mxu0
    %5972 = vmatprep.subr.mxu0 0.0
    %v5973 = vand.u32 %v5521, 4294901760
    %v5974 = vsub.f32 %v5521, %v5973
    %v5975 = vand.u32 %v5974, 4294901760
    %5976 = vmatpush1.msra.mxu0 %v5975
    %5977 = vmatprep.subr.mxu0 0.0
    %v5978 = vand.u32 %v5522, 4294901760
    %v5979 = vsub.f32 %v5522, %v5978
    %v5980 = vand.u32 %v5979, 4294901760
    %5981 = vmatpush1.msra.mxu0 %v5980
    %5982 = vmatprep.subr.mxu0 0.0
    %v5983 = vand.u32 %v5523, 4294901760
    %v5984 = vsub.f32 %v5523, %v5983
    %v5985 = vand.u32 %v5984, 4294901760
    %5986 = vmatpush1.msra.mxu0 %v5985
    %5987 = vmatprep.subr.mxu0 0.0
    %v5988 = vand.u32 %v5524, 4294901760
    %v5989 = vsub.f32 %v5524, %v5988
    %v5990 = vand.u32 %v5989, 4294901760
    %5991 = vmatpush1.msra.mxu0 %v5990
    %5992 = vmatprep.subr.mxu0 0.0
    %v5993 = vand.u32 %v5525, 4294901760
    %v5994 = vsub.f32 %v5525, %v5993
    %v5995 = vand.u32 %v5994, 4294901760
    %5996 = vmatpush1.msra.mxu0 %v5995
    %5997 = vmatprep.subr.mxu0 0.0
    %v5998 = vand.u32 %v5526, 4294901760
    %v5999 = vsub.f32 %v5526, %v5998
    %v6000 = vand.u32 %v5999, 4294901760
    %6001 = vmatpush1.msra.mxu0 %v6000
    %6002 = vmatprep.subr.mxu0 0.0
    %v6003 = vand.u32 %v5527, 4294901760
    %v6004 = vsub.f32 %v5527, %v6003
    %v6005 = vand.u32 %v6004, 4294901760
    %6006 = vmatpush1.msra.mxu0 %v6005
    %6007 = vmatprep.subr.mxu0 0.0
    %v6008 = vand.u32 %v5528, 4294901760
    %v6009 = vsub.f32 %v5528, %v6008
    %v6010 = vand.u32 %v6009, 4294901760
    %6011 = vmatpush1.msra.mxu0 %v6010
    %6012 = vmatprep.subr.mxu0 0.0
    %v6013 = vand.u32 %v5529, 4294901760
    %v6014 = vsub.f32 %v5529, %v6013
    %v6015 = vand.u32 %v6014, 4294901760
    %6016 = vmatpush1.msra.mxu0 %v6015
    %6017 = vmatprep.subr.mxu0 0.0
    %v6018 = vand.u32 %v5530, 4294901760
    %v6019 = vsub.f32 %v5530, %v6018
    %v6020 = vand.u32 %v6019, 4294901760
    %6021 = vmatpush1.msra.mxu0 %v6020
    %6022 = vmatprep.subr.mxu0 0.0
    %v6023 = vand.u32 %v5531, 4294901760
    %v6024 = vsub.f32 %v5531, %v6023
    %v6025 = vand.u32 %v6024, 4294901760
    %6026 = vmatpush1.msra.mxu0 %v6025
    %6027 = vmatprep.subr.mxu0 0.0
    %v6028 = vand.u32 %v5532, 4294901760
    %v6029 = vsub.f32 %v5532, %v6028
    %v6030 = vand.u32 %v6029, 4294901760
    %6031 = vmatpush1.msra.mxu0 %v6030
    %6032 = vmatprep.subr.mxu0 0.0
    %v6033 = vand.u32 %v5533, 4294901760
    %v6034 = vsub.f32 %v5533, %v6033
    %v6035 = vand.u32 %v6034, 4294901760
    %6036 = vmatpush1.msra.mxu0 %v6035
    %6037 = vmatprep.subr.mxu0 0.0
    %v6038 = vand.u32 %v5534, 4294901760
    %v6039 = vsub.f32 %v5534, %v6038
    %v6040 = vand.u32 %v6039, 4294901760
    %6041 = vmatpush1.msra.mxu0 %v6040
    %6042 = vmatprep.subr.mxu0 0.0
    %v6043 = vand.u32 %v5535, 4294901760
    %v6044 = vsub.f32 %v5535, %v6043
    %v6045 = vand.u32 %v6044, 4294901760
    %6046 = vmatpush1.msra.mxu0 %v6045
    %6047 = vmatprep.subr.mxu0 0.0
    %v6048 = vand.u32 %v5536, 4294901760
    %v6049 = vsub.f32 %v5536, %v6048
    %v6050 = vand.u32 %v6049, 4294901760
    %6051 = vmatpush1.msra.mxu0 %v6050
    %6052 = vmatprep.subr.mxu0 0.0
    %6053 = vmatpush1.msra.mxu0 0.0
    %6054 = vmatprep.subr.mxu0 0.0
    %6055 = vmatpush1.msra.mxu0 0.0
    %6056 = vmatprep.subr.mxu0 0.0
    %6057 = vmatpush1.msra.mxu0 0.0
    %6058 = vmatprep.subr.mxu0 0.0
    %6059 = vmatpush1.msra.mxu0 0.0
    %6060 = vmatprep.subr.mxu0 0.0
    %6061 = vmatpush1.msra.mxu0 0.0
    %6062 = vmatprep.subr.mxu0 0.0
    %6063 = vmatpush1.msra.mxu0 0.0
    %6064 = vmatprep.subr.mxu0 0.0
    %6065 = vmatpush1.msra.mxu0 0.0
    %6066 = vmatprep.subr.mxu0 0.0
    %6067 = vmatpush1.msra.mxu0 0.0
    %6068 = vmatprep.subr.mxu0 0.0
    %6069 = vmatpush1.msra.mxu0 0.0
    %6070 = vmatprep.subr.mxu0 0.0
    %6071 = vmatpush1.msra.mxu0 0.0
    %6072 = vmatprep.subr.mxu0 0.0
    %6073 = vmatpush1.msra.mxu0 0.0
    %6074 = vmatprep.subr.mxu0 0.0
    %6075 = vmatpush1.msra.mxu0 0.0
    %6076 = vmatprep.subr.mxu0 0.0
    %6077 = vmatpush1.msra.mxu0 0.0
    %6078 = vmatprep.subr.mxu0 0.0
    %6079 = vmatpush1.msra.mxu0 0.0
    %6080 = vmatprep.subr.mxu0 0.0
    %6081 = vmatpush1.msra.mxu0 0.0
    %6082 = vmatprep.subr.mxu0 0.0
    %6083 = vmatpush1.msra.mxu0 0.0
    %6084 = vmatprep.mubr.f32.mxu0 0.0
    %v6085 = vand.u32 %v5507, 4294901760
    %6086 = vmatmul.mubr.f32.gmra.mrb[0].mxu0 %v6085
    %v6087 = vpop.f32.mrb[0].mxu0
    %v6088 = vadd.f32 %v5969, %v6087
    %v6089 = vpop.f32.mrb[0].mxu0
    %6090 = vdwg.mxu0
    %6091 = vmatprep.subr.mxu0 0.0
    %v6092 = vand.u32 %v5521, 4294901760
    %6093 = vmatpush1.msra.mxu0 %v6092
    %6094 = vmatprep.subr.mxu0 0.0
    %v6095 = vand.u32 %v5522, 4294901760
    %6096 = vmatpush1.msra.mxu0 %v6095
    %6097 = vmatprep.subr.mxu0 0.0
    %v6098 = vand.u32 %v5523, 4294901760
    %6099 = vmatpush1.msra.mxu0 %v6098
    %6100 = vmatprep.subr.mxu0 0.0
    %v6101 = vand.u32 %v5524, 4294901760
    %6102 = vmatpush1.msra.mxu0 %v6101
    %6103 = vmatprep.subr.mxu0 0.0
    %v6104 = vand.u32 %v5525, 4294901760
    %6105 = vmatpush1.msra.mxu0 %v6104
    %6106 = vmatprep.subr.mxu0 0.0
    %v6107 = vand.u32 %v5526, 4294901760
    %6108 = vmatpush1.msra.mxu0 %v6107
    %6109 = vmatprep.subr.mxu0 0.0
    %v6110 = vand.u32 %v5527, 4294901760
    %6111 = vmatpush1.msra.mxu0 %v6110
    %6112 = vmatprep.subr.mxu0 0.0
    %v6113 = vand.u32 %v5528, 4294901760
    %6114 = vmatpush1.msra.mxu0 %v6113
    %6115 = vmatprep.subr.mxu0 0.0
    %v6116 = vand.u32 %v5529, 4294901760
    %6117 = vmatpush1.msra.mxu0 %v6116
    %6118 = vmatprep.subr.mxu0 0.0
    %v6119 = vand.u32 %v5530, 4294901760
    %6120 = vmatpush1.msra.mxu0 %v6119
    %6121 = vmatprep.subr.mxu0 0.0
    %v6122 = vand.u32 %v5531, 4294901760
    %6123 = vmatpush1.msra.mxu0 %v6122
    %6124 = vmatprep.subr.mxu0 0.0
    %v6125 = vand.u32 %v5532, 4294901760
    %6126 = vmatpush1.msra.mxu0 %v6125
    %6127 = vmatprep.subr.mxu0 0.0
    %v6128 = vand.u32 %v5533, 4294901760
    %6129 = vmatpush1.msra.mxu0 %v6128
    %6130 = vmatprep.subr.mxu0 0.0
    %v6131 = vand.u32 %v5534, 4294901760
    %6132 = vmatpush1.msra.mxu0 %v6131
    %6133 = vmatprep.subr.mxu0 0.0
    %v6134 = vand.u32 %v5535, 4294901760
    %6135 = vmatpush1.msra.mxu0 %v6134
    %6136 = vmatprep.subr.mxu0 0.0
    %v6137 = vand.u32 %v5536, 4294901760
    %6138 = vmatpush1.msra.mxu0 %v6137
    %6139 = vmatprep.subr.mxu0 0.0
    %6140 = vmatpush1.msra.mxu0 0.0
    %6141 = vmatprep.subr.mxu0 0.0
    %6142 = vmatpush1.msra.mxu0 0.0
    %6143 = vmatprep.subr.mxu0 0.0
    %6144 = vmatpush1.msra.mxu0 0.0
    %6145 = vmatprep.subr.mxu0 0.0
    %6146 = vmatpush1.msra.mxu0 0.0
    %6147 = vmatprep.subr.mxu0 0.0
    %6148 = vmatpush1.msra.mxu0 0.0
    %6149 = vmatprep.subr.mxu0 0.0
    %6150 = vmatpush1.msra.mxu0 0.0
    %6151 = vmatprep.subr.mxu0 0.0
    %6152 = vmatpush1.msra.mxu0 0.0
    %6153 = vmatprep.subr.mxu0 0.0
    %6154 = vmatpush1.msra.mxu0 0.0
    %6155 = vmatprep.subr.mxu0 0.0
    %6156 = vmatpush1.msra.mxu0 0.0
    %6157 = vmatprep.subr.mxu0 0.0
    %6158 = vmatpush1.msra.mxu0 0.0
    %6159 = vmatprep.subr.mxu0 0.0
    %6160 = vmatpush1.msra.mxu0 0.0
    %6161 = vmatprep.subr.mxu0 0.0
    %6162 = vmatpush1.msra.mxu0 0.0
    %6163 = vmatprep.subr.mxu0 0.0
    %6164 = vmatpush1.msra.mxu0 0.0
    %6165 = vmatprep.subr.mxu0 0.0
    %6166 = vmatpush1.msra.mxu0 0.0
    %6167 = vmatprep.subr.mxu0 0.0
    %6168 = vmatpush1.msra.mxu0 0.0
    %6169 = vmatprep.subr.mxu0 0.0
    %6170 = vmatpush1.msra.mxu0 0.0
    %6171 = vmatprep.mubr.f32.mxu0 0.0
    %v6172 = vand.u32 %v5507, 4294901760
    %6173 = vmatmul.mubr.f32.gmra.mrb[0].mxu0 %v6172
    %v6174 = vpop.f32.mrb[0].mxu0
    %v6175 = vadd.f32 %v6088, %v6174
    %v6176 = vpop.f32.mrb[0].mxu0
    %6177 = vdwg.mxu0
    %6178 = vmatprep.subr.mxu0 0.0
    %v6179 = vand.u32 %v5521, 4294901760
    %6180 = vmatpush1.msra.mxu0 %v6179
    %6181 = vmatprep.subr.mxu0 0.0
    %v6182 = vand.u32 %v5522, 4294901760
    %6183 = vmatpush1.msra.mxu0 %v6182
    %6184 = vmatprep.subr.mxu0 0.0
    %v6185 = vand.u32 %v5523, 4294901760
    %6186 = vmatpush1.msra.mxu0 %v6185
    %6187 = vmatprep.subr.mxu0 0.0
    %v6188 = vand.u32 %v5524, 4294901760
    %6189 = vmatpush1.msra.mxu0 %v6188
    %6190 = vmatprep.subr.mxu0 0.0
    %v6191 = vand.u32 %v5525, 4294901760
    %6192 = vmatpush1.msra.mxu0 %v6191
    %6193 = vmatprep.subr.mxu0 0.0
    %v6194 = vand.u32 %v5526, 4294901760
    %6195 = vmatpush1.msra.mxu0 %v6194
    %6196 = vmatprep.subr.mxu0 0.0
    %v6197 = vand.u32 %v5527, 4294901760
    %6198 = vmatpush1.msra.mxu0 %v6197
    %6199 = vmatprep.subr.mxu0 0.0
    %v6200 = vand.u32 %v5528, 4294901760
    %6201 = vmatpush1.msra.mxu0 %v6200
    %6202 = vmatprep.subr.mxu0 0.0
    %v6203 = vand.u32 %v5529, 4294901760
    %6204 = vmatpush1.msra.mxu0 %v6203
    %6205 = vmatprep.subr.mxu0 0.0
    %v6206 = vand.u32 %v5530, 4294901760
    %6207 = vmatpush1.msra.mxu0 %v6206
    %6208 = vmatprep.subr.mxu0 0.0
    %v6209 = vand.u32 %v5531, 4294901760
    %6210 = vmatpush1.msra.mxu0 %v6209
    %6211 = vmatprep.subr.mxu0 0.0
    %v6212 = vand.u32 %v5532, 4294901760
    %6213 = vmatpush1.msra.mxu0 %v6212
    %6214 = vmatprep.subr.mxu0 0.0
    %v6215 = vand.u32 %v5533, 4294901760
    %6216 = vmatpush1.msra.mxu0 %v6215
    %6217 = vmatprep.subr.mxu0 0.0
    %v6218 = vand.u32 %v5534, 4294901760
    %6219 = vmatpush1.msra.mxu0 %v6218
    %6220 = vmatprep.subr.mxu0 0.0
    %v6221 = vand.u32 %v5535, 4294901760
    %6222 = vmatpush1.msra.mxu0 %v6221
    %6223 = vmatprep.subr.mxu0 0.0
    %v6224 = vand.u32 %v5536, 4294901760
    %6225 = vmatpush1.msra.mxu0 %v6224
    %6226 = vmatprep.subr.mxu0 0.0
    %6227 = vmatpush1.msra.mxu0 0.0
    %6228 = vmatprep.subr.mxu0 0.0
    %6229 = vmatpush1.msra.mxu0 0.0
    %6230 = vmatprep.subr.mxu0 0.0
    %6231 = vmatpush1.msra.mxu0 0.0
    %6232 = vmatprep.subr.mxu0 0.0
    %6233 = vmatpush1.msra.mxu0 0.0
    %6234 = vmatprep.subr.mxu0 0.0
    %6235 = vmatpush1.msra.mxu0 0.0
    %6236 = vmatprep.subr.mxu0 0.0
    %6237 = vmatpush1.msra.mxu0 0.0
    %6238 = vmatprep.subr.mxu0 0.0
    %6239 = vmatpush1.msra.mxu0 0.0
    %6240 = vmatprep.subr.mxu0 0.0
    %6241 = vmatpush1.msra.mxu0 0.0
    %6242 = vmatprep.subr.mxu0 0.0
    %6243 = vmatpush1.msra.mxu0 0.0
    %6244 = vmatprep.subr.mxu0 0.0
    %6245 = vmatpush1.msra.mxu0 0.0
    %6246 = vmatprep.subr.mxu0 0.0
    %6247 = vmatpush1.msra.mxu0 0.0
    %6248 = vmatprep.subr.mxu0 0.0
    %6249 = vmatpush1.msra.mxu0 0.0
    %6250 = vmatprep.subr.mxu0 0.0
    %6251 = vmatpush1.msra.mxu0 0.0
    %6252 = vmatprep.subr.mxu0 0.0
    %6253 = vmatpush1.msra.mxu0 0.0
    %6254 = vmatprep.subr.mxu0 0.0
    %6255 = vmatpush1.msra.mxu0 0.0
    %6256 = vmatprep.subr.mxu0 0.0
    %6257 = vmatpush1.msra.mxu0 0.0
    %6258 = vmatprep.mubr.f32.mxu0 0.0
    %v6259 = vand.u32 %v5520, 4294901760
    %v6260 = vsub.f32 %v5520, %v6259
    %v6261 = vand.u32 %v6260, 4294901760
    %v6262 = vsub.f32 %v6260, %v6261
    %v6263 = vand.u32 %v6262, 4294901760
    %6264 = vmatmul.mubr.f32.gmra.mrb[0].mxu0 %v6263
    %v6265 = vpop.f32.mrb[0].mxu0
    %v6266 = vadd.f32 0.0, %v6265
    %v6267 = vpop.f32.mrb[0].mxu0
    %6268 = vdwg.mxu0
    %6269 = vmatprep.subr.mxu0 0.0
    %v6270 = vand.u32 %v5521, 4294901760
    %v6271 = vsub.f32 %v5521, %v6270
    %v6272 = vand.u32 %v6271, 4294901760
    %v6273 = vsub.f32 %v6271, %v6272
    %v6274 = vand.u32 %v6273, 4294901760
    %6275 = vmatpush1.msra.mxu0 %v6274
    %6276 = vmatprep.subr.mxu0 0.0
    %v6277 = vand.u32 %v5522, 4294901760
    %v6278 = vsub.f32 %v5522, %v6277
    %v6279 = vand.u32 %v6278, 4294901760
    %v6280 = vsub.f32 %v6278, %v6279
    %v6281 = vand.u32 %v6280, 4294901760
    %6282 = vmatpush1.msra.mxu0 %v6281
    %6283 = vmatprep.subr.mxu0 0.0
    %v6284 = vand.u32 %v5523, 4294901760
    %v6285 = vsub.f32 %v5523, %v6284
    %v6286 = vand.u32 %v6285, 4294901760
    %v6287 = vsub.f32 %v6285, %v6286
    %v6288 = vand.u32 %v6287, 4294901760
    %6289 = vmatpush1.msra.mxu0 %v6288
    %6290 = vmatprep.subr.mxu0 0.0
    %v6291 = vand.u32 %v5524, 4294901760
    %v6292 = vsub.f32 %v5524, %v6291
    %v6293 = vand.u32 %v6292, 4294901760
    %v6294 = vsub.f32 %v6292, %v6293
    %v6295 = vand.u32 %v6294, 4294901760
    %6296 = vmatpush1.msra.mxu0 %v6295
    %6297 = vmatprep.subr.mxu0 0.0
    %v6298 = vand.u32 %v5525, 4294901760
    %v6299 = vsub.f32 %v5525, %v6298
    %v6300 = vand.u32 %v6299, 4294901760
    %v6301 = vsub.f32 %v6299, %v6300
    %v6302 = vand.u32 %v6301, 4294901760
    %6303 = vmatpush1.msra.mxu0 %v6302
    %6304 = vmatprep.subr.mxu0 0.0
    %v6305 = vand.u32 %v5526, 4294901760
    %v6306 = vsub.f32 %v5526, %v6305
    %v6307 = vand.u32 %v6306, 4294901760
    %v6308 = vsub.f32 %v6306, %v6307
    %v6309 = vand.u32 %v6308, 4294901760
    %6310 = vmatpush1.msra.mxu0 %v6309
    %6311 = vmatprep.subr.mxu0 0.0
    %v6312 = vand.u32 %v5527, 4294901760
    %v6313 = vsub.f32 %v5527, %v6312
    %v6314 = vand.u32 %v6313, 4294901760
    %v6315 = vsub.f32 %v6313, %v6314
    %v6316 = vand.u32 %v6315, 4294901760
    %6317 = vmatpush1.msra.mxu0 %v6316
    %6318 = vmatprep.subr.mxu0 0.0
    %v6319 = vand.u32 %v5528, 4294901760
    %v6320 = vsub.f32 %v5528, %v6319
    %v6321 = vand.u32 %v6320, 4294901760
    %v6322 = vsub.f32 %v6320, %v6321
    %v6323 = vand.u32 %v6322, 4294901760
    %6324 = vmatpush1.msra.mxu0 %v6323
    %6325 = vmatprep.subr.mxu0 0.0
    %v6326 = vand.u32 %v5529, 4294901760
    %v6327 = vsub.f32 %v5529, %v6326
    %v6328 = vand.u32 %v6327, 4294901760
    %v6329 = vsub.f32 %v6327, %v6328
    %v6330 = vand.u32 %v6329, 4294901760
    %6331 = vmatpush1.msra.mxu0 %v6330
    %6332 = vmatprep.subr.mxu0 0.0
    %v6333 = vand.u32 %v5530, 4294901760
    %v6334 = vsub.f32 %v5530, %v6333
    %v6335 = vand.u32 %v6334, 4294901760
    %v6336 = vsub.f32 %v6334, %v6335
    %v6337 = vand.u32 %v6336, 4294901760
    %6338 = vmatpush1.msra.mxu0 %v6337
    %6339 = vmatprep.subr.mxu0 0.0
    %v6340 = vand.u32 %v5531, 4294901760
    %v6341 = vsub.f32 %v5531, %v6340
    %v6342 = vand.u32 %v6341, 4294901760
    %v6343 = vsub.f32 %v6341, %v6342
    %v6344 = vand.u32 %v6343, 4294901760
    %6345 = vmatpush1.msra.mxu0 %v6344
    %6346 = vmatprep.subr.mxu0 0.0
    %v6347 = vand.u32 %v5532, 4294901760
    %v6348 = vsub.f32 %v5532, %v6347
    %v6349 = vand.u32 %v6348, 4294901760
    %v6350 = vsub.f32 %v6348, %v6349
    %v6351 = vand.u32 %v6350, 4294901760
    %6352 = vmatpush1.msra.mxu0 %v6351
    %6353 = vmatprep.subr.mxu0 0.0
    %v6354 = vand.u32 %v5533, 4294901760
    %v6355 = vsub.f32 %v5533, %v6354
    %v6356 = vand.u32 %v6355, 4294901760
    %v6357 = vsub.f32 %v6355, %v6356
    %v6358 = vand.u32 %v6357, 4294901760
    %6359 = vmatpush1.msra.mxu0 %v6358
    %6360 = vmatprep.subr.mxu0 0.0
    %v6361 = vand.u32 %v5534, 4294901760
    %v6362 = vsub.f32 %v5534, %v6361
    %v6363 = vand.u32 %v6362, 4294901760
    %v6364 = vsub.f32 %v6362, %v6363
    %v6365 = vand.u32 %v6364, 4294901760
    %6366 = vmatpush1.msra.mxu0 %v6365
    %6367 = vmatprep.subr.mxu0 0.0
    %v6368 = vand.u32 %v5535, 4294901760
    %v6369 = vsub.f32 %v5535, %v6368
    %v6370 = vand.u32 %v6369, 4294901760
    %v6371 = vsub.f32 %v6369, %v6370
    %v6372 = vand.u32 %v6371, 4294901760
    %6373 = vmatpush1.msra.mxu0 %v6372
    %6374 = vmatprep.subr.mxu0 0.0
    %v6375 = vand.u32 %v5536, 4294901760
    %v6376 = vsub.f32 %v5536, %v6375
    %v6377 = vand.u32 %v6376, 4294901760
    %v6378 = vsub.f32 %v6376, %v6377
    %v6379 = vand.u32 %v6378, 4294901760
    %6380 = vmatpush1.msra.mxu0 %v6379
    %6381 = vmatprep.subr.mxu0 0.0
    %6382 = vmatpush1.msra.mxu0 0.0
    %6383 = vmatprep.subr.mxu0 0.0
    %6384 = vmatpush1.msra.mxu0 0.0
    %6385 = vmatprep.subr.mxu0 0.0
    %6386 = vmatpush1.msra.mxu0 0.0
    %6387 = vmatprep.subr.mxu0 0.0
    %6388 = vmatpush1.msra.mxu0 0.0
    %6389 = vmatprep.subr.mxu0 0.0
    %6390 = vmatpush1.msra.mxu0 0.0
    %6391 = vmatprep.subr.mxu0 0.0
    %6392 = vmatpush1.msra.mxu0 0.0
    %6393 = vmatprep.subr.mxu0 0.0
    %6394 = vmatpush1.msra.mxu0 0.0
    %6395 = vmatprep.subr.mxu0 0.0
    %6396 = vmatpush1.msra.mxu0 0.0
    %6397 = vmatprep.subr.mxu0 0.0
    %6398 = vmatpush1.msra.mxu0 0.0
    %6399 = vmatprep.subr.mxu0 0.0
    %6400 = vmatpush1.msra.mxu0 0.0
    %6401 = vmatprep.subr.mxu0 0.0
    %6402 = vmatpush1.msra.mxu0 0.0
    %6403 = vmatprep.subr.mxu0 0.0
    %6404 = vmatpush1.msra.mxu0 0.0
    %6405 = vmatprep.subr.mxu0 0.0
    %6406 = vmatpush1.msra.mxu0 0.0
    %6407 = vmatprep.subr.mxu0 0.0
    %6408 = vmatpush1.msra.mxu0 0.0
    %6409 = vmatprep.subr.mxu0 0.0
    %6410 = vmatpush1.msra.mxu0 0.0
    %6411 = vmatprep.subr.mxu0 0.0
    %6412 = vmatpush1.msra.mxu0 0.0
    %6413 = vmatprep.mubr.f32.mxu0 0.0
    %v6414 = vand.u32 %v5520, 4294901760
    %6415 = vmatmul.mubr.f32.gmra.mrb[0].mxu0 %v6414
    %v6416 = vpop.f32.mrb[0].mxu0
    %v6417 = vadd.f32 %v6266, %v6416
    %v6418 = vpop.f32.mrb[0].mxu0
    %6419 = vdwg.mxu0
    %6420 = vmatprep.subr.mxu0 0.0
    %v6421 = vand.u32 %v5521, 4294901760
    %v6422 = vsub.f32 %v5521, %v6421
    %6423 = vmatpush1.msra.mxu0 %v6422
    %6424 = vmatprep.subr.mxu0 0.0
    %v6425 = vand.u32 %v5522, 4294901760
    %v6426 = vsub.f32 %v5522, %v6425
    %6427 = vmatpush1.msra.mxu0 %v6426
    %6428 = vmatprep.subr.mxu0 0.0
    %v6429 = vand.u32 %v5523, 4294901760
    %v6430 = vsub.f32 %v5523, %v6429
    %6431 = vmatpush1.msra.mxu0 %v6430
    %6432 = vmatprep.subr.mxu0 0.0
    %v6433 = vand.u32 %v5524, 4294901760
    %v6434 = vsub.f32 %v5524, %v6433
    %6435 = vmatpush1.msra.mxu0 %v6434
    %6436 = vmatprep.subr.mxu0 0.0
    %v6437 = vand.u32 %v5525, 4294901760
    %v6438 = vsub.f32 %v5525, %v6437
    %6439 = vmatpush1.msra.mxu0 %v6438
    %6440 = vmatprep.subr.mxu0 0.0
    %v6441 = vand.u32 %v5526, 4294901760
    %v6442 = vsub.f32 %v5526, %v6441
    %6443 = vmatpush1.msra.mxu0 %v6442
    %6444 = vmatprep.subr.mxu0 0.0
    %v6445 = vand.u32 %v5527, 4294901760
    %v6446 = vsub.f32 %v5527, %v6445
    %6447 = vmatpush1.msra.mxu0 %v6446
    %6448 = vmatprep.subr.mxu0 0.0
    %v6449 = vand.u32 %v5528, 4294901760
    %v6450 = vsub.f32 %v5528, %v6449
    %6451 = vmatpush1.msra.mxu0 %v6450
    %6452 = vmatprep.subr.mxu0 0.0
    %v6453 = vand.u32 %v5529, 4294901760
    %v6454 = vsub.f32 %v5529, %v6453
    %6455 = vmatpush1.msra.mxu0 %v6454
    %6456 = vmatprep.subr.mxu0 0.0
    %v6457 = vand.u32 %v5530, 4294901760
    %v6458 = vsub.f32 %v5530, %v6457
    %6459 = vmatpush1.msra.mxu0 %v6458
    %6460 = vmatprep.subr.mxu0 0.0
    %v6461 = vand.u32 %v5531, 4294901760
    %v6462 = vsub.f32 %v5531, %v6461
    %6463 = vmatpush1.msra.mxu0 %v6462
    %6464 = vmatprep.subr.mxu0 0.0
    %v6465 = vand.u32 %v5532, 4294901760
    %v6466 = vsub.f32 %v5532, %v6465
    %6467 = vmatpush1.msra.mxu0 %v6466
    %6468 = vmatprep.subr.mxu0 0.0
    %v6469 = vand.u32 %v5533, 4294901760
    %v6470 = vsub.f32 %v5533, %v6469
    %6471 = vmatpush1.msra.mxu0 %v6470
    %6472 = vmatprep.subr.mxu0 0.0
    %v6473 = vand.u32 %v5534, 4294901760
    %v6474 = vsub.f32 %v5534, %v6473
    %6475 = vmatpush1.msra.mxu0 %v6474
    %6476 = vmatprep.subr.mxu0 0.0
    %v6477 = vand.u32 %v5535, 4294901760
    %v6478 = vsub.f32 %v5535, %v6477
    %6479 = vmatpush1.msra.mxu0 %v6478
    %6480 = vmatprep.subr.mxu0 0.0
    %v6481 = vand.u32 %v5536, 4294901760
    %v6482 = vsub.f32 %v5536, %v6481
    %6483 = vmatpush1.msra.mxu0 %v6482
    %6484 = vmatprep.subr.mxu0 0.0
    %6485 = vmatpush1.msra.mxu0 0.0
    %6486 = vmatprep.subr.mxu0 0.0
    %6487 = vmatpush1.msra.mxu0 0.0
    %6488 = vmatprep.subr.mxu0 0.0
    %6489 = vmatpush1.msra.mxu0 0.0
    %6490 = vmatprep.subr.mxu0 0.0
    %6491 = vmatpush1.msra.mxu0 0.0
    %6492 = vmatprep.subr.mxu0 0.0
    %6493 = vmatpush1.msra.mxu0 0.0
    %6494 = vmatprep.subr.mxu0 0.0
    %6495 = vmatpush1.msra.mxu0 0.0
    %6496 = vmatprep.subr.mxu0 0.0
    %6497 = vmatpush1.msra.mxu0 0.0
    %6498 = vmatprep.subr.mxu0 0.0
    %6499 = vmatpush1.msra.mxu0 0.0
    %6500 = vmatprep.subr.mxu0 0.0
    %6501 = vmatpush1.msra.mxu0 0.0
    %6502 = vmatprep.subr.mxu0 0.0
    %6503 = vmatpush1.msra.mxu0 0.0
    %6504 = vmatprep.subr.mxu0 0.0
    %6505 = vmatpush1.msra.mxu0 0.0
    %6506 = vmatprep.subr.mxu0 0.0
    %6507 = vmatpush1.msra.mxu0 0.0
    %6508 = vmatprep.subr.mxu0 0.0
    %6509 = vmatpush1.msra.mxu0 0.0
    %6510 = vmatprep.subr.mxu0 0.0
    %6511 = vmatpush1.msra.mxu0 0.0
    %6512 = vmatprep.subr.mxu0 0.0
    %6513 = vmatpush1.msra.mxu0 0.0
    %6514 = vmatprep.subr.mxu0 0.0
    %6515 = vmatpush1.msra.mxu0 0.0
    %6516 = vmatprep.mubr.f32.mxu0 0.0
    %v6517 = vand.u32 %v5520, 4294901760
    %v6518 = vsub.f32 %v5520, %v6517
    %6519 = vmatmul.mubr.f32.gmra.mrb[0].mxu0 %v6518
    %v6520 = vpop.f32.mrb[0].mxu0
    %v6521 = vadd.f32 %v6417, %v6520
    %v6522 = vpop.f32.mrb[0].mxu0
    %6523 = vdwg.mxu0
    %6524 = vmatprep.subr.mxu0 0.0
    %v6525 = vand.u32 %v5521, 4294901760
    %6526 = vmatpush1.msra.mxu0 %v6525
    %6527 = vmatprep.subr.mxu0 0.0
    %v6528 = vand.u32 %v5522, 4294901760
    %6529 = vmatpush1.msra.mxu0 %v6528
    %6530 = vmatprep.subr.mxu0 0.0
    %v6531 = vand.u32 %v5523, 4294901760
    %6532 = vmatpush1.msra.mxu0 %v6531
    %6533 = vmatprep.subr.mxu0 0.0
    %v6534 = vand.u32 %v5524, 4294901760
    %6535 = vmatpush1.msra.mxu0 %v6534
    %6536 = vmatprep.subr.mxu0 0.0
    %v6537 = vand.u32 %v5525, 4294901760
    %6538 = vmatpush1.msra.mxu0 %v6537
    %6539 = vmatprep.subr.mxu0 0.0
    %v6540 = vand.u32 %v5526, 4294901760
    %6541 = vmatpush1.msra.mxu0 %v6540
    %6542 = vmatprep.subr.mxu0 0.0
    %v6543 = vand.u32 %v5527, 4294901760
    %6544 = vmatpush1.msra.mxu0 %v6543
    %6545 = vmatprep.subr.mxu0 0.0
    %v6546 = vand.u32 %v5528, 4294901760
    %6547 = vmatpush1.msra.mxu0 %v6546
    %6548 = vmatprep.subr.mxu0 0.0
    %v6549 = vand.u32 %v5529, 4294901760
    %6550 = vmatpush1.msra.mxu0 %v6549
    %6551 = vmatprep.subr.mxu0 0.0
    %v6552 = vand.u32 %v5530, 4294901760
    %6553 = vmatpush1.msra.mxu0 %v6552
    %6554 = vmatprep.subr.mxu0 0.0
    %v6555 = vand.u32 %v5531, 4294901760
    %6556 = vmatpush1.msra.mxu0 %v6555
    %6557 = vmatprep.subr.mxu0 0.0
    %v6558 = vand.u32 %v5532, 4294901760
    %6559 = vmatpush1.msra.mxu0 %v6558
    %6560 = vmatprep.subr.mxu0 0.0
    %v6561 = vand.u32 %v5533, 4294901760
    %6562 = vmatpush1.msra.mxu0 %v6561
    %6563 = vmatprep.subr.mxu0 0.0
    %v6564 = vand.u32 %v5534, 4294901760
    %6565 = vmatpush1.msra.mxu0 %v6564
    %6566 = vmatprep.subr.mxu0 0.0
    %v6567 = vand.u32 %v5535, 4294901760
    %6568 = vmatpush1.msra.mxu0 %v6567
    %6569 = vmatprep.subr.mxu0 0.0
    %v6570 = vand.u32 %v5536, 4294901760
    %6571 = vmatpush1.msra.mxu0 %v6570
    %6572 = vmatprep.subr.mxu0 0.0
    %6573 = vmatpush1.msra.mxu0 0.0
    %6574 = vmatprep.subr.mxu0 0.0
    %6575 = vmatpush1.msra.mxu0 0.0
    %6576 = vmatprep.subr.mxu0 0.0
    %6577 = vmatpush1.msra.mxu0 0.0
    %6578 = vmatprep.subr.mxu0 0.0
    %6579 = vmatpush1.msra.mxu0 0.0
    %6580 = vmatprep.subr.mxu0 0.0
    %6581 = vmatpush1.msra.mxu0 0.0
    %6582 = vmatprep.subr.mxu0 0.0
    %6583 = vmatpush1.msra.mxu0 0.0
    %6584 = vmatprep.subr.mxu0 0.0
    %6585 = vmatpush1.msra.mxu0 0.0
    %6586 = vmatprep.subr.mxu0 0.0
    %6587 = vmatpush1.msra.mxu0 0.0
    %6588 = vmatprep.subr.mxu0 0.0
    %6589 = vmatpush1.msra.mxu0 0.0
    %6590 = vmatprep.subr.mxu0 0.0
    %6591 = vmatpush1.msra.mxu0 0.0
    %6592 = vmatprep.subr.mxu0 0.0
    %6593 = vmatpush1.msra.mxu0 0.0
    %6594 = vmatprep.subr.mxu0 0.0
    %6595 = vmatpush1.msra.mxu0 0.0
    %6596 = vmatprep.subr.mxu0 0.0
    %6597 = vmatpush1.msra.mxu0 0.0
    %6598 = vmatprep.subr.mxu0 0.0
    %6599 = vmatpush1.msra.mxu0 0.0
    %6600 = vmatprep.subr.mxu0 0.0
    %6601 = vmatpush1.msra.mxu0 0.0
    %6602 = vmatprep.subr.mxu0 0.0
    %6603 = vmatpush1.msra.mxu0 0.0
    %6604 = vmatprep.mubr.f32.mxu0 0.0
    %v6605 = vand.u32 %v5520, 4294901760
    %v6606 = vsub.f32 %v5520, %v6605
    %v6607 = vand.u32 %v6606, 4294901760
    %6608 = vmatmul.mubr.f32.gmra.mrb[0].mxu0 %v6607
    %v6609 = vpop.f32.mrb[0].mxu0
    %v6610 = vadd.f32 %v6521, %v6609
    %v6611 = vpop.f32.mrb[0].mxu0
    %6612 = vdwg.mxu0
    %6613 = vmatprep.subr.mxu0 0.0
    %v6614 = vand.u32 %v5521, 4294901760
    %v6615 = vsub.f32 %v5521, %v6614
    %v6616 = vand.u32 %v6615, 4294901760
    %6617 = vmatpush1.msra.mxu0 %v6616
    %6618 = vmatprep.subr.mxu0 0.0
    %v6619 = vand.u32 %v5522, 4294901760
    %v6620 = vsub.f32 %v5522, %v6619
    %v6621 = vand.u32 %v6620, 4294901760
    %6622 = vmatpush1.msra.mxu0 %v6621
    %6623 = vmatprep.subr.mxu0 0.0
    %v6624 = vand.u32 %v5523, 4294901760
    %v6625 = vsub.f32 %v5523, %v6624
    %v6626 = vand.u32 %v6625, 4294901760
    %6627 = vmatpush1.msra.mxu0 %v6626
    %6628 = vmatprep.subr.mxu0 0.0
    %v6629 = vand.u32 %v5524, 4294901760
    %v6630 = vsub.f32 %v5524, %v6629
    %v6631 = vand.u32 %v6630, 4294901760
    %6632 = vmatpush1.msra.mxu0 %v6631
    %6633 = vmatprep.subr.mxu0 0.0
    %v6634 = vand.u32 %v5525, 4294901760
    %v6635 = vsub.f32 %v5525, %v6634
    %v6636 = vand.u32 %v6635, 4294901760
    %6637 = vmatpush1.msra.mxu0 %v6636
    %6638 = vmatprep.subr.mxu0 0.0
    %v6639 = vand.u32 %v5526, 4294901760
    %v6640 = vsub.f32 %v5526, %v6639
    %v6641 = vand.u32 %v6640, 4294901760
    %6642 = vmatpush1.msra.mxu0 %v6641
    %6643 = vmatprep.subr.mxu0 0.0
    %v6644 = vand.u32 %v5527, 4294901760
    %v6645 = vsub.f32 %v5527, %v6644
    %v6646 = vand.u32 %v6645, 4294901760
    %6647 = vmatpush1.msra.mxu0 %v6646
    %6648 = vmatprep.subr.mxu0 0.0
    %v6649 = vand.u32 %v5528, 4294901760
    %v6650 = vsub.f32 %v5528, %v6649
    %v6651 = vand.u32 %v6650, 4294901760
    %6652 = vmatpush1.msra.mxu0 %v6651
    %6653 = vmatprep.subr.mxu0 0.0
    %v6654 = vand.u32 %v5529, 4294901760
    %v6655 = vsub.f32 %v5529, %v6654
    %v6656 = vand.u32 %v6655, 4294901760
    %6657 = vmatpush1.msra.mxu0 %v6656
    %6658 = vmatprep.subr.mxu0 0.0
    %v6659 = vand.u32 %v5530, 4294901760
    %v6660 = vsub.f32 %v5530, %v6659
    %v6661 = vand.u32 %v6660, 4294901760
    %6662 = vmatpush1.msra.mxu0 %v6661
    %6663 = vmatprep.subr.mxu0 0.0
    %v6664 = vand.u32 %v5531, 4294901760
    %v6665 = vsub.f32 %v5531, %v6664
    %v6666 = vand.u32 %v6665, 4294901760
    %6667 = vmatpush1.msra.mxu0 %v6666
    %6668 = vmatprep.subr.mxu0 0.0
    %v6669 = vand.u32 %v5532, 4294901760
    %v6670 = vsub.f32 %v5532, %v6669
    %v6671 = vand.u32 %v6670, 4294901760
    %6672 = vmatpush1.msra.mxu0 %v6671
    %6673 = vmatprep.subr.mxu0 0.0
    %v6674 = vand.u32 %v5533, 4294901760
    %v6675 = vsub.f32 %v5533, %v6674
    %v6676 = vand.u32 %v6675, 4294901760
    %6677 = vmatpush1.msra.mxu0 %v6676
    %6678 = vmatprep.subr.mxu0 0.0
    %v6679 = vand.u32 %v5534, 4294901760
    %v6680 = vsub.f32 %v5534, %v6679
    %v6681 = vand.u32 %v6680, 4294901760
    %6682 = vmatpush1.msra.mxu0 %v6681
    %6683 = vmatprep.subr.mxu0 0.0
    %v6684 = vand.u32 %v5535, 4294901760
    %v6685 = vsub.f32 %v5535, %v6684
    %v6686 = vand.u32 %v6685, 4294901760
    %6687 = vmatpush1.msra.mxu0 %v6686
    %6688 = vmatprep.subr.mxu0 0.0
    %v6689 = vand.u32 %v5536, 4294901760
    %v6690 = vsub.f32 %v5536, %v6689
    %v6691 = vand.u32 %v6690, 4294901760
    %6692 = vmatpush1.msra.mxu0 %v6691
    %6693 = vmatprep.subr.mxu0 0.0
    %6694 = vmatpush1.msra.mxu0 0.0
    %6695 = vmatprep.subr.mxu0 0.0
    %6696 = vmatpush1.msra.mxu0 0.0
    %6697 = vmatprep.subr.mxu0 0.0
    %6698 = vmatpush1.msra.mxu0 0.0
    %6699 = vmatprep.subr.mxu0 0.0
    %6700 = vmatpush1.msra.mxu0 0.0
    %6701 = vmatprep.subr.mxu0 0.0
    %6702 = vmatpush1.msra.mxu0 0.0
    %6703 = vmatprep.subr.mxu0 0.0
    %6704 = vmatpush1.msra.mxu0 0.0
    %6705 = vmatprep.subr.mxu0 0.0
    %6706 = vmatpush1.msra.mxu0 0.0
    %6707 = vmatprep.subr.mxu0 0.0
    %6708 = vmatpush1.msra.mxu0 0.0
    %6709 = vmatprep.subr.mxu0 0.0
    %6710 = vmatpush1.msra.mxu0 0.0
    %6711 = vmatprep.subr.mxu0 0.0
    %6712 = vmatpush1.msra.mxu0 0.0
    %6713 = vmatprep.subr.mxu0 0.0
    %6714 = vmatpush1.msra.mxu0 0.0
    %6715 = vmatprep.subr.mxu0 0.0
    %6716 = vmatpush1.msra.mxu0 0.0
    %6717 = vmatprep.subr.mxu0 0.0
    %6718 = vmatpush1.msra.mxu0 0.0
    %6719 = vmatprep.subr.mxu0 0.0
    %6720 = vmatpush1.msra.mxu0 0.0
    %6721 = vmatprep.subr.mxu0 0.0
    %6722 = vmatpush1.msra.mxu0 0.0
    %6723 = vmatprep.subr.mxu0 0.0
    %6724 = vmatpush1.msra.mxu0 0.0
    %6725 = vmatprep.mubr.f32.mxu0 0.0
    %v6726 = vand.u32 %v5520, 4294901760
    %6727 = vmatmul.mubr.f32.gmra.mrb[0].mxu0 %v6726
    %v6728 = vpop.f32.mrb[0].mxu0
    %v6729 = vadd.f32 %v6610, %v6728
    %v6730 = vpop.f32.mrb[0].mxu0
    %6731 = vdwg.mxu0
    %6732 = vmatprep.subr.mxu0 0.0
    %v6733 = vand.u32 %v5521, 4294901760
    %6734 = vmatpush1.msra.mxu0 %v6733
    %6735 = vmatprep.subr.mxu0 0.0
    %v6736 = vand.u32 %v5522, 4294901760
    %6737 = vmatpush1.msra.mxu0 %v6736
    %6738 = vmatprep.subr.mxu0 0.0
    %v6739 = vand.u32 %v5523, 4294901760
    %6740 = vmatpush1.msra.mxu0 %v6739
    %6741 = vmatprep.subr.mxu0 0.0
    %v6742 = vand.u32 %v5524, 4294901760
    %6743 = vmatpush1.msra.mxu0 %v6742
    %6744 = vmatprep.subr.mxu0 0.0
    %v6745 = vand.u32 %v5525, 4294901760
    %6746 = vmatpush1.msra.mxu0 %v6745
    %6747 = vmatprep.subr.mxu0 0.0
    %v6748 = vand.u32 %v5526, 4294901760
    %6749 = vmatpush1.msra.mxu0 %v6748
    %6750 = vmatprep.subr.mxu0 0.0
    %v6751 = vand.u32 %v5527, 4294901760
    %6752 = vmatpush1.msra.mxu0 %v6751
    %6753 = vmatprep.subr.mxu0 0.0
    %v6754 = vand.u32 %v5528, 4294901760
    %6755 = vmatpush1.msra.mxu0 %v6754
    %6756 = vmatprep.subr.mxu0 0.0
    %v6757 = vand.u32 %v5529, 4294901760
    %6758 = vmatpush1.msra.mxu0 %v6757
    %6759 = vmatprep.subr.mxu0 0.0
    %v6760 = vand.u32 %v5530, 4294901760
    %6761 = vmatpush1.msra.mxu0 %v6760
    %6762 = vmatprep.subr.mxu0 0.0
    %v6763 = vand.u32 %v5531, 4294901760
    %6764 = vmatpush1.msra.mxu0 %v6763
    %6765 = vmatprep.subr.mxu0 0.0
    %v6766 = vand.u32 %v5532, 4294901760
    %6767 = vmatpush1.msra.mxu0 %v6766
    %6768 = vmatprep.subr.mxu0 0.0
    %v6769 = vand.u32 %v5533, 4294901760
    %6770 = vmatpush1.msra.mxu0 %v6769
    %6771 = vmatprep.subr.mxu0 0.0
    %v6772 = vand.u32 %v5534, 4294901760
    %6773 = vmatpush1.msra.mxu0 %v6772
    %6774 = vmatprep.subr.mxu0 0.0
    %v6775 = vand.u32 %v5535, 4294901760
    %6776 = vmatpush1.msra.mxu0 %v6775
    %6777 = vmatprep.subr.mxu0 0.0
    %v6778 = vand.u32 %v5536, 4294901760
    %6779 = vmatpush1.msra.mxu0 %v6778
    %6780 = vmatprep.subr.mxu0 0.0
    %6781 = vmatpush1.msra.mxu0 0.0
    %6782 = vmatprep.subr.mxu0 0.0
    %6783 = vmatpush1.msra.mxu0 0.0
    %6784 = vmatprep.subr.mxu0 0.0
    %6785 = vmatpush1.msra.mxu0 0.0
    %6786 = vmatprep.subr.mxu0 0.0
    %6787 = vmatpush1.msra.mxu0 0.0
    %6788 = vmatprep.subr.mxu0 0.0
    %6789 = vmatpush1.msra.mxu0 0.0
    %6790 = vmatprep.subr.mxu0 0.0
    %6791 = vmatpush1.msra.mxu0 0.0
    %6792 = vmatprep.subr.mxu0 0.0
    %6793 = vmatpush1.msra.mxu0 0.0
    %6794 = vmatprep.subr.mxu0 0.0
    %6795 = vmatpush1.msra.mxu0 0.0
    %6796 = vmatprep.subr.mxu0 0.0
    %6797 = vmatpush1.msra.mxu0 0.0
    %6798 = vmatprep.subr.mxu0 0.0
    %6799 = vmatpush1.msra.mxu0 0.0
    %6800 = vmatprep.subr.mxu0 0.0
    %6801 = vmatpush1.msra.mxu0 0.0
    %6802 = vmatprep.subr.mxu0 0.0
    %6803 = vmatpush1.msra.mxu0 0.0
    %6804 = vmatprep.subr.mxu0 0.0
    %6805 = vmatpush1.msra.mxu0 0.0
    %6806 = vmatprep.subr.mxu0 0.0
    %6807 = vmatpush1.msra.mxu0 0.0
    %6808 = vmatprep.subr.mxu0 0.0
    %6809 = vmatpush1.msra.mxu0 0.0
    %6810 = vmatprep.subr.mxu0 0.0
    %6811 = vmatpush1.msra.mxu0 0.0
    %6812 = vmatprep.mubr.f32.mxu0 0.0
    %v6813 = vand.u32 %v5520, 4294901760
    %6814 = vmatmul.mubr.f32.gmra.mrb[0].mxu0 %v6813
    %v6815 = vpop.f32.mrb[0].mxu0
    %v6816 = vadd.f32 %v6729, %v6815
    %v6817 = vpop.f32.mrb[0].mxu0
    %6818 = vdwg.mxu0
    %v6819 = vmul.f32 %v6175, %v1318
    %v6820 = vmul.f32 %v6816, %v1318
    %v6821 = vmul.f32 %v6819, %v6819
    %v6822 = vsub.f32 %v6820, %v6821
    %v6823 = vld [vmem:[#allocation14] sm:$0x1]
    %v6824 = vadd.f32 %v6822, 1e-05
    %v6825 = vrsqrt.pop %v6824
    %v6826 = vmul.f32 %v6823, %v6825
    %v6827 = vld [vmem:[#allocation15] sm:$0x1]
    %v6828 = vmul.f32 %v6819, %v6826
    %v6829 = vsub.f32 %v6827, %v6828
    %v6830 = vld [vmem:[%s16] sm:$0xff]
    %v6832 = vsel %vm4045, %v6826, 0
    %6834 = vmatprep.subr.mxu0 0.0
    %v6835 = vand.u32 %v6830, 4294901760
    %6836 = vmatpush1.msra.mxu0 %v6835
    %6837 = vmatprep.subr.mxu0 0.0
    %6838 = vmatpush1.msra.mxu0 0.0
    %6839 = vmatprep.subr.mxu0 0.0
    %6840 = vmatpush1.msra.mxu0 0.0
    %6841 = vmatprep.subr.mxu0 0.0
    %6842 = vmatpush1.msra.mxu0 0.0
    %6843 = vmatprep.subr.mxu0 0.0
    %6844 = vmatpush1.msra.mxu0 0.0
    %6845 = vmatprep.subr.mxu0 0.0
    %6846 = vmatpush1.msra.mxu0 0.0
    %6847 = vmatprep.subr.mxu0 0.0
    %6848 = vmatpush1.msra.mxu0 0.0
    %6849 = vmatprep.subr.mxu0 0.0
    %6850 = vmatpush1.msra.mxu0 0.0
    %6851 = vmatprep.subr.mxu0 0.0
    %6852 = vmatpush1.msra.mxu0 0.0
    %6853 = vmatprep.subr.mxu0 0.0
    %6854 = vmatpush1.msra.mxu0 0.0
    %6855 = vmatprep.subr.mxu0 0.0
    %6856 = vmatpush1.msra.mxu0 0.0
    %6857 = vmatprep.subr.mxu0 0.0
    %6858 = vmatpush1.msra.mxu0 0.0
    %6859 = vmatprep.subr.mxu0 0.0
    %6860 = vmatpush1.msra.mxu0 0.0
    %6861 = vmatprep.subr.mxu0 0.0
    %6862 = vmatpush1.msra.mxu0 0.0
    %6863 = vmatprep.subr.mxu0 0.0
    %6864 = vmatpush1.msra.mxu0 0.0
    %6865 = vmatprep.subr.mxu0 0.0
    %6866 = vmatpush1.msra.mxu0 0.0
    %6867 = vmatprep.subr.mxu0 0.0
    %6868 = vmatpush1.msra.mxu0 0.0
    %6869 = vmatprep.subr.mxu0 0.0
    %6870 = vmatpush1.msra.mxu0 0.0
    %6871 = vmatprep.subr.mxu0 0.0
    %6872 = vmatpush1.msra.mxu0 0.0
    %6873 = vmatprep.subr.mxu0 0.0
    %6874 = vmatpush1.msra.mxu0 0.0
    %6875 = vmatprep.subr.mxu0 0.0
    %6876 = vmatpush1.msra.mxu0 0.0
    %6877 = vmatprep.subr.mxu0 0.0
    %6878 = vmatpush1.msra.mxu0 0.0
    %6879 = vmatprep.subr.mxu0 0.0
    %6880 = vmatpush1.msra.mxu0 0.0
    %6881 = vmatprep.subr.mxu0 0.0
    %6882 = vmatpush1.msra.mxu0 0.0
    %6883 = vmatprep.subr.mxu0 0.0
    %6884 = vmatpush1.msra.mxu0 0.0
    %6885 = vmatprep.subr.mxu0 0.0
    %6886 = vmatpush1.msra.mxu0 0.0
    %6887 = vmatprep.subr.mxu0 0.0
    %6888 = vmatpush1.msra.mxu0 0.0
    %6889 = vmatprep.subr.mxu0 0.0
    %6890 = vmatpush1.msra.mxu0 0.0
    %6891 = vmatprep.subr.mxu0 0.0
    %6892 = vmatpush1.msra.mxu0 0.0
    %6893 = vmatprep.subr.mxu0 0.0
    %6894 = vmatpush1.msra.mxu0 0.0
    %6895 = vmatprep.subr.mxu0 0.0
    %6896 = vmatpush1.msra.mxu0 0.0
    %6897 = vmatprep.subr.mxu0 0.0
    %6898 = vmatpush1.msra.mxu0 0.0
    %6899 = vmatprep.mubr.f32.mxu0 0.0
    %v6900 = vand.u32 %v6832, 4294901760
    %v6901 = vsub.f32 %v6832, %v6900
    %v6902 = vand.u32 %v6901, 4294901760
    %v6903 = vsub.f32 %v6901, %v6902
    %v6904 = vand.u32 %v6903, 4294901760
    %6905 = vmatmul.mubr.f32.gmra.mrb[0].mxu0 %v6904
    %v6906 = vpop.f32.mrb[0].mxu0
    %v6907 = vadd.f32 0.0, %v6906
    %v6908 = vpop.f32.mrb[0].mxu0
    %6909 = vdwg.mxu0
    %6910 = vmatprep.subr.mxu0 0.0
    %v6911 = vand.u32 %v6830, 4294901760
    %v6912 = vsub.f32 %v6830, %v6911
    %v6913 = vand.u32 %v6912, 4294901760
    %v6914 = vsub.f32 %v6912, %v6913
    %v6915 = vand.u32 %v6914, 4294901760
    %6916 = vmatpush1.msra.mxu0 %v6915
    %6917 = vmatprep.subr.mxu0 0.0
    %6918 = vmatpush1.msra.mxu0 0.0
    %6919 = vmatprep.subr.mxu0 0.0
    %6920 = vmatpush1.msra.mxu0 0.0
    %6921 = vmatprep.subr.mxu0 0.0
    %6922 = vmatpush1.msra.mxu0 0.0
    %6923 = vmatprep.subr.mxu0 0.0
    %6924 = vmatpush1.msra.mxu0 0.0
    %6925 = vmatprep.subr.mxu0 0.0
    %6926 = vmatpush1.msra.mxu0 0.0
    %6927 = vmatprep.subr.mxu0 0.0
    %6928 = vmatpush1.msra.mxu0 0.0
    %6929 = vmatprep.subr.mxu0 0.0
    %6930 = vmatpush1.msra.mxu0 0.0
    %6931 = vmatprep.subr.mxu0 0.0
    %6932 = vmatpush1.msra.mxu0 0.0
    %6933 = vmatprep.subr.mxu0 0.0
    %6934 = vmatpush1.msra.mxu0 0.0
    %6935 = vmatprep.subr.mxu0 0.0
    %6936 = vmatpush1.msra.mxu0 0.0
    %6937 = vmatprep.subr.mxu0 0.0
    %6938 = vmatpush1.msra.mxu0 0.0
    %6939 = vmatprep.subr.mxu0 0.0
    %6940 = vmatpush1.msra.mxu0 0.0
    %6941 = vmatprep.subr.mxu0 0.0
    %6942 = vmatpush1.msra.mxu0 0.0
    %6943 = vmatprep.subr.mxu0 0.0
    %6944 = vmatpush1.msra.mxu0 0.0
    %6945 = vmatprep.subr.mxu0 0.0
    %6946 = vmatpush1.msra.mxu0 0.0
    %6947 = vmatprep.subr.mxu0 0.0
    %6948 = vmatpush1.msra.mxu0 0.0
    %6949 = vmatprep.subr.mxu0 0.0
    %6950 = vmatpush1.msra.mxu0 0.0
    %6951 = vmatprep.subr.mxu0 0.0
    %6952 = vmatpush1.msra.mxu0 0.0
    %6953 = vmatprep.subr.mxu0 0.0
    %6954 = vmatpush1.msra.mxu0 0.0
    %6955 = vmatprep.subr.mxu0 0.0
    %6956 = vmatpush1.msra.mxu0 0.0
    %6957 = vmatprep.subr.mxu0 0.0
    %6958 = vmatpush1.msra.mxu0 0.0
    %6959 = vmatprep.subr.mxu0 0.0
    %6960 = vmatpush1.msra.mxu0 0.0
    %6961 = vmatprep.subr.mxu0 0.0
    %6962 = vmatpush1.msra.mxu0 0.0
    %6963 = vmatprep.subr.mxu0 0.0
    %6964 = vmatpush1.msra.mxu0 0.0
    %6965 = vmatprep.subr.mxu0 0.0
    %6966 = vmatpush1.msra.mxu0 0.0
    %6967 = vmatprep.subr.mxu0 0.0
    %6968 = vmatpush1.msra.mxu0 0.0
    %6969 = vmatprep.subr.mxu0 0.0
    %6970 = vmatpush1.msra.mxu0 0.0
    %6971 = vmatprep.subr.mxu0 0.0
    %6972 = vmatpush1.msra.mxu0 0.0
    %6973 = vmatprep.subr.mxu0 0.0
    %6974 = vmatpush1.msra.mxu0 0.0
    %6975 = vmatprep.subr.mxu0 0.0
    %6976 = vmatpush1.msra.mxu0 0.0
    %6977 = vmatprep.subr.mxu0 0.0
    %6978 = vmatpush1.msra.mxu0 0.0
    %6979 = vmatprep.mubr.f32.mxu0 0.0
    %v6980 = vand.u32 %v6832, 4294901760
    %6981 = vmatmul.mubr.f32.gmra.mrb[0].mxu0 %v6980
    %v6982 = vpop.f32.mrb[0].mxu0
    %v6983 = vadd.f32 %v6907, %v6982
    %v6984 = vpop.f32.mrb[0].mxu0
    %6985 = vdwg.mxu0
    %6986 = vmatprep.subr.mxu0 0.0
    %v6987 = vand.u32 %v6830, 4294901760
    %v6988 = vsub.f32 %v6830, %v6987
    %6989 = vmatpush1.msra.mxu0 %v6988
    %6990 = vmatprep.subr.mxu0 0.0
    %6991 = vmatpush1.msra.mxu0 0.0
    %6992 = vmatprep.subr.mxu0 0.0
    %6993 = vmatpush1.msra.mxu0 0.0
    %6994 = vmatprep.subr.mxu0 0.0
    %6995 = vmatpush1.msra.mxu0 0.0
    %6996 = vmatprep.subr.mxu0 0.0
    %6997 = vmatpush1.msra.mxu0 0.0
    %6998 = vmatprep.subr.mxu0 0.0
    %6999 = vmatpush1.msra.mxu0 0.0
    %7000 = vmatprep.subr.mxu0 0.0
    %7001 = vmatpush1.msra.mxu0 0.0
    %7002 = vmatprep.subr.mxu0 0.0
    %7003 = vmatpush1.msra.mxu0 0.0
    %7004 = vmatprep.subr.mxu0 0.0
    %7005 = vmatpush1.msra.mxu0 0.0
    %7006 = vmatprep.subr.mxu0 0.0
    %7007 = vmatpush1.msra.mxu0 0.0
    %7008 = vmatprep.subr.mxu0 0.0
    %7009 = vmatpush1.msra.mxu0 0.0
    %7010 = vmatprep.subr.mxu0 0.0
    %7011 = vmatpush1.msra.mxu0 0.0
    %7012 = vmatprep.subr.mxu0 0.0
    %7013 = vmatpush1.msra.mxu0 0.0
    %7014 = vmatprep.subr.mxu0 0.0
    %7015 = vmatpush1.msra.mxu0 0.0
    %7016 = vmatprep.subr.mxu0 0.0
    %7017 = vmatpush1.msra.mxu0 0.0
    %7018 = vmatprep.subr.mxu0 0.0
    %7019 = vmatpush1.msra.mxu0 0.0
    %7020 = vmatprep.subr.mxu0 0.0
    %7021 = vmatpush1.msra.mxu0 0.0
    %7022 = vmatprep.subr.mxu0 0.0
    %7023 = vmatpush1.msra.mxu0 0.0
    %7024 = vmatprep.subr.mxu0 0.0
    %7025 = vmatpush1.msra.mxu0 0.0
    %7026 = vmatprep.subr.mxu0 0.0
    %7027 = vmatpush1.msra.mxu0 0.0
    %7028 = vmatprep.subr.mxu0 0.0
    %7029 = vmatpush1.msra.mxu0 0.0
    %7030 = vmatprep.subr.mxu0 0.0
    %7031 = vmatpush1.msra.mxu0 0.0
    %7032 = vmatprep.subr.mxu0 0.0
    %7033 = vmatpush1.msra.mxu0 0.0
    %7034 = vmatprep.subr.mxu0 0.0
    %7035 = vmatpush1.msra.mxu0 0.0
    %7036 = vmatprep.subr.mxu0 0.0
    %7037 = vmatpush1.msra.mxu0 0.0
    %7038 = vmatprep.subr.mxu0 0.0
    %7039 = vmatpush1.msra.mxu0 0.0
    %7040 = vmatprep.subr.mxu0 0.0
    %7041 = vmatpush1.msra.mxu0 0.0
    %7042 = vmatprep.subr.mxu0 0.0
    %7043 = vmatpush1.msra.mxu0 0.0
    %7044 = vmatprep.subr.mxu0 0.0
    %7045 = vmatpush1.msra.mxu0 0.0
    %7046 = vmatprep.subr.mxu0 0.0
    %7047 = vmatpush1.msra.mxu0 0.0
    %7048 = vmatprep.subr.mxu0 0.0
    %7049 = vmatpush1.msra.mxu0 0.0
    %7050 = vmatprep.subr.mxu0 0.0
    %7051 = vmatpush1.msra.mxu0 0.0
    %7052 = vmatprep.mubr.f32.mxu0 0.0
    %v7053 = vand.u32 %v6832, 4294901760
    %v7054 = vsub.f32 %v6832, %v7053
    %7055 = vmatmul.mubr.f32.gmra.mrb[0].mxu0 %v7054
    %v7056 = vpop.f32.mrb[0].mxu0
    %v7057 = vadd.f32 %v6983, %v7056
    %v7058 = vpop.f32.mrb[0].mxu0
    %7059 = vdwg.mxu0
    %7060 = vmatprep.subr.mxu0 0.0
    %v7061 = vand.u32 %v6830, 4294901760
    %7062 = vmatpush1.msra.mxu0 %v7061
    %7063 = vmatprep.subr.mxu0 0.0
    %7064 = vmatpush1.msra.mxu0 0.0
    %7065 = vmatprep.subr.mxu0 0.0
    %7066 = vmatpush1.msra.mxu0 0.0
    %7067 = vmatprep.subr.mxu0 0.0
    %7068 = vmatpush1.msra.mxu0 0.0
    %7069 = vmatprep.subr.mxu0 0.0
    %7070 = vmatpush1.msra.mxu0 0.0
    %7071 = vmatprep.subr.mxu0 0.0
    %7072 = vmatpush1.msra.mxu0 0.0
    %7073 = vmatprep.subr.mxu0 0.0
    %7074 = vmatpush1.msra.mxu0 0.0
    %7075 = vmatprep.subr.mxu0 0.0
    %7076 = vmatpush1.msra.mxu0 0.0
    %7077 = vmatprep.subr.mxu0 0.0
    %7078 = vmatpush1.msra.mxu0 0.0
    %7079 = vmatprep.subr.mxu0 0.0
    %7080 = vmatpush1.msra.mxu0 0.0
    %7081 = vmatprep.subr.mxu0 0.0
    %7082 = vmatpush1.msra.mxu0 0.0
    %7083 = vmatprep.subr.mxu0 0.0
    %7084 = vmatpush1.msra.mxu0 0.0
    %7085 = vmatprep.subr.mxu0 0.0
    %7086 = vmatpush1.msra.mxu0 0.0
    %7087 = vmatprep.subr.mxu0 0.0
    %7088 = vmatpush1.msra.mxu0 0.0
    %7089 = vmatprep.subr.mxu0 0.0
    %7090 = vmatpush1.msra.mxu0 0.0
    %7091 = vmatprep.subr.mxu0 0.0
    %7092 = vmatpush1.msra.mxu0 0.0
    %7093 = vmatprep.subr.mxu0 0.0
    %7094 = vmatpush1.msra.mxu0 0.0
    %7095 = vmatprep.subr.mxu0 0.0
    %7096 = vmatpush1.msra.mxu0 0.0
    %7097 = vmatprep.subr.mxu0 0.0
    %7098 = vmatpush1.msra.mxu0 0.0
    %7099 = vmatprep.subr.mxu0 0.0
    %7100 = vmatpush1.msra.mxu0 0.0
    %7101 = vmatprep.subr.mxu0 0.0
    %7102 = vmatpush1.msra.mxu0 0.0
    %7103 = vmatprep.subr.mxu0 0.0
    %7104 = vmatpush1.msra.mxu0 0.0
    %7105 = vmatprep.subr.mxu0 0.0
    %7106 = vmatpush1.msra.mxu0 0.0
    %7107 = vmatprep.subr.mxu0 0.0
    %7108 = vmatpush1.msra.mxu0 0.0
    %7109 = vmatprep.subr.mxu0 0.0
    %7110 = vmatpush1.msra.mxu0 0.0
    %7111 = vmatprep.subr.mxu0 0.0
    %7112 = vmatpush1.msra.mxu0 0.0
    %7113 = vmatprep.subr.mxu0 0.0
    %7114 = vmatpush1.msra.mxu0 0.0
    %7115 = vmatprep.subr.mxu0 0.0
    %7116 = vmatpush1.msra.mxu0 0.0
    %7117 = vmatprep.subr.mxu0 0.0
    %7118 = vmatpush1.msra.mxu0 0.0
    %7119 = vmatprep.subr.mxu0 0.0
    %7120 = vmatpush1.msra.mxu0 0.0
    %7121 = vmatprep.subr.mxu0 0.0
    %7122 = vmatpush1.msra.mxu0 0.0
    %7123 = vmatprep.subr.mxu0 0.0
    %7124 = vmatpush1.msra.mxu0 0.0
    %7125 = vmatprep.mubr.f32.mxu0 0.0
    %v7126 = vand.u32 %v6832, 4294901760
    %v7127 = vsub.f32 %v6832, %v7126
    %v7128 = vand.u32 %v7127, 4294901760
    %7129 = vmatmul.mubr.f32.gmra.mrb[0].mxu0 %v7128
    %v7130 = vpop.f32.mrb[0].mxu0
    %v7131 = vadd.f32 %v7057, %v7130
    %v7132 = vpop.f32.mrb[0].mxu0
    %7133 = vdwg.mxu0
    %7134 = vmatprep.subr.mxu0 0.0
    %v7135 = vand.u32 %v6830, 4294901760
    %v7136 = vsub.f32 %v6830, %v7135
    %v7137 = vand.u32 %v7136, 4294901760
    %7138 = vmatpush1.msra.mxu0 %v7137
    %7139 = vmatprep.subr.mxu0 0.0
    %7140 = vmatpush1.msra.mxu0 0.0
    %7141 = vmatprep.subr.mxu0 0.0
    %7142 = vmatpush1.msra.mxu0 0.0
    %7143 = vmatprep.subr.mxu0 0.0
    %7144 = vmatpush1.msra.mxu0 0.0
    %7145 = vmatprep.subr.mxu0 0.0
    %7146 = vmatpush1.msra.mxu0 0.0
    %7147 = vmatprep.subr.mxu0 0.0
    %7148 = vmatpush1.msra.mxu0 0.0
    %7149 = vmatprep.subr.mxu0 0.0
    %7150 = vmatpush1.msra.mxu0 0.0
    %7151 = vmatprep.subr.mxu0 0.0
    %7152 = vmatpush1.msra.mxu0 0.0
    %7153 = vmatprep.subr.mxu0 0.0
    %7154 = vmatpush1.msra.mxu0 0.0
    %7155 = vmatprep.subr.mxu0 0.0
    %7156 = vmatpush1.msra.mxu0 0.0
    %7157 = vmatprep.subr.mxu0 0.0
    %7158 = vmatpush1.msra.mxu0 0.0
    %7159 = vmatprep.subr.mxu0 0.0
    %7160 = vmatpush1.msra.mxu0 0.0
    %7161 = vmatprep.subr.mxu0 0.0
    %7162 = vmatpush1.msra.mxu0 0.0
    %7163 = vmatprep.subr.mxu0 0.0
    %7164 = vmatpush1.msra.mxu0 0.0
    %7165 = vmatprep.subr.mxu0 0.0
    %7166 = vmatpush1.msra.mxu0 0.0
    %7167 = vmatprep.subr.mxu0 0.0
    %7168 = vmatpush1.msra.mxu0 0.0
    %7169 = vmatprep.subr.mxu0 0.0
    %7170 = vmatpush1.msra.mxu0 0.0
    %7171 = vmatprep.subr.mxu0 0.0
    %7172 = vmatpush1.msra.mxu0 0.0
    %7173 = vmatprep.subr.mxu0 0.0
    %7174 = vmatpush1.msra.mxu0 0.0
    %7175 = vmatprep.subr.mxu0 0.0
    %7176 = vmatpush1.msra.mxu0 0.0
    %7177 = vmatprep.subr.mxu0 0.0
    %7178 = vmatpush1.msra.mxu0 0.0
    %7179 = vmatprep.subr.mxu0 0.0
    %7180 = vmatpush1.msra.mxu0 0.0
    %7181 = vmatprep.subr.mxu0 0.0
    %7182 = vmatpush1.msra.mxu0 0.0
    %7183 = vmatprep.subr.mxu0 0.0
    %7184 = vmatpush1.msra.mxu0 0.0
    %7185 = vmatprep.subr.mxu0 0.0
    %7186 = vmatpush1.msra.mxu0 0.0
    %7187 = vmatprep.subr.mxu0 0.0
    %7188 = vmatpush1.msra.mxu0 0.0
    %7189 = vmatprep.subr.mxu0 0.0
    %7190 = vmatpush1.msra.mxu0 0.0
    %7191 = vmatprep.subr.mxu0 0.0
    %7192 = vmatpush1.msra.mxu0 0.0
    %7193 = vmatprep.subr.mxu0 0.0
    %7194 = vmatpush1.msra.mxu0 0.0
    %7195 = vmatprep.subr.mxu0 0.0
    %7196 = vmatpush1.msra.mxu0 0.0
    %7197 = vmatprep.subr.mxu0 0.0
    %7198 = vmatpush1.msra.mxu0 0.0
    %7199 = vmatprep.subr.mxu0 0.0
    %7200 = vmatpush1.msra.mxu0 0.0
    %7201 = vmatprep.mubr.f32.mxu0 0.0
    %v7202 = vand.u32 %v6832, 4294901760
    %7203 = vmatmul.mubr.f32.gmra.mrb[0].mxu0 %v7202
    %v7204 = vpop.f32.mrb[0].mxu0
    %v7205 = vadd.f32 %v7131, %v7204
    %v7206 = vpop.f32.mrb[0].mxu0
    %7207 = vdwg.mxu0
    %7208 = vmatprep.subr.mxu0 0.0
    %v7209 = vand.u32 %v6830, 4294901760
    %7210 = vmatpush1.msra.mxu0 %v7209
    %7211 = vmatprep.subr.mxu0 0.0
    %7212 = vmatpush1.msra.mxu0 0.0
    %7213 = vmatprep.subr.mxu0 0.0
    %7214 = vmatpush1.msra.mxu0 0.0
    %7215 = vmatprep.subr.mxu0 0.0
    %7216 = vmatpush1.msra.mxu0 0.0
    %7217 = vmatprep.subr.mxu0 0.0
    %7218 = vmatpush1.msra.mxu0 0.0
    %7219 = vmatprep.subr.mxu0 0.0
    %7220 = vmatpush1.msra.mxu0 0.0
    %7221 = vmatprep.subr.mxu0 0.0
    %7222 = vmatpush1.msra.mxu0 0.0
    %7223 = vmatprep.subr.mxu0 0.0
    %7224 = vmatpush1.msra.mxu0 0.0
    %7225 = vmatprep.subr.mxu0 0.0
    %7226 = vmatpush1.msra.mxu0 0.0
    %7227 = vmatprep.subr.mxu0 0.0
    %7228 = vmatpush1.msra.mxu0 0.0
    %7229 = vmatprep.subr.mxu0 0.0
    %7230 = vmatpush1.msra.mxu0 0.0
    %7231 = vmatprep.subr.mxu0 0.0
    %7232 = vmatpush1.msra.mxu0 0.0
    %7233 = vmatprep.subr.mxu0 0.0
    %7234 = vmatpush1.msra.mxu0 0.0
    %7235 = vmatprep.subr.mxu0 0.0
    %7236 = vmatpush1.msra.mxu0 0.0
    %7237 = vmatprep.subr.mxu0 0.0
    %7238 = vmatpush1.msra.mxu0 0.0
    %7239 = vmatprep.subr.mxu0 0.0
    %7240 = vmatpush1.msra.mxu0 0.0
    %7241 = vmatprep.subr.mxu0 0.0
    %7242 = vmatpush1.msra.mxu0 0.0
    %7243 = vmatprep.subr.mxu0 0.0
    %7244 = vmatpush1.msra.mxu0 0.0
    %7245 = vmatprep.subr.mxu0 0.0
    %7246 = vmatpush1.msra.mxu0 0.0
    %7247 = vmatprep.subr.mxu0 0.0
    %7248 = vmatpush1.msra.mxu0 0.0
    %7249 = vmatprep.subr.mxu0 0.0
    %7250 = vmatpush1.msra.mxu0 0.0
    %7251 = vmatprep.subr.mxu0 0.0
    %7252 = vmatpush1.msra.mxu0 0.0
    %7253 = vmatprep.subr.mxu0 0.0
    %7254 = vmatpush1.msra.mxu0 0.0
    %7255 = vmatprep.subr.mxu0 0.0
    %7256 = vmatpush1.msra.mxu0 0.0
    %7257 = vmatprep.subr.mxu0 0.0
    %7258 = vmatpush1.msra.mxu0 0.0
    %7259 = vmatprep.subr.mxu0 0.0
    %7260 = vmatpush1.msra.mxu0 0.0
    %7261 = vmatprep.subr.mxu0 0.0
    %7262 = vmatpush1.msra.mxu0 0.0
    %7263 = vmatprep.subr.mxu0 0.0
    %7264 = vmatpush1.msra.mxu0 0.0
    %7265 = vmatprep.subr.mxu0 0.0
    %7266 = vmatpush1.msra.mxu0 0.0
    %7267 = vmatprep.subr.mxu0 0.0
    %7268 = vmatpush1.msra.mxu0 0.0
    %7269 = vmatprep.subr.mxu0 0.0
    %7270 = vmatpush1.msra.mxu0 0.0
    %7271 = vmatprep.subr.mxu0 0.0
    %7272 = vmatpush1.msra.mxu0 0.0
    %7273 = vmatprep.mubr.f32.mxu0 0.0
    %v7274 = vand.u32 %v6832, 4294901760
    %7275 = vmatmul.mubr.f32.gmra.mrb[0].mxu0 %v7274
    %v7276 = vpop.f32.mrb[0].mxu0
    %v7277 = vadd.f32 %v7205, %v7276
    %v7278 = vpop.f32.mrb[0].mxu0
    %7279 = vdwg.mxu0
    %v7281 = vsel %vm4045, %v6829, 0
    %7283 = vmatprep.subr.mxu0 0.0
    %v7284 = vand.u32 %v6830, 4294901760
    %7285 = vmatpush1.msra.mxu0 %v7284
    %7286 = vmatprep.subr.mxu0 0.0
    %7287 = vmatpush1.msra.mxu0 0.0
    %7288 = vmatprep.subr.mxu0 0.0
    %7289 = vmatpush1.msra.mxu0 0.0
    %7290 = vmatprep.subr.mxu0 0.0
    %7291 = vmatpush1.msra.mxu0 0.0
    %7292 = vmatprep.subr.mxu0 0.0
    %7293 = vmatpush1.msra.mxu0 0.0
    %7294 = vmatprep.subr.mxu0 0.0
    %7295 = vmatpush1.msra.mxu0 0.0
    %7296 = vmatprep.subr.mxu0 0.0
    %7297 = vmatpush1.msra.mxu0 0.0
    %7298 = vmatprep.subr.mxu0 0.0
    %7299 = vmatpush1.msra.mxu0 0.0
    %7300 = vmatprep.subr.mxu0 0.0
    %7301 = vmatpush1.msra.mxu0 0.0
    %7302 = vmatprep.subr.mxu0 0.0
    %7303 = vmatpush1.msra.mxu0 0.0
    %7304 = vmatprep.subr.mxu0 0.0
    %7305 = vmatpush1.msra.mxu0 0.0
    %7306 = vmatprep.subr.mxu0 0.0
    %7307 = vmatpush1.msra.mxu0 0.0
    %7308 = vmatprep.subr.mxu0 0.0
    %7309 = vmatpush1.msra.mxu0 0.0
    %7310 = vmatprep.subr.mxu0 0.0
    %7311 = vmatpush1.msra.mxu0 0.0
    %7312 = vmatprep.subr.mxu0 0.0
    %7313 = vmatpush1.msra.mxu0 0.0
    %7314 = vmatprep.subr.mxu0 0.0
    %7315 = vmatpush1.msra.mxu0 0.0
    %7316 = vmatprep.subr.mxu0 0.0
    %7317 = vmatpush1.msra.mxu0 0.0
    %7318 = vmatprep.subr.mxu0 0.0
    %7319 = vmatpush1.msra.mxu0 0.0
    %7320 = vmatprep.subr.mxu0 0.0
    %7321 = vmatpush1.msra.mxu0 0.0
    %7322 = vmatprep.subr.mxu0 0.0
    %7323 = vmatpush1.msra.mxu0 0.0
    %7324 = vmatprep.subr.mxu0 0.0
    %7325 = vmatpush1.msra.mxu0 0.0
    %7326 = vmatprep.subr.mxu0 0.0
    %7327 = vmatpush1.msra.mxu0 0.0
    %7328 = vmatprep.subr.mxu0 0.0
    %7329 = vmatpush1.msra.mxu0 0.0
    %7330 = vmatprep.subr.mxu0 0.0
    %7331 = vmatpush1.msra.mxu0 0.0
    %7332 = vmatprep.subr.mxu0 0.0
    %7333 = vmatpush1.msra.mxu0 0.0
    %7334 = vmatprep.subr.mxu0 0.0
    %7335 = vmatpush1.msra.mxu0 0.0
    %7336 = vmatprep.subr.mxu0 0.0
    %7337 = vmatpush1.msra.mxu0 0.0
    %7338 = vmatprep.subr.mxu0 0.0
    %7339 = vmatpush1.msra.mxu0 0.0
    %7340 = vmatprep.subr.mxu0 0.0
    %7341 = vmatpush1.msra.mxu0 0.0
    %7342 = vmatprep.subr.mxu0 0.0
    %7343 = vmatpush1.msra.mxu0 0.0
    %7344 = vmatprep.subr.mxu0 0.0
    %7345 = vmatpush1.msra.mxu0 0.0
    %7346 = vmatprep.subr.mxu0 0.0
    %7347 = vmatpush1.msra.mxu0 0.0
    %7348 = vmatprep.mubr.f32.mxu0 0.0
    %v7349 = vand.u32 %v7281, 4294901760
    %v7350 = vsub.f32 %v7281, %v7349
    %v7351 = vand.u32 %v7350, 4294901760
    %v7352 = vsub.f32 %v7350, %v7351
    %v7353 = vand.u32 %v7352, 4294901760
    %7354 = vmatmul.mubr.f32.gmra.mrb[0].mxu0 %v7353
    %v7355 = vpop.f32.mrb[0].mxu0
    %v7356 = vadd.f32 0.0, %v7355
    %v7357 = vpop.f32.mrb[0].mxu0
    %7358 = vdwg.mxu0
    %7359 = vmatprep.subr.mxu0 0.0
    %v7360 = vand.u32 %v6830, 4294901760
    %v7361 = vsub.f32 %v6830, %v7360
    %v7362 = vand.u32 %v7361, 4294901760
    %v7363 = vsub.f32 %v7361, %v7362
    %v7364 = vand.u32 %v7363, 4294901760
    %7365 = vmatpush1.msra.mxu0 %v7364
    %7366 = vmatprep.subr.mxu0 0.0
    %7367 = vmatpush1.msra.mxu0 0.0
    %7368 = vmatprep.subr.mxu0 0.0
    %7369 = vmatpush1.msra.mxu0 0.0
    %7370 = vmatprep.subr.mxu0 0.0
    %7371 = vmatpush1.msra.mxu0 0.0
    %7372 = vmatprep.subr.mxu0 0.0
    %7373 = vmatpush1.msra.mxu0 0.0
    %7374 = vmatprep.subr.mxu0 0.0
    %7375 = vmatpush1.msra.mxu0 0.0
    %7376 = vmatprep.subr.mxu0 0.0
    %7377 = vmatpush1.msra.mxu0 0.0
    %7378 = vmatprep.subr.mxu0 0.0
    %7379 = vmatpush1.msra.mxu0 0.0
    %7380 = vmatprep.subr.mxu0 0.0
    %7381 = vmatpush1.msra.mxu0 0.0
    %7382 = vmatprep.subr.mxu0 0.0
    %7383 = vmatpush1.msra.mxu0 0.0
    %7384 = vmatprep.subr.mxu0 0.0
    %7385 = vmatpush1.msra.mxu0 0.0
    %7386 = vmatprep.subr.mxu0 0.0
    %7387 = vmatpush1.msra.mxu0 0.0
    %7388 = vmatprep.subr.mxu0 0.0
    %7389 = vmatpush1.msra.mxu0 0.0
    %7390 = vmatprep.subr.mxu0 0.0
    %7391 = vmatpush1.msra.mxu0 0.0
    %7392 = vmatprep.subr.mxu0 0.0
    %7393 = vmatpush1.msra.mxu0 0.0
    %7394 = vmatprep.subr.mxu0 0.0
    %7395 = vmatpush1.msra.mxu0 0.0
    %7396 = vmatprep.subr.mxu0 0.0
    %7397 = vmatpush1.msra.mxu0 0.0
    %7398 = vmatprep.subr.mxu0 0.0
    %7399 = vmatpush1.msra.mxu0 0.0
    %7400 = vmatprep.subr.mxu0 0.0
    %7401 = vmatpush1.msra.mxu0 0.0
    %7402 = vmatprep.subr.mxu0 0.0
    %7403 = vmatpush1.msra.mxu0 0.0
    %7404 = vmatprep.subr.mxu0 0.0
    %7405 = vmatpush1.msra.mxu0 0.0
    %7406 = vmatprep.subr.mxu0 0.0
    %7407 = vmatpush1.msra.mxu0 0.0
    %7408 = vmatprep.subr.mxu0 0.0
    %7409 = vmatpush1.msra.mxu0 0.0
    %7410 = vmatprep.subr.mxu0 0.0
    %7411 = vmatpush1.msra.mxu0 0.0
    %7412 = vmatprep.subr.mxu0 0.0
    %7413 = vmatpush1.msra.mxu0 0.0
    %7414 = vmatprep.subr.mxu0 0.0
    %7415 = vmatpush1.msra.mxu0 0.0
    %7416 = vmatprep.subr.mxu0 0.0
    %7417 = vmatpush1.msra.mxu0 0.0
    %7418 = vmatprep.subr.mxu0 0.0
    %7419 = vmatpush1.msra.mxu0 0.0
    %7420 = vmatprep.subr.mxu0 0.0
    %7421 = vmatpush1.msra.mxu0 0.0
    %7422 = vmatprep.subr.mxu0 0.0
    %7423 = vmatpush1.msra.mxu0 0.0
    %7424 = vmatprep.subr.mxu0 0.0
    %7425 = vmatpush1.msra.mxu0 0.0
    %7426 = vmatprep.subr.mxu0 0.0
    %7427 = vmatpush1.msra.mxu0 0.0
    %7428 = vmatprep.mubr.f32.mxu0 0.0
    %v7429 = vand.u32 %v7281, 4294901760
    %7430 = vmatmul.mubr.f32.gmra.mrb[0].mxu0 %v7429
    %v7431 = vpop.f32.mrb[0].mxu0
    %v7432 = vadd.f32 %v7356, %v7431
    %v7433 = vpop.f32.mrb[0].mxu0
    %7434 = vdwg.mxu0
    %7435 = vmatprep.subr.mxu0 0.0
    %v7436 = vand.u32 %v6830, 4294901760
    %v7437 = vsub.f32 %v6830, %v7436
    %7438 = vmatpush1.msra.mxu0 %v7437
    %7439 = vmatprep.subr.mxu0 0.0
    %7440 = vmatpush1.msra.mxu0 0.0
    %7441 = vmatprep.subr.mxu0 0.0
    %7442 = vmatpush1.msra.mxu0 0.0
    %7443 = vmatprep.subr.mxu0 0.0
    %7444 = vmatpush1.msra.mxu0 0.0
    %7445 = vmatprep.subr.mxu0 0.0
    %7446 = vmatpush1.msra.mxu0 0.0
    %7447 = vmatprep.subr.mxu0 0.0
    %7448 = vmatpush1.msra.mxu0 0.0
    %7449 = vmatprep.subr.mxu0 0.0
    %7450 = vmatpush1.msra.mxu0 0.0
    %7451 = vmatprep.subr.mxu0 0.0
    %7452 = vmatpush1.msra.mxu0 0.0
    %7453 = vmatprep.subr.mxu0 0.0
    %7454 = vmatpush1.msra.mxu0 0.0
    %7455 = vmatprep.subr.mxu0 0.0
    %7456 = vmatpush1.msra.mxu0 0.0
    %7457 = vmatprep.subr.mxu0 0.0
    %7458 = vmatpush1.msra.mxu0 0.0
    %7459 = vmatprep.subr.mxu0 0.0
    %7460 = vmatpush1.msra.mxu0 0.0
    %7461 = vmatprep.subr.mxu0 0.0
    %7462 = vmatpush1.msra.mxu0 0.0
    %7463 = vmatprep.subr.mxu0 0.0
    %7464 = vmatpush1.msra.mxu0 0.0
    %7465 = vmatprep.subr.mxu0 0.0
    %7466 = vmatpush1.msra.mxu0 0.0
    %7467 = vmatprep.subr.mxu0 0.0
    %7468 = vmatpush1.msra.mxu0 0.0
    %7469 = vmatprep.subr.mxu0 0.0
    %7470 = vmatpush1.msra.mxu0 0.0
    %7471 = vmatprep.subr.mxu0 0.0
    %7472 = vmatpush1.msra.mxu0 0.0
    %7473 = vmatprep.subr.mxu0 0.0
    %7474 = vmatpush1.msra.mxu0 0.0
    %7475 = vmatprep.subr.mxu0 0.0
    %7476 = vmatpush1.msra.mxu0 0.0
    %7477 = vmatprep.subr.mxu0 0.0
    %7478 = vmatpush1.msra.mxu0 0.0
    %7479 = vmatprep.subr.mxu0 0.0
    %7480 = vmatpush1.msra.mxu0 0.0
    %7481 = vmatprep.subr.mxu0 0.0
    %7482 = vmatpush1.msra.mxu0 0.0
    %7483 = vmatprep.subr.mxu0 0.0
    %7484 = vmatpush1.msra.mxu0 0.0
    %7485 = vmatprep.subr.mxu0 0.0
    %7486 = vmatpush1.msra.mxu0 0.0
    %7487 = vmatprep.subr.mxu0 0.0
    %7488 = vmatpush1.msra.mxu0 0.0
    %7489 = vmatprep.subr.mxu0 0.0
    %7490 = vmatpush1.msra.mxu0 0.0
    %7491 = vmatprep.subr.mxu0 0.0
    %7492 = vmatpush1.msra.mxu0 0.0
    %7493 = vmatprep.subr.mxu0 0.0
    %7494 = vmatpush1.msra.mxu0 0.0
    %7495 = vmatprep.subr.mxu0 0.0
    %7496 = vmatpush1.msra.mxu0 0.0
    %7497 = vmatprep.subr.mxu0 0.0
    %7498 = vmatpush1.msra.mxu0 0.0
    %7499 = vmatprep.subr.mxu0 0.0
    %7500 = vmatpush1.msra.mxu0 0.0
    %7501 = vmatprep.mubr.f32.mxu0 0.0
    %v7502 = vand.u32 %v7281, 4294901760
    %v7503 = vsub.f32 %v7281, %v7502
    %7504 = vmatmul.mubr.f32.gmra.mrb[0].mxu0 %v7503
    %v7505 = vpop.f32.mrb[0].mxu0
    %v7506 = vadd.f32 %v7432, %v7505
    %v7507 = vpop.f32.mrb[0].mxu0
    %7508 = vdwg.mxu0
    %7509 = vmatprep.subr.mxu0 0.0
    %v7510 = vand.u32 %v6830, 4294901760
    %7511 = vmatpush1.msra.mxu0 %v7510
    %7512 = vmatprep.subr.mxu0 0.0
    %7513 = vmatpush1.msra.mxu0 0.0
    %7514 = vmatprep.subr.mxu0 0.0
    %7515 = vmatpush1.msra.mxu0 0.0
    %7516 = vmatprep.subr.mxu0 0.0
    %7517 = vmatpush1.msra.mxu0 0.0
    %7518 = vmatprep.subr.mxu0 0.0
    %7519 = vmatpush1.msra.mxu0 0.0
    %7520 = vmatprep.subr.mxu0 0.0
    %7521 = vmatpush1.msra.mxu0 0.0
    %7522 = vmatprep.subr.mxu0 0.0
    %7523 = vmatpush1.msra.mxu0 0.0
    %7524 = vmatprep.subr.mxu0 0.0
    %7525 = vmatpush1.msra.mxu0 0.0
    %7526 = vmatprep.subr.mxu0 0.0
    %7527 = vmatpush1.msra.mxu0 0.0
    %7528 = vmatprep.subr.mxu0 0.0
    %7529 = vmatpush1.msra.mxu0 0.0
    %7530 = vmatprep.subr.mxu0 0.0
    %7531 = vmatpush1.msra.mxu0 0.0
    %7532 = vmatprep.subr.mxu0 0.0
    %7533 = vmatpush1.msra.mxu0 0.0
    %7534 = vmatprep.subr.mxu0 0.0
    %7535 = vmatpush1.msra.mxu0 0.0
    %7536 = vmatprep.subr.mxu0 0.0
    %7537 = vmatpush1.msra.mxu0 0.0
    %7538 = vmatprep.subr.mxu0 0.0
    %7539 = vmatpush1.msra.mxu0 0.0
    %7540 = vmatprep.subr.mxu0 0.0
    %7541 = vmatpush1.msra.mxu0 0.0
    %7542 = vmatprep.subr.mxu0 0.0
    %7543 = vmatpush1.msra.mxu0 0.0
    %7544 = vmatprep.subr.mxu0 0.0
    %7545 = vmatpush1.msra.mxu0 0.0
    %7546 = vmatprep.subr.mxu0 0.0
    %7547 = vmatpush1.msra.mxu0 0.0
    %7548 = vmatprep.subr.mxu0 0.0
    %7549 = vmatpush1.msra.mxu0 0.0
    %7550 = vmatprep.subr.mxu0 0.0
    %7551 = vmatpush1.msra.mxu0 0.0
    %7552 = vmatprep.subr.mxu0 0.0
    %7553 = vmatpush1.msra.mxu0 0.0
    %7554 = vmatprep.subr.mxu0 0.0
    %7555 = vmatpush1.msra.mxu0 0.0
    %7556 = vmatprep.subr.mxu0 0.0
    %7557 = vmatpush1.msra.mxu0 0.0
    %7558 = vmatprep.subr.mxu0 0.0
    %7559 = vmatpush1.msra.mxu0 0.0
    %7560 = vmatprep.subr.mxu0 0.0
    %7561 = vmatpush1.msra.mxu0 0.0
    %7562 = vmatprep.subr.mxu0 0.0
    %7563 = vmatpush1.msra.mxu0 0.0
    %7564 = vmatprep.subr.mxu0 0.0
    %7565 = vmatpush1.msra.mxu0 0.0
    %7566 = vmatprep.subr.mxu0 0.0
    %7567 = vmatpush1.msra.mxu0 0.0
    %7568 = vmatprep.subr.mxu0 0.0
    %7569 = vmatpush1.msra.mxu0 0.0
    %7570 = vmatprep.subr.mxu0 0.0
    %7571 = vmatpush1.msra.mxu0 0.0
    %7572 = vmatprep.subr.mxu0 0.0
    %7573 = vmatpush1.msra.mxu0 0.0
    %7574 = vmatprep.mubr.f32.mxu0 0.0
    %v7575 = vand.u32 %v7281, 4294901760
    %v7576 = vsub.f32 %v7281, %v7575
    %v7577 = vand.u32 %v7576, 4294901760
    %7578 = vmatmul.mubr.f32.gmra.mrb[0].mxu0 %v7577
    %v7579 = vpop.f32.mrb[0].mxu0
    %v7580 = vadd.f32 %v7506, %v7579
    %v7581 = vpop.f32.mrb[0].mxu0
    %7582 = vdwg.mxu0
    %7583 = vmatprep.subr.mxu0 0.0
    %v7584 = vand.u32 %v6830, 4294901760
    %v7585 = vsub.f32 %v6830, %v7584
    %v7586 = vand.u32 %v7585, 4294901760
    %7587 = vmatpush1.msra.mxu0 %v7586
    %7588 = vmatprep.subr.mxu0 0.0
    %7589 = vmatpush1.msra.mxu0 0.0
    %7590 = vmatprep.subr.mxu0 0.0
    %7591 = vmatpush1.msra.mxu0 0.0
    %7592 = vmatprep.subr.mxu0 0.0
    %7593 = vmatpush1.msra.mxu0 0.0
    %7594 = vmatprep.subr.mxu0 0.0
    %7595 = vmatpush1.msra.mxu0 0.0
    %7596 = vmatprep.subr.mxu0 0.0
    %7597 = vmatpush1.msra.mxu0 0.0
    %7598 = vmatprep.subr.mxu0 0.0
    %7599 = vmatpush1.msra.mxu0 0.0
    %7600 = vmatprep.subr.mxu0 0.0
    %7601 = vmatpush1.msra.mxu0 0.0
    %7602 = vmatprep.subr.mxu0 0.0
    %7603 = vmatpush1.msra.mxu0 0.0
    %7604 = vmatprep.subr.mxu0 0.0
    %7605 = vmatpush1.msra.mxu0 0.0
    %7606 = vmatprep.subr.mxu0 0.0
    %7607 = vmatpush1.msra.mxu0 0.0
    %7608 = vmatprep.subr.mxu0 0.0
    %7609 = vmatpush1.msra.mxu0 0.0
    %7610 = vmatprep.subr.mxu0 0.0
    %7611 = vmatpush1.msra.mxu0 0.0
    %7612 = vmatprep.subr.mxu0 0.0
    %7613 = vmatpush1.msra.mxu0 0.0
    %7614 = vmatprep.subr.mxu0 0.0
    %7615 = vmatpush1.msra.mxu0 0.0
    %7616 = vmatprep.subr.mxu0 0.0
    %7617 = vmatpush1.msra.mxu0 0.0
    %7618 = vmatprep.subr.mxu0 0.0
    %7619 = vmatpush1.msra.mxu0 0.0
    %7620 = vmatprep.subr.mxu0 0.0
    %7621 = vmatpush1.msra.mxu0 0.0
    %7622 = vmatprep.subr.mxu0 0.0
    %7623 = vmatpush1.msra.mxu0 0.0
    %7624 = vmatprep.subr.mxu0 0.0
    %7625 = vmatpush1.msra.mxu0 0.0
    %7626 = vmatprep.subr.mxu0 0.0
    %7627 = vmatpush1.msra.mxu0 0.0
    %7628 = vmatprep.subr.mxu0 0.0
    %7629 = vmatpush1.msra.mxu0 0.0
    %7630 = vmatprep.subr.mxu0 0.0
    %7631 = vmatpush1.msra.mxu0 0.0
    %7632 = vmatprep.subr.mxu0 0.0
    %7633 = vmatpush1.msra.mxu0 0.0
    %7634 = vmatprep.subr.mxu0 0.0
    %7635 = vmatpush1.msra.mxu0 0.0
    %7636 = vmatprep.subr.mxu0 0.0
    %7637 = vmatpush1.msra.mxu0 0.0
    %7638 = vmatprep.subr.mxu0 0.0
    %7639 = vmatpush1.msra.mxu0 0.0
    %7640 = vmatprep.subr.mxu0 0.0
    %7641 = vmatpush1.msra.mxu0 0.0
    %7642 = vmatprep.subr.mxu0 0.0
    %7643 = vmatpush1.msra.mxu0 0.0
    %7644 = vmatprep.subr.mxu0 0.0
    %7645 = vmatpush1.msra.mxu0 0.0
    %7646 = vmatprep.subr.mxu0 0.0
    %7647 = vmatpush1.msra.mxu0 0.0
    %7648 = vmatprep.subr.mxu0 0.0
    %7649 = vmatpush1.msra.mxu0 0.0
    %7650 = vmatprep.mubr.f32.mxu0 0.0
    %v7651 = vand.u32 %v7281, 4294901760
    %7652 = vmatmul.mubr.f32.gmra.mrb[0].mxu0 %v7651
    %v7653 = vpop.f32.mrb[0].mxu0
    %v7654 = vadd.f32 %v7580, %v7653
    %v7655 = vpop.f32.mrb[0].mxu0
    %7656 = vdwg.mxu0
    %7657 = vmatprep.subr.mxu0 0.0
    %v7658 = vand.u32 %v6830, 4294901760
    %7659 = vmatpush1.msra.mxu0 %v7658
    %7660 = vmatprep.subr.mxu0 0.0
    %7661 = vmatpush1.msra.mxu0 0.0
    %7662 = vmatprep.subr.mxu0 0.0
    %7663 = vmatpush1.msra.mxu0 0.0
    %7664 = vmatprep.subr.mxu0 0.0
    %7665 = vmatpush1.msra.mxu0 0.0
    %7666 = vmatprep.subr.mxu0 0.0
    %7667 = vmatpush1.msra.mxu0 0.0
    %7668 = vmatprep.subr.mxu0 0.0
    %7669 = vmatpush1.msra.mxu0 0.0
    %7670 = vmatprep.subr.mxu0 0.0
    %7671 = vmatpush1.msra.mxu0 0.0
    %7672 = vmatprep.subr.mxu0 0.0
    %7673 = vmatpush1.msra.mxu0 0.0
    %7674 = vmatprep.subr.mxu0 0.0
    %7675 = vmatpush1.msra.mxu0 0.0
    %7676 = vmatprep.subr.mxu0 0.0
    %7677 = vmatpush1.msra.mxu0 0.0
    %7678 = vmatprep.subr.mxu0 0.0
    %7679 = vmatpush1.msra.mxu0 0.0
    %7680 = vmatprep.subr.mxu0 0.0
    %7681 = vmatpush1.msra.mxu0 0.0
    %7682 = vmatprep.subr.mxu0 0.0
    %7683 = vmatpush1.msra.mxu0 0.0
    %7684 = vmatprep.subr.mxu0 0.0
    %7685 = vmatpush1.msra.mxu0 0.0
    %7686 = vmatprep.subr.mxu0 0.0
    %7687 = vmatpush1.msra.mxu0 0.0
    %7688 = vmatprep.subr.mxu0 0.0
    %7689 = vmatpush1.msra.mxu0 0.0
    %7690 = vmatprep.subr.mxu0 0.0
    %7691 = vmatpush1.msra.mxu0 0.0
    %7692 = vmatprep.subr.mxu0 0.0
    %7693 = vmatpush1.msra.mxu0 0.0
    %7694 = vmatprep.subr.mxu0 0.0
    %7695 = vmatpush1.msra.mxu0 0.0
    %7696 = vmatprep.subr.mxu0 0.0
    %7697 = vmatpush1.msra.mxu0 0.0
    %7698 = vmatprep.subr.mxu0 0.0
    %7699 = vmatpush1.msra.mxu0 0.0
    %7700 = vmatprep.subr.mxu0 0.0
    %7701 = vmatpush1.msra.mxu0 0.0
    %7702 = vmatprep.subr.mxu0 0.0
    %7703 = vmatpush1.msra.mxu0 0.0
    %7704 = vmatprep.subr.mxu0 0.0
    %7705 = vmatpush1.msra.mxu0 0.0
    %7706 = vmatprep.subr.mxu0 0.0
    %7707 = vmatpush1.msra.mxu0 0.0
    %7708 = vmatprep.subr.mxu0 0.0
    %7709 = vmatpush1.msra.mxu0 0.0
    %7710 = vmatprep.subr.mxu0 0.0
    %7711 = vmatpush1.msra.mxu0 0.0
    %7712 = vmatprep.subr.mxu0 0.0
    %7713 = vmatpush1.msra.mxu0 0.0
    %7714 = vmatprep.subr.mxu0 0.0
    %7715 = vmatpush1.msra.mxu0 0.0
    %7716 = vmatprep.subr.mxu0 0.0
    %7717 = vmatpush1.msra.mxu0 0.0
    %7718 = vmatprep.subr.mxu0 0.0
    %7719 = vmatpush1.msra.mxu0 0.0
    %7720 = vmatprep.subr.mxu0 0.0
    %7721 = vmatpush1.msra.mxu0 0.0
    %7722 = vmatprep.mubr.f32.mxu0 0.0
    %v7723 = vand.u32 %v7281, 4294901760
    %7724 = vmatmul.mubr.f32.gmra.mrb[0].mxu0 %v7723
    %v7725 = vpop.f32.mrb[0].mxu0
    %v7726 = vadd.f32 %v7654, %v7725
    %v7727 = vpop.f32.mrb[0].mxu0
    %7728 = vdwg.mxu0
    %v7729 = vlaneseq
    %v7730 = vshrl.u32 %v7729, 7
    %v7731 = vsub.s32 0, %v7730
    %v7732 = vrot.slane %v7277, %v7731
    %v7733 = vmul.f32 %v5495, %v7732
    %v7734 = vmul.f32 %v5496, %v7732
    %v7735 = vmul.f32 %v5497, %v7732
    %v7736 = vmul.f32 %v5498, %v7732
    %v7737 = vlaneseq
    %v7738 = vshrl.u32 %v7737, 7
    %v7739 = vsub.s32 0, %v7738
    %v7740 = vrot.slane %v7726, %v7739
    %v7741 = vadd.f32 %v7733, %v7740
    %v7742 = vadd.f32 %v7734, %v7740
    %v7743 = vadd.f32 %v7735, %v7740
    %v7744 = vadd.f32 %v7736, %v7740
    %v7745 = vpack.c.bf16 %v179, %v178
    %v7746 = vpack.c.bf16 %v181, %v180
    %v7747 = vld [vmem:[#allocation17] sm:$0xf]
    %v7748 = vld [vmem:[#allocation17 + $0x4] sm:$0xf]
    %v7749 = vld [vmem:[#allocation17 + $0x8] sm:$0xf]
    %v7750 = vld [vmem:[#allocation17 + $0xc] sm:$0xf]
    %v7751 = vld [vmem:[#allocation17 + $0x10] sm:$0xf]
    %v7752 = vld [vmem:[#allocation17 + $0x14] sm:$0xf]
    %v7753 = vld [vmem:[#allocation17 + $0x18] sm:$0xf]
    %v7754 = vld [vmem:[#allocation17 + $0x1c] sm:$0xf]
    %v7755 = vld [vmem:[#allocation18] sm:$0x1]
    %v7757 = vlaneseq
    %v7758 = vshrl.u32 %v7757, 7
    %v7759 = vsub.s32 0, %v7758
    %v7760 = vrot.slane %v7755, %v7759
    %v7770 = vunpack.c.l.b16 %v7747
    %v7771 = vunpack.c.l.b16 %v7748
    %v7772 = vunpack.c.l.b16 %v7749
    %v7773 = vunpack.c.l.b16 %v7750
    %v7774 = vunpack.c.l.b16 %v7751
    %v7775 = vunpack.c.l.b16 %v7752
    %v7776 = vunpack.c.l.b16 %v7753
    %v7777 = vunpack.c.l.b16 %v7754
    %v7778 = vpack.c.b16 %v7771, %v7770
    %v7779 = vpack.c.b16 %v7773, %v7772
    %v7780 = vpack.c.b16 %v7775, %v7774
    %v7781 = vpack.c.b16 %v7777, %v7776
    %v7787 = vsel %vm199, %v7745, 0
    %v7790 = vsel %vm199, %v7746, 0
    %7792 = vmatprep.subr.bf16.mxu0 0
    %7793 = vmatpush1.bf16.msra.mxu0 %v7778
    %7794 = vmatprep.subr.bf16.mxu0 0
    %7795 = vmatpush1.bf16.msra.mxu0 %v7779
    %7796 = vmatprep.subr.bf16.mxu0 0
    %7797 = vmatpush1.bf16.msra.mxu0 %v7780
    %7798 = vmatprep.subr.bf16.mxu0 0
    %7799 = vmatpush1.bf16.msra.mxu0 %v7781
    %7800 = vmatprep.subr.bf16.mxu0 0
    %7801 = vmatpush1.bf16.msra.mxu0 0
    %7802 = vmatprep.subr.bf16.mxu0 0
    %7803 = vmatpush1.bf16.msra.mxu0 0
    %7804 = vmatprep.subr.bf16.mxu0 0
    %7805 = vmatpush1.bf16.msra.mxu0 0
    %7806 = vmatprep.subr.bf16.mxu0 0
    %7807 = vmatpush1.bf16.msra.mxu0 0
    %7808 = vmatprep.subr.bf16.mxu0 0
    %7809 = vmatpush1.bf16.msra.mxu0 0
    %7810 = vmatprep.subr.bf16.mxu0 0
    %7811 = vmatpush1.bf16.msra.mxu0 0
    %7812 = vmatprep.subr.bf16.mxu0 0
    %7813 = vmatpush1.bf16.msra.mxu0 0
    %7814 = vmatprep.subr.bf16.mxu0 0
    %7815 = vmatpush1.bf16.msra.mxu0 0
    %7816 = vmatprep.subr.bf16.mxu0 0
    %7817 = vmatpush1.bf16.msra.mxu0 0
    %7818 = vmatprep.subr.bf16.mxu0 0
    %7819 = vmatpush1.bf16.msra.mxu0 0
    %7820 = vmatprep.subr.bf16.mxu0 0
    %7821 = vmatpush1.bf16.msra.mxu0 0
    %7822 = vmatprep.subr.bf16.mxu0 0
    %7823 = vmatpush1.bf16.msra.mxu0 0
    %7824 = vmatprep.mubr.bf16.mxu0 0
    %7825 = vmatmul.mubr.bf16.gmra.mrb[0].mxu0 %v7787
    %v7826 = vpop.f32.mrb[0].mxu0
    %v7827 = vadd.f32 %v7760, %v7826
    %v7828 = vpop.f32.mrb[0].mxu0
    %v7829 = vpop.f32.mrb[0].mxu0
    %v7830 = vadd.f32 %v7760, %v7829
    %v7831 = vpop.f32.mrb[0].mxu0
    %7832 = vmatprep.mubr.bf16.mxu0 0
    %7833 = vmatmul.mubr.bf16.gmra.mrb[0].mxu0 %v7790
    %v7834 = vpop.f32.mrb[0].mxu0
    %v7835 = vadd.f32 %v7760, %v7834
    %v7836 = vpop.f32.mrb[0].mxu0
    %v7837 = vpop.f32.mrb[0].mxu0
    %v7838 = vadd.f32 %v7760, %v7837
    %v7839 = vpop.f32.mrb[0].mxu0
    %7840 = vdwg.mxu0
    %v7841 = vadd.f32 %v7741, %v7827
    %v7842 = vadd.f32 %v7742, %v7830
    %v7843 = vadd.f32 %v7743, %v7835
    %v7844 = vadd.f32 %v7744, %v7838
    %7845 = vst [vmem:[#allocation20] sm:$0xff] %v7841
    %7846 = vst [vmem:[#allocation20 + $0x8] sm:$0xff] %v7842
    %7847 = vst [vmem:[#allocation20 + $0x10] sm:$0xff] %v7843
    %7848 = vst [vmem:[#allocation20 + $0x18] sm:$0xff] %v7844
    // Predicated region
    $region110: #{tpu_custom_call.1} parent=1 // pred_check
      _
    $region111: #{tpu_custom_call.1} parent=1 // pred_check_branch
      %7850 = sbr.rel (0) target = $region113
    $region112: #{tpu_custom_call.1} parent=1 // pred_region
      %s7852 = ssub.s32 512, 512
      %7853 = vsyncadd [#allocation5], %s7852
      %s7854 = sshll.u32 [#allocation20], 4
      %s7855 = int_to_ptr.vmem [resolvable:$true] %s7854
      %7860 = dma.vmem_to_hbm [thread:$0]  %s7855, 512, %s17, [#allocation5], 128, 128, 8
    $region113: #{tpu_custom_call.1} parent=1 // pred_fallthru
      _
    // Predicated region
    $region114: #{tpu_custom_call.1} parent=1 // pred_check
      _
    $region115: #{tpu_custom_call.1} parent=1 // pred_check_branch
      %7862 = sbr.rel (0) target = $region117
    $region116: #{tpu_custom_call.1} parent=1 // pred_region
      %7863 = dma.done [#allocation5], 512
    $region117: #{tpu_custom_call.1} parent=1 // pred_fallthru
      _
    %7864 = vsyncpa [#allocation4], 1
    %7865 = vsyncpa [#allocation7], 1
    %7866 = vsyncpa [#allocation10], 1
    %7867 = vsyncpa [#allocation13], 1
    %7868 = vsyncpa [#allocation16], 1
    %7869 = vsyncpa [#allocation19], 1
    %7870 = vsyncpa [#allocation5], 1

</llo_original>
